<compile_context>
chip_gen: v6e
topology: v6e:2x2x1
jax: 0.10.0
libtpu: 0.0.40
codegen_flags: <defaults>
</compile_context>

<pallas_src>
import functools

import jax
import jax.numpy as jnp
from jax import lax
from jax.experimental import pallas as pl
from jax.experimental.pallas import tpu as pltpu


# ---------------------------------------------------------------------------
# bilinear interpolation matrix (align_corners=True)
# ---------------------------------------------------------------------------
def _bilinear_matrix(n_in, n_out, dtype=jnp.float32):
    # align_corners=True: src = i_out * (n_in - 1) / (n_out - 1)
    i = jnp.arange(n_out, dtype=jnp.float32)
    src = i * (n_in - 1) / (n_out - 1)
    lo = jnp.clip(jnp.floor(src).astype(jnp.int32), 0, n_in - 2)
    frac = src - lo.astype(jnp.float32)
    rows = jnp.arange(n_out)
    M = jnp.zeros((n_out, n_in), dtype)
    M = M.at[rows, lo].set((1.0 - frac).astype(dtype))
    M = M.at[rows, lo + 1].add(frac.astype(dtype))
    return M


# ---------------------------------------------------------------------------
# fused Up1 kernel (one grid step = one image)
# ---------------------------------------------------------------------------
def _up1_kernel(x_ref, m2_ref, w1_ref, b1_ref, w2t_ref, b2_ref, o_ref,
                p1, p2, q1, q2, *, H, W, C):
    # x_ref  : (1, C, H*W)        NCHW-flat input image
    # m2_ref : (Ho*Wo, H*W)       Kronecker bilinear interpolation matrix (f32)
    # w1_ref : (25*C, C)          5x5 conv weight, rows ordered (dy,dx,cin)
    # b1_ref : (1, C)
    # w2t_ref: (C, 9*C)           3x3 conv weight, transposed (cout major)
    # b2_ref : (C, 1)
    # o_ref  : (1, C, Hc*Wc)      NCHW-flat output
    # p1     : (Hc+4, Wc+4, C)    zero-halo scratch for the 5x5 conv
    # p2     : (Hc+2, Wc+2, C)    zero-halo scratch for the 3x3 conv
    # q1     : (Hc*Wc, 25*C)      im2col patch scratch (5x5)
    # q2     : (Hc*Wc, 9*C)       im2col patch scratch (3x3)
    Ho, Wo = 2 * H, 2 * W
    Hc, Wc = Ho + 1, Wo          # spatial shape after F.pad(x, (0, 0, 1, 0))
    f32 = jnp.float32

    # 1) bilinear x2 upsample.  up[p, c] = sum_hw M2[p, hw] * x[c, hw]:
    #    the NCHW->NHWC transpose is folded into the matmul (A . B^T), so the
    #    result is NHWC-flat with no explicit transpose / relayout.
    up = lax.dot_general(m2_ref[...], x_ref[0].astype(f32),
                         (((1,), (1,)), ((), ())),
                         preferred_element_type=f32)              # (Ho*Wo, C)

    # 2) 5x5-conv halo: zero only the frame (interior is fully overwritten).
    #    Rows 0..2 of p1 stay zero: 2 conv-pad rows + the F.pad(x,(0,0,1,0)) row.
    p1[0:3, :, :] = jnp.zeros((3, Wc + 4, C), f32)
    p1[3 + Ho:Ho + 5, :, :] = jnp.zeros((2, Wc + 4, C), f32)
    p1[3:3 + Ho, 0:2, :] = jnp.zeros((Ho, 2, C), f32)
    p1[3:3 + Ho, 2 + Wo:Wo + 4, :] = jnp.zeros((Ho, 2, C), f32)
    p1[3:3 + Ho, 2:2 + Wo, :] = up.reshape(Ho, Wo, C)

    # 3) full im2col into VMEM, then ONE MXU matmul with K = 25*C.
    for dy in range(5):
        for dx in range(5):
            k = dy * 5 + dx
            q1[:, k * C:(k + 1) * C] = (
                p1[dy:dy + Hc, dx:dx + Wc, :].reshape(Hc * Wc, C))
    a1 = jnp.maximum(
        jnp.dot(q1[...], w1_ref[...], preferred_element_type=f32) + b1_ref[...],
        0.0)                                                      # (Hc*Wc, C)
    # Dropout2d == identity (eval mode).

    # 4) 3x3-conv halo (frame-only zeroing again).
    p2[0:1, :, :] = jnp.zeros((1, Wc + 2, C), f32)
    p2[1 + Hc:Hc + 2, :, :] = jnp.zeros((1, Wc + 2, C), f32)
    p2[1:1 + Hc, 0:1, :] = jnp.zeros((Hc, 1, C), f32)
    p2[1:1 + Hc, 1 + Wc:Wc + 2, :] = jnp.zeros((Hc, 1, C), f32)
    p2[1:1 + Hc, 1:1 + Wc, :] = a1.reshape(Hc, Wc, C)

    # 5) im2col + one K = 9*C matmul, emitted C-major so the store is already
    #    NCHW-flat (no output transpose anywhere): out_t[c, m] = sum_k W2t[c,k]*q2[m,k].
    for dy in range(3):
        for dx in range(3):
            k = dy * 3 + dx
            q2[:, k * C:(k + 1) * C] = (
                p2[dy:dy + Hc, dx:dx + Wc, :].reshape(Hc * Wc, C))
    a2t = lax.dot_general(w2t_ref[...], q2[...],
                          (((1,), (1,)), ((), ())),
                          preferred_element_type=f32)             # (C, Hc*Wc)
    o_ref[0] = jnp.maximum(a2t + b2_ref[...], 0.0).astype(o_ref.dtype)


def up1_forward(x, params):
    """x: (N, 64, H, W) NCHW -> (N, 64, 2H+1, 2W) NCHW (matches the PyTorch module)."""
    w1, b1, w2, b2 = params                          # conv weights in HWIO layout
    N, C, H, W = x.shape
    Ho, Wo = 2 * H, 2 * W
    Hc, Wc = Ho + 1, Wo

    # Separable bilinear interpolation folded into one (Ho*Wo, H*W) f32 matrix.
    Mh = _bilinear_matrix(H, Ho)
    Mw = _bilinear_matrix(W, Wo)
    M2 = jnp.kron(Mh, Mw).astype(jnp.float32)        # M2[p*Wo+q, h*W+w] = Mh[p,h]*Mw[q,w]

    # Free reshapes only — no host-side transpose of activations.
    x_flat = x.reshape(N, C, H * W)

    # Conv weights for the single-matmul im2col: rows ordered ((dy*kw+dx)*Cin + c).
    w1_full = w1.astype(jnp.float32).reshape(5 * 5 * C, C)          # (25C, C)
    w2t = w2.astype(jnp.float32).reshape(3 * 3 * C, C).T            # (C, 9C)
    b1r = b1.astype(jnp.float32).reshape(1, C)
    b2r = b2.astype(jnp.float32).reshape(C, 1)

    kernel = functools.partial(_up1_kernel, H=H, W=W, C=C)
    out_flat = pl.pallas_call(
        kernel,
        out_shape=jax.ShapeDtypeStruct((N, C, Hc * Wc), x.dtype),
        grid=(N,),
        in_specs=[
            pl.BlockSpec((1, C, H * W), lambda n: (n, 0, 0)),       # image n (NCHW-flat)
            pl.BlockSpec((Ho * Wo, H * W), lambda n: (0, 0)),       # interp matrix (resident)
            pl.BlockSpec((5 * 5 * C, C), lambda n: (0, 0)),         # w1 (resident)
            pl.BlockSpec((1, C), lambda n: (0, 0)),                 # b1
            pl.BlockSpec((C, 3 * 3 * C), lambda n: (0, 0)),         # w2^T (resident)
            pl.BlockSpec((C, 1), lambda n: (0, 0)),                 # b2
        ],
        out_specs=pl.BlockSpec((1, C, Hc * Wc), lambda n: (n, 0, 0)),
        scratch_shapes=[
            pltpu.VMEM((Hc + 4, Wc + 4, C), jnp.float32),           # 5x5 zero-halo
            pltpu.VMEM((Hc + 2, Wc + 2, C), jnp.float32),           # 3x3 zero-halo
            pltpu.VMEM((Hc * Wc, 5 * 5 * C), jnp.float32),          # im2col patch (5x5)
            pltpu.VMEM((Hc * Wc, 3 * 3 * C), jnp.float32),          # im2col patch (3x3)
        ],
        compiler_params=pltpu.CompilerParams(
            dimension_semantics=("parallel",)),      # batch splits across TCs (v7x megacore)
    )(x_flat, M2, w1_full, b1r, w2t, b2r)

    # NCHW-flat -> NCHW: pure reshape, no data movement, no extra XLA kernel.
    return out_flat.reshape(N, C, Hc, Wc)


# ---------------------------------------------------------------------------
# pure-JAX reference for a sanity check
# ---------------------------------------------------------------------------
def up1_reference(x, params):
    w1, b1, w2, b2 = params
    N, C, H, W = x.shape
    Mh = _bilinear_matrix(H, 2 * H)
    Mw = _bilinear_matrix(W, 2 * W)
    x = jnp.einsum('ph,nchw,qw->ncpq', Mh, x.astype(jnp.float32), Mw,
                   precision=lax.Precision.HIGHEST)
    x = jnp.pad(x, ((0, 0), (0, 0), (1, 0), (0, 0)))          # F.pad(x, (0,0,1,0))
    x = jnp.transpose(x, (0, 2, 3, 1))
    x = lax.conv_general_dilated(x, w1, (1, 1), ((2, 2), (2, 2)),
                                 dimension_numbers=('NHWC', 'HWIO', 'NHWC'),
                                 precision=lax.Precision.HIGHEST) + b1
    x = jnp.maximum(x, 0.0)
    x = lax.conv_general_dilated(x, w2, (1, 1), ((1, 1), (1, 1)),
                                 dimension_numbers=('NHWC', 'HWIO', 'NHWC'),
                                 precision=lax.Precision.HIGHEST) + b2
    x = jnp.maximum(x, 0.0)
    return jnp.transpose(x, (0, 3, 1, 2))


if __name__ == "__main__":
    key = jax.random.PRNGKey(0)
    kx, kw1, kb1, kw2, kb2 = jax.random.split(key, 5)

    N, C, H, W = 2, 64, 8, 8                             # Conv2d(64, 64, ...) forces C=64
    x = jax.random.normal(kx, (N, C, H, W), jnp.float32)
    w1 = jax.random.normal(kw1, (5, 5, 64, 64), jnp.float32) * 0.02   # HWIO
    b1 = jax.random.normal(kb1, (64,), jnp.float32) * 0.02
    w2 = jax.random.normal(kw2, (3, 3, 64, 64), jnp.float32) * 0.02   # HWIO
    b2 = jax.random.normal(kb2, (64,), jnp.float32) * 0.02
    params = (w1, b1, w2, b2)

    fwd = jax.jit(up1_forward)
    out = jax.block_until_ready(fwd(x, params))
    assert out.shape == (N, 64, 2 * H + 1, 2 * W), out.shape

    ref = jax.block_until_ready(up1_reference(x, params))
    err = float(jnp.max(jnp.abs(out - ref)))
    assert jnp.allclose(out, ref, rtol=2e-3, atol=2e-3), err

    print("KERNEL_OK")
</pallas_src>

<mosaic_0001>
module attributes {stable_mosaic.version = 11 : i64} {
  func.func private @main(%arg0: i32) attributes {dimension_semantics = [#tpu.dimension_semantics<core_parallel>], iteration_bounds = array<i64: 2>, tpu.core_type = #tpu.core_type<sc_scalar_subcore>, window_params = []} {
    return
  }
}

module attributes {stable_mosaic.version = 11 : i64} {
  func.func private @main(%arg0: i32) attributes {dimension_semantics = [#tpu.dimension_semantics<core_parallel>], iteration_bounds = array<i64: 2>, tpu.core_type = #tpu.core_type<sc_scalar_subcore>, window_params = []} {
    return
  }
}

module attributes {stable_mosaic.version = 11 : i64} {
  func.func @_up1_kernel(%arg0: i32, %arg1: memref<1x64x64xf32, #tpu.memory_space<vmem>>, %arg2: memref<256x64xf32, #tpu.memory_space<vmem>>, %arg3: memref<1600x64xf32, #tpu.memory_space<vmem>>, %arg4: memref<1x64xf32, #tpu.memory_space<vmem>>, %arg5: memref<64x576xf32, #tpu.memory_space<vmem>>, %arg6: memref<64x1xf32, #tpu.memory_space<vmem>>, %arg7: memref<1x64x272xf32, #tpu.memory_space<vmem>>, %arg8: memref<21x20x64xf32, #tpu.memory_space<vmem>>, %arg9: memref<19x18x64xf32, #tpu.memory_space<vmem>>, %arg10: memref<272x1600xf32, #tpu.memory_space<vmem>>, %arg11: memref<272x576xf32, #tpu.memory_space<vmem>>) attributes {dimension_semantics = [#tpu.dimension_semantics<parallel>], iteration_bounds = array<i64: 2>, scalar_prefetch = 0 : i64, scratch_operands = 4 : i64, tpu.core_type = #tpu.core_type<tc>, window_params = [{transform_indices = @transform_0, window_bounds = array<i64: 1, 64, 64>}, {pipeline_mode = #tpu.pipeline_mode<synchronous>, transform_indices = @transform_1, window_bounds = array<i64: 256, 64>}, {pipeline_mode = #tpu.pipeline_mode<synchronous>, transform_indices = @transform_2, window_bounds = array<i64: 1600, 64>}, {pipeline_mode = #tpu.pipeline_mode<synchronous>, transform_indices = @transform_3, window_bounds = array<i64: 1, 64>}, {pipeline_mode = #tpu.pipeline_mode<synchronous>, transform_indices = @transform_4, window_bounds = array<i64: 64, 576>}, {pipeline_mode = #tpu.pipeline_mode<synchronous>, transform_indices = @transform_5, window_bounds = array<i64: 64, 1>}, {transform_indices = @transform_6, window_bounds = array<i64: 1, 64, 272>}]} {
    %c0 = arith.constant 0 : index
    %c0_0 = arith.constant 0 : index
    %0 = vector.load %arg2[%c0, %c0_0] : memref<256x64xf32, #tpu.memory_space<vmem>>, vector<256x64xf32>
    %c0_1 = arith.constant 0 : index
    %c0_2 = arith.constant 0 : index
    %c0_3 = arith.constant 0 : index
    %1 = vector.load %arg1[%c0_1, %c0_2, %c0_3] : memref<1x64x64xf32, #tpu.memory_space<vmem>>, vector<1x64x64xf32>
    %2 = vector.shape_cast %1 : vector<1x64x64xf32> to vector<64x64xf32>
    %cst = arith.constant dense<0.000000e+00> : vector<256x64xf32>
    %3 = tpu.matmul %0, %2, %cst {dimension_numbers = #tpu.dot_dimension_numbers<[1], [1], [0], [0], [0, 0, 1, 0], [], []>} : vector<256x64xf32>, vector<64x64xf32>, vector<256x64xf32> -> vector<256x64xf32>
    %cst_4 = arith.constant 0.000000e+00 : f32
    %4 = vector.broadcast %cst_4 : f32 to vector<3x20x64xf32>
    %c0_5 = arith.constant 0 : index
    %c0_6 = arith.constant 0 : index
    %c0_7 = arith.constant 0 : index
    %5 = vector.load %arg8[%c0_5, %c0_6, %c0_7] : memref<21x20x64xf32, #tpu.memory_space<vmem>>, vector<3x20x64xf32>
    tpu.vector_store %arg8[%c0_5, %c0_6, %c0_7], %4 {strides = array<i32>} : memref<21x20x64xf32, #tpu.memory_space<vmem>>, vector<3x20x64xf32>,
    %cst_8 = arith.constant 0.000000e+00 : f32
    %6 = vector.broadcast %cst_8 : f32 to vector<2x20x64xf32>
    %c19 = arith.constant 19 : index
    %c0_9 = arith.constant 0 : index
    %c0_10 = arith.constant 0 : index
    %7 = vector.load %arg8[%c19, %c0_9, %c0_10] : memref<21x20x64xf32, #tpu.memory_space<vmem>>, vector<2x20x64xf32>
    tpu.vector_store %arg8[%c19, %c0_9, %c0_10], %6 {strides = array<i32>} : memref<21x20x64xf32, #tpu.memory_space<vmem>>, vector<2x20x64xf32>,
    %cst_11 = arith.constant 0.000000e+00 : f32
    %8 = vector.broadcast %cst_11 : f32 to vector<16x2x64xf32>
    %c3 = arith.constant 3 : index
    %c0_12 = arith.constant 0 : index
    %c0_13 = arith.constant 0 : index
    %9 = vector.load %arg8[%c3, %c0_12, %c0_13] : memref<21x20x64xf32, #tpu.memory_space<vmem>>, vector<16x2x64xf32>
    tpu.vector_store %arg8[%c3, %c0_12, %c0_13], %8 {strides = array<i32>} : memref<21x20x64xf32, #tpu.memory_space<vmem>>, vector<16x2x64xf32>,
    %cst_14 = arith.constant 0.000000e+00 : f32
    %10 = vector.broadcast %cst_14 : f32 to vector<16x2x64xf32>
    %c3_15 = arith.constant 3 : index
    %c18 = arith.constant 18 : index
    %c0_16 = arith.constant 0 : index
    %11 = vector.load %arg8[%c3_15, %c18, %c0_16] : memref<21x20x64xf32, #tpu.memory_space<vmem>>, vector<16x2x64xf32>
    tpu.vector_store %arg8[%c3_15, %c18, %c0_16], %10 {strides = array<i32>} : memref<21x20x64xf32, #tpu.memory_space<vmem>>, vector<16x2x64xf32>,
    %12 = vector.shape_cast %3 : vector<256x64xf32> to vector<16x16x64xf32>
    %c3_17 = arith.constant 3 : index
    %c2 = arith.constant 2 : index
    %c0_18 = arith.constant 0 : index
    %13 = vector.load %arg8[%c3_17, %c2, %c0_18] : memref<21x20x64xf32, #tpu.memory_space<vmem>>, vector<16x16x64xf32>
    tpu.vector_store %arg8[%c3_17, %c2, %c0_18], %12 {strides = array<i32>} : memref<21x20x64xf32, #tpu.memory_space<vmem>>, vector<16x16x64xf32>,
    %c0_19 = arith.constant 0 : index
    %c0_20 = arith.constant 0 : index
    %c0_21 = arith.constant 0 : index
    %14 = vector.load %arg8[%c0_19, %c0_20, %c0_21] : memref<21x20x64xf32, #tpu.memory_space<vmem>>, vector<17x16x64xf32>
    %15 = vector.shape_cast %14 : vector<17x16x64xf32> to vector<272x64xf32>
    %c0_22 = arith.constant 0 : index
    %c0_23 = arith.constant 0 : index
    %16 = vector.load %arg10[%c0_22, %c0_23] : memref<272x1600xf32, #tpu.memory_space<vmem>>, vector<272x64xf32>
    tpu.vector_store %arg10[%c0_22, %c0_23], %15 {strides = array<i32>} : memref<272x1600xf32, #tpu.memory_space<vmem>>, vector<272x64xf32>,
    %c0_24 = arith.constant 0 : index
    %c1 = arith.constant 1 : index
    %c0_25 = arith.constant 0 : index
    %17 = vector.load %arg8[%c0_24, %c1, %c0_25] : memref<21x20x64xf32, #tpu.memory_space<vmem>>, vector<17x16x64xf32>
    %18 = vector.shape_cast %17 : vector<17x16x64xf32> to vector<272x64xf32>
    %c0_26 = arith.constant 0 : index
    %c64 = arith.constant 64 : index
    %19 = vector.load %arg10[%c0_26, %c64] : memref<272x1600xf32, #tpu.memory_space<vmem>>, vector<272x64xf32>
    tpu.vector_store %arg10[%c0_26, %c64], %18 {strides = array<i32>} : memref<272x1600xf32, #tpu.memory_space<vmem>>, vector<272x64xf32>,
    %c0_27 = arith.constant 0 : index
    %c2_28 = arith.constant 2 : index
    %c0_29 = arith.constant 0 : index
    %20 = vector.load %arg8[%c0_27, %c2_28, %c0_29] : memref<21x20x64xf32, #tpu.memory_space<vmem>>, vector<17x16x64xf32>
    %21 = vector.shape_cast %20 : vector<17x16x64xf32> to vector<272x64xf32>
    %c0_30 = arith.constant 0 : index
    %c128 = arith.constant 128 : index
    %22 = vector.load %arg10[%c0_30, %c128] : memref<272x1600xf32, #tpu.memory_space<vmem>>, vector<272x64xf32>
    tpu.vector_store %arg10[%c0_30, %c128], %21 {strides = array<i32>} : memref<272x1600xf32, #tpu.memory_space<vmem>>, vector<272x64xf32>,
    %c0_31 = arith.constant 0 : index
    %c3_32 = arith.constant 3 : index
    %c0_33 = arith.constant 0 : index
    %23 = vector.load %arg8[%c0_31, %c3_32, %c0_33] : memref<21x20x64xf32, #tpu.memory_space<vmem>>, vector<17x16x64xf32>
    %24 = vector.shape_cast %23 : vector<17x16x64xf32> to vector<272x64xf32>
    %c0_34 = arith.constant 0 : index
    %c192 = arith.constant 192 : index
    %25 = vector.load %arg10[%c0_34, %c192] : memref<272x1600xf32, #tpu.memory_space<vmem>>, vector<272x64xf32>
    tpu.vector_store %arg10[%c0_34, %c192], %24 {strides = array<i32>} : memref<272x1600xf32, #tpu.memory_space<vmem>>, vector<272x64xf32>,
    %c0_35 = arith.constant 0 : index
    %c4 = arith.constant 4 : index
    %c0_36 = arith.constant 0 : index
    %26 = vector.load %arg8[%c0_35, %c4, %c0_36] : memref<21x20x64xf32, #tpu.memory_space<vmem>>, vector<17x16x64xf32>
    %27 = vector.shape_cast %26 : vector<17x16x64xf32> to vector<272x64xf32>
    %c0_37 = arith.constant 0 : index
    %c256 = arith.constant 256 : index
    %28 = vector.load %arg10[%c0_37, %c256] : memref<272x1600xf32, #tpu.memory_space<vmem>>, vector<272x64xf32>
    tpu.vector_store %arg10[%c0_37, %c256], %27 {strides = array<i32>} : memref<272x1600xf32, #tpu.memory_space<vmem>>, vector<272x64xf32>,
    %c1_38 = arith.constant 1 : index
    %c0_39 = arith.constant 0 : index
    %c0_40 = arith.constant 0 : index
    %29 = vector.load %arg8[%c1_38, %c0_39, %c0_40] : memref<21x20x64xf32, #tpu.memory_space<vmem>>, vector<17x16x64xf32>
    %30 = vector.shape_cast %29 : vector<17x16x64xf32> to vector<272x64xf32>
    %c0_41 = arith.constant 0 : index
    %c320 = arith.constant 320 : index
    %31 = vector.load %arg10[%c0_41, %c320] : memref<272x1600xf32, #tpu.memory_space<vmem>>, vector<272x64xf32>
    tpu.vector_store %arg10[%c0_41, %c320], %30 {strides = array<i32>} : memref<272x1600xf32, #tpu.memory_space<vmem>>, vector<272x64xf32>,
    %c1_42 = arith.constant 1 : index
    %c1_43 = arith.constant 1 : index
    %c0_44 = arith.constant 0 : index
    %32 = vector.load %arg8[%c1_42, %c1_43, %c0_44] : memref<21x20x64xf32, #tpu.memory_space<vmem>>, vector<17x16x64xf32>
    %33 = vector.shape_cast %32 : vector<17x16x64xf32> to vector<272x64xf32>
    %c0_45 = arith.constant 0 : index
    %c384 = arith.constant 384 : index
    %34 = vector.load %arg10[%c0_45, %c384] : memref<272x1600xf32, #tpu.memory_space<vmem>>, vector<272x64xf32>
    tpu.vector_store %arg10[%c0_45, %c384], %33 {strides = array<i32>} : memref<272x1600xf32, #tpu.memory_space<vmem>>, vector<272x64xf32>,
    %c1_46 = arith.constant 1 : index
    %c2_47 = arith.constant 2 : index
    %c0_48 = arith.constant 0 : index
    %35 = vector.load %arg8[%c1_46, %c2_47, %c0_48] : memref<21x20x64xf32, #tpu.memory_space<vmem>>, vector<17x16x64xf32>
    %36 = vector.shape_cast %35 : vector<17x16x64xf32> to vector<272x64xf32>
    %c0_49 = arith.constant 0 : index
    %c448 = arith.constant 448 : index
    %37 = vector.load %arg10[%c0_49, %c448] : memref<272x1600xf32, #tpu.memory_space<vmem>>, vector<272x64xf32>
    tpu.vector_store %arg10[%c0_49, %c448], %36 {strides = array<i32>} : memref<272x1600xf32, #tpu.memory_space<vmem>>, vector<272x64xf32>,
    %c1_50 = arith.constant 1 : index
    %c3_51 = arith.constant 3 : index
    %c0_52 = arith.constant 0 : index
    %38 = vector.load %arg8[%c1_50, %c3_51, %c0_52] : memref<21x20x64xf32, #tpu.memory_space<vmem>>, vector<17x16x64xf32>
    %39 = vector.shape_cast %38 : vector<17x16x64xf32> to vector<272x64xf32>
    %c0_53 = arith.constant 0 : index
    %c512 = arith.constant 512 : index
    %40 = vector.load %arg10[%c0_53, %c512] : memref<272x1600xf32, #tpu.memory_space<vmem>>, vector<272x64xf32>
    tpu.vector_store %arg10[%c0_53, %c512], %39 {strides = array<i32>} : memref<272x1600xf32, #tpu.memory_space<vmem>>, vector<272x64xf32>,
    %c1_54 = arith.constant 1 : index
    %c4_55 = arith.constant 4 : index
    %c0_56 = arith.constant 0 : index
    %41 = vector.load %arg8[%c1_54, %c4_55, %c0_56] : memref<21x20x64xf32, #tpu.memory_space<vmem>>, vector<17x16x64xf32>
    %42 = vector.shape_cast %41 : vector<17x16x64xf32> to vector<272x64xf32>
    %c0_57 = arith.constant 0 : index
    %c576 = arith.constant 576 : index
    %43 = vector.load %arg10[%c0_57, %c576] : memref<272x1600xf32, #tpu.memory_space<vmem>>, vector<272x64xf32>
    tpu.vector_store %arg10[%c0_57, %c576], %42 {strides = array<i32>} : memref<272x1600xf32, #tpu.memory_space<vmem>>, vector<272x64xf32>,
    %c2_58 = arith.constant 2 : index
    %c0_59 = arith.constant 0 : index
    %c0_60 = arith.constant 0 : index
    %44 = vector.load %arg8[%c2_58, %c0_59, %c0_60] : memref<21x20x64xf32, #tpu.memory_space<vmem>>, vector<17x16x64xf32>
    %45 = vector.shape_cast %44 : vector<17x16x64xf32> to vector<272x64xf32>
    %c0_61 = arith.constant 0 : index
    %c640 = arith.constant 640 : index
    %46 = vector.load %arg10[%c0_61, %c640] : memref<272x1600xf32, #tpu.memory_space<vmem>>, vector<272x64xf32>
    tpu.vector_store %arg10[%c0_61, %c640], %45 {strides = array<i32>} : memref<272x1600xf32, #tpu.memory_space<vmem>>, vector<272x64xf32>,
    %c2_62 = arith.constant 2 : index
    %c1_63 = arith.constant 1 : index
    %c0_64 = arith.constant 0 : index
    %47 = vector.load %arg8[%c2_62, %c1_63, %c0_64] : memref<21x20x64xf32, #tpu.memory_space<vmem>>, vector<17x16x64xf32>
    %48 = vector.shape_cast %47 : vector<17x16x64xf32> to vector<272x64xf32>
    %c0_65 = arith.constant 0 : index
    %c704 = arith.constant 704 : index
    %49 = vector.load %arg10[%c0_65, %c704] : memref<272x1600xf32, #tpu.memory_space<vmem>>, vector<272x64xf32>
    tpu.vector_store %arg10[%c0_65, %c704], %48 {strides = array<i32>} : memref<272x1600xf32, #tpu.memory_space<vmem>>, vector<272x64xf32>,
    %c2_66 = arith.constant 2 : index
    %c2_67 = arith.constant 2 : index
    %c0_68 = arith.constant 0 : index
    %50 = vector.load %arg8[%c2_66, %c2_67, %c0_68] : memref<21x20x64xf32, #tpu.memory_space<vmem>>, vector<17x16x64xf32>
    %51 = vector.shape_cast %50 : vector<17x16x64xf32> to vector<272x64xf32>
    %c0_69 = arith.constant 0 : index
    %c768 = arith.constant 768 : index
    %52 = vector.load %arg10[%c0_69, %c768] : memref<272x1600xf32, #tpu.memory_space<vmem>>, vector<272x64xf32>
    tpu.vector_store %arg10[%c0_69, %c768], %51 {strides = array<i32>} : memref<272x1600xf32, #tpu.memory_space<vmem>>, vector<272x64xf32>,
    %c2_70 = arith.constant 2 : index
    %c3_71 = arith.constant 3 : index
    %c0_72 = arith.constant 0 : index
    %53 = vector.load %arg8[%c2_70, %c3_71, %c0_72] : memref<21x20x64xf32, #tpu.memory_space<vmem>>, vector<17x16x64xf32>
    %54 = vector.shape_cast %53 : vector<17x16x64xf32> to vector<272x64xf32>
    %c0_73 = arith.constant 0 : index
    %c832 = arith.constant 832 : index
    %55 = vector.load %arg10[%c0_73, %c832] : memref<272x1600xf32, #tpu.memory_space<vmem>>, vector<272x64xf32>
    tpu.vector_store %arg10[%c0_73, %c832], %54 {strides = array<i32>} : memref<272x1600xf32, #tpu.memory_space<vmem>>, vector<272x64xf32>,
    %c2_74 = arith.constant 2 : index
    %c4_75 = arith.constant 4 : index
    %c0_76 = arith.constant 0 : index
    %56 = vector.load %arg8[%c2_74, %c4_75, %c0_76] : memref<21x20x64xf32, #tpu.memory_space<vmem>>, vector<17x16x64xf32>
    %57 = vector.shape_cast %56 : vector<17x16x64xf32> to vector<272x64xf32>
    %c0_77 = arith.constant 0 : index
    %c896 = arith.constant 896 : index
    %58 = vector.load %arg10[%c0_77, %c896] : memref<272x1600xf32, #tpu.memory_space<vmem>>, vector<272x64xf32>
    tpu.vector_store %arg10[%c0_77, %c896], %57 {strides = array<i32>} : memref<272x1600xf32, #tpu.memory_space<vmem>>, vector<272x64xf32>,
    %c3_78 = arith.constant 3 : index
    %c0_79 = arith.constant 0 : index
    %c0_80 = arith.constant 0 : index
    %59 = vector.load %arg8[%c3_78, %c0_79, %c0_80] : memref<21x20x64xf32, #tpu.memory_space<vmem>>, vector<17x16x64xf32>
    %60 = vector.shape_cast %59 : vector<17x16x64xf32> to vector<272x64xf32>
    %c0_81 = arith.constant 0 : index
    %c960 = arith.constant 960 : index
    %61 = vector.load %arg10[%c0_81, %c960] : memref<272x1600xf32, #tpu.memory_space<vmem>>, vector<272x64xf32>
    tpu.vector_store %arg10[%c0_81, %c960], %60 {strides = array<i32>} : memref<272x1600xf32, #tpu.memory_space<vmem>>, vector<272x64xf32>,
    %c3_82 = arith.constant 3 : index
    %c1_83 = arith.constant 1 : index
    %c0_84 = arith.constant 0 : index
    %62 = vector.load %arg8[%c3_82, %c1_83, %c0_84] : memref<21x20x64xf32, #tpu.memory_space<vmem>>, vector<17x16x64xf32>
    %63 = vector.shape_cast %62 : vector<17x16x64xf32> to vector<272x64xf32>
    %c0_85 = arith.constant 0 : index
    %c1024 = arith.constant 1024 : index
    %64 = vector.load %arg10[%c0_85, %c1024] : memref<272x1600xf32, #tpu.memory_space<vmem>>, vector<272x64xf32>
    tpu.vector_store %arg10[%c0_85, %c1024], %63 {strides = array<i32>} : memref<272x1600xf32, #tpu.memory_space<vmem>>, vector<272x64xf32>,
    %c3_86 = arith.constant 3 : index
    %c2_87 = arith.constant 2 : index
    %c0_88 = arith.constant 0 : index
    %65 = vector.load %arg8[%c3_86, %c2_87, %c0_88] : memref<21x20x64xf32, #tpu.memory_space<vmem>>, vector<17x16x64xf32>
    %66 = vector.shape_cast %65 : vector<17x16x64xf32> to vector<272x64xf32>
    %c0_89 = arith.constant 0 : index
    %c1088 = arith.constant 1088 : index
    %67 = vector.load %arg10[%c0_89, %c1088] : memref<272x1600xf32, #tpu.memory_space<vmem>>, vector<272x64xf32>
    tpu.vector_store %arg10[%c0_89, %c1088], %66 {strides = array<i32>} : memref<272x1600xf32, #tpu.memory_space<vmem>>, vector<272x64xf32>,
    %c3_90 = arith.constant 3 : index
    %c3_91 = arith.constant 3 : index
    %c0_92 = arith.constant 0 : index
    %68 = vector.load %arg8[%c3_90, %c3_91, %c0_92] : memref<21x20x64xf32, #tpu.memory_space<vmem>>, vector<17x16x64xf32>
    %69 = vector.shape_cast %68 : vector<17x16x64xf32> to vector<272x64xf32>
    %c0_93 = arith.constant 0 : index
    %c1152 = arith.constant 1152 : index
    %70 = vector.load %arg10[%c0_93, %c1152] : memref<272x1600xf32, #tpu.memory_space<vmem>>, vector<272x64xf32>
    tpu.vector_store %arg10[%c0_93, %c1152], %69 {strides = array<i32>} : memref<272x1600xf32, #tpu.memory_space<vmem>>, vector<272x64xf32>,
    %c3_94 = arith.constant 3 : index
    %c4_95 = arith.constant 4 : index
    %c0_96 = arith.constant 0 : index
    %71 = vector.load %arg8[%c3_94, %c4_95, %c0_96] : memref<21x20x64xf32, #tpu.memory_space<vmem>>, vector<17x16x64xf32>
    %72 = vector.shape_cast %71 : vector<17x16x64xf32> to vector<272x64xf32>
    %c0_97 = arith.constant 0 : index
    %c1216 = arith.constant 1216 : index
    %73 = vector.load %arg10[%c0_97, %c1216] : memref<272x1600xf32, #tpu.memory_space<vmem>>, vector<272x64xf32>
    tpu.vector_store %arg10[%c0_97, %c1216], %72 {strides = array<i32>} : memref<272x1600xf32, #tpu.memory_space<vmem>>, vector<272x64xf32>,
    %c4_98 = arith.constant 4 : index
    %c0_99 = arith.constant 0 : index
    %c0_100 = arith.constant 0 : index
    %74 = vector.load %arg8[%c4_98, %c0_99, %c0_100] : memref<21x20x64xf32, #tpu.memory_space<vmem>>, vector<17x16x64xf32>
    %75 = vector.shape_cast %74 : vector<17x16x64xf32> to vector<272x64xf32>
    %c0_101 = arith.constant 0 : index
    %c1280 = arith.constant 1280 : index
    %76 = vector.load %arg10[%c0_101, %c1280] : memref<272x1600xf32, #tpu.memory_space<vmem>>, vector<272x64xf32>
    tpu.vector_store %arg10[%c0_101, %c1280], %75 {strides = array<i32>} : memref<272x1600xf32, #tpu.memory_space<vmem>>, vector<272x64xf32>,
    %c4_102 = arith.constant 4 : index
    %c1_103 = arith.constant 1 : index
    %c0_104 = arith.constant 0 : index
    %77 = vector.load %arg8[%c4_102, %c1_103, %c0_104] : memref<21x20x64xf32, #tpu.memory_space<vmem>>, vector<17x16x64xf32>
    %78 = vector.shape_cast %77 : vector<17x16x64xf32> to vector<272x64xf32>
    %c0_105 = arith.constant 0 : index
    %c1344 = arith.constant 1344 : index
    %79 = vector.load %arg10[%c0_105, %c1344] : memref<272x1600xf32, #tpu.memory_space<vmem>>, vector<272x64xf32>
    tpu.vector_store %arg10[%c0_105, %c1344], %78 {strides = array<i32>} : memref<272x1600xf32, #tpu.memory_space<vmem>>, vector<272x64xf32>,
    %c4_106 = arith.constant 4 : index
    %c2_107 = arith.constant 2 : index
    %c0_108 = arith.constant 0 : index
    %80 = vector.load %arg8[%c4_106, %c2_107, %c0_108] : memref<21x20x64xf32, #tpu.memory_space<vmem>>, vector<17x16x64xf32>
    %81 = vector.shape_cast %80 : vector<17x16x64xf32> to vector<272x64xf32>
    %c0_109 = arith.constant 0 : index
    %c1408 = arith.constant 1408 : index
    %82 = vector.load %arg10[%c0_109, %c1408] : memref<272x1600xf32, #tpu.memory_space<vmem>>, vector<272x64xf32>
    tpu.vector_store %arg10[%c0_109, %c1408], %81 {strides = array<i32>} : memref<272x1600xf32, #tpu.memory_space<vmem>>, vector<272x64xf32>,
    %c4_110 = arith.constant 4 : index
    %c3_111 = arith.constant 3 : index
    %c0_112 = arith.constant 0 : index
    %83 = vector.load %arg8[%c4_110, %c3_111, %c0_112] : memref<21x20x64xf32, #tpu.memory_space<vmem>>, vector<17x16x64xf32>
    %84 = vector.shape_cast %83 : vector<17x16x64xf32> to vector<272x64xf32>
    %c0_113 = arith.constant 0 : index
    %c1472 = arith.constant 1472 : index
    %85 = vector.load %arg10[%c0_113, %c1472] : memref<272x1600xf32, #tpu.memory_space<vmem>>, vector<272x64xf32>
    tpu.vector_store %arg10[%c0_113, %c1472], %84 {strides = array<i32>} : memref<272x1600xf32, #tpu.memory_space<vmem>>, vector<272x64xf32>,
    %c4_114 = arith.constant 4 : index
    %c4_115 = arith.constant 4 : index
    %c0_116 = arith.constant 0 : index
    %86 = vector.load %arg8[%c4_114, %c4_115, %c0_116] : memref<21x20x64xf32, #tpu.memory_space<vmem>>, vector<17x16x64xf32>
    %87 = vector.shape_cast %86 : vector<17x16x64xf32> to vector<272x64xf32>
    %c0_117 = arith.constant 0 : index
    %c1536 = arith.constant 1536 : index
    %88 = vector.load %arg10[%c0_117, %c1536] : memref<272x1600xf32, #tpu.memory_space<vmem>>, vector<272x64xf32>
    tpu.vector_store %arg10[%c0_117, %c1536], %87 {strides = array<i32>} : memref<272x1600xf32, #tpu.memory_space<vmem>>, vector<272x64xf32>,
    %c0_118 = arith.constant 0 : index
    %c0_119 = arith.constant 0 : index
    %89 = vector.load %arg10[%c0_118, %c0_119] : memref<272x1600xf32, #tpu.memory_space<vmem>>, vector<272x1600xf32>
    %c0_120 = arith.constant 0 : index
    %c0_121 = arith.constant 0 : index
    %90 = vector.load %arg3[%c0_120, %c0_121] : memref<1600x64xf32, #tpu.memory_space<vmem>>, vector<1600x64xf32>
    %cst_122 = arith.constant dense<0.000000e+00> : vector<272x64xf32>
    %91 = tpu.matmul %89, %90, %cst_122 {dimension_numbers = #tpu.dot_dimension_numbers<[1], [0], [0], [1], [0, 0, 1, 1], [], []>} : vector<272x1600xf32>, vector<1600x64xf32>, vector<272x64xf32> -> vector<272x64xf32>
    %c0_123 = arith.constant 0 : index
    %c0_124 = arith.constant 0 : index
    %92 = vector.load %arg4[%c0_123, %c0_124] : memref<1x64xf32, #tpu.memory_space<vmem>>, vector<1x64xf32>
    %93 = vector.broadcast %92 : vector<1x64xf32> to vector<272x64xf32>
    %94 = arith.addf %91, %93 : vector<272x64xf32>
    %cst_125 = arith.constant 0.000000e+00 : f32
    %95 = vector.broadcast %cst_125 : f32 to vector<272x64xf32>
    %96 = arith.maximumf %94, %95 : vector<272x64xf32>
    %cst_126 = arith.constant 0.000000e+00 : f32
    %97 = vector.broadcast %cst_126 : f32 to vector<1x18x64xf32>
    %c0_127 = arith.constant 0 : index
    %c0_128 = arith.constant 0 : index
    %c0_129 = arith.constant 0 : index
    %98 = vector.load %arg9[%c0_127, %c0_128, %c0_129] : memref<19x18x64xf32, #tpu.memory_space<vmem>>, vector<1x18x64xf32>
    tpu.vector_store %arg9[%c0_127, %c0_128, %c0_129], %97 {strides = array<i32>} : memref<19x18x64xf32, #tpu.memory_space<vmem>>, vector<1x18x64xf32>,
    %cst_130 = arith.constant 0.000000e+00 : f32
    %99 = vector.broadcast %cst_130 : f32 to vector<1x18x64xf32>
    %c18_131 = arith.constant 18 : index
    %c0_132 = arith.constant 0 : index
    %c0_133 = arith.constant 0 : index
    %100 = vector.load %arg9[%c18_131, %c0_132, %c0_133] : memref<19x18x64xf32, #tpu.memory_space<vmem>>, vector<1x18x64xf32>
    tpu.vector_store %arg9[%c18_131, %c0_132, %c0_133], %99 {strides = array<i32>} : memref<19x18x64xf32, #tpu.memory_space<vmem>>, vector<1x18x64xf32>,
    %cst_134 = arith.constant 0.000000e+00 : f32
    %101 = vector.broadcast %cst_134 : f32 to vector<17x1x64xf32>
    %c1_135 = arith.constant 1 : index
    %c0_136 = arith.constant 0 : index
    %c0_137 = arith.constant 0 : index
    %102 = vector.load %arg9[%c1_135, %c0_136, %c0_137] : memref<19x18x64xf32, #tpu.memory_space<vmem>>, vector<17x1x64xf32>
    tpu.vector_store %arg9[%c1_135, %c0_136, %c0_137], %101 {strides = array<i32>} : memref<19x18x64xf32, #tpu.memory_space<vmem>>, vector<17x1x64xf32>,
    %cst_138 = arith.constant 0.000000e+00 : f32
    %103 = vector.broadcast %cst_138 : f32 to vector<17x1x64xf32>
    %c1_139 = arith.constant 1 : index
    %c17 = arith.constant 17 : index
    %c0_140 = arith.constant 0 : index
    %104 = vector.load %arg9[%c1_139, %c17, %c0_140] : memref<19x18x64xf32, #tpu.memory_space<vmem>>, vector<17x1x64xf32>
    tpu.vector_store %arg9[%c1_139, %c17, %c0_140], %103 {strides = array<i32>} : memref<19x18x64xf32, #tpu.memory_space<vmem>>, vector<17x1x64xf32>,
    %105 = vector.shape_cast %96 : vector<272x64xf32> to vector<17x16x64xf32>
    %c1_141 = arith.constant 1 : index
    %c1_142 = arith.constant 1 : index
    %c0_143 = arith.constant 0 : index
    %106 = vector.load %arg9[%c1_141, %c1_142, %c0_143] : memref<19x18x64xf32, #tpu.memory_space<vmem>>, vector<17x16x64xf32>
    tpu.vector_store %arg9[%c1_141, %c1_142, %c0_143], %105 {strides = array<i32>} : memref<19x18x64xf32, #tpu.memory_space<vmem>>, vector<17x16x64xf32>,
    %c0_144 = arith.constant 0 : index
    %c0_145 = arith.constant 0 : index
    %c0_146 = arith.constant 0 : index
    %107 = vector.load %arg9[%c0_144, %c0_145, %c0_146] : memref<19x18x64xf32, #tpu.memory_space<vmem>>, vector<17x16x64xf32>
    %108 = vector.shape_cast %107 : vector<17x16x64xf32> to vector<272x64xf32>
    %c0_147 = arith.constant 0 : index
    %c0_148 = arith.constant 0 : index
    %109 = vector.load %arg11[%c0_147, %c0_148] : memref<272x576xf32, #tpu.memory_space<vmem>>, vector<272x64xf32>
    tpu.vector_store %arg11[%c0_147, %c0_148], %108 {strides = array<i32>} : memref<272x576xf32, #tpu.memory_space<vmem>>, vector<272x64xf32>,
    %c0_149 = arith.constant 0 : index
    %c1_150 = arith.constant 1 : index
    %c0_151 = arith.constant 0 : index
    %110 = vector.load %arg9[%c0_149, %c1_150, %c0_151] : memref<19x18x64xf32, #tpu.memory_space<vmem>>, vector<17x16x64xf32>
    %111 = vector.shape_cast %110 : vector<17x16x64xf32> to vector<272x64xf32>
    %c0_152 = arith.constant 0 : index
    %c64_153 = arith.constant 64 : index
    %112 = vector.load %arg11[%c0_152, %c64_153] : memref<272x576xf32, #tpu.memory_space<vmem>>, vector<272x64xf32>
    tpu.vector_store %arg11[%c0_152, %c64_153], %111 {strides = array<i32>} : memref<272x576xf32, #tpu.memory_space<vmem>>, vector<272x64xf32>,
    %c0_154 = arith.constant 0 : index
    %c2_155 = arith.constant 2 : index
    %c0_156 = arith.constant 0 : index
    %113 = vector.load %arg9[%c0_154, %c2_155, %c0_156] : memref<19x18x64xf32, #tpu.memory_space<vmem>>, vector<17x16x64xf32>
    %114 = vector.shape_cast %113 : vector<17x16x64xf32> to vector<272x64xf32>
    %c0_157 = arith.constant 0 : index
    %c128_158 = arith.constant 128 : index
    %115 = vector.load %arg11[%c0_157, %c128_158] : memref<272x576xf32, #tpu.memory_space<vmem>>, vector<272x64xf32>
    tpu.vector_store %arg11[%c0_157, %c128_158], %114 {strides = array<i32>} : memref<272x576xf32, #tpu.memory_space<vmem>>, vector<272x64xf32>,
    %c1_159 = arith.constant 1 : index
    %c0_160 = arith.constant 0 : index
    %c0_161 = arith.constant 0 : index
    %116 = vector.load %arg9[%c1_159, %c0_160, %c0_161] : memref<19x18x64xf32, #tpu.memory_space<vmem>>, vector<17x16x64xf32>
    %117 = vector.shape_cast %116 : vector<17x16x64xf32> to vector<272x64xf32>
    %c0_162 = arith.constant 0 : index
    %c192_163 = arith.constant 192 : index
    %118 = vector.load %arg11[%c0_162, %c192_163] : memref<272x576xf32, #tpu.memory_space<vmem>>, vector<272x64xf32>
    tpu.vector_store %arg11[%c0_162, %c192_163], %117 {strides = array<i32>} : memref<272x576xf32, #tpu.memory_space<vmem>>, vector<272x64xf32>,
    %c1_164 = arith.constant 1 : index
    %c1_165 = arith.constant 1 : index
    %c0_166 = arith.constant 0 : index
    %119 = vector.load %arg9[%c1_164, %c1_165, %c0_166] : memref<19x18x64xf32, #tpu.memory_space<vmem>>, vector<17x16x64xf32>
    %120 = vector.shape_cast %119 : vector<17x16x64xf32> to vector<272x64xf32>
    %c0_167 = arith.constant 0 : index
    %c256_168 = arith.constant 256 : index
    %121 = vector.load %arg11[%c0_167, %c256_168] : memref<272x576xf32, #tpu.memory_space<vmem>>, vector<272x64xf32>
    tpu.vector_store %arg11[%c0_167, %c256_168], %120 {strides = array<i32>} : memref<272x576xf32, #tpu.memory_space<vmem>>, vector<272x64xf32>,
    %c1_169 = arith.constant 1 : index
    %c2_170 = arith.constant 2 : index
    %c0_171 = arith.constant 0 : index
    %122 = vector.load %arg9[%c1_169, %c2_170, %c0_171] : memref<19x18x64xf32, #tpu.memory_space<vmem>>, vector<17x16x64xf32>
    %123 = vector.shape_cast %122 : vector<17x16x64xf32> to vector<272x64xf32>
    %c0_172 = arith.constant 0 : index
    %c320_173 = arith.constant 320 : index
    %124 = vector.load %arg11[%c0_172, %c320_173] : memref<272x576xf32, #tpu.memory_space<vmem>>, vector<272x64xf32>
    tpu.vector_store %arg11[%c0_172, %c320_173], %123 {strides = array<i32>} : memref<272x576xf32, #tpu.memory_space<vmem>>, vector<272x64xf32>,
    %c2_174 = arith.constant 2 : index
    %c0_175 = arith.constant 0 : index
    %c0_176 = arith.constant 0 : index
    %125 = vector.load %arg9[%c2_174, %c0_175, %c0_176] : memref<19x18x64xf32, #tpu.memory_space<vmem>>, vector<17x16x64xf32>
    %126 = vector.shape_cast %125 : vector<17x16x64xf32> to vector<272x64xf32>
    %c0_177 = arith.constant 0 : index
    %c384_178 = arith.constant 384 : index
    %127 = vector.load %arg11[%c0_177, %c384_178] : memref<272x576xf32, #tpu.memory_space<vmem>>, vector<272x64xf32>
    tpu.vector_store %arg11[%c0_177, %c384_178], %126 {strides = array<i32>} : memref<272x576xf32, #tpu.memory_space<vmem>>, vector<272x64xf32>,
    %c2_179 = arith.constant 2 : index
    %c1_180 = arith.constant 1 : index
    %c0_181 = arith.constant 0 : index
    %128 = vector.load %arg9[%c2_179, %c1_180, %c0_181] : memref<19x18x64xf32, #tpu.memory_space<vmem>>, vector<17x16x64xf32>
    %129 = vector.shape_cast %128 : vector<17x16x64xf32> to vector<272x64xf32>
    %c0_182 = arith.constant 0 : index
    %c448_183 = arith.constant 448 : index
    %130 = vector.load %arg11[%c0_182, %c448_183] : memref<272x576xf32, #tpu.memory_space<vmem>>, vector<272x64xf32>
    tpu.vector_store %arg11[%c0_182, %c448_183], %129 {strides = array<i32>} : memref<272x576xf32, #tpu.memory_space<vmem>>, vector<272x64xf32>,
    %c2_184 = arith.constant 2 : index
    %c2_185 = arith.constant 2 : index
    %c0_186 = arith.constant 0 : index
    %131 = vector.load %arg9[%c2_184, %c2_185, %c0_186] : memref<19x18x64xf32, #tpu.memory_space<vmem>>, vector<17x16x64xf32>
    %132 = vector.shape_cast %131 : vector<17x16x64xf32> to vector<272x64xf32>
    %c0_187 = arith.constant 0 : index
    %c512_188 = arith.constant 512 : index
    %133 = vector.load %arg11[%c0_187, %c512_188] : memref<272x576xf32, #tpu.memory_space<vmem>>, vector<272x64xf32>
    tpu.vector_store %arg11[%c0_187, %c512_188], %132 {strides = array<i32>} : memref<272x576xf32, #tpu.memory_space<vmem>>, vector<272x64xf32>,
    %c0_189 = arith.constant 0 : index
    %c0_190 = arith.constant 0 : index
    %134 = vector.load %arg5[%c0_189, %c0_190] : memref<64x576xf32, #tpu.memory_space<vmem>>, vector<64x576xf32>
    %c0_191 = arith.constant 0 : index
    %c0_192 = arith.constant 0 : index
    %135 = vector.load %arg11[%c0_191, %c0_192] : memref<272x576xf32, #tpu.memory_space<vmem>>, vector<272x576xf32>
    %cst_193 = arith.constant dense<0.000000e+00> : vector<64x272xf32>
    %136 = tpu.matmul %134, %135, %cst_193 {dimension_numbers = #tpu.dot_dimension_numbers<[1], [1], [0], [0], [0, 0, 1, 0], [], []>} : vector<64x576xf32>, vector<272x576xf32>, vector<64x272xf32> -> vector<64x272xf32>
    %c0_194 = arith.constant 0 : index
    %c0_195 = arith.constant 0 : index
    %137 = vector.load %arg6[%c0_194, %c0_195] : memref<64x1xf32, #tpu.memory_space<vmem>>, vector<64x1xf32>
    %138 = vector.broadcast %137 : vector<64x1xf32> to vector<64x272xf32>
    %139 = arith.addf %136, %138 : vector<64x272xf32>
    %cst_196 = arith.constant 0.000000e+00 : f32
    %140 = vector.broadcast %cst_196 : f32 to vector<64x272xf32>
    %141 = arith.maximumf %139, %140 : vector<64x272xf32>
    %c0_197 = arith.constant 0 : index
    %c0_198 = arith.constant 0 : index
    %c0_199 = arith.constant 0 : index
    %142 = vector.load %arg7[%c0_197, %c0_198, %c0_199] : memref<1x64x272xf32, #tpu.memory_space<vmem>>, vector<1x64x272xf32>
    %143 = vector.shape_cast %142 : vector<1x64x272xf32> to vector<64x272xf32>
    %144 = vector.shape_cast %141 : vector<64x272xf32> to vector<1x64x272xf32>
    tpu.vector_store %arg7[%c0_197, %c0_198, %c0_199], %144 {strides = array<i32>} : memref<1x64x272xf32, #tpu.memory_space<vmem>>, vector<1x64x272xf32>,
    return
  }
  func.func @transform_0(%arg0: i32) -> (i32, i32, i32) {
    %c0_i32 = arith.constant 0 : i32
    %c0_i32_0 = arith.constant 0 : i32
    %c0_i32_1 = arith.constant 0 : i32
    return %arg0, %c0_i32, %c0_i32_0 : i32, i32, i32
  }
  func.func @transform_1(%arg0: i32) -> (i32, i32) {
    %c0_i32 = arith.constant 0 : i32
    %c0_i32_0 = arith.constant 0 : i32
    %c0_i32_1 = arith.constant 0 : i32
    return %c0_i32, %c0_i32_0 : i32, i32
  }
  func.func @transform_2(%arg0: i32) -> (i32, i32) {
    %c0_i32 = arith.constant 0 : i32
    %c0_i32_0 = arith.constant 0 : i32
    %c0_i32_1 = arith.constant 0 : i32
    return %c0_i32, %c0_i32_0 : i32, i32
  }
  func.func @transform_3(%arg0: i32) -> (i32, i32) {
    %c0_i32 = arith.constant 0 : i32
    %c0_i32_0 = arith.constant 0 : i32
    %c0_i32_1 = arith.constant 0 : i32
    return %c0_i32, %c0_i32_0 : i32, i32
  }
  func.func @transform_4(%arg0: i32) -> (i32, i32) {
    %c0_i32 = arith.constant 0 : i32
    %c0_i32_0 = arith.constant 0 : i32
    %c0_i32_1 = arith.constant 0 : i32
    return %c0_i32, %c0_i32_0 : i32, i32
  }
  func.func @transform_5(%arg0: i32) -> (i32, i32) {
    %c0_i32 = arith.constant 0 : i32
    %c0_i32_0 = arith.constant 0 : i32
    %c0_i32_1 = arith.constant 0 : i32
    return %c0_i32, %c0_i32_0 : i32, i32
  }
  func.func @transform_6(%arg0: i32) -> (i32, i32, i32) {
    %c0_i32 = arith.constant 0 : i32
    %c0_i32_0 = arith.constant 0 : i32
    %c0_i32_1 = arith.constant 0 : i32
    return %arg0, %c0_i32, %c0_i32_0 : i32, i32, i32
  }
}

</mosaic_0001>

<llo_original>
// kernel: up1_forward.1
$region0: #{up1_forward.1}
  #allocation0 [shape = 'u32[]', space=smem, size = 0x4, offset = 0x4, fixed_abs, tag = 'smem constant byte address 0x4 - core index']
  #allocation1 [shape = 'u32[144,128]{1,0:T(1,128)}', space=vmem, size = 0x12000, scoped, tag = 'internal scratch']
  #allocation2 [shape = 'f32[21,20,64]{2,1,0:T(8,128)}', space=vmem, size = 0x3f000, scoped, tag = 'scratch operand']
  #allocation3 [shape = 'f32[19,18,64]{2,1,0:T(8,128)}', space=vmem, size = 0x39000, scoped, tag = 'scratch operand']
  #allocation4 [shape = 'f32[272,1600]{1,0:T(8,128)}', space=vmem, size = 0x1ba000, scoped, tag = 'scratch operand']
  #allocation5 [shape = 'f32[272,576]{1,0:T(8,128)}', space=vmem, size = 0xaa000, scoped, tag = 'scratch operand']
  %s0 = inlined_call_operand.vmem [shape: f32[2,64,64], index: 0, kind: input, shape index: {}]
  %s1 = inlined_call_operand.vmem [shape: f32[256,64], index: 1, kind: input, shape index: {}]
  %s2 = inlined_call_operand.vmem [shape: f32[1600,64], index: 2, kind: input, shape index: {}]
  %s3 = inlined_call_operand.vmem [shape: f32[1,64], index: 3, kind: input, shape index: {}]
  %s4 = inlined_call_operand.vmem [shape: f32[64,576], index: 4, kind: input, shape index: {}]
  %s5 = inlined_call_operand.vmem [shape: f32[64,1], index: 5, kind: input, shape index: {}]
  %s6 = inlined_call_operand.vmem [shape: f32[2,64,272], index: 6, kind: output, shape index: {}]
  %s7 = sld [smem:[#allocation0]]
  $region57: #{up1_forward.1} parent=0
    _
  %s9 = ssub.s32 1, %s7
  %s10 = scalar_select 0, %s9, %s7
  loop: start=0, step=1, limit=4
  $region2: #{up1_forward.1} parent=0 // loop_pre_header
    _
  $region3: #{up1_forward.1} parent=0 // loop_header
    %s12 = sphi 0, %s16
    %p13 = scmp.ge.s32.totalorder %s12, 4
    %s22 = sphi 0, %s24
    %s25 = sphi 0, %s22
    %s26 = sphi 0, %s25
    %s42 = sphi 0, %s26
    %s46 = sphi 0, %s46
    %s48 = sphi 0, %s46
    %s49 = sphi 0, %s48
    %s63 = sphi 0, %s49
    %s67 = sphi 0, %s67
    %s69 = sphi 0, %s67
    %s70 = sphi 0, %s69
    %s84 = sphi 0, %s70
    %s88 = sphi 0, %s88
    %s90 = sphi 0, %s88
    %s91 = sphi 0, %s90
    %s105 = sphi 0, %s91
    %s109 = sphi 0, %s109
    %s111 = sphi 0, %s109
    %s112 = sphi 0, %s111
    %s126 = sphi 0, %s112
    %s130 = sphi 0, %s130
    %s132 = sphi 0, %s130
    %s133 = sphi 0, %s132
    %s147 = sphi 0, %s133
    %s153 = sphi 0, %s155
    %s156 = sphi 0, %s153
    %s157 = sphi 0, %s156
    %s173 = sphi 0, %s157
  $region4: #{up1_forward.1} parent=0 // loop_header_branch
    %15 = sbr.rel (%p13) target = $region8
  $region5: #{up1_forward.1} parent=0 // loop_body
    %s17 = ssub.s32 %s12, 1
    %s18 = ssub.s32 %s12, 2
    %s19 = sadd.s32 %s12, 1
    %s20 = ssub.s32 %s12, %s19
    %p21 = scmp.eq.s32.totalorder %s20, 0
    %s23 = sadd.s32 %s22, 1
    %s24 = scalar_select %p21, %s22, %s23
    %p27 = pneg %p21
    %p28 = scmp.eq.s32.totalorder %s12, 1
    %p29 = por %p27, %p28
    %p30 = scmp.ne.s32.totalorder %s22, %s25
    %p31 = scmp.eq.s32.totalorder %s12, 0
    %p32 = por %p30, %p31
    %p33 = scmp.ne.s32.totalorder %s22, %s25
    %p34 = scmp.eq.s32.totalorder %s17, 1
    %p35 = por %p33, %p34
    %p36 = scmp.ne.s32.totalorder %s25, %s26
    %p37 = scmp.eq.s32.totalorder %s17, 0
    %p38 = por %p36, %p37
    %p39 = scmp.ne.s32.totalorder %s25, %s26
    %p40 = scmp.eq.s32.totalorder %s18, 1
    %p41 = por %p39, %p40
    %p43 = scmp.ne.s32.totalorder %s26, %s42
    %p44 = scmp.eq.s32.totalorder %s18, 0
    %p45 = por %p43, %p44
    %s47 = sadd.s32 %s46, 1
    %p50 = scmp.eq.s32.totalorder %s12, 1
    %p51 = scmp.ne.s32.totalorder %s46, %s48
    %p52 = scmp.eq.s32.totalorder %s12, 0
    %p53 = por %p51, %p52
    %p54 = scmp.ne.s32.totalorder %s46, %s48
    %p55 = scmp.eq.s32.totalorder %s17, 1
    %p56 = por %p54, %p55
    %p57 = scmp.ne.s32.totalorder %s48, %s49
    %p58 = scmp.eq.s32.totalorder %s17, 0
    %p59 = por %p57, %p58
    %p60 = scmp.ne.s32.totalorder %s48, %s49
    %p61 = scmp.eq.s32.totalorder %s18, 1
    %p62 = por %p60, %p61
    %p64 = scmp.ne.s32.totalorder %s49, %s63
    %p65 = scmp.eq.s32.totalorder %s18, 0
    %p66 = por %p64, %p65
    %s68 = sadd.s32 %s67, 1
    %p71 = scmp.eq.s32.totalorder %s12, 1
    %p72 = scmp.ne.s32.totalorder %s67, %s69
    %p73 = scmp.eq.s32.totalorder %s12, 0
    %p74 = por %p72, %p73
    %p75 = scmp.ne.s32.totalorder %s67, %s69
    %p76 = scmp.eq.s32.totalorder %s17, 1
    %p77 = por %p75, %p76
    %p78 = scmp.ne.s32.totalorder %s69, %s70
    %p79 = scmp.eq.s32.totalorder %s17, 0
    %p80 = por %p78, %p79
    %p81 = scmp.ne.s32.totalorder %s69, %s70
    %p82 = scmp.eq.s32.totalorder %s18, 1
    %p83 = por %p81, %p82
    %p85 = scmp.ne.s32.totalorder %s70, %s84
    %p86 = scmp.eq.s32.totalorder %s18, 0
    %p87 = por %p85, %p86
    %s89 = sadd.s32 %s88, 1
    %p92 = scmp.eq.s32.totalorder %s12, 1
    %p93 = scmp.ne.s32.totalorder %s88, %s90
    %p94 = scmp.eq.s32.totalorder %s12, 0
    %p95 = por %p93, %p94
    %p96 = scmp.ne.s32.totalorder %s88, %s90
    %p97 = scmp.eq.s32.totalorder %s17, 1
    %p98 = por %p96, %p97
    %p99 = scmp.ne.s32.totalorder %s90, %s91
    %p100 = scmp.eq.s32.totalorder %s17, 0
    %p101 = por %p99, %p100
    %p102 = scmp.ne.s32.totalorder %s90, %s91
    %p103 = scmp.eq.s32.totalorder %s18, 1
    %p104 = por %p102, %p103
    %p106 = scmp.ne.s32.totalorder %s91, %s105
    %p107 = scmp.eq.s32.totalorder %s18, 0
    %p108 = por %p106, %p107
    %s110 = sadd.s32 %s109, 1
    %p113 = scmp.eq.s32.totalorder %s12, 1
    %p114 = scmp.ne.s32.totalorder %s109, %s111
    %p115 = scmp.eq.s32.totalorder %s12, 0
    %p116 = por %p114, %p115
    %p117 = scmp.ne.s32.totalorder %s109, %s111
    %p118 = scmp.eq.s32.totalorder %s17, 1
    %p119 = por %p117, %p118
    %p120 = scmp.ne.s32.totalorder %s111, %s112
    %p121 = scmp.eq.s32.totalorder %s17, 0
    %p122 = por %p120, %p121
    %p123 = scmp.ne.s32.totalorder %s111, %s112
    %p124 = scmp.eq.s32.totalorder %s18, 1
    %p125 = por %p123, %p124
    %p127 = scmp.ne.s32.totalorder %s112, %s126
    %p128 = scmp.eq.s32.totalorder %s18, 0
    %p129 = por %p127, %p128
    %s131 = sadd.s32 %s130, 1
    %p134 = scmp.eq.s32.totalorder %s12, 1
    %p135 = scmp.ne.s32.totalorder %s130, %s132
    %p136 = scmp.eq.s32.totalorder %s12, 0
    %p137 = por %p135, %p136
    %p138 = scmp.ne.s32.totalorder %s130, %s132
    %p139 = scmp.eq.s32.totalorder %s17, 1
    %p140 = por %p138, %p139
    %p141 = scmp.ne.s32.totalorder %s132, %s133
    %p142 = scmp.eq.s32.totalorder %s17, 0
    %p143 = por %p141, %p142
    %p144 = scmp.ne.s32.totalorder %s132, %s133
    %p145 = scmp.eq.s32.totalorder %s18, 1
    %p146 = por %p144, %p145
    %p148 = scmp.ne.s32.totalorder %s133, %s147
    %p149 = scmp.eq.s32.totalorder %s18, 0
    %p150 = por %p148, %p149
    %s151 = ssub.s32 %s12, %s19
    %p152 = scmp.eq.s32.totalorder %s151, 0
    %s154 = sadd.s32 %s153, 1
    %s155 = scalar_select %p152, %s153, %s154
    %p158 = pneg %p152
    %p159 = scmp.eq.s32.totalorder %s12, 1
    %p160 = por %p158, %p159
    %p161 = scmp.ne.s32.totalorder %s153, %s156
    %p162 = scmp.eq.s32.totalorder %s12, 0
    %p163 = por %p161, %p162
    %p164 = scmp.ne.s32.totalorder %s153, %s156
    %p165 = scmp.eq.s32.totalorder %s17, 1
    %p166 = por %p164, %p165
    %p167 = scmp.ne.s32.totalorder %s156, %s157
    %p168 = scmp.eq.s32.totalorder %s17, 0
    %p169 = por %p167, %p168
    %p170 = scmp.ne.s32.totalorder %s156, %s157
    %p171 = scmp.eq.s32.totalorder %s18, 1
    %p172 = por %p170, %p171
    %p174 = scmp.ne.s32.totalorder %s157, %s173
    %p175 = scmp.eq.s32.totalorder %s18, 0
    %p176 = por %p174, %p175
    %p177 = scmp.le.s32.totalorder 1, %s12
    %p178 = scmp.lt.s32.totalorder %s12, 3
    %p179 = pnand %p177, %p178
    %p180 = pneg %p179
    // Predicated region
    $region9: #{up1_forward.1} parent=5 // pred_check
      _
    $region10: #{up1_forward.1} parent=5 // pred_check_branch
      %182 = sbr.rel (%p179) target = $region12
    $region11: #{up1_forward.1} parent=5 // pred_region
      %s183 = ssub.s32 %s12, 1
      // Predicated region
      $region13: #{up1_forward.1} parent=11 // pred_check
        %p184 = pneg %p59
      $region14: #{up1_forward.1} parent=11 // pred_check_branch
        %186 = sbr.rel (%p184) target = $region16
      $region15: #{up1_forward.1} parent=11 // pred_region
        _
      $region16: #{up1_forward.1} parent=11 // pred_fallthru
        _
      // Predicated region
      $region17: #{up1_forward.1} parent=11 // pred_check
        %p187 = pneg %p80
      $region18: #{up1_forward.1} parent=11 // pred_check_branch
        %189 = sbr.rel (%p187) target = $region20
      $region19: #{up1_forward.1} parent=11 // pred_region
        _
      $region20: #{up1_forward.1} parent=11 // pred_fallthru
        _
      // Predicated region
      $region21: #{up1_forward.1} parent=11 // pred_check
        %p190 = pneg %p101
      $region22: #{up1_forward.1} parent=11 // pred_check_branch
        %192 = sbr.rel (%p190) target = $region24
      $region23: #{up1_forward.1} parent=11 // pred_region
        _
      $region24: #{up1_forward.1} parent=11 // pred_fallthru
        _
      // Predicated region
      $region25: #{up1_forward.1} parent=11 // pred_check
        %p193 = pneg %p122
      $region26: #{up1_forward.1} parent=11 // pred_check_branch
        %195 = sbr.rel (%p193) target = $region28
      $region27: #{up1_forward.1} parent=11 // pred_region
        _
      $region28: #{up1_forward.1} parent=11 // pred_fallthru
        _
      // Predicated region
      $region29: #{up1_forward.1} parent=11 // pred_check
        %p196 = pneg %p143
      $region30: #{up1_forward.1} parent=11 // pred_check_branch
        %198 = sbr.rel (%p196) target = $region32
      $region31: #{up1_forward.1} parent=11 // pred_region
        _
      $region32: #{up1_forward.1} parent=11 // pred_fallthru
        _
    $region12: #{up1_forward.1} parent=5 // pred_fallthru
      _
    %p199 = scmp.lt.s32.totalorder %s12, 2
    // Predicated region
    $region33: #{up1_forward.1} parent=5 // pred_check
      %p200 = pneg %p199
    $region34: #{up1_forward.1} parent=5 // pred_check_branch
      %202 = sbr.rel (%p200) target = $region36
    $region35: #{up1_forward.1} parent=5 // pred_region
      // Predicated region
      $region37: #{up1_forward.1} parent=35 // pred_check
        %p203 = pneg %p32
      $region38: #{up1_forward.1} parent=35 // pred_check_branch
        %205 = sbr.rel (%p203) target = $region40
      $region39: #{up1_forward.1} parent=35 // pred_region
        %p206 = scmp.lt.s32.totalorder %s12, 1
        %s207 = scalar_select %p206, %s12, 1
        %s208 = smul.addr %s207, 8
        %s209 = smul.addr %s208, 8
        %s210 = scalar_lea.vmem %s0, %s209
      $region40: #{up1_forward.1} parent=35 // pred_fallthru
        _
    $region36: #{up1_forward.1} parent=5 // pred_fallthru
      _
    %p211 = scmp.le.s32.totalorder 1, %s12
    %p212 = scmp.lt.s32.totalorder %s12, 3
    %p213 = pnand %p211, %p212
    %p214 = pneg %p213
    // Predicated region
    $region41: #{up1_forward.1} parent=5 // pred_check
      _
    $region42: #{up1_forward.1} parent=5 // pred_check_branch
      %216 = sbr.rel (%p213) target = $region44
    $region43: #{up1_forward.1} parent=5 // pred_region
      %s217 = ssub.s32 %s12, 1
      %p218 = scmp.lt.s32.totalorder %s17, 1
      %s219 = scalar_select %p218, %s17, 1
      %s220 = smul.addr %s219, 8
      %s221 = smul.addr %s220, 8
      %s222 = scalar_lea.vmem %s0, %s221
      %p223 = pneg %p38
      %p224 = pneg %p35
      %p225 = pneg %p59
      %p226 = pneg %p56
      %p227 = pneg %p80
      %p228 = pneg %p77
      %p229 = pneg %p101
      %p230 = pneg %p98
      %p231 = pneg %p122
      %p232 = pneg %p119
      %p233 = pneg %p143
      %p234 = pneg %p140
      %p235 = pneg %p169
      %p236 = pneg %p166
      %p237 = scmp.lt.s32.totalorder %s17, 1
      %s238 = scalar_select %p237, %s17, 1
      %s239 = smul.addr %s238, 24
      %s240 = smul.addr %s239, 8
      %s241 = scalar_lea.vmem %s6, %s240
      %p242 = scmp.lt.s32.totalorder %s17, 1
      %s243 = scalar_select %p242, %s17, 1
      %s244 = smul.addr %s243, 8
      %s245 = smul.addr %s244, 8
      %s246 = scalar_lea.vmem %s0, %s245
      %p247 = scmp.lt.s32.totalorder %s17, 1
      %s248 = scalar_select %p247, %s17, 1
      %s249 = smul.addr %s248, 24
      %s250 = smul.addr %s249, 8
      %s251 = scalar_lea.vmem %s6, %s250
      %v252 = vld [vmem:[%s1] sm:$0xff]
      %v253 = vld [vmem:[%s1 + $0x8] sm:$0xff]
      %v254 = vld [vmem:[%s1 + $0x10] sm:$0xff]
      %v255 = vld [vmem:[%s1 + $0x18] sm:$0xff]
      %v256 = vld [vmem:[%s1 + $0x20] sm:$0xff]
      %v257 = vld [vmem:[%s1 + $0x28] sm:$0xff]
      %v258 = vld [vmem:[%s1 + $0x30] sm:$0xff]
      %v259 = vld [vmem:[%s1 + $0x38] sm:$0xff]
      %v260 = vld [vmem:[%s1 + $0x40] sm:$0xff]
      %v261 = vld [vmem:[%s1 + $0x48] sm:$0xff]
      %v262 = vld [vmem:[%s1 + $0x50] sm:$0xff]
      %v263 = vld [vmem:[%s1 + $0x58] sm:$0xff]
      %v264 = vld [vmem:[%s1 + $0x60] sm:$0xff]
      %v265 = vld [vmem:[%s1 + $0x68] sm:$0xff]
      %v266 = vld [vmem:[%s1 + $0x70] sm:$0xff]
      %v267 = vld [vmem:[%s1 + $0x78] sm:$0xff]
      %v268 = vld [vmem:[%s1 + $0x80] sm:$0xff]
      %v269 = vld [vmem:[%s1 + $0x88] sm:$0xff]
      %v270 = vld [vmem:[%s1 + $0x90] sm:$0xff]
      %v271 = vld [vmem:[%s1 + $0x98] sm:$0xff]
      %v272 = vld [vmem:[%s1 + $0xa0] sm:$0xff]
      %v273 = vld [vmem:[%s1 + $0xa8] sm:$0xff]
      %v274 = vld [vmem:[%s1 + $0xb0] sm:$0xff]
      %v275 = vld [vmem:[%s1 + $0xb8] sm:$0xff]
      %v276 = vld [vmem:[%s1 + $0xc0] sm:$0xff]
      %v277 = vld [vmem:[%s1 + $0xc8] sm:$0xff]
      %v278 = vld [vmem:[%s1 + $0xd0] sm:$0xff]
      %v279 = vld [vmem:[%s1 + $0xd8] sm:$0xff]
      %v280 = vld [vmem:[%s1 + $0xe0] sm:$0xff]
      %v281 = vld [vmem:[%s1 + $0xe8] sm:$0xff]
      %v282 = vld [vmem:[%s1 + $0xf0] sm:$0xff]
      %v283 = vld [vmem:[%s1 + $0xf8] sm:$0xff]
      %v284 = vld [vmem:[%s246] sm:$0xff]
      %v285 = vld [vmem:[%s246 + $0x8] sm:$0xff]
      %v286 = vld [vmem:[%s246 + $0x10] sm:$0xff]
      %v287 = vld [vmem:[%s246 + $0x18] sm:$0xff]
      %v288 = vld [vmem:[%s246 + $0x20] sm:$0xff]
      %v289 = vld [vmem:[%s246 + $0x28] sm:$0xff]
      %v290 = vld [vmem:[%s246 + $0x30] sm:$0xff]
      %v291 = vld [vmem:[%s246 + $0x38] sm:$0xff]
      %vm292 = vcmask 523264
      %v294 = vsel %vm292, %v252, 0
      %v297 = vsel %vm292, %v253, 0
      %v300 = vsel %vm292, %v254, 0
      %v303 = vsel %vm292, %v255, 0
      %v306 = vsel %vm292, %v256, 0
      %v309 = vsel %vm292, %v257, 0
      %v312 = vsel %vm292, %v258, 0
      %v315 = vsel %vm292, %v259, 0
      %v318 = vsel %vm292, %v260, 0
      %v321 = vsel %vm292, %v261, 0
      %v324 = vsel %vm292, %v262, 0
      %v327 = vsel %vm292, %v263, 0
      %v330 = vsel %vm292, %v264, 0
      %v333 = vsel %vm292, %v265, 0
      %v336 = vsel %vm292, %v266, 0
      %v339 = vsel %vm292, %v267, 0
      %v342 = vsel %vm292, %v268, 0
      %v345 = vsel %vm292, %v269, 0
      %v348 = vsel %vm292, %v270, 0
      %v351 = vsel %vm292, %v271, 0
      %v354 = vsel %vm292, %v272, 0
      %v357 = vsel %vm292, %v273, 0
      %v360 = vsel %vm292, %v274, 0
      %v363 = vsel %vm292, %v275, 0
      %v366 = vsel %vm292, %v276, 0
      %v369 = vsel %vm292, %v277, 0
      %v372 = vsel %vm292, %v278, 0
      %v375 = vsel %vm292, %v279, 0
      %v378 = vsel %vm292, %v280, 0
      %v381 = vsel %vm292, %v281, 0
      %v384 = vsel %vm292, %v282, 0
      %v387 = vsel %vm292, %v283, 0
      %v390 = vsel %vm292, %v284, 0
      %v393 = vsel %vm292, %v285, 0
      %v396 = vsel %vm292, %v286, 0
      %v399 = vsel %vm292, %v287, 0
      %v402 = vsel %vm292, %v288, 0
      %v405 = vsel %vm292, %v289, 0
      %v408 = vsel %vm292, %v290, 0
      %v411 = vsel %vm292, %v291, 0
      %413 = vmatprep.subr.mxu0 0.0
      %414 = vmatpush1.xpose.msra.mxu0 0.0
      %415 = vmatprep.subr.mxu0 0.0
      %416 = vmatpush1.xpose.msra.mxu0 0.0
      %417 = vmatprep.subr.mxu0 0.0
      %418 = vmatpush1.xpose.msra.mxu0 0.0
      %419 = vmatprep.subr.mxu0 0.0
      %420 = vmatpush1.xpose.msra.mxu0 0.0
      %421 = vmatprep.subr.mxu0 0.0
      %422 = vmatpush1.xpose.msra.mxu0 0.0
      %423 = vmatprep.subr.mxu0 0.0
      %424 = vmatpush1.xpose.msra.mxu0 0.0
      %425 = vmatprep.subr.mxu0 0.0
      %426 = vmatpush1.xpose.msra.mxu0 0.0
      %427 = vmatprep.subr.mxu0 0.0
      %428 = vmatpush1.xpose.msra.mxu0 0.0
      %429 = vmatprep.subr.mxu0 0.0
      %430 = vmatpush1.xpose.msra.mxu0 %v411
      %431 = vmatprep.subr.mxu0 0.0
      %432 = vmatpush1.xpose.msra.mxu0 %v408
      %433 = vmatprep.subr.mxu0 0.0
      %434 = vmatpush1.xpose.msra.mxu0 %v405
      %435 = vmatprep.subr.mxu0 0.0
      %436 = vmatpush1.xpose.msra.mxu0 %v402
      %437 = vmatprep.subr.mxu0 0.0
      %438 = vmatpush1.xpose.msra.mxu0 %v399
      %439 = vmatprep.subr.mxu0 0.0
      %440 = vmatpush1.xpose.msra.mxu0 %v396
      %441 = vmatprep.subr.mxu0 0.0
      %442 = vmatpush1.xpose.msra.mxu0 %v393
      %443 = vmatprep.subr.mxu0 0.0
      %444 = vmatpush1.xpose.msra.mxu0 %v390
      %445 = vmatprep.subr.mxu0 0.0
      %446 = vmatpush2.xpose.msra.mxu0 0.0
      %447 = vmatprep.subr.mxu0 0.0
      %448 = vmatpush2.xpose.msra.mxu0 0.0
      %449 = vmatprep.subr.mxu0 0.0
      %450 = vmatpush2.xpose.msra.mxu0 0.0
      %451 = vmatprep.subr.mxu0 0.0
      %452 = vmatpush2.xpose.msra.mxu0 0.0
      %453 = vmatprep.subr.mxu0 0.0
      %454 = vmatpush2.xpose.msra.mxu0 0.0
      %455 = vmatprep.subr.mxu0 0.0
      %456 = vmatpush2.xpose.msra.mxu0 0.0
      %457 = vmatprep.subr.mxu0 0.0
      %458 = vmatpush2.xpose.msra.mxu0 0.0
      %459 = vmatprep.subr.mxu0 0.0
      %460 = vmatpush2.xpose.msra.mxu0 0.0
      %461 = vmatprep.subr.mxu0 0.0
      %462 = vmatpush2.xpose.msra.mxu0 0.0
      %463 = vmatprep.subr.mxu0 0.0
      %464 = vmatpush2.xpose.msra.mxu0 0.0
      %465 = vmatprep.subr.mxu0 0.0
      %466 = vmatpush2.xpose.msra.mxu0 0.0
      %467 = vmatprep.subr.mxu0 0.0
      %468 = vmatpush2.xpose.msra.mxu0 0.0
      %469 = vmatprep.subr.mxu0 0.0
      %470 = vmatpush2.xpose.msra.mxu0 0.0
      %471 = vmatprep.subr.mxu0 0.0
      %472 = vmatpush2.xpose.msra.mxu0 0.0
      %473 = vmatprep.subr.mxu0 0.0
      %474 = vmatpush2.xpose.msra.mxu0 0.0
      %475 = vmatprep.subr.mxu0 0.0
      %476 = vmatpush2.xpose.msra.mxu0 0.0
      %477 = vmatprep.mubr.f32.mxu0 0.0
      %478 = vmatmul.mubr.f32.gmra.mxu0 %v294
      %v479 = vpop.f32.mrf.mxu0
      %v480 = vadd.f32 0.0, %v479
      %v481 = vpop.f32.mrf.mxu0
      %482 = vmatprep.mubr.f32.mxu0 0.0
      %483 = vmatmul.mubr.f32.gmra.mxu0 %v297
      %v484 = vpop.f32.mrf.mxu0
      %v485 = vadd.f32 0.0, %v484
      %v486 = vpop.f32.mrf.mxu0
      %487 = vmatprep.mubr.f32.mxu0 0.0
      %488 = vmatmul.mubr.f32.gmra.mxu0 %v300
      %v489 = vpop.f32.mrf.mxu0
      %v490 = vadd.f32 0.0, %v489
      %v491 = vpop.f32.mrf.mxu0
      %492 = vmatprep.mubr.f32.mxu0 0.0
      %493 = vmatmul.mubr.f32.gmra.mxu0 %v303
      %v494 = vpop.f32.mrf.mxu0
      %v495 = vadd.f32 0.0, %v494
      %v496 = vpop.f32.mrf.mxu0
      %497 = vmatprep.mubr.f32.mxu0 0.0
      %498 = vmatmul.mubr.f32.gmra.mxu0 %v306
      %v499 = vpop.f32.mrf.mxu0
      %v500 = vadd.f32 0.0, %v499
      %v501 = vpop.f32.mrf.mxu0
      %502 = vmatprep.mubr.f32.mxu0 0.0
      %503 = vmatmul.mubr.f32.gmra.mxu0 %v309
      %v504 = vpop.f32.mrf.mxu0
      %v505 = vadd.f32 0.0, %v504
      %v506 = vpop.f32.mrf.mxu0
      %507 = vmatprep.mubr.f32.mxu0 0.0
      %508 = vmatmul.mubr.f32.gmra.mxu0 %v312
      %v509 = vpop.f32.mrf.mxu0
      %v510 = vadd.f32 0.0, %v509
      %v511 = vpop.f32.mrf.mxu0
      %512 = vmatprep.mubr.f32.mxu0 0.0
      %513 = vmatmul.mubr.f32.gmra.mxu0 %v315
      %v514 = vpop.f32.mrf.mxu0
      %v515 = vadd.f32 0.0, %v514
      %v516 = vpop.f32.mrf.mxu0
      %517 = vmatprep.mubr.f32.mxu0 0.0
      %518 = vmatmul.mubr.f32.gmra.mxu0 %v318
      %v519 = vpop.f32.mrf.mxu0
      %v520 = vadd.f32 0.0, %v519
      %v521 = vpop.f32.mrf.mxu0
      %522 = vmatprep.mubr.f32.mxu0 0.0
      %523 = vmatmul.mubr.f32.gmra.mxu0 %v321
      %v524 = vpop.f32.mrf.mxu0
      %v525 = vadd.f32 0.0, %v524
      %v526 = vpop.f32.mrf.mxu0
      %527 = vmatprep.mubr.f32.mxu0 0.0
      %528 = vmatmul.mubr.f32.gmra.mxu0 %v324
      %v529 = vpop.f32.mrf.mxu0
      %v530 = vadd.f32 0.0, %v529
      %v531 = vpop.f32.mrf.mxu0
      %532 = vmatprep.mubr.f32.mxu0 0.0
      %533 = vmatmul.mubr.f32.gmra.mxu0 %v327
      %v534 = vpop.f32.mrf.mxu0
      %v535 = vadd.f32 0.0, %v534
      %v536 = vpop.f32.mrf.mxu0
      %537 = vmatprep.mubr.f32.mxu0 0.0
      %538 = vmatmul.mubr.f32.gmra.mxu0 %v330
      %v539 = vpop.f32.mrf.mxu0
      %v540 = vadd.f32 0.0, %v539
      %v541 = vpop.f32.mrf.mxu0
      %542 = vmatprep.mubr.f32.mxu0 0.0
      %543 = vmatmul.mubr.f32.gmra.mxu0 %v333
      %v544 = vpop.f32.mrf.mxu0
      %v545 = vadd.f32 0.0, %v544
      %v546 = vpop.f32.mrf.mxu0
      %547 = vmatprep.mubr.f32.mxu0 0.0
      %548 = vmatmul.mubr.f32.gmra.mxu0 %v336
      %v549 = vpop.f32.mrf.mxu0
      %v550 = vadd.f32 0.0, %v549
      %v551 = vpop.f32.mrf.mxu0
      %552 = vmatprep.mubr.f32.mxu0 0.0
      %553 = vmatmul.mubr.f32.gmra.mxu0 %v339
      %v554 = vpop.f32.mrf.mxu0
      %v555 = vadd.f32 0.0, %v554
      %v556 = vpop.f32.mrf.mxu0
      %557 = vmatprep.mubr.f32.mxu0 0.0
      %558 = vmatmul.mubr.f32.gmra.mxu0 %v342
      %v559 = vpop.f32.mrf.mxu0
      %v560 = vadd.f32 0.0, %v559
      %v561 = vpop.f32.mrf.mxu0
      %562 = vmatprep.mubr.f32.mxu0 0.0
      %563 = vmatmul.mubr.f32.gmra.mxu0 %v345
      %v564 = vpop.f32.mrf.mxu0
      %v565 = vadd.f32 0.0, %v564
      %v566 = vpop.f32.mrf.mxu0
      %567 = vmatprep.mubr.f32.mxu0 0.0
      %568 = vmatmul.mubr.f32.gmra.mxu0 %v348
      %v569 = vpop.f32.mrf.mxu0
      %v570 = vadd.f32 0.0, %v569
      %v571 = vpop.f32.mrf.mxu0
      %572 = vmatprep.mubr.f32.mxu0 0.0
      %573 = vmatmul.mubr.f32.gmra.mxu0 %v351
      %v574 = vpop.f32.mrf.mxu0
      %v575 = vadd.f32 0.0, %v574
      %v576 = vpop.f32.mrf.mxu0
      %577 = vmatprep.mubr.f32.mxu0 0.0
      %578 = vmatmul.mubr.f32.gmra.mxu0 %v354
      %v579 = vpop.f32.mrf.mxu0
      %v580 = vadd.f32 0.0, %v579
      %v581 = vpop.f32.mrf.mxu0
      %582 = vmatprep.mubr.f32.mxu0 0.0
      %583 = vmatmul.mubr.f32.gmra.mxu0 %v357
      %v584 = vpop.f32.mrf.mxu0
      %v585 = vadd.f32 0.0, %v584
      %v586 = vpop.f32.mrf.mxu0
      %587 = vmatprep.mubr.f32.mxu0 0.0
      %588 = vmatmul.mubr.f32.gmra.mxu0 %v360
      %v589 = vpop.f32.mrf.mxu0
      %v590 = vadd.f32 0.0, %v589
      %v591 = vpop.f32.mrf.mxu0
      %592 = vmatprep.mubr.f32.mxu0 0.0
      %593 = vmatmul.mubr.f32.gmra.mxu0 %v363
      %v594 = vpop.f32.mrf.mxu0
      %v595 = vadd.f32 0.0, %v594
      %v596 = vpop.f32.mrf.mxu0
      %597 = vmatprep.mubr.f32.mxu0 0.0
      %598 = vmatmul.mubr.f32.gmra.mxu0 %v366
      %v599 = vpop.f32.mrf.mxu0
      %v600 = vadd.f32 0.0, %v599
      %v601 = vpop.f32.mrf.mxu0
      %602 = vmatprep.mubr.f32.mxu0 0.0
      %603 = vmatmul.mubr.f32.gmra.mxu0 %v369
      %v604 = vpop.f32.mrf.mxu0
      %v605 = vadd.f32 0.0, %v604
      %v606 = vpop.f32.mrf.mxu0
      %607 = vmatprep.mubr.f32.mxu0 0.0
      %608 = vmatmul.mubr.f32.gmra.mxu0 %v372
      %v609 = vpop.f32.mrf.mxu0
      %v610 = vadd.f32 0.0, %v609
      %v611 = vpop.f32.mrf.mxu0
      %612 = vmatprep.mubr.f32.mxu0 0.0
      %613 = vmatmul.mubr.f32.gmra.mxu0 %v375
      %v614 = vpop.f32.mrf.mxu0
      %v615 = vadd.f32 0.0, %v614
      %v616 = vpop.f32.mrf.mxu0
      %617 = vmatprep.mubr.f32.mxu0 0.0
      %618 = vmatmul.mubr.f32.gmra.mxu0 %v378
      %v619 = vpop.f32.mrf.mxu0
      %v620 = vadd.f32 0.0, %v619
      %v621 = vpop.f32.mrf.mxu0
      %622 = vmatprep.mubr.f32.mxu0 0.0
      %623 = vmatmul.mubr.f32.gmra.mxu0 %v381
      %v624 = vpop.f32.mrf.mxu0
      %v625 = vadd.f32 0.0, %v624
      %v626 = vpop.f32.mrf.mxu0
      %627 = vmatprep.mubr.f32.mxu0 0.0
      %628 = vmatmul.mubr.f32.gmra.mxu0 %v384
      %v629 = vpop.f32.mrf.mxu0
      %v630 = vadd.f32 0.0, %v629
      %v631 = vpop.f32.mrf.mxu0
      %632 = vmatprep.mubr.f32.mxu0 0.0
      %633 = vmatmul.mubr.f32.gmra.mxu0 %v387
      %v634 = vpop.f32.mrf.mxu0
      %v635 = vadd.f32 0.0, %v634
      %v636 = vpop.f32.mrf.mxu0
      %637 = vdwg.mxu0
      %638 = vst.msk [vmem:[#allocation2] sm:$0xff] %vm292, 0.0
      %639 = vst.msk [vmem:[#allocation2 + $0x8] sm:$0xff] %vm292, 0.0
      %vm640 = vcmask 519168
      %641 = vst.msk [vmem:[#allocation2 + $0x10] sm:$0xf] %vm640, 0.0
      %642 = vst.msk [vmem:[#allocation2 + $0x18] sm:$0xff] %vm292, 0.0
      %643 = vst.msk [vmem:[#allocation2 + $0x20] sm:$0xff] %vm292, 0.0
      %644 = vst.msk [vmem:[#allocation2 + $0x28] sm:$0xf] %vm640, 0.0
      %645 = vst.msk [vmem:[#allocation2 + $0x30] sm:$0xff] %vm292, 0.0
      %646 = vst.msk [vmem:[#allocation2 + $0x38] sm:$0xff] %vm292, 0.0
      %647 = vst.msk [vmem:[#allocation2 + $0x40] sm:$0xf] %vm640, 0.0
      %s648 = scalar_lea.vmem [#allocation2], 456
      %649 = vst.msk [vmem:[%s648] sm:$0xff] %vm292, 0.0
      %650 = vst.msk [vmem:[%s648 + $0x8] sm:$0xff] %vm292, 0.0
      %651 = vst.msk [vmem:[%s648 + $0x10] sm:$0xf] %vm640, 0.0
      %652 = vst.msk [vmem:[%s648 + $0x18] sm:$0xff] %vm292, 0.0
      %653 = vst.msk [vmem:[%s648 + $0x20] sm:$0xff] %vm292, 0.0
      %654 = vst.msk [vmem:[%s648 + $0x28] sm:$0xf] %vm640, 0.0
      %s655 = scalar_lea.vmem [#allocation2], 72
      %vm656 = vcmask 517120
      %657 = vst.msk [vmem:[%s655] sm:$0x3] %vm656, 0.0
      %658 = vst.msk [vmem:[%s655 + $0x18] sm:$0x3] %vm656, 0.0
      %659 = vst.msk [vmem:[%s655 + $0x30] sm:$0x3] %vm656, 0.0
      %660 = vst.msk [vmem:[%s655 + $0x48] sm:$0x3] %vm656, 0.0
      %661 = vst.msk [vmem:[%s655 + $0x60] sm:$0x3] %vm656, 0.0
      %662 = vst.msk [vmem:[%s655 + $0x78] sm:$0x3] %vm656, 0.0
      %663 = vst.msk [vmem:[%s655 + $0x90] sm:$0x3] %vm656, 0.0
      %664 = vst.msk [vmem:[%s655 + $0xa8] sm:$0x3] %vm656, 0.0
      %665 = vst.msk [vmem:[%s655 + $0xc0] sm:$0x3] %vm656, 0.0
      %666 = vst.msk [vmem:[%s655 + $0xd8] sm:$0x3] %vm656, 0.0
      %667 = vst.msk [vmem:[%s655 + $0xf0] sm:$0x3] %vm656, 0.0
      %668 = vst.msk [vmem:[%s655 + $0x108] sm:$0x3] %vm656, 0.0
      %669 = vst.msk [vmem:[%s655 + $0x120] sm:$0x3] %vm656, 0.0
      %670 = vst.msk [vmem:[%s655 + $0x138] sm:$0x3] %vm656, 0.0
      %671 = vst.msk [vmem:[%s655 + $0x150] sm:$0x3] %vm656, 0.0
      %672 = vst.msk [vmem:[%s655 + $0x168] sm:$0x3] %vm656, 0.0
      %673 = vst.msk [vmem:[%s655 + $0x12] sm:$0x3] %vm656, 0.0
      %674 = vst.msk [vmem:[%s655 + $0x2a] sm:$0x3] %vm656, 0.0
      %675 = vst.msk [vmem:[%s655 + $0x42] sm:$0x3] %vm656, 0.0
      %676 = vst.msk [vmem:[%s655 + $0x5a] sm:$0x3] %vm656, 0.0
      %677 = vst.msk [vmem:[%s655 + $0x72] sm:$0x3] %vm656, 0.0
      %678 = vst.msk [vmem:[%s655 + $0x8a] sm:$0x3] %vm656, 0.0
      %679 = vst.msk [vmem:[%s655 + $0xa2] sm:$0x3] %vm656, 0.0
      %680 = vst.msk [vmem:[%s655 + $0xba] sm:$0x3] %vm656, 0.0
      %681 = vst.msk [vmem:[%s655 + $0xd2] sm:$0x3] %vm656, 0.0
      %682 = vst.msk [vmem:[%s655 + $0xea] sm:$0x3] %vm656, 0.0
      %683 = vst.msk [vmem:[%s655 + $0x102] sm:$0x3] %vm656, 0.0
      %684 = vst.msk [vmem:[%s655 + $0x11a] sm:$0x3] %vm656, 0.0
      %685 = vst.msk [vmem:[%s655 + $0x132] sm:$0x3] %vm656, 0.0
      %686 = vst.msk [vmem:[%s655 + $0x14a] sm:$0x3] %vm656, 0.0
      %687 = vst.msk [vmem:[%s655 + $0x162] sm:$0x3] %vm656, 0.0
      %688 = vst.msk [vmem:[%s655 + $0x17a] sm:$0x3] %vm656, 0.0
      %689 = vst.msk [vmem:[%s655 + $0x2] sm:$0xff] %vm292, %v480
      %690 = vst.msk [vmem:[%s655 + $0xa] sm:$0xff] %vm292, %v485
      %691 = vst.msk [vmem:[%s655 + $0x1a] sm:$0xff] %vm292, %v490
      %692 = vst.msk [vmem:[%s655 + $0x22] sm:$0xff] %vm292, %v495
      %693 = vst.msk [vmem:[%s655 + $0x32] sm:$0xff] %vm292, %v500
      %694 = vst.msk [vmem:[%s655 + $0x3a] sm:$0xff] %vm292, %v505
      %695 = vst.msk [vmem:[%s655 + $0x4a] sm:$0xff] %vm292, %v510
      %696 = vst.msk [vmem:[%s655 + $0x52] sm:$0xff] %vm292, %v515
      %697 = vst.msk [vmem:[%s655 + $0x62] sm:$0xff] %vm292, %v520
      %698 = vst.msk [vmem:[%s655 + $0x6a] sm:$0xff] %vm292, %v525
      %699 = vst.msk [vmem:[%s655 + $0x7a] sm:$0xff] %vm292, %v530
      %700 = vst.msk [vmem:[%s655 + $0x82] sm:$0xff] %vm292, %v535
      %701 = vst.msk [vmem:[%s655 + $0x92] sm:$0xff] %vm292, %v540
      %702 = vst.msk [vmem:[%s655 + $0x9a] sm:$0xff] %vm292, %v545
      %703 = vst.msk [vmem:[%s655 + $0xaa] sm:$0xff] %vm292, %v550
      %704 = vst.msk [vmem:[%s655 + $0xb2] sm:$0xff] %vm292, %v555
      %705 = vst.msk [vmem:[%s655 + $0xc2] sm:$0xff] %vm292, %v560
      %706 = vst.msk [vmem:[%s655 + $0xca] sm:$0xff] %vm292, %v565
      %707 = vst.msk [vmem:[%s655 + $0xda] sm:$0xff] %vm292, %v570
      %708 = vst.msk [vmem:[%s655 + $0xe2] sm:$0xff] %vm292, %v575
      %709 = vst.msk [vmem:[%s655 + $0xf2] sm:$0xff] %vm292, %v580
      %710 = vst.msk [vmem:[%s655 + $0xfa] sm:$0xff] %vm292, %v585
      %711 = vst.msk [vmem:[%s655 + $0x10a] sm:$0xff] %vm292, %v590
      %712 = vst.msk [vmem:[%s655 + $0x112] sm:$0xff] %vm292, %v595
      %713 = vst.msk [vmem:[%s655 + $0x122] sm:$0xff] %vm292, %v600
      %714 = vst.msk [vmem:[%s655 + $0x12a] sm:$0xff] %vm292, %v605
      %715 = vst.msk [vmem:[%s655 + $0x13a] sm:$0xff] %vm292, %v610
      %716 = vst.msk [vmem:[%s655 + $0x142] sm:$0xff] %vm292, %v615
      %717 = vst.msk [vmem:[%s655 + $0x152] sm:$0xff] %vm292, %v620
      %718 = vst.msk [vmem:[%s655 + $0x15a] sm:$0xff] %vm292, %v625
      %719 = vst.msk [vmem:[%s655 + $0x16a] sm:$0xff] %vm292, %v630
      %720 = vst.msk [vmem:[%s655 + $0x172] sm:$0xff] %vm292, %v635
      %v721 = vld [vmem:[#allocation2] sm:$0xff]
      %v722 = vld [vmem:[#allocation2 + $0x8] sm:$0xff]
      %v723 = vld [vmem:[#allocation2 + $0x18] sm:$0xff]
      %v724 = vld [vmem:[#allocation2 + $0x20] sm:$0xff]
      %v725 = vld [vmem:[#allocation2 + $0x30] sm:$0xff]
      %v726 = vld [vmem:[#allocation2 + $0x38] sm:$0xff]
      %v727 = vld [vmem:[#allocation2 + $0x48] sm:$0xff]
      %v728 = vld [vmem:[#allocation2 + $0x50] sm:$0xff]
      %v729 = vld [vmem:[#allocation2 + $0x60] sm:$0xff]
      %v730 = vld [vmem:[#allocation2 + $0x68] sm:$0xff]
      %v731 = vld [vmem:[#allocation2 + $0x78] sm:$0xff]
      %v732 = vld [vmem:[#allocation2 + $0x80] sm:$0xff]
      %v733 = vld [vmem:[#allocation2 + $0x90] sm:$0xff]
      %v734 = vld [vmem:[#allocation2 + $0x98] sm:$0xff]
      %v735 = vld [vmem:[#allocation2 + $0xa8] sm:$0xff]
      %v736 = vld [vmem:[#allocation2 + $0xb0] sm:$0xff]
      %v737 = vld [vmem:[#allocation2 + $0xc0] sm:$0xff]
      %v738 = vld [vmem:[#allocation2 + $0xc8] sm:$0xff]
      %v739 = vld [vmem:[#allocation2 + $0xd8] sm:$0xff]
      %v740 = vld [vmem:[#allocation2 + $0xe0] sm:$0xff]
      %v741 = vld [vmem:[#allocation2 + $0xf0] sm:$0xff]
      %v742 = vld [vmem:[#allocation2 + $0xf8] sm:$0xff]
      %v743 = vld [vmem:[#allocation2 + $0x108] sm:$0xff]
      %v744 = vld [vmem:[#allocation2 + $0x110] sm:$0xff]
      %v745 = vld [vmem:[#allocation2 + $0x120] sm:$0xff]
      %v746 = vld [vmem:[#allocation2 + $0x128] sm:$0xff]
      %v747 = vld [vmem:[#allocation2 + $0x138] sm:$0xff]
      %v748 = vld [vmem:[#allocation2 + $0x140] sm:$0xff]
      %v749 = vld [vmem:[#allocation2 + $0x150] sm:$0xff]
      %v750 = vld [vmem:[#allocation2 + $0x158] sm:$0xff]
      %v751 = vld [vmem:[#allocation2 + $0x168] sm:$0xff]
      %v752 = vld [vmem:[#allocation2 + $0x170] sm:$0xff]
      %v753 = vld [vmem:[#allocation2 + $0x180] sm:$0xff]
      %v754 = vld [vmem:[#allocation2 + $0x188] sm:$0xff]
      %755 = vst.msk [vmem:[#allocation4] sm:$0xff] %vm292, %v721
      %756 = vst.msk [vmem:[#allocation4 + $0x68] sm:$0xff] %vm292, %v722
      %757 = vst.msk [vmem:[#allocation4 + $0xd0] sm:$0xff] %vm292, %v723
      %758 = vst.msk [vmem:[#allocation4 + $0x138] sm:$0xff] %vm292, %v724
      %759 = vst.msk [vmem:[#allocation4 + $0x1a0] sm:$0xff] %vm292, %v725
      %760 = vst.msk [vmem:[#allocation4 + $0x208] sm:$0xff] %vm292, %v726
      %761 = vst.msk [vmem:[#allocation4 + $0x270] sm:$0xff] %vm292, %v727
      %762 = vst.msk [vmem:[#allocation4 + $0x2d8] sm:$0xff] %vm292, %v728
      %763 = vst.msk [vmem:[#allocation4 + $0x340] sm:$0xff] %vm292, %v729
      %764 = vst.msk [vmem:[#allocation4 + $0x3a8] sm:$0xff] %vm292, %v730
      %765 = vst.msk [vmem:[#allocation4 + $0x410] sm:$0xff] %vm292, %v731
      %766 = vst.msk [vmem:[#allocation4 + $0x478] sm:$0xff] %vm292, %v732
      %767 = vst.msk [vmem:[#allocation4 + $0x4e0] sm:$0xff] %vm292, %v733
      %768 = vst.msk [vmem:[#allocation4 + $0x548] sm:$0xff] %vm292, %v734
      %769 = vst.msk [vmem:[#allocation4 + $0x5b0] sm:$0xff] %vm292, %v735
      %770 = vst.msk [vmem:[#allocation4 + $0x618] sm:$0xff] %vm292, %v736
      %771 = vst.msk [vmem:[#allocation4 + $0x680] sm:$0xff] %vm292, %v737
      %772 = vst.msk [vmem:[#allocation4 + $0x6e8] sm:$0xff] %vm292, %v738
      %773 = vst.msk [vmem:[#allocation4 + $0x750] sm:$0xff] %vm292, %v739
      %774 = vst.msk [vmem:[#allocation4 + $0x7b8] sm:$0xff] %vm292, %v740
      %775 = vst.msk [vmem:[#allocation4 + $0x820] sm:$0xff] %vm292, %v741
      %776 = vst.msk [vmem:[#allocation4 + $0x888] sm:$0xff] %vm292, %v742
      %777 = vst.msk [vmem:[#allocation4 + $0x8f0] sm:$0xff] %vm292, %v743
      %778 = vst.msk [vmem:[#allocation4 + $0x958] sm:$0xff] %vm292, %v744
      %779 = vst.msk [vmem:[#allocation4 + $0x9c0] sm:$0xff] %vm292, %v745
      %780 = vst.msk [vmem:[#allocation4 + $0xa28] sm:$0xff] %vm292, %v746
      %781 = vst.msk [vmem:[#allocation4 + $0xa90] sm:$0xff] %vm292, %v747
      %782 = vst.msk [vmem:[#allocation4 + $0xaf8] sm:$0xff] %vm292, %v748
      %783 = vst.msk [vmem:[#allocation4 + $0xb60] sm:$0xff] %vm292, %v749
      %784 = vst.msk [vmem:[#allocation4 + $0xbc8] sm:$0xff] %vm292, %v750
      %785 = vst.msk [vmem:[#allocation4 + $0xc30] sm:$0xff] %vm292, %v751
      %786 = vst.msk [vmem:[#allocation4 + $0xc98] sm:$0xff] %vm292, %v752
      %787 = vst.msk [vmem:[#allocation4 + $0xd00] sm:$0xff] %vm292, %v753
      %788 = vst.msk [vmem:[#allocation4 + $0xd68] sm:$0xff] %vm292, %v754
      %v789 = vld [vmem:[#allocation2 + $0x1] sm:$0xff]
      %v790 = vld [vmem:[#allocation2 + $0x9] sm:$0xff]
      %v791 = vld [vmem:[#allocation2 + $0x19] sm:$0xff]
      %v792 = vld [vmem:[#allocation2 + $0x21] sm:$0xff]
      %v793 = vld [vmem:[#allocation2 + $0x31] sm:$0xff]
      %v794 = vld [vmem:[#allocation2 + $0x39] sm:$0xff]
      %v795 = vld [vmem:[#allocation2 + $0x49] sm:$0xff]
      %v796 = vld [vmem:[#allocation2 + $0x51] sm:$0xff]
      %v797 = vld [vmem:[#allocation2 + $0x61] sm:$0xff]
      %v798 = vld [vmem:[#allocation2 + $0x69] sm:$0xff]
      %v799 = vld [vmem:[#allocation2 + $0x79] sm:$0xff]
      %v800 = vld [vmem:[#allocation2 + $0x81] sm:$0xff]
      %v801 = vld [vmem:[#allocation2 + $0x91] sm:$0xff]
      %v802 = vld [vmem:[#allocation2 + $0x99] sm:$0xff]
      %v803 = vld [vmem:[#allocation2 + $0xa9] sm:$0xff]
      %v804 = vld [vmem:[#allocation2 + $0xb1] sm:$0xff]
      %v805 = vld [vmem:[#allocation2 + $0xc1] sm:$0xff]
      %v806 = vld [vmem:[#allocation2 + $0xc9] sm:$0xff]
      %v807 = vld [vmem:[#allocation2 + $0xd9] sm:$0xff]
      %v808 = vld [vmem:[#allocation2 + $0xe1] sm:$0xff]
      %v809 = vld [vmem:[#allocation2 + $0xf1] sm:$0xff]
      %v810 = vld [vmem:[#allocation2 + $0xf9] sm:$0xff]
      %v811 = vld [vmem:[#allocation2 + $0x109] sm:$0xff]
      %v812 = vld [vmem:[#allocation2 + $0x111] sm:$0xff]
      %v813 = vld [vmem:[#allocation2 + $0x121] sm:$0xff]
      %v814 = vld [vmem:[#allocation2 + $0x129] sm:$0xff]
      %v815 = vld [vmem:[#allocation2 + $0x139] sm:$0xff]
      %v816 = vld [vmem:[#allocation2 + $0x141] sm:$0xff]
      %v817 = vld [vmem:[#allocation2 + $0x151] sm:$0xff]
      %v818 = vld [vmem:[#allocation2 + $0x159] sm:$0xff]
      %v819 = vld [vmem:[#allocation2 + $0x169] sm:$0xff]
      %v820 = vld [vmem:[#allocation2 + $0x171] sm:$0xff]
      %v821 = vld [vmem:[#allocation2 + $0x181] sm:$0xff]
      %v822 = vld [vmem:[#allocation2 + $0x189] sm:$0xff]
      %857 = vrot.lane.b32.xlu0 %v789, 64
      %v858 = vpop.permute.xlu0 %857
      %859 = vrot.lane.b32.xlu0 %v790, 64
      %v860 = vpop.permute.xlu0 %859
      %861 = vrot.lane.b32.xlu0 %v791, 64
      %v862 = vpop.permute.xlu0 %861
      %863 = vrot.lane.b32.xlu0 %v792, 64
      %v864 = vpop.permute.xlu0 %863
      %865 = vrot.lane.b32.xlu0 %v793, 64
      %v866 = vpop.permute.xlu0 %865
      %867 = vrot.lane.b32.xlu0 %v794, 64
      %v868 = vpop.permute.xlu0 %867
      %869 = vrot.lane.b32.xlu0 %v795, 64
      %v870 = vpop.permute.xlu0 %869
      %871 = vrot.lane.b32.xlu0 %v796, 64
      %v872 = vpop.permute.xlu0 %871
      %873 = vrot.lane.b32.xlu0 %v797, 64
      %v874 = vpop.permute.xlu0 %873
      %875 = vrot.lane.b32.xlu0 %v798, 64
      %v876 = vpop.permute.xlu0 %875
      %877 = vrot.lane.b32.xlu0 %v799, 64
      %v878 = vpop.permute.xlu0 %877
      %879 = vrot.lane.b32.xlu0 %v800, 64
      %v880 = vpop.permute.xlu0 %879
      %881 = vrot.lane.b32.xlu0 %v801, 64
      %v882 = vpop.permute.xlu0 %881
      %883 = vrot.lane.b32.xlu0 %v802, 64
      %v884 = vpop.permute.xlu0 %883
      %885 = vrot.lane.b32.xlu0 %v803, 64
      %v886 = vpop.permute.xlu0 %885
      %887 = vrot.lane.b32.xlu0 %v804, 64
      %v888 = vpop.permute.xlu0 %887
      %889 = vrot.lane.b32.xlu0 %v805, 64
      %v890 = vpop.permute.xlu0 %889
      %891 = vrot.lane.b32.xlu0 %v806, 64
      %v892 = vpop.permute.xlu0 %891
      %893 = vrot.lane.b32.xlu0 %v807, 64
      %v894 = vpop.permute.xlu0 %893
      %895 = vrot.lane.b32.xlu0 %v808, 64
      %v896 = vpop.permute.xlu0 %895
      %897 = vrot.lane.b32.xlu0 %v809, 64
      %v898 = vpop.permute.xlu0 %897
      %899 = vrot.lane.b32.xlu0 %v810, 64
      %v900 = vpop.permute.xlu0 %899
      %901 = vrot.lane.b32.xlu0 %v811, 64
      %v902 = vpop.permute.xlu0 %901
      %903 = vrot.lane.b32.xlu0 %v812, 64
      %v904 = vpop.permute.xlu0 %903
      %905 = vrot.lane.b32.xlu0 %v813, 64
      %v906 = vpop.permute.xlu0 %905
      %907 = vrot.lane.b32.xlu0 %v814, 64
      %v908 = vpop.permute.xlu0 %907
      %909 = vrot.lane.b32.xlu0 %v815, 64
      %v910 = vpop.permute.xlu0 %909
      %911 = vrot.lane.b32.xlu0 %v816, 64
      %v912 = vpop.permute.xlu0 %911
      %913 = vrot.lane.b32.xlu0 %v817, 64
      %v914 = vpop.permute.xlu0 %913
      %915 = vrot.lane.b32.xlu0 %v818, 64
      %v916 = vpop.permute.xlu0 %915
      %917 = vrot.lane.b32.xlu0 %v819, 64
      %v918 = vpop.permute.xlu0 %917
      %919 = vrot.lane.b32.xlu0 %v820, 64
      %v920 = vpop.permute.xlu0 %919
      %921 = vrot.lane.b32.xlu0 %v821, 64
      %v922 = vpop.permute.xlu0 %921
      %923 = vrot.lane.b32.xlu0 %v822, 64
      %v924 = vpop.permute.xlu0 %923
      %vm959 = vcmask 1048064
      %960 = vst.msk [vmem:[#allocation4] sm:$0xff] %vm959, %v858
      %961 = vst.msk [vmem:[#allocation4 + $0x68] sm:$0xff] %vm959, %v860
      %962 = vst.msk [vmem:[#allocation4 + $0xd0] sm:$0xff] %vm959, %v862
      %963 = vst.msk [vmem:[#allocation4 + $0x138] sm:$0xff] %vm959, %v864
      %964 = vst.msk [vmem:[#allocation4 + $0x1a0] sm:$0xff] %vm959, %v866
      %965 = vst.msk [vmem:[#allocation4 + $0x208] sm:$0xff] %vm959, %v868
      %966 = vst.msk [vmem:[#allocation4 + $0x270] sm:$0xff] %vm959, %v870
      %967 = vst.msk [vmem:[#allocation4 + $0x2d8] sm:$0xff] %vm959, %v872
      %968 = vst.msk [vmem:[#allocation4 + $0x340] sm:$0xff] %vm959, %v874
      %969 = vst.msk [vmem:[#allocation4 + $0x3a8] sm:$0xff] %vm959, %v876
      %970 = vst.msk [vmem:[#allocation4 + $0x410] sm:$0xff] %vm959, %v878
      %971 = vst.msk [vmem:[#allocation4 + $0x478] sm:$0xff] %vm959, %v880
      %972 = vst.msk [vmem:[#allocation4 + $0x4e0] sm:$0xff] %vm959, %v882
      %973 = vst.msk [vmem:[#allocation4 + $0x548] sm:$0xff] %vm959, %v884
      %974 = vst.msk [vmem:[#allocation4 + $0x5b0] sm:$0xff] %vm959, %v886
      %975 = vst.msk [vmem:[#allocation4 + $0x618] sm:$0xff] %vm959, %v888
      %976 = vst.msk [vmem:[#allocation4 + $0x680] sm:$0xff] %vm959, %v890
      %977 = vst.msk [vmem:[#allocation4 + $0x6e8] sm:$0xff] %vm959, %v892
      %978 = vst.msk [vmem:[#allocation4 + $0x750] sm:$0xff] %vm959, %v894
      %979 = vst.msk [vmem:[#allocation4 + $0x7b8] sm:$0xff] %vm959, %v896
      %980 = vst.msk [vmem:[#allocation4 + $0x820] sm:$0xff] %vm959, %v898
      %981 = vst.msk [vmem:[#allocation4 + $0x888] sm:$0xff] %vm959, %v900
      %982 = vst.msk [vmem:[#allocation4 + $0x8f0] sm:$0xff] %vm959, %v902
      %983 = vst.msk [vmem:[#allocation4 + $0x958] sm:$0xff] %vm959, %v904
      %984 = vst.msk [vmem:[#allocation4 + $0x9c0] sm:$0xff] %vm959, %v906
      %985 = vst.msk [vmem:[#allocation4 + $0xa28] sm:$0xff] %vm959, %v908
      %986 = vst.msk [vmem:[#allocation4 + $0xa90] sm:$0xff] %vm959, %v910
      %987 = vst.msk [vmem:[#allocation4 + $0xaf8] sm:$0xff] %vm959, %v912
      %988 = vst.msk [vmem:[#allocation4 + $0xb60] sm:$0xff] %vm959, %v914
      %989 = vst.msk [vmem:[#allocation4 + $0xbc8] sm:$0xff] %vm959, %v916
      %990 = vst.msk [vmem:[#allocation4 + $0xc30] sm:$0xff] %vm959, %v918
      %991 = vst.msk [vmem:[#allocation4 + $0xc98] sm:$0xff] %vm959, %v920
      %992 = vst.msk [vmem:[#allocation4 + $0xd00] sm:$0xff] %vm959, %v922
      %993 = vst.msk [vmem:[#allocation4 + $0xd68] sm:$0xff] %vm959, %v924
      %v994 = vld [vmem:[#allocation2 + $0x2] sm:$0xff]
      %v995 = vld [vmem:[#allocation2 + $0xa] sm:$0xff]
      %v996 = vld [vmem:[#allocation2 + $0x1a] sm:$0xff]
      %v997 = vld [vmem:[#allocation2 + $0x22] sm:$0xff]
      %v998 = vld [vmem:[#allocation2 + $0x32] sm:$0xff]
      %v999 = vld [vmem:[#allocation2 + $0x3a] sm:$0xff]
      %v1000 = vld [vmem:[#allocation2 + $0x4a] sm:$0xff]
      %v1001 = vld [vmem:[#allocation2 + $0x52] sm:$0xff]
      %v1002 = vld [vmem:[#allocation2 + $0x62] sm:$0xff]
      %v1003 = vld [vmem:[#allocation2 + $0x6a] sm:$0xff]
      %v1004 = vld [vmem:[#allocation2 + $0x7a] sm:$0xff]
      %v1005 = vld [vmem:[#allocation2 + $0x82] sm:$0xff]
      %v1006 = vld [vmem:[#allocation2 + $0x92] sm:$0xff]
      %v1007 = vld [vmem:[#allocation2 + $0x9a] sm:$0xff]
      %v1008 = vld [vmem:[#allocation2 + $0xaa] sm:$0xff]
      %v1009 = vld [vmem:[#allocation2 + $0xb2] sm:$0xff]
      %v1010 = vld [vmem:[#allocation2 + $0xc2] sm:$0xff]
      %v1011 = vld [vmem:[#allocation2 + $0xca] sm:$0xff]
      %v1012 = vld [vmem:[#allocation2 + $0xda] sm:$0xff]
      %v1013 = vld [vmem:[#allocation2 + $0xe2] sm:$0xff]
      %v1014 = vld [vmem:[#allocation2 + $0xf2] sm:$0xff]
      %v1015 = vld [vmem:[#allocation2 + $0xfa] sm:$0xff]
      %v1016 = vld [vmem:[#allocation2 + $0x10a] sm:$0xff]
      %v1017 = vld [vmem:[#allocation2 + $0x112] sm:$0xff]
      %v1018 = vld [vmem:[#allocation2 + $0x122] sm:$0xff]
      %v1019 = vld [vmem:[#allocation2 + $0x12a] sm:$0xff]
      %v1020 = vld [vmem:[#allocation2 + $0x13a] sm:$0xff]
      %v1021 = vld [vmem:[#allocation2 + $0x142] sm:$0xff]
      %v1022 = vld [vmem:[#allocation2 + $0x152] sm:$0xff]
      %v1023 = vld [vmem:[#allocation2 + $0x15a] sm:$0xff]
      %v1024 = vld [vmem:[#allocation2 + $0x16a] sm:$0xff]
      %v1025 = vld [vmem:[#allocation2 + $0x172] sm:$0xff]
      %v1026 = vld [vmem:[#allocation2 + $0x182] sm:$0xff]
      %v1027 = vld [vmem:[#allocation2 + $0x18a] sm:$0xff]
      %1028 = vst.msk [vmem:[#allocation4 + $0x8] sm:$0xff] %vm292, %v994
      %1029 = vst.msk [vmem:[#allocation4 + $0x70] sm:$0xff] %vm292, %v995
      %1030 = vst.msk [vmem:[#allocation4 + $0xd8] sm:$0xff] %vm292, %v996
      %1031 = vst.msk [vmem:[#allocation4 + $0x140] sm:$0xff] %vm292, %v997
      %1032 = vst.msk [vmem:[#allocation4 + $0x1a8] sm:$0xff] %vm292, %v998
      %1033 = vst.msk [vmem:[#allocation4 + $0x210] sm:$0xff] %vm292, %v999
      %1034 = vst.msk [vmem:[#allocation4 + $0x278] sm:$0xff] %vm292, %v1000
      %1035 = vst.msk [vmem:[#allocation4 + $0x2e0] sm:$0xff] %vm292, %v1001
      %1036 = vst.msk [vmem:[#allocation4 + $0x348] sm:$0xff] %vm292, %v1002
      %1037 = vst.msk [vmem:[#allocation4 + $0x3b0] sm:$0xff] %vm292, %v1003
      %1038 = vst.msk [vmem:[#allocation4 + $0x418] sm:$0xff] %vm292, %v1004
      %1039 = vst.msk [vmem:[#allocation4 + $0x480] sm:$0xff] %vm292, %v1005
      %1040 = vst.msk [vmem:[#allocation4 + $0x4e8] sm:$0xff] %vm292, %v1006
      %1041 = vst.msk [vmem:[#allocation4 + $0x550] sm:$0xff] %vm292, %v1007
      %1042 = vst.msk [vmem:[#allocation4 + $0x5b8] sm:$0xff] %vm292, %v1008
      %1043 = vst.msk [vmem:[#allocation4 + $0x620] sm:$0xff] %vm292, %v1009
      %1044 = vst.msk [vmem:[#allocation4 + $0x688] sm:$0xff] %vm292, %v1010
      %1045 = vst.msk [vmem:[#allocation4 + $0x6f0] sm:$0xff] %vm292, %v1011
      %1046 = vst.msk [vmem:[#allocation4 + $0x758] sm:$0xff] %vm292, %v1012
      %1047 = vst.msk [vmem:[#allocation4 + $0x7c0] sm:$0xff] %vm292, %v1013
      %1048 = vst.msk [vmem:[#allocation4 + $0x828] sm:$0xff] %vm292, %v1014
      %1049 = vst.msk [vmem:[#allocation4 + $0x890] sm:$0xff] %vm292, %v1015
      %1050 = vst.msk [vmem:[#allocation4 + $0x8f8] sm:$0xff] %vm292, %v1016
      %1051 = vst.msk [vmem:[#allocation4 + $0x960] sm:$0xff] %vm292, %v1017
      %1052 = vst.msk [vmem:[#allocation4 + $0x9c8] sm:$0xff] %vm292, %v1018
      %1053 = vst.msk [vmem:[#allocation4 + $0xa30] sm:$0xff] %vm292, %v1019
      %1054 = vst.msk [vmem:[#allocation4 + $0xa98] sm:$0xff] %vm292, %v1020
      %1055 = vst.msk [vmem:[#allocation4 + $0xb00] sm:$0xff] %vm292, %v1021
      %1056 = vst.msk [vmem:[#allocation4 + $0xb68] sm:$0xff] %vm292, %v1022
      %1057 = vst.msk [vmem:[#allocation4 + $0xbd0] sm:$0xff] %vm292, %v1023
      %1058 = vst.msk [vmem:[#allocation4 + $0xc38] sm:$0xff] %vm292, %v1024
      %1059 = vst.msk [vmem:[#allocation4 + $0xca0] sm:$0xff] %vm292, %v1025
      %1060 = vst.msk [vmem:[#allocation4 + $0xd08] sm:$0xff] %vm292, %v1026
      %1061 = vst.msk [vmem:[#allocation4 + $0xd70] sm:$0xff] %vm292, %v1027
      %v1062 = vld [vmem:[#allocation2 + $0x3] sm:$0xff]
      %v1063 = vld [vmem:[#allocation2 + $0xb] sm:$0xff]
      %v1064 = vld [vmem:[#allocation2 + $0x1b] sm:$0xff]
      %v1065 = vld [vmem:[#allocation2 + $0x23] sm:$0xff]
      %v1066 = vld [vmem:[#allocation2 + $0x33] sm:$0xff]
      %v1067 = vld [vmem:[#allocation2 + $0x3b] sm:$0xff]
      %v1068 = vld [vmem:[#allocation2 + $0x4b] sm:$0xff]
      %v1069 = vld [vmem:[#allocation2 + $0x53] sm:$0xff]
      %v1070 = vld [vmem:[#allocation2 + $0x63] sm:$0xff]
      %v1071 = vld [vmem:[#allocation2 + $0x6b] sm:$0xff]
      %v1072 = vld [vmem:[#allocation2 + $0x7b] sm:$0xff]
      %v1073 = vld [vmem:[#allocation2 + $0x83] sm:$0xff]
      %v1074 = vld [vmem:[#allocation2 + $0x93] sm:$0xff]
      %v1075 = vld [vmem:[#allocation2 + $0x9b] sm:$0xff]
      %v1076 = vld [vmem:[#allocation2 + $0xab] sm:$0xff]
      %v1077 = vld [vmem:[#allocation2 + $0xb3] sm:$0xff]
      %v1078 = vld [vmem:[#allocation2 + $0xc3] sm:$0xff]
      %v1079 = vld [vmem:[#allocation2 + $0xcb] sm:$0xff]
      %v1080 = vld [vmem:[#allocation2 + $0xdb] sm:$0xff]
      %v1081 = vld [vmem:[#allocation2 + $0xe3] sm:$0xff]
      %v1082 = vld [vmem:[#allocation2 + $0xf3] sm:$0xff]
      %v1083 = vld [vmem:[#allocation2 + $0xfb] sm:$0xff]
      %v1084 = vld [vmem:[#allocation2 + $0x10b] sm:$0xff]
      %v1085 = vld [vmem:[#allocation2 + $0x113] sm:$0xff]
      %v1086 = vld [vmem:[#allocation2 + $0x123] sm:$0xff]
      %v1087 = vld [vmem:[#allocation2 + $0x12b] sm:$0xff]
      %v1088 = vld [vmem:[#allocation2 + $0x13b] sm:$0xff]
      %v1089 = vld [vmem:[#allocation2 + $0x143] sm:$0xff]
      %v1090 = vld [vmem:[#allocation2 + $0x153] sm:$0xff]
      %v1091 = vld [vmem:[#allocation2 + $0x15b] sm:$0xff]
      %v1092 = vld [vmem:[#allocation2 + $0x16b] sm:$0xff]
      %v1093 = vld [vmem:[#allocation2 + $0x173] sm:$0xff]
      %v1094 = vld [vmem:[#allocation2 + $0x183] sm:$0xff]
      %v1095 = vld [vmem:[#allocation2 + $0x18b] sm:$0xff]
      %1130 = vrot.lane.b32.xlu0 %v1062, 64
      %v1131 = vpop.permute.xlu0 %1130
      %1132 = vrot.lane.b32.xlu0 %v1063, 64
      %v1133 = vpop.permute.xlu0 %1132
      %1134 = vrot.lane.b32.xlu0 %v1064, 64
      %v1135 = vpop.permute.xlu0 %1134
      %1136 = vrot.lane.b32.xlu0 %v1065, 64
      %v1137 = vpop.permute.xlu0 %1136
      %1138 = vrot.lane.b32.xlu0 %v1066, 64
      %v1139 = vpop.permute.xlu0 %1138
      %1140 = vrot.lane.b32.xlu0 %v1067, 64
      %v1141 = vpop.permute.xlu0 %1140
      %1142 = vrot.lane.b32.xlu0 %v1068, 64
      %v1143 = vpop.permute.xlu0 %1142
      %1144 = vrot.lane.b32.xlu0 %v1069, 64
      %v1145 = vpop.permute.xlu0 %1144
      %1146 = vrot.lane.b32.xlu0 %v1070, 64
      %v1147 = vpop.permute.xlu0 %1146
      %1148 = vrot.lane.b32.xlu0 %v1071, 64
      %v1149 = vpop.permute.xlu0 %1148
      %1150 = vrot.lane.b32.xlu0 %v1072, 64
      %v1151 = vpop.permute.xlu0 %1150
      %1152 = vrot.lane.b32.xlu0 %v1073, 64
      %v1153 = vpop.permute.xlu0 %1152
      %1154 = vrot.lane.b32.xlu0 %v1074, 64
      %v1155 = vpop.permute.xlu0 %1154
      %1156 = vrot.lane.b32.xlu0 %v1075, 64
      %v1157 = vpop.permute.xlu0 %1156
      %1158 = vrot.lane.b32.xlu0 %v1076, 64
      %v1159 = vpop.permute.xlu0 %1158
      %1160 = vrot.lane.b32.xlu0 %v1077, 64
      %v1161 = vpop.permute.xlu0 %1160
      %1162 = vrot.lane.b32.xlu0 %v1078, 64
      %v1163 = vpop.permute.xlu0 %1162
      %1164 = vrot.lane.b32.xlu0 %v1079, 64
      %v1165 = vpop.permute.xlu0 %1164
      %1166 = vrot.lane.b32.xlu0 %v1080, 64
      %v1167 = vpop.permute.xlu0 %1166
      %1168 = vrot.lane.b32.xlu0 %v1081, 64
      %v1169 = vpop.permute.xlu0 %1168
      %1170 = vrot.lane.b32.xlu0 %v1082, 64
      %v1171 = vpop.permute.xlu0 %1170
      %1172 = vrot.lane.b32.xlu0 %v1083, 64
      %v1173 = vpop.permute.xlu0 %1172
      %1174 = vrot.lane.b32.xlu0 %v1084, 64
      %v1175 = vpop.permute.xlu0 %1174
      %1176 = vrot.lane.b32.xlu0 %v1085, 64
      %v1177 = vpop.permute.xlu0 %1176
      %1178 = vrot.lane.b32.xlu0 %v1086, 64
      %v1179 = vpop.permute.xlu0 %1178
      %1180 = vrot.lane.b32.xlu0 %v1087, 64
      %v1181 = vpop.permute.xlu0 %1180
      %1182 = vrot.lane.b32.xlu0 %v1088, 64
      %v1183 = vpop.permute.xlu0 %1182
      %1184 = vrot.lane.b32.xlu0 %v1089, 64
      %v1185 = vpop.permute.xlu0 %1184
      %1186 = vrot.lane.b32.xlu0 %v1090, 64
      %v1187 = vpop.permute.xlu0 %1186
      %1188 = vrot.lane.b32.xlu0 %v1091, 64
      %v1189 = vpop.permute.xlu0 %1188
      %1190 = vrot.lane.b32.xlu0 %v1092, 64
      %v1191 = vpop.permute.xlu0 %1190
      %1192 = vrot.lane.b32.xlu0 %v1093, 64
      %v1193 = vpop.permute.xlu0 %1192
      %1194 = vrot.lane.b32.xlu0 %v1094, 64
      %v1195 = vpop.permute.xlu0 %1194
      %1196 = vrot.lane.b32.xlu0 %v1095, 64
      %v1197 = vpop.permute.xlu0 %1196
      %1232 = vst.msk [vmem:[#allocation4 + $0x8] sm:$0xff] %vm959, %v1131
      %1233 = vst.msk [vmem:[#allocation4 + $0x70] sm:$0xff] %vm959, %v1133
      %1234 = vst.msk [vmem:[#allocation4 + $0xd8] sm:$0xff] %vm959, %v1135
      %1235 = vst.msk [vmem:[#allocation4 + $0x140] sm:$0xff] %vm959, %v1137
      %1236 = vst.msk [vmem:[#allocation4 + $0x1a8] sm:$0xff] %vm959, %v1139
      %1237 = vst.msk [vmem:[#allocation4 + $0x210] sm:$0xff] %vm959, %v1141
      %1238 = vst.msk [vmem:[#allocation4 + $0x278] sm:$0xff] %vm959, %v1143
      %1239 = vst.msk [vmem:[#allocation4 + $0x2e0] sm:$0xff] %vm959, %v1145
      %1240 = vst.msk [vmem:[#allocation4 + $0x348] sm:$0xff] %vm959, %v1147
      %1241 = vst.msk [vmem:[#allocation4 + $0x3b0] sm:$0xff] %vm959, %v1149
      %1242 = vst.msk [vmem:[#allocation4 + $0x418] sm:$0xff] %vm959, %v1151
      %1243 = vst.msk [vmem:[#allocation4 + $0x480] sm:$0xff] %vm959, %v1153
      %1244 = vst.msk [vmem:[#allocation4 + $0x4e8] sm:$0xff] %vm959, %v1155
      %1245 = vst.msk [vmem:[#allocation4 + $0x550] sm:$0xff] %vm959, %v1157
      %1246 = vst.msk [vmem:[#allocation4 + $0x5b8] sm:$0xff] %vm959, %v1159
      %1247 = vst.msk [vmem:[#allocation4 + $0x620] sm:$0xff] %vm959, %v1161
      %1248 = vst.msk [vmem:[#allocation4 + $0x688] sm:$0xff] %vm959, %v1163
      %1249 = vst.msk [vmem:[#allocation4 + $0x6f0] sm:$0xff] %vm959, %v1165
      %1250 = vst.msk [vmem:[#allocation4 + $0x758] sm:$0xff] %vm959, %v1167
      %1251 = vst.msk [vmem:[#allocation4 + $0x7c0] sm:$0xff] %vm959, %v1169
      %1252 = vst.msk [vmem:[#allocation4 + $0x828] sm:$0xff] %vm959, %v1171
      %1253 = vst.msk [vmem:[#allocation4 + $0x890] sm:$0xff] %vm959, %v1173
      %1254 = vst.msk [vmem:[#allocation4 + $0x8f8] sm:$0xff] %vm959, %v1175
      %1255 = vst.msk [vmem:[#allocation4 + $0x960] sm:$0xff] %vm959, %v1177
      %1256 = vst.msk [vmem:[#allocation4 + $0x9c8] sm:$0xff] %vm959, %v1179
      %1257 = vst.msk [vmem:[#allocation4 + $0xa30] sm:$0xff] %vm959, %v1181
      %1258 = vst.msk [vmem:[#allocation4 + $0xa98] sm:$0xff] %vm959, %v1183
      %1259 = vst.msk [vmem:[#allocation4 + $0xb00] sm:$0xff] %vm959, %v1185
      %1260 = vst.msk [vmem:[#allocation4 + $0xb68] sm:$0xff] %vm959, %v1187
      %1261 = vst.msk [vmem:[#allocation4 + $0xbd0] sm:$0xff] %vm959, %v1189
      %1262 = vst.msk [vmem:[#allocation4 + $0xc38] sm:$0xff] %vm959, %v1191
      %1263 = vst.msk [vmem:[#allocation4 + $0xca0] sm:$0xff] %vm959, %v1193
      %1264 = vst.msk [vmem:[#allocation4 + $0xd08] sm:$0xff] %vm959, %v1195
      %1265 = vst.msk [vmem:[#allocation4 + $0xd70] sm:$0xff] %vm959, %v1197
      %v1266 = vld [vmem:[#allocation2 + $0x4] sm:$0xff]
      %v1267 = vld [vmem:[#allocation2 + $0xc] sm:$0xff]
      %v1268 = vld [vmem:[#allocation2 + $0x1c] sm:$0xff]
      %v1269 = vld [vmem:[#allocation2 + $0x24] sm:$0xff]
      %v1270 = vld [vmem:[#allocation2 + $0x34] sm:$0xff]
      %v1271 = vld [vmem:[#allocation2 + $0x3c] sm:$0xff]
      %v1272 = vld [vmem:[#allocation2 + $0x4c] sm:$0xff]
      %v1273 = vld [vmem:[#allocation2 + $0x54] sm:$0xff]
      %v1274 = vld [vmem:[#allocation2 + $0x64] sm:$0xff]
      %v1275 = vld [vmem:[#allocation2 + $0x6c] sm:$0xff]
      %v1276 = vld [vmem:[#allocation2 + $0x7c] sm:$0xff]
      %v1277 = vld [vmem:[#allocation2 + $0x84] sm:$0xff]
      %v1278 = vld [vmem:[#allocation2 + $0x94] sm:$0xff]
      %v1279 = vld [vmem:[#allocation2 + $0x9c] sm:$0xff]
      %v1280 = vld [vmem:[#allocation2 + $0xac] sm:$0xff]
      %v1281 = vld [vmem:[#allocation2 + $0xb4] sm:$0xff]
      %v1282 = vld [vmem:[#allocation2 + $0xc4] sm:$0xff]
      %v1283 = vld [vmem:[#allocation2 + $0xcc] sm:$0xff]
      %v1284 = vld [vmem:[#allocation2 + $0xdc] sm:$0xff]
      %v1285 = vld [vmem:[#allocation2 + $0xe4] sm:$0xff]
      %v1286 = vld [vmem:[#allocation2 + $0xf4] sm:$0xff]
      %v1287 = vld [vmem:[#allocation2 + $0xfc] sm:$0xff]
      %v1288 = vld [vmem:[#allocation2 + $0x10c] sm:$0xff]
      %v1289 = vld [vmem:[#allocation2 + $0x114] sm:$0xff]
      %v1290 = vld [vmem:[#allocation2 + $0x124] sm:$0xff]
      %v1291 = vld [vmem:[#allocation2 + $0x12c] sm:$0xff]
      %v1292 = vld [vmem:[#allocation2 + $0x13c] sm:$0xff]
      %v1293 = vld [vmem:[#allocation2 + $0x144] sm:$0xff]
      %v1294 = vld [vmem:[#allocation2 + $0x154] sm:$0xff]
      %v1295 = vld [vmem:[#allocation2 + $0x15c] sm:$0xff]
      %v1296 = vld [vmem:[#allocation2 + $0x16c] sm:$0xff]
      %v1297 = vld [vmem:[#allocation2 + $0x174] sm:$0xff]
      %v1298 = vld [vmem:[#allocation2 + $0x184] sm:$0xff]
      %v1299 = vld [vmem:[#allocation2 + $0x18c] sm:$0xff]
      %1300 = vst.msk [vmem:[#allocation4 + $0x10] sm:$0xff] %vm292, %v1266
      %1301 = vst.msk [vmem:[#allocation4 + $0x78] sm:$0xff] %vm292, %v1267
      %1302 = vst.msk [vmem:[#allocation4 + $0xe0] sm:$0xff] %vm292, %v1268
      %1303 = vst.msk [vmem:[#allocation4 + $0x148] sm:$0xff] %vm292, %v1269
      %1304 = vst.msk [vmem:[#allocation4 + $0x1b0] sm:$0xff] %vm292, %v1270
      %1305 = vst.msk [vmem:[#allocation4 + $0x218] sm:$0xff] %vm292, %v1271
      %1306 = vst.msk [vmem:[#allocation4 + $0x280] sm:$0xff] %vm292, %v1272
      %1307 = vst.msk [vmem:[#allocation4 + $0x2e8] sm:$0xff] %vm292, %v1273
      %1308 = vst.msk [vmem:[#allocation4 + $0x350] sm:$0xff] %vm292, %v1274
      %1309 = vst.msk [vmem:[#allocation4 + $0x3b8] sm:$0xff] %vm292, %v1275
      %1310 = vst.msk [vmem:[#allocation4 + $0x420] sm:$0xff] %vm292, %v1276
      %1311 = vst.msk [vmem:[#allocation4 + $0x488] sm:$0xff] %vm292, %v1277
      %1312 = vst.msk [vmem:[#allocation4 + $0x4f0] sm:$0xff] %vm292, %v1278
      %1313 = vst.msk [vmem:[#allocation4 + $0x558] sm:$0xff] %vm292, %v1279
      %1314 = vst.msk [vmem:[#allocation4 + $0x5c0] sm:$0xff] %vm292, %v1280
      %1315 = vst.msk [vmem:[#allocation4 + $0x628] sm:$0xff] %vm292, %v1281
      %1316 = vst.msk [vmem:[#allocation4 + $0x690] sm:$0xff] %vm292, %v1282
      %1317 = vst.msk [vmem:[#allocation4 + $0x6f8] sm:$0xff] %vm292, %v1283
      %1318 = vst.msk [vmem:[#allocation4 + $0x760] sm:$0xff] %vm292, %v1284
      %1319 = vst.msk [vmem:[#allocation4 + $0x7c8] sm:$0xff] %vm292, %v1285
      %1320 = vst.msk [vmem:[#allocation4 + $0x830] sm:$0xff] %vm292, %v1286
      %1321 = vst.msk [vmem:[#allocation4 + $0x898] sm:$0xff] %vm292, %v1287
      %1322 = vst.msk [vmem:[#allocation4 + $0x900] sm:$0xff] %vm292, %v1288
      %1323 = vst.msk [vmem:[#allocation4 + $0x968] sm:$0xff] %vm292, %v1289
      %1324 = vst.msk [vmem:[#allocation4 + $0x9d0] sm:$0xff] %vm292, %v1290
      %1325 = vst.msk [vmem:[#allocation4 + $0xa38] sm:$0xff] %vm292, %v1291
      %1326 = vst.msk [vmem:[#allocation4 + $0xaa0] sm:$0xff] %vm292, %v1292
      %1327 = vst.msk [vmem:[#allocation4 + $0xb08] sm:$0xff] %vm292, %v1293
      %1328 = vst.msk [vmem:[#allocation4 + $0xb70] sm:$0xff] %vm292, %v1294
      %1329 = vst.msk [vmem:[#allocation4 + $0xbd8] sm:$0xff] %vm292, %v1295
      %1330 = vst.msk [vmem:[#allocation4 + $0xc40] sm:$0xff] %vm292, %v1296
      %1331 = vst.msk [vmem:[#allocation4 + $0xca8] sm:$0xff] %vm292, %v1297
      %1332 = vst.msk [vmem:[#allocation4 + $0xd10] sm:$0xff] %vm292, %v1298
      %1333 = vst.msk [vmem:[#allocation4 + $0xd78] sm:$0xff] %vm292, %v1299
      %s1334 = scalar_lea.vmem [#allocation2], 24
      %v1335 = vld [vmem:[%s1334] sm:$0xff]
      %v1336 = vld [vmem:[%s1334 + $0x8] sm:$0xff]
      %v1337 = vld [vmem:[%s1334 + $0x18] sm:$0xff]
      %v1338 = vld [vmem:[%s1334 + $0x20] sm:$0xff]
      %v1339 = vld [vmem:[%s1334 + $0x30] sm:$0xff]
      %v1340 = vld [vmem:[%s1334 + $0x38] sm:$0xff]
      %v1341 = vld [vmem:[%s1334 + $0x48] sm:$0xff]
      %v1342 = vld [vmem:[%s1334 + $0x50] sm:$0xff]
      %v1343 = vld [vmem:[%s1334 + $0x60] sm:$0xff]
      %v1344 = vld [vmem:[%s1334 + $0x68] sm:$0xff]
      %v1345 = vld [vmem:[%s1334 + $0x78] sm:$0xff]
      %v1346 = vld [vmem:[%s1334 + $0x80] sm:$0xff]
      %v1347 = vld [vmem:[%s1334 + $0x90] sm:$0xff]
      %v1348 = vld [vmem:[%s1334 + $0x98] sm:$0xff]
      %v1349 = vld [vmem:[%s1334 + $0xa8] sm:$0xff]
      %v1350 = vld [vmem:[%s1334 + $0xb0] sm:$0xff]
      %v1351 = vld [vmem:[%s1334 + $0xc0] sm:$0xff]
      %v1352 = vld [vmem:[%s1334 + $0xc8] sm:$0xff]
      %v1353 = vld [vmem:[%s1334 + $0xd8] sm:$0xff]
      %v1354 = vld [vmem:[%s1334 + $0xe0] sm:$0xff]
      %v1355 = vld [vmem:[%s1334 + $0xf0] sm:$0xff]
      %v1356 = vld [vmem:[%s1334 + $0xf8] sm:$0xff]
      %v1357 = vld [vmem:[%s1334 + $0x108] sm:$0xff]
      %v1358 = vld [vmem:[%s1334 + $0x110] sm:$0xff]
      %v1359 = vld [vmem:[%s1334 + $0x120] sm:$0xff]
      %v1360 = vld [vmem:[%s1334 + $0x128] sm:$0xff]
      %v1361 = vld [vmem:[%s1334 + $0x138] sm:$0xff]
      %v1362 = vld [vmem:[%s1334 + $0x140] sm:$0xff]
      %v1363 = vld [vmem:[%s1334 + $0x150] sm:$0xff]
      %v1364 = vld [vmem:[%s1334 + $0x158] sm:$0xff]
      %v1365 = vld [vmem:[%s1334 + $0x168] sm:$0xff]
      %v1366 = vld [vmem:[%s1334 + $0x170] sm:$0xff]
      %v1367 = vld [vmem:[%s1334 + $0x180] sm:$0xff]
      %v1368 = vld [vmem:[%s1334 + $0x188] sm:$0xff]
      %1403 = vrot.lane.b32.xlu0 %v1335, 64
      %v1404 = vpop.permute.xlu0 %1403
      %1405 = vrot.lane.b32.xlu0 %v1336, 64
      %v1406 = vpop.permute.xlu0 %1405
      %1407 = vrot.lane.b32.xlu0 %v1337, 64
      %v1408 = vpop.permute.xlu0 %1407
      %1409 = vrot.lane.b32.xlu0 %v1338, 64
      %v1410 = vpop.permute.xlu0 %1409
      %1411 = vrot.lane.b32.xlu0 %v1339, 64
      %v1412 = vpop.permute.xlu0 %1411
      %1413 = vrot.lane.b32.xlu0 %v1340, 64
      %v1414 = vpop.permute.xlu0 %1413
      %1415 = vrot.lane.b32.xlu0 %v1341, 64
      %v1416 = vpop.permute.xlu0 %1415
      %1417 = vrot.lane.b32.xlu0 %v1342, 64
      %v1418 = vpop.permute.xlu0 %1417
      %1419 = vrot.lane.b32.xlu0 %v1343, 64
      %v1420 = vpop.permute.xlu0 %1419
      %1421 = vrot.lane.b32.xlu0 %v1344, 64
      %v1422 = vpop.permute.xlu0 %1421
      %1423 = vrot.lane.b32.xlu0 %v1345, 64
      %v1424 = vpop.permute.xlu0 %1423
      %1425 = vrot.lane.b32.xlu0 %v1346, 64
      %v1426 = vpop.permute.xlu0 %1425
      %1427 = vrot.lane.b32.xlu0 %v1347, 64
      %v1428 = vpop.permute.xlu0 %1427
      %1429 = vrot.lane.b32.xlu0 %v1348, 64
      %v1430 = vpop.permute.xlu0 %1429
      %1431 = vrot.lane.b32.xlu0 %v1349, 64
      %v1432 = vpop.permute.xlu0 %1431
      %1433 = vrot.lane.b32.xlu0 %v1350, 64
      %v1434 = vpop.permute.xlu0 %1433
      %1435 = vrot.lane.b32.xlu0 %v1351, 64
      %v1436 = vpop.permute.xlu0 %1435
      %1437 = vrot.lane.b32.xlu0 %v1352, 64
      %v1438 = vpop.permute.xlu0 %1437
      %1439 = vrot.lane.b32.xlu0 %v1353, 64
      %v1440 = vpop.permute.xlu0 %1439
      %1441 = vrot.lane.b32.xlu0 %v1354, 64
      %v1442 = vpop.permute.xlu0 %1441
      %1443 = vrot.lane.b32.xlu0 %v1355, 64
      %v1444 = vpop.permute.xlu0 %1443
      %1445 = vrot.lane.b32.xlu0 %v1356, 64
      %v1446 = vpop.permute.xlu0 %1445
      %1447 = vrot.lane.b32.xlu0 %v1357, 64
      %v1448 = vpop.permute.xlu0 %1447
      %1449 = vrot.lane.b32.xlu0 %v1358, 64
      %v1450 = vpop.permute.xlu0 %1449
      %1451 = vrot.lane.b32.xlu0 %v1359, 64
      %v1452 = vpop.permute.xlu0 %1451
      %1453 = vrot.lane.b32.xlu0 %v1360, 64
      %v1454 = vpop.permute.xlu0 %1453
      %1455 = vrot.lane.b32.xlu0 %v1361, 64
      %v1456 = vpop.permute.xlu0 %1455
      %1457 = vrot.lane.b32.xlu0 %v1362, 64
      %v1458 = vpop.permute.xlu0 %1457
      %1459 = vrot.lane.b32.xlu0 %v1363, 64
      %v1460 = vpop.permute.xlu0 %1459
      %1461 = vrot.lane.b32.xlu0 %v1364, 64
      %v1462 = vpop.permute.xlu0 %1461
      %1463 = vrot.lane.b32.xlu0 %v1365, 64
      %v1464 = vpop.permute.xlu0 %1463
      %1465 = vrot.lane.b32.xlu0 %v1366, 64
      %v1466 = vpop.permute.xlu0 %1465
      %1467 = vrot.lane.b32.xlu0 %v1367, 64
      %v1468 = vpop.permute.xlu0 %1467
      %1469 = vrot.lane.b32.xlu0 %v1368, 64
      %v1470 = vpop.permute.xlu0 %1469
      %1505 = vst.msk [vmem:[#allocation4 + $0x10] sm:$0xff] %vm959, %v1404
      %1506 = vst.msk [vmem:[#allocation4 + $0x78] sm:$0xff] %vm959, %v1406
      %1507 = vst.msk [vmem:[#allocation4 + $0xe0] sm:$0xff] %vm959, %v1408
      %1508 = vst.msk [vmem:[#allocation4 + $0x148] sm:$0xff] %vm959, %v1410
      %1509 = vst.msk [vmem:[#allocation4 + $0x1b0] sm:$0xff] %vm959, %v1412
      %1510 = vst.msk [vmem:[#allocation4 + $0x218] sm:$0xff] %vm959, %v1414
      %1511 = vst.msk [vmem:[#allocation4 + $0x280] sm:$0xff] %vm959, %v1416
      %1512 = vst.msk [vmem:[#allocation4 + $0x2e8] sm:$0xff] %vm959, %v1418
      %1513 = vst.msk [vmem:[#allocation4 + $0x350] sm:$0xff] %vm959, %v1420
      %1514 = vst.msk [vmem:[#allocation4 + $0x3b8] sm:$0xff] %vm959, %v1422
      %1515 = vst.msk [vmem:[#allocation4 + $0x420] sm:$0xff] %vm959, %v1424
      %1516 = vst.msk [vmem:[#allocation4 + $0x488] sm:$0xff] %vm959, %v1426
      %1517 = vst.msk [vmem:[#allocation4 + $0x4f0] sm:$0xff] %vm959, %v1428
      %1518 = vst.msk [vmem:[#allocation4 + $0x558] sm:$0xff] %vm959, %v1430
      %1519 = vst.msk [vmem:[#allocation4 + $0x5c0] sm:$0xff] %vm959, %v1432
      %1520 = vst.msk [vmem:[#allocation4 + $0x628] sm:$0xff] %vm959, %v1434
      %1521 = vst.msk [vmem:[#allocation4 + $0x690] sm:$0xff] %vm959, %v1436
      %1522 = vst.msk [vmem:[#allocation4 + $0x6f8] sm:$0xff] %vm959, %v1438
      %1523 = vst.msk [vmem:[#allocation4 + $0x760] sm:$0xff] %vm959, %v1440
      %1524 = vst.msk [vmem:[#allocation4 + $0x7c8] sm:$0xff] %vm959, %v1442
      %1525 = vst.msk [vmem:[#allocation4 + $0x830] sm:$0xff] %vm959, %v1444
      %1526 = vst.msk [vmem:[#allocation4 + $0x898] sm:$0xff] %vm959, %v1446
      %1527 = vst.msk [vmem:[#allocation4 + $0x900] sm:$0xff] %vm959, %v1448
      %1528 = vst.msk [vmem:[#allocation4 + $0x968] sm:$0xff] %vm959, %v1450
      %1529 = vst.msk [vmem:[#allocation4 + $0x9d0] sm:$0xff] %vm959, %v1452
      %1530 = vst.msk [vmem:[#allocation4 + $0xa38] sm:$0xff] %vm959, %v1454
      %1531 = vst.msk [vmem:[#allocation4 + $0xaa0] sm:$0xff] %vm959, %v1456
      %1532 = vst.msk [vmem:[#allocation4 + $0xb08] sm:$0xff] %vm959, %v1458
      %1533 = vst.msk [vmem:[#allocation4 + $0xb70] sm:$0xff] %vm959, %v1460
      %1534 = vst.msk [vmem:[#allocation4 + $0xbd8] sm:$0xff] %vm959, %v1462
      %1535 = vst.msk [vmem:[#allocation4 + $0xc40] sm:$0xff] %vm959, %v1464
      %1536 = vst.msk [vmem:[#allocation4 + $0xca8] sm:$0xff] %vm959, %v1466
      %1537 = vst.msk [vmem:[#allocation4 + $0xd10] sm:$0xff] %vm959, %v1468
      %1538 = vst.msk [vmem:[#allocation4 + $0xd78] sm:$0xff] %vm959, %v1470
      %v1539 = vld [vmem:[%s1334 + $0x1] sm:$0xff]
      %v1540 = vld [vmem:[%s1334 + $0x9] sm:$0xff]
      %v1541 = vld [vmem:[%s1334 + $0x19] sm:$0xff]
      %v1542 = vld [vmem:[%s1334 + $0x21] sm:$0xff]
      %v1543 = vld [vmem:[%s1334 + $0x31] sm:$0xff]
      %v1544 = vld [vmem:[%s1334 + $0x39] sm:$0xff]
      %v1545 = vld [vmem:[%s1334 + $0x49] sm:$0xff]
      %v1546 = vld [vmem:[%s1334 + $0x51] sm:$0xff]
      %v1547 = vld [vmem:[%s1334 + $0x61] sm:$0xff]
      %v1548 = vld [vmem:[%s1334 + $0x69] sm:$0xff]
      %v1549 = vld [vmem:[%s1334 + $0x79] sm:$0xff]
      %v1550 = vld [vmem:[%s1334 + $0x81] sm:$0xff]
      %v1551 = vld [vmem:[%s1334 + $0x91] sm:$0xff]
      %v1552 = vld [vmem:[%s1334 + $0x99] sm:$0xff]
      %v1553 = vld [vmem:[%s1334 + $0xa9] sm:$0xff]
      %v1554 = vld [vmem:[%s1334 + $0xb1] sm:$0xff]
      %v1555 = vld [vmem:[%s1334 + $0xc1] sm:$0xff]
      %v1556 = vld [vmem:[%s1334 + $0xc9] sm:$0xff]
      %v1557 = vld [vmem:[%s1334 + $0xd9] sm:$0xff]
      %v1558 = vld [vmem:[%s1334 + $0xe1] sm:$0xff]
      %v1559 = vld [vmem:[%s1334 + $0xf1] sm:$0xff]
      %v1560 = vld [vmem:[%s1334 + $0xf9] sm:$0xff]
      %v1561 = vld [vmem:[%s1334 + $0x109] sm:$0xff]
      %v1562 = vld [vmem:[%s1334 + $0x111] sm:$0xff]
      %v1563 = vld [vmem:[%s1334 + $0x121] sm:$0xff]
      %v1564 = vld [vmem:[%s1334 + $0x129] sm:$0xff]
      %v1565 = vld [vmem:[%s1334 + $0x139] sm:$0xff]
      %v1566 = vld [vmem:[%s1334 + $0x141] sm:$0xff]
      %v1567 = vld [vmem:[%s1334 + $0x151] sm:$0xff]
      %v1568 = vld [vmem:[%s1334 + $0x159] sm:$0xff]
      %v1569 = vld [vmem:[%s1334 + $0x169] sm:$0xff]
      %v1570 = vld [vmem:[%s1334 + $0x171] sm:$0xff]
      %v1571 = vld [vmem:[%s1334 + $0x181] sm:$0xff]
      %v1572 = vld [vmem:[%s1334 + $0x189] sm:$0xff]
      %1573 = vst.msk [vmem:[#allocation4 + $0x18] sm:$0xff] %vm292, %v1539
      %1574 = vst.msk [vmem:[#allocation4 + $0x80] sm:$0xff] %vm292, %v1540
      %1575 = vst.msk [vmem:[#allocation4 + $0xe8] sm:$0xff] %vm292, %v1541
      %1576 = vst.msk [vmem:[#allocation4 + $0x150] sm:$0xff] %vm292, %v1542
      %1577 = vst.msk [vmem:[#allocation4 + $0x1b8] sm:$0xff] %vm292, %v1543
      %1578 = vst.msk [vmem:[#allocation4 + $0x220] sm:$0xff] %vm292, %v1544
      %1579 = vst.msk [vmem:[#allocation4 + $0x288] sm:$0xff] %vm292, %v1545
      %1580 = vst.msk [vmem:[#allocation4 + $0x2f0] sm:$0xff] %vm292, %v1546
      %1581 = vst.msk [vmem:[#allocation4 + $0x358] sm:$0xff] %vm292, %v1547
      %1582 = vst.msk [vmem:[#allocation4 + $0x3c0] sm:$0xff] %vm292, %v1548
      %1583 = vst.msk [vmem:[#allocation4 + $0x428] sm:$0xff] %vm292, %v1549
      %1584 = vst.msk [vmem:[#allocation4 + $0x490] sm:$0xff] %vm292, %v1550
      %1585 = vst.msk [vmem:[#allocation4 + $0x4f8] sm:$0xff] %vm292, %v1551
      %1586 = vst.msk [vmem:[#allocation4 + $0x560] sm:$0xff] %vm292, %v1552
      %1587 = vst.msk [vmem:[#allocation4 + $0x5c8] sm:$0xff] %vm292, %v1553
      %1588 = vst.msk [vmem:[#allocation4 + $0x630] sm:$0xff] %vm292, %v1554
      %1589 = vst.msk [vmem:[#allocation4 + $0x698] sm:$0xff] %vm292, %v1555
      %1590 = vst.msk [vmem:[#allocation4 + $0x700] sm:$0xff] %vm292, %v1556
      %1591 = vst.msk [vmem:[#allocation4 + $0x768] sm:$0xff] %vm292, %v1557
      %1592 = vst.msk [vmem:[#allocation4 + $0x7d0] sm:$0xff] %vm292, %v1558
      %1593 = vst.msk [vmem:[#allocation4 + $0x838] sm:$0xff] %vm292, %v1559
      %1594 = vst.msk [vmem:[#allocation4 + $0x8a0] sm:$0xff] %vm292, %v1560
      %1595 = vst.msk [vmem:[#allocation4 + $0x908] sm:$0xff] %vm292, %v1561
      %1596 = vst.msk [vmem:[#allocation4 + $0x970] sm:$0xff] %vm292, %v1562
      %1597 = vst.msk [vmem:[#allocation4 + $0x9d8] sm:$0xff] %vm292, %v1563
      %1598 = vst.msk [vmem:[#allocation4 + $0xa40] sm:$0xff] %vm292, %v1564
      %1599 = vst.msk [vmem:[#allocation4 + $0xaa8] sm:$0xff] %vm292, %v1565
      %1600 = vst.msk [vmem:[#allocation4 + $0xb10] sm:$0xff] %vm292, %v1566
      %1601 = vst.msk [vmem:[#allocation4 + $0xb78] sm:$0xff] %vm292, %v1567
      %1602 = vst.msk [vmem:[#allocation4 + $0xbe0] sm:$0xff] %vm292, %v1568
      %1603 = vst.msk [vmem:[#allocation4 + $0xc48] sm:$0xff] %vm292, %v1569
      %1604 = vst.msk [vmem:[#allocation4 + $0xcb0] sm:$0xff] %vm292, %v1570
      %1605 = vst.msk [vmem:[#allocation4 + $0xd18] sm:$0xff] %vm292, %v1571
      %1606 = vst.msk [vmem:[#allocation4 + $0xd80] sm:$0xff] %vm292, %v1572
      %v1607 = vld [vmem:[%s1334 + $0x2] sm:$0xff]
      %v1608 = vld [vmem:[%s1334 + $0xa] sm:$0xff]
      %v1609 = vld [vmem:[%s1334 + $0x1a] sm:$0xff]
      %v1610 = vld [vmem:[%s1334 + $0x22] sm:$0xff]
      %v1611 = vld [vmem:[%s1334 + $0x32] sm:$0xff]
      %v1612 = vld [vmem:[%s1334 + $0x3a] sm:$0xff]
      %v1613 = vld [vmem:[%s1334 + $0x4a] sm:$0xff]
      %v1614 = vld [vmem:[%s1334 + $0x52] sm:$0xff]
      %v1615 = vld [vmem:[%s1334 + $0x62] sm:$0xff]
      %v1616 = vld [vmem:[%s1334 + $0x6a] sm:$0xff]
      %v1617 = vld [vmem:[%s1334 + $0x7a] sm:$0xff]
      %v1618 = vld [vmem:[%s1334 + $0x82] sm:$0xff]
      %v1619 = vld [vmem:[%s1334 + $0x92] sm:$0xff]
      %v1620 = vld [vmem:[%s1334 + $0x9a] sm:$0xff]
      %v1621 = vld [vmem:[%s1334 + $0xaa] sm:$0xff]
      %v1622 = vld [vmem:[%s1334 + $0xb2] sm:$0xff]
      %v1623 = vld [vmem:[%s1334 + $0xc2] sm:$0xff]
      %v1624 = vld [vmem:[%s1334 + $0xca] sm:$0xff]
      %v1625 = vld [vmem:[%s1334 + $0xda] sm:$0xff]
      %v1626 = vld [vmem:[%s1334 + $0xe2] sm:$0xff]
      %v1627 = vld [vmem:[%s1334 + $0xf2] sm:$0xff]
      %v1628 = vld [vmem:[%s1334 + $0xfa] sm:$0xff]
      %v1629 = vld [vmem:[%s1334 + $0x10a] sm:$0xff]
      %v1630 = vld [vmem:[%s1334 + $0x112] sm:$0xff]
      %v1631 = vld [vmem:[%s1334 + $0x122] sm:$0xff]
      %v1632 = vld [vmem:[%s1334 + $0x12a] sm:$0xff]
      %v1633 = vld [vmem:[%s1334 + $0x13a] sm:$0xff]
      %v1634 = vld [vmem:[%s1334 + $0x142] sm:$0xff]
      %v1635 = vld [vmem:[%s1334 + $0x152] sm:$0xff]
      %v1636 = vld [vmem:[%s1334 + $0x15a] sm:$0xff]
      %v1637 = vld [vmem:[%s1334 + $0x16a] sm:$0xff]
      %v1638 = vld [vmem:[%s1334 + $0x172] sm:$0xff]
      %v1639 = vld [vmem:[%s1334 + $0x182] sm:$0xff]
      %v1640 = vld [vmem:[%s1334 + $0x18a] sm:$0xff]
      %1675 = vrot.lane.b32.xlu0 %v1607, 64
      %v1676 = vpop.permute.xlu0 %1675
      %1677 = vrot.lane.b32.xlu0 %v1608, 64
      %v1678 = vpop.permute.xlu0 %1677
      %1679 = vrot.lane.b32.xlu0 %v1609, 64
      %v1680 = vpop.permute.xlu0 %1679
      %1681 = vrot.lane.b32.xlu0 %v1610, 64
      %v1682 = vpop.permute.xlu0 %1681
      %1683 = vrot.lane.b32.xlu0 %v1611, 64
      %v1684 = vpop.permute.xlu0 %1683
      %1685 = vrot.lane.b32.xlu0 %v1612, 64
      %v1686 = vpop.permute.xlu0 %1685
      %1687 = vrot.lane.b32.xlu0 %v1613, 64
      %v1688 = vpop.permute.xlu0 %1687
      %1689 = vrot.lane.b32.xlu0 %v1614, 64
      %v1690 = vpop.permute.xlu0 %1689
      %1691 = vrot.lane.b32.xlu0 %v1615, 64
      %v1692 = vpop.permute.xlu0 %1691
      %1693 = vrot.lane.b32.xlu0 %v1616, 64
      %v1694 = vpop.permute.xlu0 %1693
      %1695 = vrot.lane.b32.xlu0 %v1617, 64
      %v1696 = vpop.permute.xlu0 %1695
      %1697 = vrot.lane.b32.xlu0 %v1618, 64
      %v1698 = vpop.permute.xlu0 %1697
      %1699 = vrot.lane.b32.xlu0 %v1619, 64
      %v1700 = vpop.permute.xlu0 %1699
      %1701 = vrot.lane.b32.xlu0 %v1620, 64
      %v1702 = vpop.permute.xlu0 %1701
      %1703 = vrot.lane.b32.xlu0 %v1621, 64
      %v1704 = vpop.permute.xlu0 %1703
      %1705 = vrot.lane.b32.xlu0 %v1622, 64
      %v1706 = vpop.permute.xlu0 %1705
      %1707 = vrot.lane.b32.xlu0 %v1623, 64
      %v1708 = vpop.permute.xlu0 %1707
      %1709 = vrot.lane.b32.xlu0 %v1624, 64
      %v1710 = vpop.permute.xlu0 %1709
      %1711 = vrot.lane.b32.xlu0 %v1625, 64
      %v1712 = vpop.permute.xlu0 %1711
      %1713 = vrot.lane.b32.xlu0 %v1626, 64
      %v1714 = vpop.permute.xlu0 %1713
      %1715 = vrot.lane.b32.xlu0 %v1627, 64
      %v1716 = vpop.permute.xlu0 %1715
      %1717 = vrot.lane.b32.xlu0 %v1628, 64
      %v1718 = vpop.permute.xlu0 %1717
      %1719 = vrot.lane.b32.xlu0 %v1629, 64
      %v1720 = vpop.permute.xlu0 %1719
      %1721 = vrot.lane.b32.xlu0 %v1630, 64
      %v1722 = vpop.permute.xlu0 %1721
      %1723 = vrot.lane.b32.xlu0 %v1631, 64
      %v1724 = vpop.permute.xlu0 %1723
      %1725 = vrot.lane.b32.xlu0 %v1632, 64
      %v1726 = vpop.permute.xlu0 %1725
      %1727 = vrot.lane.b32.xlu0 %v1633, 64
      %v1728 = vpop.permute.xlu0 %1727
      %1729 = vrot.lane.b32.xlu0 %v1634, 64
      %v1730 = vpop.permute.xlu0 %1729
      %1731 = vrot.lane.b32.xlu0 %v1635, 64
      %v1732 = vpop.permute.xlu0 %1731
      %1733 = vrot.lane.b32.xlu0 %v1636, 64
      %v1734 = vpop.permute.xlu0 %1733
      %1735 = vrot.lane.b32.xlu0 %v1637, 64
      %v1736 = vpop.permute.xlu0 %1735
      %1737 = vrot.lane.b32.xlu0 %v1638, 64
      %v1738 = vpop.permute.xlu0 %1737
      %1739 = vrot.lane.b32.xlu0 %v1639, 64
      %v1740 = vpop.permute.xlu0 %1739
      %1741 = vrot.lane.b32.xlu0 %v1640, 64
      %v1742 = vpop.permute.xlu0 %1741
      %1777 = vst.msk [vmem:[#allocation4 + $0x18] sm:$0xff] %vm959, %v1676
      %1778 = vst.msk [vmem:[#allocation4 + $0x80] sm:$0xff] %vm959, %v1678
      %1779 = vst.msk [vmem:[#allocation4 + $0xe8] sm:$0xff] %vm959, %v1680
      %1780 = vst.msk [vmem:[#allocation4 + $0x150] sm:$0xff] %vm959, %v1682
      %1781 = vst.msk [vmem:[#allocation4 + $0x1b8] sm:$0xff] %vm959, %v1684
      %1782 = vst.msk [vmem:[#allocation4 + $0x220] sm:$0xff] %vm959, %v1686
      %1783 = vst.msk [vmem:[#allocation4 + $0x288] sm:$0xff] %vm959, %v1688
      %1784 = vst.msk [vmem:[#allocation4 + $0x2f0] sm:$0xff] %vm959, %v1690
      %1785 = vst.msk [vmem:[#allocation4 + $0x358] sm:$0xff] %vm959, %v1692
      %1786 = vst.msk [vmem:[#allocation4 + $0x3c0] sm:$0xff] %vm959, %v1694
      %1787 = vst.msk [vmem:[#allocation4 + $0x428] sm:$0xff] %vm959, %v1696
      %1788 = vst.msk [vmem:[#allocation4 + $0x490] sm:$0xff] %vm959, %v1698
      %1789 = vst.msk [vmem:[#allocation4 + $0x4f8] sm:$0xff] %vm959, %v1700
      %1790 = vst.msk [vmem:[#allocation4 + $0x560] sm:$0xff] %vm959, %v1702
      %1791 = vst.msk [vmem:[#allocation4 + $0x5c8] sm:$0xff] %vm959, %v1704
      %1792 = vst.msk [vmem:[#allocation4 + $0x630] sm:$0xff] %vm959, %v1706
      %1793 = vst.msk [vmem:[#allocation4 + $0x698] sm:$0xff] %vm959, %v1708
      %1794 = vst.msk [vmem:[#allocation4 + $0x700] sm:$0xff] %vm959, %v1710
      %1795 = vst.msk [vmem:[#allocation4 + $0x768] sm:$0xff] %vm959, %v1712
      %1796 = vst.msk [vmem:[#allocation4 + $0x7d0] sm:$0xff] %vm959, %v1714
      %1797 = vst.msk [vmem:[#allocation4 + $0x838] sm:$0xff] %vm959, %v1716
      %1798 = vst.msk [vmem:[#allocation4 + $0x8a0] sm:$0xff] %vm959, %v1718
      %1799 = vst.msk [vmem:[#allocation4 + $0x908] sm:$0xff] %vm959, %v1720
      %1800 = vst.msk [vmem:[#allocation4 + $0x970] sm:$0xff] %vm959, %v1722
      %1801 = vst.msk [vmem:[#allocation4 + $0x9d8] sm:$0xff] %vm959, %v1724
      %1802 = vst.msk [vmem:[#allocation4 + $0xa40] sm:$0xff] %vm959, %v1726
      %1803 = vst.msk [vmem:[#allocation4 + $0xaa8] sm:$0xff] %vm959, %v1728
      %1804 = vst.msk [vmem:[#allocation4 + $0xb10] sm:$0xff] %vm959, %v1730
      %1805 = vst.msk [vmem:[#allocation4 + $0xb78] sm:$0xff] %vm959, %v1732
      %1806 = vst.msk [vmem:[#allocation4 + $0xbe0] sm:$0xff] %vm959, %v1734
      %1807 = vst.msk [vmem:[#allocation4 + $0xc48] sm:$0xff] %vm959, %v1736
      %1808 = vst.msk [vmem:[#allocation4 + $0xcb0] sm:$0xff] %vm959, %v1738
      %1809 = vst.msk [vmem:[#allocation4 + $0xd18] sm:$0xff] %vm959, %v1740
      %1810 = vst.msk [vmem:[#allocation4 + $0xd80] sm:$0xff] %vm959, %v1742
      %v1811 = vld [vmem:[%s1334 + $0x3] sm:$0xff]
      %v1812 = vld [vmem:[%s1334 + $0xb] sm:$0xff]
      %v1813 = vld [vmem:[%s1334 + $0x1b] sm:$0xff]
      %v1814 = vld [vmem:[%s1334 + $0x23] sm:$0xff]
      %v1815 = vld [vmem:[%s1334 + $0x33] sm:$0xff]
      %v1816 = vld [vmem:[%s1334 + $0x3b] sm:$0xff]
      %v1817 = vld [vmem:[%s1334 + $0x4b] sm:$0xff]
      %v1818 = vld [vmem:[%s1334 + $0x53] sm:$0xff]
      %v1819 = vld [vmem:[%s1334 + $0x63] sm:$0xff]
      %v1820 = vld [vmem:[%s1334 + $0x6b] sm:$0xff]
      %v1821 = vld [vmem:[%s1334 + $0x7b] sm:$0xff]
      %v1822 = vld [vmem:[%s1334 + $0x83] sm:$0xff]
      %v1823 = vld [vmem:[%s1334 + $0x93] sm:$0xff]
      %v1824 = vld [vmem:[%s1334 + $0x9b] sm:$0xff]
      %v1825 = vld [vmem:[%s1334 + $0xab] sm:$0xff]
      %v1826 = vld [vmem:[%s1334 + $0xb3] sm:$0xff]
      %v1827 = vld [vmem:[%s1334 + $0xc3] sm:$0xff]
      %v1828 = vld [vmem:[%s1334 + $0xcb] sm:$0xff]
      %v1829 = vld [vmem:[%s1334 + $0xdb] sm:$0xff]
      %v1830 = vld [vmem:[%s1334 + $0xe3] sm:$0xff]
      %v1831 = vld [vmem:[%s1334 + $0xf3] sm:$0xff]
      %v1832 = vld [vmem:[%s1334 + $0xfb] sm:$0xff]
      %v1833 = vld [vmem:[%s1334 + $0x10b] sm:$0xff]
      %v1834 = vld [vmem:[%s1334 + $0x113] sm:$0xff]
      %v1835 = vld [vmem:[%s1334 + $0x123] sm:$0xff]
      %v1836 = vld [vmem:[%s1334 + $0x12b] sm:$0xff]
      %v1837 = vld [vmem:[%s1334 + $0x13b] sm:$0xff]
      %v1838 = vld [vmem:[%s1334 + $0x143] sm:$0xff]
      %v1839 = vld [vmem:[%s1334 + $0x153] sm:$0xff]
      %v1840 = vld [vmem:[%s1334 + $0x15b] sm:$0xff]
      %v1841 = vld [vmem:[%s1334 + $0x16b] sm:$0xff]
      %v1842 = vld [vmem:[%s1334 + $0x173] sm:$0xff]
      %v1843 = vld [vmem:[%s1334 + $0x183] sm:$0xff]
      %v1844 = vld [vmem:[%s1334 + $0x18b] sm:$0xff]
      %1845 = vst.msk [vmem:[#allocation4 + $0x20] sm:$0xff] %vm292, %v1811
      %1846 = vst.msk [vmem:[#allocation4 + $0x88] sm:$0xff] %vm292, %v1812
      %1847 = vst.msk [vmem:[#allocation4 + $0xf0] sm:$0xff] %vm292, %v1813
      %1848 = vst.msk [vmem:[#allocation4 + $0x158] sm:$0xff] %vm292, %v1814
      %1849 = vst.msk [vmem:[#allocation4 + $0x1c0] sm:$0xff] %vm292, %v1815
      %1850 = vst.msk [vmem:[#allocation4 + $0x228] sm:$0xff] %vm292, %v1816
      %1851 = vst.msk [vmem:[#allocation4 + $0x290] sm:$0xff] %vm292, %v1817
      %1852 = vst.msk [vmem:[#allocation4 + $0x2f8] sm:$0xff] %vm292, %v1818
      %1853 = vst.msk [vmem:[#allocation4 + $0x360] sm:$0xff] %vm292, %v1819
      %1854 = vst.msk [vmem:[#allocation4 + $0x3c8] sm:$0xff] %vm292, %v1820
      %1855 = vst.msk [vmem:[#allocation4 + $0x430] sm:$0xff] %vm292, %v1821
      %1856 = vst.msk [vmem:[#allocation4 + $0x498] sm:$0xff] %vm292, %v1822
      %1857 = vst.msk [vmem:[#allocation4 + $0x500] sm:$0xff] %vm292, %v1823
      %1858 = vst.msk [vmem:[#allocation4 + $0x568] sm:$0xff] %vm292, %v1824
      %1859 = vst.msk [vmem:[#allocation4 + $0x5d0] sm:$0xff] %vm292, %v1825
      %1860 = vst.msk [vmem:[#allocation4 + $0x638] sm:$0xff] %vm292, %v1826
      %1861 = vst.msk [vmem:[#allocation4 + $0x6a0] sm:$0xff] %vm292, %v1827
      %1862 = vst.msk [vmem:[#allocation4 + $0x708] sm:$0xff] %vm292, %v1828
      %1863 = vst.msk [vmem:[#allocation4 + $0x770] sm:$0xff] %vm292, %v1829
      %1864 = vst.msk [vmem:[#allocation4 + $0x7d8] sm:$0xff] %vm292, %v1830
      %1865 = vst.msk [vmem:[#allocation4 + $0x840] sm:$0xff] %vm292, %v1831
      %1866 = vst.msk [vmem:[#allocation4 + $0x8a8] sm:$0xff] %vm292, %v1832
      %1867 = vst.msk [vmem:[#allocation4 + $0x910] sm:$0xff] %vm292, %v1833
      %1868 = vst.msk [vmem:[#allocation4 + $0x978] sm:$0xff] %vm292, %v1834
      %1869 = vst.msk [vmem:[#allocation4 + $0x9e0] sm:$0xff] %vm292, %v1835
      %1870 = vst.msk [vmem:[#allocation4 + $0xa48] sm:$0xff] %vm292, %v1836
      %1871 = vst.msk [vmem:[#allocation4 + $0xab0] sm:$0xff] %vm292, %v1837
      %1872 = vst.msk [vmem:[#allocation4 + $0xb18] sm:$0xff] %vm292, %v1838
      %1873 = vst.msk [vmem:[#allocation4 + $0xb80] sm:$0xff] %vm292, %v1839
      %1874 = vst.msk [vmem:[#allocation4 + $0xbe8] sm:$0xff] %vm292, %v1840
      %1875 = vst.msk [vmem:[#allocation4 + $0xc50] sm:$0xff] %vm292, %v1841
      %1876 = vst.msk [vmem:[#allocation4 + $0xcb8] sm:$0xff] %vm292, %v1842
      %1877 = vst.msk [vmem:[#allocation4 + $0xd20] sm:$0xff] %vm292, %v1843
      %1878 = vst.msk [vmem:[#allocation4 + $0xd88] sm:$0xff] %vm292, %v1844
      %v1879 = vld [vmem:[%s1334 + $0x4] sm:$0xff]
      %v1880 = vld [vmem:[%s1334 + $0xc] sm:$0xff]
      %v1881 = vld [vmem:[%s1334 + $0x1c] sm:$0xff]
      %v1882 = vld [vmem:[%s1334 + $0x24] sm:$0xff]
      %v1883 = vld [vmem:[%s1334 + $0x34] sm:$0xff]
      %v1884 = vld [vmem:[%s1334 + $0x3c] sm:$0xff]
      %v1885 = vld [vmem:[%s1334 + $0x4c] sm:$0xff]
      %v1886 = vld [vmem:[%s1334 + $0x54] sm:$0xff]
      %v1887 = vld [vmem:[%s1334 + $0x64] sm:$0xff]
      %v1888 = vld [vmem:[%s1334 + $0x6c] sm:$0xff]
      %v1889 = vld [vmem:[%s1334 + $0x7c] sm:$0xff]
      %v1890 = vld [vmem:[%s1334 + $0x84] sm:$0xff]
      %v1891 = vld [vmem:[%s1334 + $0x94] sm:$0xff]
      %v1892 = vld [vmem:[%s1334 + $0x9c] sm:$0xff]
      %v1893 = vld [vmem:[%s1334 + $0xac] sm:$0xff]
      %v1894 = vld [vmem:[%s1334 + $0xb4] sm:$0xff]
      %v1895 = vld [vmem:[%s1334 + $0xc4] sm:$0xff]
      %v1896 = vld [vmem:[%s1334 + $0xcc] sm:$0xff]
      %v1897 = vld [vmem:[%s1334 + $0xdc] sm:$0xff]
      %v1898 = vld [vmem:[%s1334 + $0xe4] sm:$0xff]
      %v1899 = vld [vmem:[%s1334 + $0xf4] sm:$0xff]
      %v1900 = vld [vmem:[%s1334 + $0xfc] sm:$0xff]
      %v1901 = vld [vmem:[%s1334 + $0x10c] sm:$0xff]
      %v1902 = vld [vmem:[%s1334 + $0x114] sm:$0xff]
      %v1903 = vld [vmem:[%s1334 + $0x124] sm:$0xff]
      %v1904 = vld [vmem:[%s1334 + $0x12c] sm:$0xff]
      %v1905 = vld [vmem:[%s1334 + $0x13c] sm:$0xff]
      %v1906 = vld [vmem:[%s1334 + $0x144] sm:$0xff]
      %v1907 = vld [vmem:[%s1334 + $0x154] sm:$0xff]
      %v1908 = vld [vmem:[%s1334 + $0x15c] sm:$0xff]
      %v1909 = vld [vmem:[%s1334 + $0x16c] sm:$0xff]
      %v1910 = vld [vmem:[%s1334 + $0x174] sm:$0xff]
      %v1911 = vld [vmem:[%s1334 + $0x184] sm:$0xff]
      %v1912 = vld [vmem:[%s1334 + $0x18c] sm:$0xff]
      %1947 = vrot.lane.b32.xlu0 %v1879, 64
      %v1948 = vpop.permute.xlu0 %1947
      %1949 = vrot.lane.b32.xlu0 %v1880, 64
      %v1950 = vpop.permute.xlu0 %1949
      %1951 = vrot.lane.b32.xlu0 %v1881, 64
      %v1952 = vpop.permute.xlu0 %1951
      %1953 = vrot.lane.b32.xlu0 %v1882, 64
      %v1954 = vpop.permute.xlu0 %1953
      %1955 = vrot.lane.b32.xlu0 %v1883, 64
      %v1956 = vpop.permute.xlu0 %1955
      %1957 = vrot.lane.b32.xlu0 %v1884, 64
      %v1958 = vpop.permute.xlu0 %1957
      %1959 = vrot.lane.b32.xlu0 %v1885, 64
      %v1960 = vpop.permute.xlu0 %1959
      %1961 = vrot.lane.b32.xlu0 %v1886, 64
      %v1962 = vpop.permute.xlu0 %1961
      %1963 = vrot.lane.b32.xlu0 %v1887, 64
      %v1964 = vpop.permute.xlu0 %1963
      %1965 = vrot.lane.b32.xlu0 %v1888, 64
      %v1966 = vpop.permute.xlu0 %1965
      %1967 = vrot.lane.b32.xlu0 %v1889, 64
      %v1968 = vpop.permute.xlu0 %1967
      %1969 = vrot.lane.b32.xlu0 %v1890, 64
      %v1970 = vpop.permute.xlu0 %1969
      %1971 = vrot.lane.b32.xlu0 %v1891, 64
      %v1972 = vpop.permute.xlu0 %1971
      %1973 = vrot.lane.b32.xlu0 %v1892, 64
      %v1974 = vpop.permute.xlu0 %1973
      %1975 = vrot.lane.b32.xlu0 %v1893, 64
      %v1976 = vpop.permute.xlu0 %1975
      %1977 = vrot.lane.b32.xlu0 %v1894, 64
      %v1978 = vpop.permute.xlu0 %1977
      %1979 = vrot.lane.b32.xlu0 %v1895, 64
      %v1980 = vpop.permute.xlu0 %1979
      %1981 = vrot.lane.b32.xlu0 %v1896, 64
      %v1982 = vpop.permute.xlu0 %1981
      %1983 = vrot.lane.b32.xlu0 %v1897, 64
      %v1984 = vpop.permute.xlu0 %1983
      %1985 = vrot.lane.b32.xlu0 %v1898, 64
      %v1986 = vpop.permute.xlu0 %1985
      %1987 = vrot.lane.b32.xlu0 %v1899, 64
      %v1988 = vpop.permute.xlu0 %1987
      %1989 = vrot.lane.b32.xlu0 %v1900, 64
      %v1990 = vpop.permute.xlu0 %1989
      %1991 = vrot.lane.b32.xlu0 %v1901, 64
      %v1992 = vpop.permute.xlu0 %1991
      %1993 = vrot.lane.b32.xlu0 %v1902, 64
      %v1994 = vpop.permute.xlu0 %1993
      %1995 = vrot.lane.b32.xlu0 %v1903, 64
      %v1996 = vpop.permute.xlu0 %1995
      %1997 = vrot.lane.b32.xlu0 %v1904, 64
      %v1998 = vpop.permute.xlu0 %1997
      %1999 = vrot.lane.b32.xlu0 %v1905, 64
      %v2000 = vpop.permute.xlu0 %1999
      %2001 = vrot.lane.b32.xlu0 %v1906, 64
      %v2002 = vpop.permute.xlu0 %2001
      %2003 = vrot.lane.b32.xlu0 %v1907, 64
      %v2004 = vpop.permute.xlu0 %2003
      %2005 = vrot.lane.b32.xlu0 %v1908, 64
      %v2006 = vpop.permute.xlu0 %2005
      %2007 = vrot.lane.b32.xlu0 %v1909, 64
      %v2008 = vpop.permute.xlu0 %2007
      %2009 = vrot.lane.b32.xlu0 %v1910, 64
      %v2010 = vpop.permute.xlu0 %2009
      %2011 = vrot.lane.b32.xlu0 %v1911, 64
      %v2012 = vpop.permute.xlu0 %2011
      %2013 = vrot.lane.b32.xlu0 %v1912, 64
      %v2014 = vpop.permute.xlu0 %2013
      %2049 = vst.msk [vmem:[#allocation4 + $0x20] sm:$0xff] %vm959, %v1948
      %2050 = vst.msk [vmem:[#allocation4 + $0x88] sm:$0xff] %vm959, %v1950
      %2051 = vst.msk [vmem:[#allocation4 + $0xf0] sm:$0xff] %vm959, %v1952
      %2052 = vst.msk [vmem:[#allocation4 + $0x158] sm:$0xff] %vm959, %v1954
      %2053 = vst.msk [vmem:[#allocation4 + $0x1c0] sm:$0xff] %vm959, %v1956
      %2054 = vst.msk [vmem:[#allocation4 + $0x228] sm:$0xff] %vm959, %v1958
      %2055 = vst.msk [vmem:[#allocation4 + $0x290] sm:$0xff] %vm959, %v1960
      %2056 = vst.msk [vmem:[#allocation4 + $0x2f8] sm:$0xff] %vm959, %v1962
      %2057 = vst.msk [vmem:[#allocation4 + $0x360] sm:$0xff] %vm959, %v1964
      %2058 = vst.msk [vmem:[#allocation4 + $0x3c8] sm:$0xff] %vm959, %v1966
      %2059 = vst.msk [vmem:[#allocation4 + $0x430] sm:$0xff] %vm959, %v1968
      %2060 = vst.msk [vmem:[#allocation4 + $0x498] sm:$0xff] %vm959, %v1970
      %2061 = vst.msk [vmem:[#allocation4 + $0x500] sm:$0xff] %vm959, %v1972
      %2062 = vst.msk [vmem:[#allocation4 + $0x568] sm:$0xff] %vm959, %v1974
      %2063 = vst.msk [vmem:[#allocation4 + $0x5d0] sm:$0xff] %vm959, %v1976
      %2064 = vst.msk [vmem:[#allocation4 + $0x638] sm:$0xff] %vm959, %v1978
      %2065 = vst.msk [vmem:[#allocation4 + $0x6a0] sm:$0xff] %vm959, %v1980
      %2066 = vst.msk [vmem:[#allocation4 + $0x708] sm:$0xff] %vm959, %v1982
      %2067 = vst.msk [vmem:[#allocation4 + $0x770] sm:$0xff] %vm959, %v1984
      %2068 = vst.msk [vmem:[#allocation4 + $0x7d8] sm:$0xff] %vm959, %v1986
      %2069 = vst.msk [vmem:[#allocation4 + $0x840] sm:$0xff] %vm959, %v1988
      %2070 = vst.msk [vmem:[#allocation4 + $0x8a8] sm:$0xff] %vm959, %v1990
      %2071 = vst.msk [vmem:[#allocation4 + $0x910] sm:$0xff] %vm959, %v1992
      %2072 = vst.msk [vmem:[#allocation4 + $0x978] sm:$0xff] %vm959, %v1994
      %2073 = vst.msk [vmem:[#allocation4 + $0x9e0] sm:$0xff] %vm959, %v1996
      %2074 = vst.msk [vmem:[#allocation4 + $0xa48] sm:$0xff] %vm959, %v1998
      %2075 = vst.msk [vmem:[#allocation4 + $0xab0] sm:$0xff] %vm959, %v2000
      %2076 = vst.msk [vmem:[#allocation4 + $0xb18] sm:$0xff] %vm959, %v2002
      %2077 = vst.msk [vmem:[#allocation4 + $0xb80] sm:$0xff] %vm959, %v2004
      %2078 = vst.msk [vmem:[#allocation4 + $0xbe8] sm:$0xff] %vm959, %v2006
      %2079 = vst.msk [vmem:[#allocation4 + $0xc50] sm:$0xff] %vm959, %v2008
      %2080 = vst.msk [vmem:[#allocation4 + $0xcb8] sm:$0xff] %vm959, %v2010
      %2081 = vst.msk [vmem:[#allocation4 + $0xd20] sm:$0xff] %vm959, %v2012
      %2082 = vst.msk [vmem:[#allocation4 + $0xd88] sm:$0xff] %vm959, %v2014
      %s2083 = scalar_lea.vmem [#allocation2], 48
      %v2084 = vld [vmem:[%s2083] sm:$0xff]
      %v2085 = vld [vmem:[%s2083 + $0x8] sm:$0xff]
      %v2086 = vld [vmem:[%s2083 + $0x18] sm:$0xff]
      %v2087 = vld [vmem:[%s2083 + $0x20] sm:$0xff]
      %v2088 = vld [vmem:[%s2083 + $0x30] sm:$0xff]
      %v2089 = vld [vmem:[%s2083 + $0x38] sm:$0xff]
      %v2090 = vld [vmem:[%s2083 + $0x48] sm:$0xff]
      %v2091 = vld [vmem:[%s2083 + $0x50] sm:$0xff]
      %v2092 = vld [vmem:[%s2083 + $0x60] sm:$0xff]
      %v2093 = vld [vmem:[%s2083 + $0x68] sm:$0xff]
      %v2094 = vld [vmem:[%s2083 + $0x78] sm:$0xff]
      %v2095 = vld [vmem:[%s2083 + $0x80] sm:$0xff]
      %v2096 = vld [vmem:[%s2083 + $0x90] sm:$0xff]
      %v2097 = vld [vmem:[%s2083 + $0x98] sm:$0xff]
      %v2098 = vld [vmem:[%s2083 + $0xa8] sm:$0xff]
      %v2099 = vld [vmem:[%s2083 + $0xb0] sm:$0xff]
      %v2100 = vld [vmem:[%s2083 + $0xc0] sm:$0xff]
      %v2101 = vld [vmem:[%s2083 + $0xc8] sm:$0xff]
      %v2102 = vld [vmem:[%s2083 + $0xd8] sm:$0xff]
      %v2103 = vld [vmem:[%s2083 + $0xe0] sm:$0xff]
      %v2104 = vld [vmem:[%s2083 + $0xf0] sm:$0xff]
      %v2105 = vld [vmem:[%s2083 + $0xf8] sm:$0xff]
      %v2106 = vld [vmem:[%s2083 + $0x108] sm:$0xff]
      %v2107 = vld [vmem:[%s2083 + $0x110] sm:$0xff]
      %v2108 = vld [vmem:[%s2083 + $0x120] sm:$0xff]
      %v2109 = vld [vmem:[%s2083 + $0x128] sm:$0xff]
      %v2110 = vld [vmem:[%s2083 + $0x138] sm:$0xff]
      %v2111 = vld [vmem:[%s2083 + $0x140] sm:$0xff]
      %v2112 = vld [vmem:[%s2083 + $0x150] sm:$0xff]
      %v2113 = vld [vmem:[%s2083 + $0x158] sm:$0xff]
      %v2114 = vld [vmem:[%s2083 + $0x168] sm:$0xff]
      %v2115 = vld [vmem:[%s2083 + $0x170] sm:$0xff]
      %v2116 = vld [vmem:[%s2083 + $0x180] sm:$0xff]
      %v2117 = vld [vmem:[%s2083 + $0x188] sm:$0xff]
      %2118 = vst.msk [vmem:[#allocation4 + $0x28] sm:$0xff] %vm292, %v2084
      %2119 = vst.msk [vmem:[#allocation4 + $0x90] sm:$0xff] %vm292, %v2085
      %2120 = vst.msk [vmem:[#allocation4 + $0xf8] sm:$0xff] %vm292, %v2086
      %2121 = vst.msk [vmem:[#allocation4 + $0x160] sm:$0xff] %vm292, %v2087
      %2122 = vst.msk [vmem:[#allocation4 + $0x1c8] sm:$0xff] %vm292, %v2088
      %2123 = vst.msk [vmem:[#allocation4 + $0x230] sm:$0xff] %vm292, %v2089
      %2124 = vst.msk [vmem:[#allocation4 + $0x298] sm:$0xff] %vm292, %v2090
      %2125 = vst.msk [vmem:[#allocation4 + $0x300] sm:$0xff] %vm292, %v2091
      %2126 = vst.msk [vmem:[#allocation4 + $0x368] sm:$0xff] %vm292, %v2092
      %2127 = vst.msk [vmem:[#allocation4 + $0x3d0] sm:$0xff] %vm292, %v2093
      %2128 = vst.msk [vmem:[#allocation4 + $0x438] sm:$0xff] %vm292, %v2094
      %2129 = vst.msk [vmem:[#allocation4 + $0x4a0] sm:$0xff] %vm292, %v2095
      %2130 = vst.msk [vmem:[#allocation4 + $0x508] sm:$0xff] %vm292, %v2096
      %2131 = vst.msk [vmem:[#allocation4 + $0x570] sm:$0xff] %vm292, %v2097
      %2132 = vst.msk [vmem:[#allocation4 + $0x5d8] sm:$0xff] %vm292, %v2098
      %2133 = vst.msk [vmem:[#allocation4 + $0x640] sm:$0xff] %vm292, %v2099
      %2134 = vst.msk [vmem:[#allocation4 + $0x6a8] sm:$0xff] %vm292, %v2100
      %2135 = vst.msk [vmem:[#allocation4 + $0x710] sm:$0xff] %vm292, %v2101
      %2136 = vst.msk [vmem:[#allocation4 + $0x778] sm:$0xff] %vm292, %v2102
      %2137 = vst.msk [vmem:[#allocation4 + $0x7e0] sm:$0xff] %vm292, %v2103
      %2138 = vst.msk [vmem:[#allocation4 + $0x848] sm:$0xff] %vm292, %v2104
      %2139 = vst.msk [vmem:[#allocation4 + $0x8b0] sm:$0xff] %vm292, %v2105
      %2140 = vst.msk [vmem:[#allocation4 + $0x918] sm:$0xff] %vm292, %v2106
      %2141 = vst.msk [vmem:[#allocation4 + $0x980] sm:$0xff] %vm292, %v2107
      %2142 = vst.msk [vmem:[#allocation4 + $0x9e8] sm:$0xff] %vm292, %v2108
      %2143 = vst.msk [vmem:[#allocation4 + $0xa50] sm:$0xff] %vm292, %v2109
      %2144 = vst.msk [vmem:[#allocation4 + $0xab8] sm:$0xff] %vm292, %v2110
      %2145 = vst.msk [vmem:[#allocation4 + $0xb20] sm:$0xff] %vm292, %v2111
      %2146 = vst.msk [vmem:[#allocation4 + $0xb88] sm:$0xff] %vm292, %v2112
      %2147 = vst.msk [vmem:[#allocation4 + $0xbf0] sm:$0xff] %vm292, %v2113
      %2148 = vst.msk [vmem:[#allocation4 + $0xc58] sm:$0xff] %vm292, %v2114
      %2149 = vst.msk [vmem:[#allocation4 + $0xcc0] sm:$0xff] %vm292, %v2115
      %2150 = vst.msk [vmem:[#allocation4 + $0xd28] sm:$0xff] %vm292, %v2116
      %2151 = vst.msk [vmem:[#allocation4 + $0xd90] sm:$0xff] %vm292, %v2117
      %v2152 = vld [vmem:[%s2083 + $0x1] sm:$0xff]
      %v2153 = vld [vmem:[%s2083 + $0x9] sm:$0xff]
      %v2154 = vld [vmem:[%s2083 + $0x19] sm:$0xff]
      %v2155 = vld [vmem:[%s2083 + $0x21] sm:$0xff]
      %v2156 = vld [vmem:[%s2083 + $0x31] sm:$0xff]
      %v2157 = vld [vmem:[%s2083 + $0x39] sm:$0xff]
      %v2158 = vld [vmem:[%s2083 + $0x49] sm:$0xff]
      %v2159 = vld [vmem:[%s2083 + $0x51] sm:$0xff]
      %v2160 = vld [vmem:[%s2083 + $0x61] sm:$0xff]
      %v2161 = vld [vmem:[%s2083 + $0x69] sm:$0xff]
      %v2162 = vld [vmem:[%s2083 + $0x79] sm:$0xff]
      %v2163 = vld [vmem:[%s2083 + $0x81] sm:$0xff]
      %v2164 = vld [vmem:[%s2083 + $0x91] sm:$0xff]
      %v2165 = vld [vmem:[%s2083 + $0x99] sm:$0xff]
      %v2166 = vld [vmem:[%s2083 + $0xa9] sm:$0xff]
      %v2167 = vld [vmem:[%s2083 + $0xb1] sm:$0xff]
      %v2168 = vld [vmem:[%s2083 + $0xc1] sm:$0xff]
      %v2169 = vld [vmem:[%s2083 + $0xc9] sm:$0xff]
      %v2170 = vld [vmem:[%s2083 + $0xd9] sm:$0xff]
      %v2171 = vld [vmem:[%s2083 + $0xe1] sm:$0xff]
      %v2172 = vld [vmem:[%s2083 + $0xf1] sm:$0xff]
      %v2173 = vld [vmem:[%s2083 + $0xf9] sm:$0xff]
      %v2174 = vld [vmem:[%s2083 + $0x109] sm:$0xff]
      %v2175 = vld [vmem:[%s2083 + $0x111] sm:$0xff]
      %v2176 = vld [vmem:[%s2083 + $0x121] sm:$0xff]
      %v2177 = vld [vmem:[%s2083 + $0x129] sm:$0xff]
      %v2178 = vld [vmem:[%s2083 + $0x139] sm:$0xff]
      %v2179 = vld [vmem:[%s2083 + $0x141] sm:$0xff]
      %v2180 = vld [vmem:[%s2083 + $0x151] sm:$0xff]
      %v2181 = vld [vmem:[%s2083 + $0x159] sm:$0xff]
      %v2182 = vld [vmem:[%s2083 + $0x169] sm:$0xff]
      %v2183 = vld [vmem:[%s2083 + $0x171] sm:$0xff]
      %v2184 = vld [vmem:[%s2083 + $0x181] sm:$0xff]
      %v2185 = vld [vmem:[%s2083 + $0x189] sm:$0xff]
      %2220 = vrot.lane.b32.xlu0 %v2152, 64
      %v2221 = vpop.permute.xlu0 %2220
      %2222 = vrot.lane.b32.xlu0 %v2153, 64
      %v2223 = vpop.permute.xlu0 %2222
      %2224 = vrot.lane.b32.xlu0 %v2154, 64
      %v2225 = vpop.permute.xlu0 %2224
      %2226 = vrot.lane.b32.xlu0 %v2155, 64
      %v2227 = vpop.permute.xlu0 %2226
      %2228 = vrot.lane.b32.xlu0 %v2156, 64
      %v2229 = vpop.permute.xlu0 %2228
      %2230 = vrot.lane.b32.xlu0 %v2157, 64
      %v2231 = vpop.permute.xlu0 %2230
      %2232 = vrot.lane.b32.xlu0 %v2158, 64
      %v2233 = vpop.permute.xlu0 %2232
      %2234 = vrot.lane.b32.xlu0 %v2159, 64
      %v2235 = vpop.permute.xlu0 %2234
      %2236 = vrot.lane.b32.xlu0 %v2160, 64
      %v2237 = vpop.permute.xlu0 %2236
      %2238 = vrot.lane.b32.xlu0 %v2161, 64
      %v2239 = vpop.permute.xlu0 %2238
      %2240 = vrot.lane.b32.xlu0 %v2162, 64
      %v2241 = vpop.permute.xlu0 %2240
      %2242 = vrot.lane.b32.xlu0 %v2163, 64
      %v2243 = vpop.permute.xlu0 %2242
      %2244 = vrot.lane.b32.xlu0 %v2164, 64
      %v2245 = vpop.permute.xlu0 %2244
      %2246 = vrot.lane.b32.xlu0 %v2165, 64
      %v2247 = vpop.permute.xlu0 %2246
      %2248 = vrot.lane.b32.xlu0 %v2166, 64
      %v2249 = vpop.permute.xlu0 %2248
      %2250 = vrot.lane.b32.xlu0 %v2167, 64
      %v2251 = vpop.permute.xlu0 %2250
      %2252 = vrot.lane.b32.xlu0 %v2168, 64
      %v2253 = vpop.permute.xlu0 %2252
      %2254 = vrot.lane.b32.xlu0 %v2169, 64
      %v2255 = vpop.permute.xlu0 %2254
      %2256 = vrot.lane.b32.xlu0 %v2170, 64
      %v2257 = vpop.permute.xlu0 %2256
      %2258 = vrot.lane.b32.xlu0 %v2171, 64
      %v2259 = vpop.permute.xlu0 %2258
      %2260 = vrot.lane.b32.xlu0 %v2172, 64
      %v2261 = vpop.permute.xlu0 %2260
      %2262 = vrot.lane.b32.xlu0 %v2173, 64
      %v2263 = vpop.permute.xlu0 %2262
      %2264 = vrot.lane.b32.xlu0 %v2174, 64
      %v2265 = vpop.permute.xlu0 %2264
      %2266 = vrot.lane.b32.xlu0 %v2175, 64
      %v2267 = vpop.permute.xlu0 %2266
      %2268 = vrot.lane.b32.xlu0 %v2176, 64
      %v2269 = vpop.permute.xlu0 %2268
      %2270 = vrot.lane.b32.xlu0 %v2177, 64
      %v2271 = vpop.permute.xlu0 %2270
      %2272 = vrot.lane.b32.xlu0 %v2178, 64
      %v2273 = vpop.permute.xlu0 %2272
      %2274 = vrot.lane.b32.xlu0 %v2179, 64
      %v2275 = vpop.permute.xlu0 %2274
      %2276 = vrot.lane.b32.xlu0 %v2180, 64
      %v2277 = vpop.permute.xlu0 %2276
      %2278 = vrot.lane.b32.xlu0 %v2181, 64
      %v2279 = vpop.permute.xlu0 %2278
      %2280 = vrot.lane.b32.xlu0 %v2182, 64
      %v2281 = vpop.permute.xlu0 %2280
      %2282 = vrot.lane.b32.xlu0 %v2183, 64
      %v2283 = vpop.permute.xlu0 %2282
      %2284 = vrot.lane.b32.xlu0 %v2184, 64
      %v2285 = vpop.permute.xlu0 %2284
      %2286 = vrot.lane.b32.xlu0 %v2185, 64
      %v2287 = vpop.permute.xlu0 %2286
      %2322 = vst.msk [vmem:[#allocation4 + $0x28] sm:$0xff] %vm959, %v2221
      %2323 = vst.msk [vmem:[#allocation4 + $0x90] sm:$0xff] %vm959, %v2223
      %2324 = vst.msk [vmem:[#allocation4 + $0xf8] sm:$0xff] %vm959, %v2225
      %2325 = vst.msk [vmem:[#allocation4 + $0x160] sm:$0xff] %vm959, %v2227
      %2326 = vst.msk [vmem:[#allocation4 + $0x1c8] sm:$0xff] %vm959, %v2229
      %2327 = vst.msk [vmem:[#allocation4 + $0x230] sm:$0xff] %vm959, %v2231
      %2328 = vst.msk [vmem:[#allocation4 + $0x298] sm:$0xff] %vm959, %v2233
      %2329 = vst.msk [vmem:[#allocation4 + $0x300] sm:$0xff] %vm959, %v2235
      %2330 = vst.msk [vmem:[#allocation4 + $0x368] sm:$0xff] %vm959, %v2237
      %2331 = vst.msk [vmem:[#allocation4 + $0x3d0] sm:$0xff] %vm959, %v2239
      %2332 = vst.msk [vmem:[#allocation4 + $0x438] sm:$0xff] %vm959, %v2241
      %2333 = vst.msk [vmem:[#allocation4 + $0x4a0] sm:$0xff] %vm959, %v2243
      %2334 = vst.msk [vmem:[#allocation4 + $0x508] sm:$0xff] %vm959, %v2245
      %2335 = vst.msk [vmem:[#allocation4 + $0x570] sm:$0xff] %vm959, %v2247
      %2336 = vst.msk [vmem:[#allocation4 + $0x5d8] sm:$0xff] %vm959, %v2249
      %2337 = vst.msk [vmem:[#allocation4 + $0x640] sm:$0xff] %vm959, %v2251
      %2338 = vst.msk [vmem:[#allocation4 + $0x6a8] sm:$0xff] %vm959, %v2253
      %2339 = vst.msk [vmem:[#allocation4 + $0x710] sm:$0xff] %vm959, %v2255
      %2340 = vst.msk [vmem:[#allocation4 + $0x778] sm:$0xff] %vm959, %v2257
      %2341 = vst.msk [vmem:[#allocation4 + $0x7e0] sm:$0xff] %vm959, %v2259
      %2342 = vst.msk [vmem:[#allocation4 + $0x848] sm:$0xff] %vm959, %v2261
      %2343 = vst.msk [vmem:[#allocation4 + $0x8b0] sm:$0xff] %vm959, %v2263
      %2344 = vst.msk [vmem:[#allocation4 + $0x918] sm:$0xff] %vm959, %v2265
      %2345 = vst.msk [vmem:[#allocation4 + $0x980] sm:$0xff] %vm959, %v2267
      %2346 = vst.msk [vmem:[#allocation4 + $0x9e8] sm:$0xff] %vm959, %v2269
      %2347 = vst.msk [vmem:[#allocation4 + $0xa50] sm:$0xff] %vm959, %v2271
      %2348 = vst.msk [vmem:[#allocation4 + $0xab8] sm:$0xff] %vm959, %v2273
      %2349 = vst.msk [vmem:[#allocation4 + $0xb20] sm:$0xff] %vm959, %v2275
      %2350 = vst.msk [vmem:[#allocation4 + $0xb88] sm:$0xff] %vm959, %v2277
      %2351 = vst.msk [vmem:[#allocation4 + $0xbf0] sm:$0xff] %vm959, %v2279
      %2352 = vst.msk [vmem:[#allocation4 + $0xc58] sm:$0xff] %vm959, %v2281
      %2353 = vst.msk [vmem:[#allocation4 + $0xcc0] sm:$0xff] %vm959, %v2283
      %2354 = vst.msk [vmem:[#allocation4 + $0xd28] sm:$0xff] %vm959, %v2285
      %2355 = vst.msk [vmem:[#allocation4 + $0xd90] sm:$0xff] %vm959, %v2287
      %v2356 = vld [vmem:[%s2083 + $0x2] sm:$0xff]
      %v2357 = vld [vmem:[%s2083 + $0xa] sm:$0xff]
      %v2358 = vld [vmem:[%s2083 + $0x1a] sm:$0xff]
      %v2359 = vld [vmem:[%s2083 + $0x22] sm:$0xff]
      %v2360 = vld [vmem:[%s2083 + $0x32] sm:$0xff]
      %v2361 = vld [vmem:[%s2083 + $0x3a] sm:$0xff]
      %v2362 = vld [vmem:[%s2083 + $0x4a] sm:$0xff]
      %v2363 = vld [vmem:[%s2083 + $0x52] sm:$0xff]
      %v2364 = vld [vmem:[%s2083 + $0x62] sm:$0xff]
      %v2365 = vld [vmem:[%s2083 + $0x6a] sm:$0xff]
      %v2366 = vld [vmem:[%s2083 + $0x7a] sm:$0xff]
      %v2367 = vld [vmem:[%s2083 + $0x82] sm:$0xff]
      %v2368 = vld [vmem:[%s2083 + $0x92] sm:$0xff]
      %v2369 = vld [vmem:[%s2083 + $0x9a] sm:$0xff]
      %v2370 = vld [vmem:[%s2083 + $0xaa] sm:$0xff]
      %v2371 = vld [vmem:[%s2083 + $0xb2] sm:$0xff]
      %v2372 = vld [vmem:[%s2083 + $0xc2] sm:$0xff]
      %v2373 = vld [vmem:[%s2083 + $0xca] sm:$0xff]
      %v2374 = vld [vmem:[%s2083 + $0xda] sm:$0xff]
      %v2375 = vld [vmem:[%s2083 + $0xe2] sm:$0xff]
      %v2376 = vld [vmem:[%s2083 + $0xf2] sm:$0xff]
      %v2377 = vld [vmem:[%s2083 + $0xfa] sm:$0xff]
      %v2378 = vld [vmem:[%s2083 + $0x10a] sm:$0xff]
      %v2379 = vld [vmem:[%s2083 + $0x112] sm:$0xff]
      %v2380 = vld [vmem:[%s2083 + $0x122] sm:$0xff]
      %v2381 = vld [vmem:[%s2083 + $0x12a] sm:$0xff]
      %v2382 = vld [vmem:[%s2083 + $0x13a] sm:$0xff]
      %v2383 = vld [vmem:[%s2083 + $0x142] sm:$0xff]
      %v2384 = vld [vmem:[%s2083 + $0x152] sm:$0xff]
      %v2385 = vld [vmem:[%s2083 + $0x15a] sm:$0xff]
      %v2386 = vld [vmem:[%s2083 + $0x16a] sm:$0xff]
      %v2387 = vld [vmem:[%s2083 + $0x172] sm:$0xff]
      %v2388 = vld [vmem:[%s2083 + $0x182] sm:$0xff]
      %v2389 = vld [vmem:[%s2083 + $0x18a] sm:$0xff]
      %2390 = vst.msk [vmem:[#allocation4 + $0x30] sm:$0xff] %vm292, %v2356
      %2391 = vst.msk [vmem:[#allocation4 + $0x98] sm:$0xff] %vm292, %v2357
      %2392 = vst.msk [vmem:[#allocation4 + $0x100] sm:$0xff] %vm292, %v2358
      %2393 = vst.msk [vmem:[#allocation4 + $0x168] sm:$0xff] %vm292, %v2359
      %2394 = vst.msk [vmem:[#allocation4 + $0x1d0] sm:$0xff] %vm292, %v2360
      %2395 = vst.msk [vmem:[#allocation4 + $0x238] sm:$0xff] %vm292, %v2361
      %2396 = vst.msk [vmem:[#allocation4 + $0x2a0] sm:$0xff] %vm292, %v2362
      %2397 = vst.msk [vmem:[#allocation4 + $0x308] sm:$0xff] %vm292, %v2363
      %2398 = vst.msk [vmem:[#allocation4 + $0x370] sm:$0xff] %vm292, %v2364
      %2399 = vst.msk [vmem:[#allocation4 + $0x3d8] sm:$0xff] %vm292, %v2365
      %2400 = vst.msk [vmem:[#allocation4 + $0x440] sm:$0xff] %vm292, %v2366
      %2401 = vst.msk [vmem:[#allocation4 + $0x4a8] sm:$0xff] %vm292, %v2367
      %2402 = vst.msk [vmem:[#allocation4 + $0x510] sm:$0xff] %vm292, %v2368
      %2403 = vst.msk [vmem:[#allocation4 + $0x578] sm:$0xff] %vm292, %v2369
      %2404 = vst.msk [vmem:[#allocation4 + $0x5e0] sm:$0xff] %vm292, %v2370
      %2405 = vst.msk [vmem:[#allocation4 + $0x648] sm:$0xff] %vm292, %v2371
      %2406 = vst.msk [vmem:[#allocation4 + $0x6b0] sm:$0xff] %vm292, %v2372
      %2407 = vst.msk [vmem:[#allocation4 + $0x718] sm:$0xff] %vm292, %v2373
      %2408 = vst.msk [vmem:[#allocation4 + $0x780] sm:$0xff] %vm292, %v2374
      %2409 = vst.msk [vmem:[#allocation4 + $0x7e8] sm:$0xff] %vm292, %v2375
      %2410 = vst.msk [vmem:[#allocation4 + $0x850] sm:$0xff] %vm292, %v2376
      %2411 = vst.msk [vmem:[#allocation4 + $0x8b8] sm:$0xff] %vm292, %v2377
      %2412 = vst.msk [vmem:[#allocation4 + $0x920] sm:$0xff] %vm292, %v2378
      %2413 = vst.msk [vmem:[#allocation4 + $0x988] sm:$0xff] %vm292, %v2379
      %2414 = vst.msk [vmem:[#allocation4 + $0x9f0] sm:$0xff] %vm292, %v2380
      %2415 = vst.msk [vmem:[#allocation4 + $0xa58] sm:$0xff] %vm292, %v2381
      %2416 = vst.msk [vmem:[#allocation4 + $0xac0] sm:$0xff] %vm292, %v2382
      %2417 = vst.msk [vmem:[#allocation4 + $0xb28] sm:$0xff] %vm292, %v2383
      %2418 = vst.msk [vmem:[#allocation4 + $0xb90] sm:$0xff] %vm292, %v2384
      %2419 = vst.msk [vmem:[#allocation4 + $0xbf8] sm:$0xff] %vm292, %v2385
      %2420 = vst.msk [vmem:[#allocation4 + $0xc60] sm:$0xff] %vm292, %v2386
      %2421 = vst.msk [vmem:[#allocation4 + $0xcc8] sm:$0xff] %vm292, %v2387
      %2422 = vst.msk [vmem:[#allocation4 + $0xd30] sm:$0xff] %vm292, %v2388
      %2423 = vst.msk [vmem:[#allocation4 + $0xd98] sm:$0xff] %vm292, %v2389
      %v2424 = vld [vmem:[%s2083 + $0x3] sm:$0xff]
      %v2425 = vld [vmem:[%s2083 + $0xb] sm:$0xff]
      %v2426 = vld [vmem:[%s2083 + $0x1b] sm:$0xff]
      %v2427 = vld [vmem:[%s2083 + $0x23] sm:$0xff]
      %v2428 = vld [vmem:[%s2083 + $0x33] sm:$0xff]
      %v2429 = vld [vmem:[%s2083 + $0x3b] sm:$0xff]
      %v2430 = vld [vmem:[%s2083 + $0x4b] sm:$0xff]
      %v2431 = vld [vmem:[%s2083 + $0x53] sm:$0xff]
      %v2432 = vld [vmem:[%s2083 + $0x63] sm:$0xff]
      %v2433 = vld [vmem:[%s2083 + $0x6b] sm:$0xff]
      %v2434 = vld [vmem:[%s2083 + $0x7b] sm:$0xff]
      %v2435 = vld [vmem:[%s2083 + $0x83] sm:$0xff]
      %v2436 = vld [vmem:[%s2083 + $0x93] sm:$0xff]
      %v2437 = vld [vmem:[%s2083 + $0x9b] sm:$0xff]
      %v2438 = vld [vmem:[%s2083 + $0xab] sm:$0xff]
      %v2439 = vld [vmem:[%s2083 + $0xb3] sm:$0xff]
      %v2440 = vld [vmem:[%s2083 + $0xc3] sm:$0xff]
      %v2441 = vld [vmem:[%s2083 + $0xcb] sm:$0xff]
      %v2442 = vld [vmem:[%s2083 + $0xdb] sm:$0xff]
      %v2443 = vld [vmem:[%s2083 + $0xe3] sm:$0xff]
      %v2444 = vld [vmem:[%s2083 + $0xf3] sm:$0xff]
      %v2445 = vld [vmem:[%s2083 + $0xfb] sm:$0xff]
      %v2446 = vld [vmem:[%s2083 + $0x10b] sm:$0xff]
      %v2447 = vld [vmem:[%s2083 + $0x113] sm:$0xff]
      %v2448 = vld [vmem:[%s2083 + $0x123] sm:$0xff]
      %v2449 = vld [vmem:[%s2083 + $0x12b] sm:$0xff]
      %v2450 = vld [vmem:[%s2083 + $0x13b] sm:$0xff]
      %v2451 = vld [vmem:[%s2083 + $0x143] sm:$0xff]
      %v2452 = vld [vmem:[%s2083 + $0x153] sm:$0xff]
      %v2453 = vld [vmem:[%s2083 + $0x15b] sm:$0xff]
      %v2454 = vld [vmem:[%s2083 + $0x16b] sm:$0xff]
      %v2455 = vld [vmem:[%s2083 + $0x173] sm:$0xff]
      %v2456 = vld [vmem:[%s2083 + $0x183] sm:$0xff]
      %v2457 = vld [vmem:[%s2083 + $0x18b] sm:$0xff]
      %2492 = vrot.lane.b32.xlu0 %v2424, 64
      %v2493 = vpop.permute.xlu0 %2492
      %2494 = vrot.lane.b32.xlu0 %v2425, 64
      %v2495 = vpop.permute.xlu0 %2494
      %2496 = vrot.lane.b32.xlu0 %v2426, 64
      %v2497 = vpop.permute.xlu0 %2496
      %2498 = vrot.lane.b32.xlu0 %v2427, 64
      %v2499 = vpop.permute.xlu0 %2498
      %2500 = vrot.lane.b32.xlu0 %v2428, 64
      %v2501 = vpop.permute.xlu0 %2500
      %2502 = vrot.lane.b32.xlu0 %v2429, 64
      %v2503 = vpop.permute.xlu0 %2502
      %2504 = vrot.lane.b32.xlu0 %v2430, 64
      %v2505 = vpop.permute.xlu0 %2504
      %2506 = vrot.lane.b32.xlu0 %v2431, 64
      %v2507 = vpop.permute.xlu0 %2506
      %2508 = vrot.lane.b32.xlu0 %v2432, 64
      %v2509 = vpop.permute.xlu0 %2508
      %2510 = vrot.lane.b32.xlu0 %v2433, 64
      %v2511 = vpop.permute.xlu0 %2510
      %2512 = vrot.lane.b32.xlu0 %v2434, 64
      %v2513 = vpop.permute.xlu0 %2512
      %2514 = vrot.lane.b32.xlu0 %v2435, 64
      %v2515 = vpop.permute.xlu0 %2514
      %2516 = vrot.lane.b32.xlu0 %v2436, 64
      %v2517 = vpop.permute.xlu0 %2516
      %2518 = vrot.lane.b32.xlu0 %v2437, 64
      %v2519 = vpop.permute.xlu0 %2518
      %2520 = vrot.lane.b32.xlu0 %v2438, 64
      %v2521 = vpop.permute.xlu0 %2520
      %2522 = vrot.lane.b32.xlu0 %v2439, 64
      %v2523 = vpop.permute.xlu0 %2522
      %2524 = vrot.lane.b32.xlu0 %v2440, 64
      %v2525 = vpop.permute.xlu0 %2524
      %2526 = vrot.lane.b32.xlu0 %v2441, 64
      %v2527 = vpop.permute.xlu0 %2526
      %2528 = vrot.lane.b32.xlu0 %v2442, 64
      %v2529 = vpop.permute.xlu0 %2528
      %2530 = vrot.lane.b32.xlu0 %v2443, 64
      %v2531 = vpop.permute.xlu0 %2530
      %2532 = vrot.lane.b32.xlu0 %v2444, 64
      %v2533 = vpop.permute.xlu0 %2532
      %2534 = vrot.lane.b32.xlu0 %v2445, 64
      %v2535 = vpop.permute.xlu0 %2534
      %2536 = vrot.lane.b32.xlu0 %v2446, 64
      %v2537 = vpop.permute.xlu0 %2536
      %2538 = vrot.lane.b32.xlu0 %v2447, 64
      %v2539 = vpop.permute.xlu0 %2538
      %2540 = vrot.lane.b32.xlu0 %v2448, 64
      %v2541 = vpop.permute.xlu0 %2540
      %2542 = vrot.lane.b32.xlu0 %v2449, 64
      %v2543 = vpop.permute.xlu0 %2542
      %2544 = vrot.lane.b32.xlu0 %v2450, 64
      %v2545 = vpop.permute.xlu0 %2544
      %2546 = vrot.lane.b32.xlu0 %v2451, 64
      %v2547 = vpop.permute.xlu0 %2546
      %2548 = vrot.lane.b32.xlu0 %v2452, 64
      %v2549 = vpop.permute.xlu0 %2548
      %2550 = vrot.lane.b32.xlu0 %v2453, 64
      %v2551 = vpop.permute.xlu0 %2550
      %2552 = vrot.lane.b32.xlu0 %v2454, 64
      %v2553 = vpop.permute.xlu0 %2552
      %2554 = vrot.lane.b32.xlu0 %v2455, 64
      %v2555 = vpop.permute.xlu0 %2554
      %2556 = vrot.lane.b32.xlu0 %v2456, 64
      %v2557 = vpop.permute.xlu0 %2556
      %2558 = vrot.lane.b32.xlu0 %v2457, 64
      %v2559 = vpop.permute.xlu0 %2558
      %2594 = vst.msk [vmem:[#allocation4 + $0x30] sm:$0xff] %vm959, %v2493
      %2595 = vst.msk [vmem:[#allocation4 + $0x98] sm:$0xff] %vm959, %v2495
      %2596 = vst.msk [vmem:[#allocation4 + $0x100] sm:$0xff] %vm959, %v2497
      %2597 = vst.msk [vmem:[#allocation4 + $0x168] sm:$0xff] %vm959, %v2499
      %2598 = vst.msk [vmem:[#allocation4 + $0x1d0] sm:$0xff] %vm959, %v2501
      %2599 = vst.msk [vmem:[#allocation4 + $0x238] sm:$0xff] %vm959, %v2503
      %2600 = vst.msk [vmem:[#allocation4 + $0x2a0] sm:$0xff] %vm959, %v2505
      %2601 = vst.msk [vmem:[#allocation4 + $0x308] sm:$0xff] %vm959, %v2507
      %2602 = vst.msk [vmem:[#allocation4 + $0x370] sm:$0xff] %vm959, %v2509
      %2603 = vst.msk [vmem:[#allocation4 + $0x3d8] sm:$0xff] %vm959, %v2511
      %2604 = vst.msk [vmem:[#allocation4 + $0x440] sm:$0xff] %vm959, %v2513
      %2605 = vst.msk [vmem:[#allocation4 + $0x4a8] sm:$0xff] %vm959, %v2515
      %2606 = vst.msk [vmem:[#allocation4 + $0x510] sm:$0xff] %vm959, %v2517
      %2607 = vst.msk [vmem:[#allocation4 + $0x578] sm:$0xff] %vm959, %v2519
      %2608 = vst.msk [vmem:[#allocation4 + $0x5e0] sm:$0xff] %vm959, %v2521
      %2609 = vst.msk [vmem:[#allocation4 + $0x648] sm:$0xff] %vm959, %v2523
      %2610 = vst.msk [vmem:[#allocation4 + $0x6b0] sm:$0xff] %vm959, %v2525
      %2611 = vst.msk [vmem:[#allocation4 + $0x718] sm:$0xff] %vm959, %v2527
      %2612 = vst.msk [vmem:[#allocation4 + $0x780] sm:$0xff] %vm959, %v2529
      %2613 = vst.msk [vmem:[#allocation4 + $0x7e8] sm:$0xff] %vm959, %v2531
      %2614 = vst.msk [vmem:[#allocation4 + $0x850] sm:$0xff] %vm959, %v2533
      %2615 = vst.msk [vmem:[#allocation4 + $0x8b8] sm:$0xff] %vm959, %v2535
      %2616 = vst.msk [vmem:[#allocation4 + $0x920] sm:$0xff] %vm959, %v2537
      %2617 = vst.msk [vmem:[#allocation4 + $0x988] sm:$0xff] %vm959, %v2539
      %2618 = vst.msk [vmem:[#allocation4 + $0x9f0] sm:$0xff] %vm959, %v2541
      %2619 = vst.msk [vmem:[#allocation4 + $0xa58] sm:$0xff] %vm959, %v2543
      %2620 = vst.msk [vmem:[#allocation4 + $0xac0] sm:$0xff] %vm959, %v2545
      %2621 = vst.msk [vmem:[#allocation4 + $0xb28] sm:$0xff] %vm959, %v2547
      %2622 = vst.msk [vmem:[#allocation4 + $0xb90] sm:$0xff] %vm959, %v2549
      %2623 = vst.msk [vmem:[#allocation4 + $0xbf8] sm:$0xff] %vm959, %v2551
      %2624 = vst.msk [vmem:[#allocation4 + $0xc60] sm:$0xff] %vm959, %v2553
      %2625 = vst.msk [vmem:[#allocation4 + $0xcc8] sm:$0xff] %vm959, %v2555
      %2626 = vst.msk [vmem:[#allocation4 + $0xd30] sm:$0xff] %vm959, %v2557
      %2627 = vst.msk [vmem:[#allocation4 + $0xd98] sm:$0xff] %vm959, %v2559
      %v2628 = vld [vmem:[%s2083 + $0x4] sm:$0xff]
      %v2629 = vld [vmem:[%s2083 + $0xc] sm:$0xff]
      %v2630 = vld [vmem:[%s2083 + $0x1c] sm:$0xff]
      %v2631 = vld [vmem:[%s2083 + $0x24] sm:$0xff]
      %v2632 = vld [vmem:[%s2083 + $0x34] sm:$0xff]
      %v2633 = vld [vmem:[%s2083 + $0x3c] sm:$0xff]
      %v2634 = vld [vmem:[%s2083 + $0x4c] sm:$0xff]
      %v2635 = vld [vmem:[%s2083 + $0x54] sm:$0xff]
      %v2636 = vld [vmem:[%s2083 + $0x64] sm:$0xff]
      %v2637 = vld [vmem:[%s2083 + $0x6c] sm:$0xff]
      %v2638 = vld [vmem:[%s2083 + $0x7c] sm:$0xff]
      %v2639 = vld [vmem:[%s2083 + $0x84] sm:$0xff]
      %v2640 = vld [vmem:[%s2083 + $0x94] sm:$0xff]
      %v2641 = vld [vmem:[%s2083 + $0x9c] sm:$0xff]
      %v2642 = vld [vmem:[%s2083 + $0xac] sm:$0xff]
      %v2643 = vld [vmem:[%s2083 + $0xb4] sm:$0xff]
      %v2644 = vld [vmem:[%s2083 + $0xc4] sm:$0xff]
      %v2645 = vld [vmem:[%s2083 + $0xcc] sm:$0xff]
      %v2646 = vld [vmem:[%s2083 + $0xdc] sm:$0xff]
      %v2647 = vld [vmem:[%s2083 + $0xe4] sm:$0xff]
      %v2648 = vld [vmem:[%s2083 + $0xf4] sm:$0xff]
      %v2649 = vld [vmem:[%s2083 + $0xfc] sm:$0xff]
      %v2650 = vld [vmem:[%s2083 + $0x10c] sm:$0xff]
      %v2651 = vld [vmem:[%s2083 + $0x114] sm:$0xff]
      %v2652 = vld [vmem:[%s2083 + $0x124] sm:$0xff]
      %v2653 = vld [vmem:[%s2083 + $0x12c] sm:$0xff]
      %v2654 = vld [vmem:[%s2083 + $0x13c] sm:$0xff]
      %v2655 = vld [vmem:[%s2083 + $0x144] sm:$0xff]
      %v2656 = vld [vmem:[%s2083 + $0x154] sm:$0xff]
      %v2657 = vld [vmem:[%s2083 + $0x15c] sm:$0xff]
      %v2658 = vld [vmem:[%s2083 + $0x16c] sm:$0xff]
      %v2659 = vld [vmem:[%s2083 + $0x174] sm:$0xff]
      %v2660 = vld [vmem:[%s2083 + $0x184] sm:$0xff]
      %v2661 = vld [vmem:[%s2083 + $0x18c] sm:$0xff]
      %2662 = vst.msk [vmem:[#allocation4 + $0x38] sm:$0xff] %vm292, %v2628
      %2663 = vst.msk [vmem:[#allocation4 + $0xa0] sm:$0xff] %vm292, %v2629
      %2664 = vst.msk [vmem:[#allocation4 + $0x108] sm:$0xff] %vm292, %v2630
      %2665 = vst.msk [vmem:[#allocation4 + $0x170] sm:$0xff] %vm292, %v2631
      %2666 = vst.msk [vmem:[#allocation4 + $0x1d8] sm:$0xff] %vm292, %v2632
      %2667 = vst.msk [vmem:[#allocation4 + $0x240] sm:$0xff] %vm292, %v2633
      %2668 = vst.msk [vmem:[#allocation4 + $0x2a8] sm:$0xff] %vm292, %v2634
      %2669 = vst.msk [vmem:[#allocation4 + $0x310] sm:$0xff] %vm292, %v2635
      %2670 = vst.msk [vmem:[#allocation4 + $0x378] sm:$0xff] %vm292, %v2636
      %2671 = vst.msk [vmem:[#allocation4 + $0x3e0] sm:$0xff] %vm292, %v2637
      %2672 = vst.msk [vmem:[#allocation4 + $0x448] sm:$0xff] %vm292, %v2638
      %2673 = vst.msk [vmem:[#allocation4 + $0x4b0] sm:$0xff] %vm292, %v2639
      %2674 = vst.msk [vmem:[#allocation4 + $0x518] sm:$0xff] %vm292, %v2640
      %2675 = vst.msk [vmem:[#allocation4 + $0x580] sm:$0xff] %vm292, %v2641
      %2676 = vst.msk [vmem:[#allocation4 + $0x5e8] sm:$0xff] %vm292, %v2642
      %2677 = vst.msk [vmem:[#allocation4 + $0x650] sm:$0xff] %vm292, %v2643
      %2678 = vst.msk [vmem:[#allocation4 + $0x6b8] sm:$0xff] %vm292, %v2644
      %2679 = vst.msk [vmem:[#allocation4 + $0x720] sm:$0xff] %vm292, %v2645
      %2680 = vst.msk [vmem:[#allocation4 + $0x788] sm:$0xff] %vm292, %v2646
      %2681 = vst.msk [vmem:[#allocation4 + $0x7f0] sm:$0xff] %vm292, %v2647
      %2682 = vst.msk [vmem:[#allocation4 + $0x858] sm:$0xff] %vm292, %v2648
      %2683 = vst.msk [vmem:[#allocation4 + $0x8c0] sm:$0xff] %vm292, %v2649
      %2684 = vst.msk [vmem:[#allocation4 + $0x928] sm:$0xff] %vm292, %v2650
      %2685 = vst.msk [vmem:[#allocation4 + $0x990] sm:$0xff] %vm292, %v2651
      %2686 = vst.msk [vmem:[#allocation4 + $0x9f8] sm:$0xff] %vm292, %v2652
      %2687 = vst.msk [vmem:[#allocation4 + $0xa60] sm:$0xff] %vm292, %v2653
      %2688 = vst.msk [vmem:[#allocation4 + $0xac8] sm:$0xff] %vm292, %v2654
      %2689 = vst.msk [vmem:[#allocation4 + $0xb30] sm:$0xff] %vm292, %v2655
      %2690 = vst.msk [vmem:[#allocation4 + $0xb98] sm:$0xff] %vm292, %v2656
      %2691 = vst.msk [vmem:[#allocation4 + $0xc00] sm:$0xff] %vm292, %v2657
      %2692 = vst.msk [vmem:[#allocation4 + $0xc68] sm:$0xff] %vm292, %v2658
      %2693 = vst.msk [vmem:[#allocation4 + $0xcd0] sm:$0xff] %vm292, %v2659
      %2694 = vst.msk [vmem:[#allocation4 + $0xd38] sm:$0xff] %vm292, %v2660
      %2695 = vst.msk [vmem:[#allocation4 + $0xda0] sm:$0xff] %vm292, %v2661
      %v2696 = vld [vmem:[%s655] sm:$0xff]
      %v2697 = vld [vmem:[%s655 + $0x8] sm:$0xff]
      %v2698 = vld [vmem:[%s655 + $0x18] sm:$0xff]
      %v2699 = vld [vmem:[%s655 + $0x20] sm:$0xff]
      %v2700 = vld [vmem:[%s655 + $0x30] sm:$0xff]
      %v2701 = vld [vmem:[%s655 + $0x38] sm:$0xff]
      %v2702 = vld [vmem:[%s655 + $0x48] sm:$0xff]
      %v2703 = vld [vmem:[%s655 + $0x50] sm:$0xff]
      %v2704 = vld [vmem:[%s655 + $0x60] sm:$0xff]
      %v2705 = vld [vmem:[%s655 + $0x68] sm:$0xff]
      %v2706 = vld [vmem:[%s655 + $0x78] sm:$0xff]
      %v2707 = vld [vmem:[%s655 + $0x80] sm:$0xff]
      %v2708 = vld [vmem:[%s655 + $0x90] sm:$0xff]
      %v2709 = vld [vmem:[%s655 + $0x98] sm:$0xff]
      %v2710 = vld [vmem:[%s655 + $0xa8] sm:$0xff]
      %v2711 = vld [vmem:[%s655 + $0xb0] sm:$0xff]
      %v2712 = vld [vmem:[%s655 + $0xc0] sm:$0xff]
      %v2713 = vld [vmem:[%s655 + $0xc8] sm:$0xff]
      %v2714 = vld [vmem:[%s655 + $0xd8] sm:$0xff]
      %v2715 = vld [vmem:[%s655 + $0xe0] sm:$0xff]
      %v2716 = vld [vmem:[%s655 + $0xf0] sm:$0xff]
      %v2717 = vld [vmem:[%s655 + $0xf8] sm:$0xff]
      %v2718 = vld [vmem:[%s655 + $0x108] sm:$0xff]
      %v2719 = vld [vmem:[%s655 + $0x110] sm:$0xff]
      %v2720 = vld [vmem:[%s655 + $0x120] sm:$0xff]
      %v2721 = vld [vmem:[%s655 + $0x128] sm:$0xff]
      %v2722 = vld [vmem:[%s655 + $0x138] sm:$0xff]
      %v2723 = vld [vmem:[%s655 + $0x140] sm:$0xff]
      %v2724 = vld [vmem:[%s655 + $0x150] sm:$0xff]
      %v2725 = vld [vmem:[%s655 + $0x158] sm:$0xff]
      %v2726 = vld [vmem:[%s655 + $0x168] sm:$0xff]
      %v2727 = vld [vmem:[%s655 + $0x170] sm:$0xff]
      %v2728 = vld [vmem:[%s655 + $0x180] sm:$0xff]
      %v2729 = vld [vmem:[%s655 + $0x188] sm:$0xff]
      %2764 = vrot.lane.b32.xlu0 %v2696, 64
      %v2765 = vpop.permute.xlu0 %2764
      %2766 = vrot.lane.b32.xlu0 %v2697, 64
      %v2767 = vpop.permute.xlu0 %2766
      %2768 = vrot.lane.b32.xlu0 %v2698, 64
      %v2769 = vpop.permute.xlu0 %2768
      %2770 = vrot.lane.b32.xlu0 %v2699, 64
      %v2771 = vpop.permute.xlu0 %2770
      %2772 = vrot.lane.b32.xlu0 %v2700, 64
      %v2773 = vpop.permute.xlu0 %2772
      %2774 = vrot.lane.b32.xlu0 %v2701, 64
      %v2775 = vpop.permute.xlu0 %2774
      %2776 = vrot.lane.b32.xlu0 %v2702, 64
      %v2777 = vpop.permute.xlu0 %2776
      %2778 = vrot.lane.b32.xlu0 %v2703, 64
      %v2779 = vpop.permute.xlu0 %2778
      %2780 = vrot.lane.b32.xlu0 %v2704, 64
      %v2781 = vpop.permute.xlu0 %2780
      %2782 = vrot.lane.b32.xlu0 %v2705, 64
      %v2783 = vpop.permute.xlu0 %2782
      %2784 = vrot.lane.b32.xlu0 %v2706, 64
      %v2785 = vpop.permute.xlu0 %2784
      %2786 = vrot.lane.b32.xlu0 %v2707, 64
      %v2787 = vpop.permute.xlu0 %2786
      %2788 = vrot.lane.b32.xlu0 %v2708, 64
      %v2789 = vpop.permute.xlu0 %2788
      %2790 = vrot.lane.b32.xlu0 %v2709, 64
      %v2791 = vpop.permute.xlu0 %2790
      %2792 = vrot.lane.b32.xlu0 %v2710, 64
      %v2793 = vpop.permute.xlu0 %2792
      %2794 = vrot.lane.b32.xlu0 %v2711, 64
      %v2795 = vpop.permute.xlu0 %2794
      %2796 = vrot.lane.b32.xlu0 %v2712, 64
      %v2797 = vpop.permute.xlu0 %2796
      %2798 = vrot.lane.b32.xlu0 %v2713, 64
      %v2799 = vpop.permute.xlu0 %2798
      %2800 = vrot.lane.b32.xlu0 %v2714, 64
      %v2801 = vpop.permute.xlu0 %2800
      %2802 = vrot.lane.b32.xlu0 %v2715, 64
      %v2803 = vpop.permute.xlu0 %2802
      %2804 = vrot.lane.b32.xlu0 %v2716, 64
      %v2805 = vpop.permute.xlu0 %2804
      %2806 = vrot.lane.b32.xlu0 %v2717, 64
      %v2807 = vpop.permute.xlu0 %2806
      %2808 = vrot.lane.b32.xlu0 %v2718, 64
      %v2809 = vpop.permute.xlu0 %2808
      %2810 = vrot.lane.b32.xlu0 %v2719, 64
      %v2811 = vpop.permute.xlu0 %2810
      %2812 = vrot.lane.b32.xlu0 %v2720, 64
      %v2813 = vpop.permute.xlu0 %2812
      %2814 = vrot.lane.b32.xlu0 %v2721, 64
      %v2815 = vpop.permute.xlu0 %2814
      %2816 = vrot.lane.b32.xlu0 %v2722, 64
      %v2817 = vpop.permute.xlu0 %2816
      %2818 = vrot.lane.b32.xlu0 %v2723, 64
      %v2819 = vpop.permute.xlu0 %2818
      %2820 = vrot.lane.b32.xlu0 %v2724, 64
      %v2821 = vpop.permute.xlu0 %2820
      %2822 = vrot.lane.b32.xlu0 %v2725, 64
      %v2823 = vpop.permute.xlu0 %2822
      %2824 = vrot.lane.b32.xlu0 %v2726, 64
      %v2825 = vpop.permute.xlu0 %2824
      %2826 = vrot.lane.b32.xlu0 %v2727, 64
      %v2827 = vpop.permute.xlu0 %2826
      %2828 = vrot.lane.b32.xlu0 %v2728, 64
      %v2829 = vpop.permute.xlu0 %2828
      %2830 = vrot.lane.b32.xlu0 %v2729, 64
      %v2831 = vpop.permute.xlu0 %2830
      %2866 = vst.msk [vmem:[#allocation4 + $0x38] sm:$0xff] %vm959, %v2765
      %2867 = vst.msk [vmem:[#allocation4 + $0xa0] sm:$0xff] %vm959, %v2767
      %2868 = vst.msk [vmem:[#allocation4 + $0x108] sm:$0xff] %vm959, %v2769
      %2869 = vst.msk [vmem:[#allocation4 + $0x170] sm:$0xff] %vm959, %v2771
      %2870 = vst.msk [vmem:[#allocation4 + $0x1d8] sm:$0xff] %vm959, %v2773
      %2871 = vst.msk [vmem:[#allocation4 + $0x240] sm:$0xff] %vm959, %v2775
      %2872 = vst.msk [vmem:[#allocation4 + $0x2a8] sm:$0xff] %vm959, %v2777
      %2873 = vst.msk [vmem:[#allocation4 + $0x310] sm:$0xff] %vm959, %v2779
      %2874 = vst.msk [vmem:[#allocation4 + $0x378] sm:$0xff] %vm959, %v2781
      %2875 = vst.msk [vmem:[#allocation4 + $0x3e0] sm:$0xff] %vm959, %v2783
      %2876 = vst.msk [vmem:[#allocation4 + $0x448] sm:$0xff] %vm959, %v2785
      %2877 = vst.msk [vmem:[#allocation4 + $0x4b0] sm:$0xff] %vm959, %v2787
      %2878 = vst.msk [vmem:[#allocation4 + $0x518] sm:$0xff] %vm959, %v2789
      %2879 = vst.msk [vmem:[#allocation4 + $0x580] sm:$0xff] %vm959, %v2791
      %2880 = vst.msk [vmem:[#allocation4 + $0x5e8] sm:$0xff] %vm959, %v2793
      %2881 = vst.msk [vmem:[#allocation4 + $0x650] sm:$0xff] %vm959, %v2795
      %2882 = vst.msk [vmem:[#allocation4 + $0x6b8] sm:$0xff] %vm959, %v2797
      %2883 = vst.msk [vmem:[#allocation4 + $0x720] sm:$0xff] %vm959, %v2799
      %2884 = vst.msk [vmem:[#allocation4 + $0x788] sm:$0xff] %vm959, %v2801
      %2885 = vst.msk [vmem:[#allocation4 + $0x7f0] sm:$0xff] %vm959, %v2803
      %2886 = vst.msk [vmem:[#allocation4 + $0x858] sm:$0xff] %vm959, %v2805
      %2887 = vst.msk [vmem:[#allocation4 + $0x8c0] sm:$0xff] %vm959, %v2807
      %2888 = vst.msk [vmem:[#allocation4 + $0x928] sm:$0xff] %vm959, %v2809
      %2889 = vst.msk [vmem:[#allocation4 + $0x990] sm:$0xff] %vm959, %v2811
      %2890 = vst.msk [vmem:[#allocation4 + $0x9f8] sm:$0xff] %vm959, %v2813
      %2891 = vst.msk [vmem:[#allocation4 + $0xa60] sm:$0xff] %vm959, %v2815
      %2892 = vst.msk [vmem:[#allocation4 + $0xac8] sm:$0xff] %vm959, %v2817
      %2893 = vst.msk [vmem:[#allocation4 + $0xb30] sm:$0xff] %vm959, %v2819
      %2894 = vst.msk [vmem:[#allocation4 + $0xb98] sm:$0xff] %vm959, %v2821
      %2895 = vst.msk [vmem:[#allocation4 + $0xc00] sm:$0xff] %vm959, %v2823
      %2896 = vst.msk [vmem:[#allocation4 + $0xc68] sm:$0xff] %vm959, %v2825
      %2897 = vst.msk [vmem:[#allocation4 + $0xcd0] sm:$0xff] %vm959, %v2827
      %2898 = vst.msk [vmem:[#allocation4 + $0xd38] sm:$0xff] %vm959, %v2829
      %2899 = vst.msk [vmem:[#allocation4 + $0xda0] sm:$0xff] %vm959, %v2831
      %v2900 = vld [vmem:[%s655 + $0x1] sm:$0xff]
      %v2901 = vld [vmem:[%s655 + $0x9] sm:$0xff]
      %v2902 = vld [vmem:[%s655 + $0x19] sm:$0xff]
      %v2903 = vld [vmem:[%s655 + $0x21] sm:$0xff]
      %v2904 = vld [vmem:[%s655 + $0x31] sm:$0xff]
      %v2905 = vld [vmem:[%s655 + $0x39] sm:$0xff]
      %v2906 = vld [vmem:[%s655 + $0x49] sm:$0xff]
      %v2907 = vld [vmem:[%s655 + $0x51] sm:$0xff]
      %v2908 = vld [vmem:[%s655 + $0x61] sm:$0xff]
      %v2909 = vld [vmem:[%s655 + $0x69] sm:$0xff]
      %v2910 = vld [vmem:[%s655 + $0x79] sm:$0xff]
      %v2911 = vld [vmem:[%s655 + $0x81] sm:$0xff]
      %v2912 = vld [vmem:[%s655 + $0x91] sm:$0xff]
      %v2913 = vld [vmem:[%s655 + $0x99] sm:$0xff]
      %v2914 = vld [vmem:[%s655 + $0xa9] sm:$0xff]
      %v2915 = vld [vmem:[%s655 + $0xb1] sm:$0xff]
      %v2916 = vld [vmem:[%s655 + $0xc1] sm:$0xff]
      %v2917 = vld [vmem:[%s655 + $0xc9] sm:$0xff]
      %v2918 = vld [vmem:[%s655 + $0xd9] sm:$0xff]
      %v2919 = vld [vmem:[%s655 + $0xe1] sm:$0xff]
      %v2920 = vld [vmem:[%s655 + $0xf1] sm:$0xff]
      %v2921 = vld [vmem:[%s655 + $0xf9] sm:$0xff]
      %v2922 = vld [vmem:[%s655 + $0x109] sm:$0xff]
      %v2923 = vld [vmem:[%s655 + $0x111] sm:$0xff]
      %v2924 = vld [vmem:[%s655 + $0x121] sm:$0xff]
      %v2925 = vld [vmem:[%s655 + $0x129] sm:$0xff]
      %v2926 = vld [vmem:[%s655 + $0x139] sm:$0xff]
      %v2927 = vld [vmem:[%s655 + $0x141] sm:$0xff]
      %v2928 = vld [vmem:[%s655 + $0x151] sm:$0xff]
      %v2929 = vld [vmem:[%s655 + $0x159] sm:$0xff]
      %v2930 = vld [vmem:[%s655 + $0x169] sm:$0xff]
      %v2931 = vld [vmem:[%s655 + $0x171] sm:$0xff]
      %v2932 = vld [vmem:[%s655 + $0x181] sm:$0xff]
      %v2933 = vld [vmem:[%s655 + $0x189] sm:$0xff]
      %2934 = vst.msk [vmem:[#allocation4 + $0x40] sm:$0xff] %vm292, %v2900
      %2935 = vst.msk [vmem:[#allocation4 + $0xa8] sm:$0xff] %vm292, %v2901
      %2936 = vst.msk [vmem:[#allocation4 + $0x110] sm:$0xff] %vm292, %v2902
      %2937 = vst.msk [vmem:[#allocation4 + $0x178] sm:$0xff] %vm292, %v2903
      %2938 = vst.msk [vmem:[#allocation4 + $0x1e0] sm:$0xff] %vm292, %v2904
      %2939 = vst.msk [vmem:[#allocation4 + $0x248] sm:$0xff] %vm292, %v2905
      %2940 = vst.msk [vmem:[#allocation4 + $0x2b0] sm:$0xff] %vm292, %v2906
      %2941 = vst.msk [vmem:[#allocation4 + $0x318] sm:$0xff] %vm292, %v2907
      %2942 = vst.msk [vmem:[#allocation4 + $0x380] sm:$0xff] %vm292, %v2908
      %2943 = vst.msk [vmem:[#allocation4 + $0x3e8] sm:$0xff] %vm292, %v2909
      %2944 = vst.msk [vmem:[#allocation4 + $0x450] sm:$0xff] %vm292, %v2910
      %2945 = vst.msk [vmem:[#allocation4 + $0x4b8] sm:$0xff] %vm292, %v2911
      %2946 = vst.msk [vmem:[#allocation4 + $0x520] sm:$0xff] %vm292, %v2912
      %2947 = vst.msk [vmem:[#allocation4 + $0x588] sm:$0xff] %vm292, %v2913
      %2948 = vst.msk [vmem:[#allocation4 + $0x5f0] sm:$0xff] %vm292, %v2914
      %2949 = vst.msk [vmem:[#allocation4 + $0x658] sm:$0xff] %vm292, %v2915
      %2950 = vst.msk [vmem:[#allocation4 + $0x6c0] sm:$0xff] %vm292, %v2916
      %2951 = vst.msk [vmem:[#allocation4 + $0x728] sm:$0xff] %vm292, %v2917
      %2952 = vst.msk [vmem:[#allocation4 + $0x790] sm:$0xff] %vm292, %v2918
      %2953 = vst.msk [vmem:[#allocation4 + $0x7f8] sm:$0xff] %vm292, %v2919
      %2954 = vst.msk [vmem:[#allocation4 + $0x860] sm:$0xff] %vm292, %v2920
      %2955 = vst.msk [vmem:[#allocation4 + $0x8c8] sm:$0xff] %vm292, %v2921
      %2956 = vst.msk [vmem:[#allocation4 + $0x930] sm:$0xff] %vm292, %v2922
      %2957 = vst.msk [vmem:[#allocation4 + $0x998] sm:$0xff] %vm292, %v2923
      %2958 = vst.msk [vmem:[#allocation4 + $0xa00] sm:$0xff] %vm292, %v2924
      %2959 = vst.msk [vmem:[#allocation4 + $0xa68] sm:$0xff] %vm292, %v2925
      %2960 = vst.msk [vmem:[#allocation4 + $0xad0] sm:$0xff] %vm292, %v2926
      %2961 = vst.msk [vmem:[#allocation4 + $0xb38] sm:$0xff] %vm292, %v2927
      %2962 = vst.msk [vmem:[#allocation4 + $0xba0] sm:$0xff] %vm292, %v2928
      %2963 = vst.msk [vmem:[#allocation4 + $0xc08] sm:$0xff] %vm292, %v2929
      %2964 = vst.msk [vmem:[#allocation4 + $0xc70] sm:$0xff] %vm292, %v2930
      %2965 = vst.msk [vmem:[#allocation4 + $0xcd8] sm:$0xff] %vm292, %v2931
      %2966 = vst.msk [vmem:[#allocation4 + $0xd40] sm:$0xff] %vm292, %v2932
      %2967 = vst.msk [vmem:[#allocation4 + $0xda8] sm:$0xff] %vm292, %v2933
      %v2968 = vld [vmem:[%s655 + $0x2] sm:$0xff]
      %v2969 = vld [vmem:[%s655 + $0xa] sm:$0xff]
      %v2970 = vld [vmem:[%s655 + $0x1a] sm:$0xff]
      %v2971 = vld [vmem:[%s655 + $0x22] sm:$0xff]
      %v2972 = vld [vmem:[%s655 + $0x32] sm:$0xff]
      %v2973 = vld [vmem:[%s655 + $0x3a] sm:$0xff]
      %v2974 = vld [vmem:[%s655 + $0x4a] sm:$0xff]
      %v2975 = vld [vmem:[%s655 + $0x52] sm:$0xff]
      %v2976 = vld [vmem:[%s655 + $0x62] sm:$0xff]
      %v2977 = vld [vmem:[%s655 + $0x6a] sm:$0xff]
      %v2978 = vld [vmem:[%s655 + $0x7a] sm:$0xff]
      %v2979 = vld [vmem:[%s655 + $0x82] sm:$0xff]
      %v2980 = vld [vmem:[%s655 + $0x92] sm:$0xff]
      %v2981 = vld [vmem:[%s655 + $0x9a] sm:$0xff]
      %v2982 = vld [vmem:[%s655 + $0xaa] sm:$0xff]
      %v2983 = vld [vmem:[%s655 + $0xb2] sm:$0xff]
      %v2984 = vld [vmem:[%s655 + $0xc2] sm:$0xff]
      %v2985 = vld [vmem:[%s655 + $0xca] sm:$0xff]
      %v2986 = vld [vmem:[%s655 + $0xda] sm:$0xff]
      %v2987 = vld [vmem:[%s655 + $0xe2] sm:$0xff]
      %v2988 = vld [vmem:[%s655 + $0xf2] sm:$0xff]
      %v2989 = vld [vmem:[%s655 + $0xfa] sm:$0xff]
      %v2990 = vld [vmem:[%s655 + $0x10a] sm:$0xff]
      %v2991 = vld [vmem:[%s655 + $0x112] sm:$0xff]
      %v2992 = vld [vmem:[%s655 + $0x122] sm:$0xff]
      %v2993 = vld [vmem:[%s655 + $0x12a] sm:$0xff]
      %v2994 = vld [vmem:[%s655 + $0x13a] sm:$0xff]
      %v2995 = vld [vmem:[%s655 + $0x142] sm:$0xff]
      %v2996 = vld [vmem:[%s655 + $0x152] sm:$0xff]
      %v2997 = vld [vmem:[%s655 + $0x15a] sm:$0xff]
      %v2998 = vld [vmem:[%s655 + $0x16a] sm:$0xff]
      %v2999 = vld [vmem:[%s655 + $0x172] sm:$0xff]
      %v3000 = vld [vmem:[%s655 + $0x182] sm:$0xff]
      %v3001 = vld [vmem:[%s655 + $0x18a] sm:$0xff]
      %3036 = vrot.lane.b32.xlu0 %v2968, 64
      %v3037 = vpop.permute.xlu0 %3036
      %3038 = vrot.lane.b32.xlu0 %v2969, 64
      %v3039 = vpop.permute.xlu0 %3038
      %3040 = vrot.lane.b32.xlu0 %v2970, 64
      %v3041 = vpop.permute.xlu0 %3040
      %3042 = vrot.lane.b32.xlu0 %v2971, 64
      %v3043 = vpop.permute.xlu0 %3042
      %3044 = vrot.lane.b32.xlu0 %v2972, 64
      %v3045 = vpop.permute.xlu0 %3044
      %3046 = vrot.lane.b32.xlu0 %v2973, 64
      %v3047 = vpop.permute.xlu0 %3046
      %3048 = vrot.lane.b32.xlu0 %v2974, 64
      %v3049 = vpop.permute.xlu0 %3048
      %3050 = vrot.lane.b32.xlu0 %v2975, 64
      %v3051 = vpop.permute.xlu0 %3050
      %3052 = vrot.lane.b32.xlu0 %v2976, 64
      %v3053 = vpop.permute.xlu0 %3052
      %3054 = vrot.lane.b32.xlu0 %v2977, 64
      %v3055 = vpop.permute.xlu0 %3054
      %3056 = vrot.lane.b32.xlu0 %v2978, 64
      %v3057 = vpop.permute.xlu0 %3056
      %3058 = vrot.lane.b32.xlu0 %v2979, 64
      %v3059 = vpop.permute.xlu0 %3058
      %3060 = vrot.lane.b32.xlu0 %v2980, 64
      %v3061 = vpop.permute.xlu0 %3060
      %3062 = vrot.lane.b32.xlu0 %v2981, 64
      %v3063 = vpop.permute.xlu0 %3062
      %3064 = vrot.lane.b32.xlu0 %v2982, 64
      %v3065 = vpop.permute.xlu0 %3064
      %3066 = vrot.lane.b32.xlu0 %v2983, 64
      %v3067 = vpop.permute.xlu0 %3066
      %3068 = vrot.lane.b32.xlu0 %v2984, 64
      %v3069 = vpop.permute.xlu0 %3068
      %3070 = vrot.lane.b32.xlu0 %v2985, 64
      %v3071 = vpop.permute.xlu0 %3070
      %3072 = vrot.lane.b32.xlu0 %v2986, 64
      %v3073 = vpop.permute.xlu0 %3072
      %3074 = vrot.lane.b32.xlu0 %v2987, 64
      %v3075 = vpop.permute.xlu0 %3074
      %3076 = vrot.lane.b32.xlu0 %v2988, 64
      %v3077 = vpop.permute.xlu0 %3076
      %3078 = vrot.lane.b32.xlu0 %v2989, 64
      %v3079 = vpop.permute.xlu0 %3078
      %3080 = vrot.lane.b32.xlu0 %v2990, 64
      %v3081 = vpop.permute.xlu0 %3080
      %3082 = vrot.lane.b32.xlu0 %v2991, 64
      %v3083 = vpop.permute.xlu0 %3082
      %3084 = vrot.lane.b32.xlu0 %v2992, 64
      %v3085 = vpop.permute.xlu0 %3084
      %3086 = vrot.lane.b32.xlu0 %v2993, 64
      %v3087 = vpop.permute.xlu0 %3086
      %3088 = vrot.lane.b32.xlu0 %v2994, 64
      %v3089 = vpop.permute.xlu0 %3088
      %3090 = vrot.lane.b32.xlu0 %v2995, 64
      %v3091 = vpop.permute.xlu0 %3090
      %3092 = vrot.lane.b32.xlu0 %v2996, 64
      %v3093 = vpop.permute.xlu0 %3092
      %3094 = vrot.lane.b32.xlu0 %v2997, 64
      %v3095 = vpop.permute.xlu0 %3094
      %3096 = vrot.lane.b32.xlu0 %v2998, 64
      %v3097 = vpop.permute.xlu0 %3096
      %3098 = vrot.lane.b32.xlu0 %v2999, 64
      %v3099 = vpop.permute.xlu0 %3098
      %3100 = vrot.lane.b32.xlu0 %v3000, 64
      %v3101 = vpop.permute.xlu0 %3100
      %3102 = vrot.lane.b32.xlu0 %v3001, 64
      %v3103 = vpop.permute.xlu0 %3102
      %3138 = vst.msk [vmem:[#allocation4 + $0x40] sm:$0xff] %vm959, %v3037
      %3139 = vst.msk [vmem:[#allocation4 + $0xa8] sm:$0xff] %vm959, %v3039
      %3140 = vst.msk [vmem:[#allocation4 + $0x110] sm:$0xff] %vm959, %v3041
      %3141 = vst.msk [vmem:[#allocation4 + $0x178] sm:$0xff] %vm959, %v3043
      %3142 = vst.msk [vmem:[#allocation4 + $0x1e0] sm:$0xff] %vm959, %v3045
      %3143 = vst.msk [vmem:[#allocation4 + $0x248] sm:$0xff] %vm959, %v3047
      %3144 = vst.msk [vmem:[#allocation4 + $0x2b0] sm:$0xff] %vm959, %v3049
      %3145 = vst.msk [vmem:[#allocation4 + $0x318] sm:$0xff] %vm959, %v3051
      %3146 = vst.msk [vmem:[#allocation4 + $0x380] sm:$0xff] %vm959, %v3053
      %3147 = vst.msk [vmem:[#allocation4 + $0x3e8] sm:$0xff] %vm959, %v3055
      %3148 = vst.msk [vmem:[#allocation4 + $0x450] sm:$0xff] %vm959, %v3057
      %3149 = vst.msk [vmem:[#allocation4 + $0x4b8] sm:$0xff] %vm959, %v3059
      %3150 = vst.msk [vmem:[#allocation4 + $0x520] sm:$0xff] %vm959, %v3061
      %3151 = vst.msk [vmem:[#allocation4 + $0x588] sm:$0xff] %vm959, %v3063
      %3152 = vst.msk [vmem:[#allocation4 + $0x5f0] sm:$0xff] %vm959, %v3065
      %3153 = vst.msk [vmem:[#allocation4 + $0x658] sm:$0xff] %vm959, %v3067
      %3154 = vst.msk [vmem:[#allocation4 + $0x6c0] sm:$0xff] %vm959, %v3069
      %3155 = vst.msk [vmem:[#allocation4 + $0x728] sm:$0xff] %vm959, %v3071
      %3156 = vst.msk [vmem:[#allocation4 + $0x790] sm:$0xff] %vm959, %v3073
      %3157 = vst.msk [vmem:[#allocation4 + $0x7f8] sm:$0xff] %vm959, %v3075
      %3158 = vst.msk [vmem:[#allocation4 + $0x860] sm:$0xff] %vm959, %v3077
      %3159 = vst.msk [vmem:[#allocation4 + $0x8c8] sm:$0xff] %vm959, %v3079
      %3160 = vst.msk [vmem:[#allocation4 + $0x930] sm:$0xff] %vm959, %v3081
      %3161 = vst.msk [vmem:[#allocation4 + $0x998] sm:$0xff] %vm959, %v3083
      %3162 = vst.msk [vmem:[#allocation4 + $0xa00] sm:$0xff] %vm959, %v3085
      %3163 = vst.msk [vmem:[#allocation4 + $0xa68] sm:$0xff] %vm959, %v3087
      %3164 = vst.msk [vmem:[#allocation4 + $0xad0] sm:$0xff] %vm959, %v3089
      %3165 = vst.msk [vmem:[#allocation4 + $0xb38] sm:$0xff] %vm959, %v3091
      %3166 = vst.msk [vmem:[#allocation4 + $0xba0] sm:$0xff] %vm959, %v3093
      %3167 = vst.msk [vmem:[#allocation4 + $0xc08] sm:$0xff] %vm959, %v3095
      %3168 = vst.msk [vmem:[#allocation4 + $0xc70] sm:$0xff] %vm959, %v3097
      %3169 = vst.msk [vmem:[#allocation4 + $0xcd8] sm:$0xff] %vm959, %v3099
      %3170 = vst.msk [vmem:[#allocation4 + $0xd40] sm:$0xff] %vm959, %v3101
      %3171 = vst.msk [vmem:[#allocation4 + $0xda8] sm:$0xff] %vm959, %v3103
      %v3172 = vld [vmem:[%s655 + $0x3] sm:$0xff]
      %v3173 = vld [vmem:[%s655 + $0xb] sm:$0xff]
      %v3174 = vld [vmem:[%s655 + $0x1b] sm:$0xff]
      %v3175 = vld [vmem:[%s655 + $0x23] sm:$0xff]
      %v3176 = vld [vmem:[%s655 + $0x33] sm:$0xff]
      %v3177 = vld [vmem:[%s655 + $0x3b] sm:$0xff]
      %v3178 = vld [vmem:[%s655 + $0x4b] sm:$0xff]
      %v3179 = vld [vmem:[%s655 + $0x53] sm:$0xff]
      %v3180 = vld [vmem:[%s655 + $0x63] sm:$0xff]
      %v3181 = vld [vmem:[%s655 + $0x6b] sm:$0xff]
      %v3182 = vld [vmem:[%s655 + $0x7b] sm:$0xff]
      %v3183 = vld [vmem:[%s655 + $0x83] sm:$0xff]
      %v3184 = vld [vmem:[%s655 + $0x93] sm:$0xff]
      %v3185 = vld [vmem:[%s655 + $0x9b] sm:$0xff]
      %v3186 = vld [vmem:[%s655 + $0xab] sm:$0xff]
      %v3187 = vld [vmem:[%s655 + $0xb3] sm:$0xff]
      %v3188 = vld [vmem:[%s655 + $0xc3] sm:$0xff]
      %v3189 = vld [vmem:[%s655 + $0xcb] sm:$0xff]
      %v3190 = vld [vmem:[%s655 + $0xdb] sm:$0xff]
      %v3191 = vld [vmem:[%s655 + $0xe3] sm:$0xff]
      %v3192 = vld [vmem:[%s655 + $0xf3] sm:$0xff]
      %v3193 = vld [vmem:[%s655 + $0xfb] sm:$0xff]
      %v3194 = vld [vmem:[%s655 + $0x10b] sm:$0xff]
      %v3195 = vld [vmem:[%s655 + $0x113] sm:$0xff]
      %v3196 = vld [vmem:[%s655 + $0x123] sm:$0xff]
      %v3197 = vld [vmem:[%s655 + $0x12b] sm:$0xff]
      %v3198 = vld [vmem:[%s655 + $0x13b] sm:$0xff]
      %v3199 = vld [vmem:[%s655 + $0x143] sm:$0xff]
      %v3200 = vld [vmem:[%s655 + $0x153] sm:$0xff]
      %v3201 = vld [vmem:[%s655 + $0x15b] sm:$0xff]
      %v3202 = vld [vmem:[%s655 + $0x16b] sm:$0xff]
      %v3203 = vld [vmem:[%s655 + $0x173] sm:$0xff]
      %v3204 = vld [vmem:[%s655 + $0x183] sm:$0xff]
      %v3205 = vld [vmem:[%s655 + $0x18b] sm:$0xff]
      %3206 = vst.msk [vmem:[#allocation4 + $0x48] sm:$0xff] %vm292, %v3172
      %3207 = vst.msk [vmem:[#allocation4 + $0xb0] sm:$0xff] %vm292, %v3173
      %3208 = vst.msk [vmem:[#allocation4 + $0x118] sm:$0xff] %vm292, %v3174
      %3209 = vst.msk [vmem:[#allocation4 + $0x180] sm:$0xff] %vm292, %v3175
      %3210 = vst.msk [vmem:[#allocation4 + $0x1e8] sm:$0xff] %vm292, %v3176
      %3211 = vst.msk [vmem:[#allocation4 + $0x250] sm:$0xff] %vm292, %v3177
      %3212 = vst.msk [vmem:[#allocation4 + $0x2b8] sm:$0xff] %vm292, %v3178
      %3213 = vst.msk [vmem:[#allocation4 + $0x320] sm:$0xff] %vm292, %v3179
      %3214 = vst.msk [vmem:[#allocation4 + $0x388] sm:$0xff] %vm292, %v3180
      %3215 = vst.msk [vmem:[#allocation4 + $0x3f0] sm:$0xff] %vm292, %v3181
      %3216 = vst.msk [vmem:[#allocation4 + $0x458] sm:$0xff] %vm292, %v3182
      %3217 = vst.msk [vmem:[#allocation4 + $0x4c0] sm:$0xff] %vm292, %v3183
      %3218 = vst.msk [vmem:[#allocation4 + $0x528] sm:$0xff] %vm292, %v3184
      %3219 = vst.msk [vmem:[#allocation4 + $0x590] sm:$0xff] %vm292, %v3185
      %3220 = vst.msk [vmem:[#allocation4 + $0x5f8] sm:$0xff] %vm292, %v3186
      %3221 = vst.msk [vmem:[#allocation4 + $0x660] sm:$0xff] %vm292, %v3187
      %3222 = vst.msk [vmem:[#allocation4 + $0x6c8] sm:$0xff] %vm292, %v3188
      %3223 = vst.msk [vmem:[#allocation4 + $0x730] sm:$0xff] %vm292, %v3189
      %3224 = vst.msk [vmem:[#allocation4 + $0x798] sm:$0xff] %vm292, %v3190
      %3225 = vst.msk [vmem:[#allocation4 + $0x800] sm:$0xff] %vm292, %v3191
      %3226 = vst.msk [vmem:[#allocation4 + $0x868] sm:$0xff] %vm292, %v3192
      %3227 = vst.msk [vmem:[#allocation4 + $0x8d0] sm:$0xff] %vm292, %v3193
      %3228 = vst.msk [vmem:[#allocation4 + $0x938] sm:$0xff] %vm292, %v3194
      %3229 = vst.msk [vmem:[#allocation4 + $0x9a0] sm:$0xff] %vm292, %v3195
      %3230 = vst.msk [vmem:[#allocation4 + $0xa08] sm:$0xff] %vm292, %v3196
      %3231 = vst.msk [vmem:[#allocation4 + $0xa70] sm:$0xff] %vm292, %v3197
      %3232 = vst.msk [vmem:[#allocation4 + $0xad8] sm:$0xff] %vm292, %v3198
      %3233 = vst.msk [vmem:[#allocation4 + $0xb40] sm:$0xff] %vm292, %v3199
      %3234 = vst.msk [vmem:[#allocation4 + $0xba8] sm:$0xff] %vm292, %v3200
      %3235 = vst.msk [vmem:[#allocation4 + $0xc10] sm:$0xff] %vm292, %v3201
      %3236 = vst.msk [vmem:[#allocation4 + $0xc78] sm:$0xff] %vm292, %v3202
      %3237 = vst.msk [vmem:[#allocation4 + $0xce0] sm:$0xff] %vm292, %v3203
      %3238 = vst.msk [vmem:[#allocation4 + $0xd48] sm:$0xff] %vm292, %v3204
      %3239 = vst.msk [vmem:[#allocation4 + $0xdb0] sm:$0xff] %vm292, %v3205
      %v3240 = vld [vmem:[%s655 + $0x4] sm:$0xff]
      %v3241 = vld [vmem:[%s655 + $0xc] sm:$0xff]
      %v3242 = vld [vmem:[%s655 + $0x1c] sm:$0xff]
      %v3243 = vld [vmem:[%s655 + $0x24] sm:$0xff]
      %v3244 = vld [vmem:[%s655 + $0x34] sm:$0xff]
      %v3245 = vld [vmem:[%s655 + $0x3c] sm:$0xff]
      %v3246 = vld [vmem:[%s655 + $0x4c] sm:$0xff]
      %v3247 = vld [vmem:[%s655 + $0x54] sm:$0xff]
      %v3248 = vld [vmem:[%s655 + $0x64] sm:$0xff]
      %v3249 = vld [vmem:[%s655 + $0x6c] sm:$0xff]
      %v3250 = vld [vmem:[%s655 + $0x7c] sm:$0xff]
      %v3251 = vld [vmem:[%s655 + $0x84] sm:$0xff]
      %v3252 = vld [vmem:[%s655 + $0x94] sm:$0xff]
      %v3253 = vld [vmem:[%s655 + $0x9c] sm:$0xff]
      %v3254 = vld [vmem:[%s655 + $0xac] sm:$0xff]
      %v3255 = vld [vmem:[%s655 + $0xb4] sm:$0xff]
      %v3256 = vld [vmem:[%s655 + $0xc4] sm:$0xff]
      %v3257 = vld [vmem:[%s655 + $0xcc] sm:$0xff]
      %v3258 = vld [vmem:[%s655 + $0xdc] sm:$0xff]
      %v3259 = vld [vmem:[%s655 + $0xe4] sm:$0xff]
      %v3260 = vld [vmem:[%s655 + $0xf4] sm:$0xff]
      %v3261 = vld [vmem:[%s655 + $0xfc] sm:$0xff]
      %v3262 = vld [vmem:[%s655 + $0x10c] sm:$0xff]
      %v3263 = vld [vmem:[%s655 + $0x114] sm:$0xff]
      %v3264 = vld [vmem:[%s655 + $0x124] sm:$0xff]
      %v3265 = vld [vmem:[%s655 + $0x12c] sm:$0xff]
      %v3266 = vld [vmem:[%s655 + $0x13c] sm:$0xff]
      %v3267 = vld [vmem:[%s655 + $0x144] sm:$0xff]
      %v3268 = vld [vmem:[%s655 + $0x154] sm:$0xff]
      %v3269 = vld [vmem:[%s655 + $0x15c] sm:$0xff]
      %v3270 = vld [vmem:[%s655 + $0x16c] sm:$0xff]
      %v3271 = vld [vmem:[%s655 + $0x174] sm:$0xff]
      %v3272 = vld [vmem:[%s655 + $0x184] sm:$0xff]
      %v3273 = vld [vmem:[%s655 + $0x18c] sm:$0xff]
      %3308 = vrot.lane.b32.xlu0 %v3240, 64
      %v3309 = vpop.permute.xlu0 %3308
      %3310 = vrot.lane.b32.xlu0 %v3241, 64
      %v3311 = vpop.permute.xlu0 %3310
      %3312 = vrot.lane.b32.xlu0 %v3242, 64
      %v3313 = vpop.permute.xlu0 %3312
      %3314 = vrot.lane.b32.xlu0 %v3243, 64
      %v3315 = vpop.permute.xlu0 %3314
      %3316 = vrot.lane.b32.xlu0 %v3244, 64
      %v3317 = vpop.permute.xlu0 %3316
      %3318 = vrot.lane.b32.xlu0 %v3245, 64
      %v3319 = vpop.permute.xlu0 %3318
      %3320 = vrot.lane.b32.xlu0 %v3246, 64
      %v3321 = vpop.permute.xlu0 %3320
      %3322 = vrot.lane.b32.xlu0 %v3247, 64
      %v3323 = vpop.permute.xlu0 %3322
      %3324 = vrot.lane.b32.xlu0 %v3248, 64
      %v3325 = vpop.permute.xlu0 %3324
      %3326 = vrot.lane.b32.xlu0 %v3249, 64
      %v3327 = vpop.permute.xlu0 %3326
      %3328 = vrot.lane.b32.xlu0 %v3250, 64
      %v3329 = vpop.permute.xlu0 %3328
      %3330 = vrot.lane.b32.xlu0 %v3251, 64
      %v3331 = vpop.permute.xlu0 %3330
      %3332 = vrot.lane.b32.xlu0 %v3252, 64
      %v3333 = vpop.permute.xlu0 %3332
      %3334 = vrot.lane.b32.xlu0 %v3253, 64
      %v3335 = vpop.permute.xlu0 %3334
      %3336 = vrot.lane.b32.xlu0 %v3254, 64
      %v3337 = vpop.permute.xlu0 %3336
      %3338 = vrot.lane.b32.xlu0 %v3255, 64
      %v3339 = vpop.permute.xlu0 %3338
      %3340 = vrot.lane.b32.xlu0 %v3256, 64
      %v3341 = vpop.permute.xlu0 %3340
      %3342 = vrot.lane.b32.xlu0 %v3257, 64
      %v3343 = vpop.permute.xlu0 %3342
      %3344 = vrot.lane.b32.xlu0 %v3258, 64
      %v3345 = vpop.permute.xlu0 %3344
      %3346 = vrot.lane.b32.xlu0 %v3259, 64
      %v3347 = vpop.permute.xlu0 %3346
      %3348 = vrot.lane.b32.xlu0 %v3260, 64
      %v3349 = vpop.permute.xlu0 %3348
      %3350 = vrot.lane.b32.xlu0 %v3261, 64
      %v3351 = vpop.permute.xlu0 %3350
      %3352 = vrot.lane.b32.xlu0 %v3262, 64
      %v3353 = vpop.permute.xlu0 %3352
      %3354 = vrot.lane.b32.xlu0 %v3263, 64
      %v3355 = vpop.permute.xlu0 %3354
      %3356 = vrot.lane.b32.xlu0 %v3264, 64
      %v3357 = vpop.permute.xlu0 %3356
      %3358 = vrot.lane.b32.xlu0 %v3265, 64
      %v3359 = vpop.permute.xlu0 %3358
      %3360 = vrot.lane.b32.xlu0 %v3266, 64
      %v3361 = vpop.permute.xlu0 %3360
      %3362 = vrot.lane.b32.xlu0 %v3267, 64
      %v3363 = vpop.permute.xlu0 %3362
      %3364 = vrot.lane.b32.xlu0 %v3268, 64
      %v3365 = vpop.permute.xlu0 %3364
      %3366 = vrot.lane.b32.xlu0 %v3269, 64
      %v3367 = vpop.permute.xlu0 %3366
      %3368 = vrot.lane.b32.xlu0 %v3270, 64
      %v3369 = vpop.permute.xlu0 %3368
      %3370 = vrot.lane.b32.xlu0 %v3271, 64
      %v3371 = vpop.permute.xlu0 %3370
      %3372 = vrot.lane.b32.xlu0 %v3272, 64
      %v3373 = vpop.permute.xlu0 %3372
      %3374 = vrot.lane.b32.xlu0 %v3273, 64
      %v3375 = vpop.permute.xlu0 %3374
      %3410 = vst.msk [vmem:[#allocation4 + $0x48] sm:$0xff] %vm959, %v3309
      %3411 = vst.msk [vmem:[#allocation4 + $0xb0] sm:$0xff] %vm959, %v3311
      %3412 = vst.msk [vmem:[#allocation4 + $0x118] sm:$0xff] %vm959, %v3313
      %3413 = vst.msk [vmem:[#allocation4 + $0x180] sm:$0xff] %vm959, %v3315
      %3414 = vst.msk [vmem:[#allocation4 + $0x1e8] sm:$0xff] %vm959, %v3317
      %3415 = vst.msk [vmem:[#allocation4 + $0x250] sm:$0xff] %vm959, %v3319
      %3416 = vst.msk [vmem:[#allocation4 + $0x2b8] sm:$0xff] %vm959, %v3321
      %3417 = vst.msk [vmem:[#allocation4 + $0x320] sm:$0xff] %vm959, %v3323
      %3418 = vst.msk [vmem:[#allocation4 + $0x388] sm:$0xff] %vm959, %v3325
      %3419 = vst.msk [vmem:[#allocation4 + $0x3f0] sm:$0xff] %vm959, %v3327
      %3420 = vst.msk [vmem:[#allocation4 + $0x458] sm:$0xff] %vm959, %v3329
      %3421 = vst.msk [vmem:[#allocation4 + $0x4c0] sm:$0xff] %vm959, %v3331
      %3422 = vst.msk [vmem:[#allocation4 + $0x528] sm:$0xff] %vm959, %v3333
      %3423 = vst.msk [vmem:[#allocation4 + $0x590] sm:$0xff] %vm959, %v3335
      %3424 = vst.msk [vmem:[#allocation4 + $0x5f8] sm:$0xff] %vm959, %v3337
      %3425 = vst.msk [vmem:[#allocation4 + $0x660] sm:$0xff] %vm959, %v3339
      %3426 = vst.msk [vmem:[#allocation4 + $0x6c8] sm:$0xff] %vm959, %v3341
      %3427 = vst.msk [vmem:[#allocation4 + $0x730] sm:$0xff] %vm959, %v3343
      %3428 = vst.msk [vmem:[#allocation4 + $0x798] sm:$0xff] %vm959, %v3345
      %3429 = vst.msk [vmem:[#allocation4 + $0x800] sm:$0xff] %vm959, %v3347
      %3430 = vst.msk [vmem:[#allocation4 + $0x868] sm:$0xff] %vm959, %v3349
      %3431 = vst.msk [vmem:[#allocation4 + $0x8d0] sm:$0xff] %vm959, %v3351
      %3432 = vst.msk [vmem:[#allocation4 + $0x938] sm:$0xff] %vm959, %v3353
      %3433 = vst.msk [vmem:[#allocation4 + $0x9a0] sm:$0xff] %vm959, %v3355
      %3434 = vst.msk [vmem:[#allocation4 + $0xa08] sm:$0xff] %vm959, %v3357
      %3435 = vst.msk [vmem:[#allocation4 + $0xa70] sm:$0xff] %vm959, %v3359
      %3436 = vst.msk [vmem:[#allocation4 + $0xad8] sm:$0xff] %vm959, %v3361
      %3437 = vst.msk [vmem:[#allocation4 + $0xb40] sm:$0xff] %vm959, %v3363
      %3438 = vst.msk [vmem:[#allocation4 + $0xba8] sm:$0xff] %vm959, %v3365
      %3439 = vst.msk [vmem:[#allocation4 + $0xc10] sm:$0xff] %vm959, %v3367
      %3440 = vst.msk [vmem:[#allocation4 + $0xc78] sm:$0xff] %vm959, %v3369
      %3441 = vst.msk [vmem:[#allocation4 + $0xce0] sm:$0xff] %vm959, %v3371
      %3442 = vst.msk [vmem:[#allocation4 + $0xd48] sm:$0xff] %vm959, %v3373
      %3443 = vst.msk [vmem:[#allocation4 + $0xdb0] sm:$0xff] %vm959, %v3375
      %s3444 = scalar_lea.vmem [#allocation2], 96
      %v3445 = vld [vmem:[%s3444] sm:$0xff]
      %v3446 = vld [vmem:[%s3444 + $0x8] sm:$0xff]
      %v3447 = vld [vmem:[%s3444 + $0x18] sm:$0xff]
      %v3448 = vld [vmem:[%s3444 + $0x20] sm:$0xff]
      %v3449 = vld [vmem:[%s3444 + $0x30] sm:$0xff]
      %v3450 = vld [vmem:[%s3444 + $0x38] sm:$0xff]
      %v3451 = vld [vmem:[%s3444 + $0x48] sm:$0xff]
      %v3452 = vld [vmem:[%s3444 + $0x50] sm:$0xff]
      %v3453 = vld [vmem:[%s3444 + $0x60] sm:$0xff]
      %v3454 = vld [vmem:[%s3444 + $0x68] sm:$0xff]
      %v3455 = vld [vmem:[%s3444 + $0x78] sm:$0xff]
      %v3456 = vld [vmem:[%s3444 + $0x80] sm:$0xff]
      %v3457 = vld [vmem:[%s3444 + $0x90] sm:$0xff]
      %v3458 = vld [vmem:[%s3444 + $0x98] sm:$0xff]
      %v3459 = vld [vmem:[%s3444 + $0xa8] sm:$0xff]
      %v3460 = vld [vmem:[%s3444 + $0xb0] sm:$0xff]
      %v3461 = vld [vmem:[%s3444 + $0xc0] sm:$0xff]
      %v3462 = vld [vmem:[%s3444 + $0xc8] sm:$0xff]
      %v3463 = vld [vmem:[%s3444 + $0xd8] sm:$0xff]
      %v3464 = vld [vmem:[%s3444 + $0xe0] sm:$0xff]
      %v3465 = vld [vmem:[%s3444 + $0xf0] sm:$0xff]
      %v3466 = vld [vmem:[%s3444 + $0xf8] sm:$0xff]
      %v3467 = vld [vmem:[%s3444 + $0x108] sm:$0xff]
      %v3468 = vld [vmem:[%s3444 + $0x110] sm:$0xff]
      %v3469 = vld [vmem:[%s3444 + $0x120] sm:$0xff]
      %v3470 = vld [vmem:[%s3444 + $0x128] sm:$0xff]
      %v3471 = vld [vmem:[%s3444 + $0x138] sm:$0xff]
      %v3472 = vld [vmem:[%s3444 + $0x140] sm:$0xff]
      %v3473 = vld [vmem:[%s3444 + $0x150] sm:$0xff]
      %v3474 = vld [vmem:[%s3444 + $0x158] sm:$0xff]
      %v3475 = vld [vmem:[%s3444 + $0x168] sm:$0xff]
      %v3476 = vld [vmem:[%s3444 + $0x170] sm:$0xff]
      %v3477 = vld [vmem:[%s3444 + $0x180] sm:$0xff]
      %v3478 = vld [vmem:[%s3444 + $0x188] sm:$0xff]
      %3479 = vst.msk [vmem:[#allocation4 + $0x50] sm:$0xff] %vm292, %v3445
      %3480 = vst.msk [vmem:[#allocation4 + $0xb8] sm:$0xff] %vm292, %v3446
      %3481 = vst.msk [vmem:[#allocation4 + $0x120] sm:$0xff] %vm292, %v3447
      %3482 = vst.msk [vmem:[#allocation4 + $0x188] sm:$0xff] %vm292, %v3448
      %3483 = vst.msk [vmem:[#allocation4 + $0x1f0] sm:$0xff] %vm292, %v3449
      %3484 = vst.msk [vmem:[#allocation4 + $0x258] sm:$0xff] %vm292, %v3450
      %3485 = vst.msk [vmem:[#allocation4 + $0x2c0] sm:$0xff] %vm292, %v3451
      %3486 = vst.msk [vmem:[#allocation4 + $0x328] sm:$0xff] %vm292, %v3452
      %3487 = vst.msk [vmem:[#allocation4 + $0x390] sm:$0xff] %vm292, %v3453
      %3488 = vst.msk [vmem:[#allocation4 + $0x3f8] sm:$0xff] %vm292, %v3454
      %3489 = vst.msk [vmem:[#allocation4 + $0x460] sm:$0xff] %vm292, %v3455
      %3490 = vst.msk [vmem:[#allocation4 + $0x4c8] sm:$0xff] %vm292, %v3456
      %3491 = vst.msk [vmem:[#allocation4 + $0x530] sm:$0xff] %vm292, %v3457
      %3492 = vst.msk [vmem:[#allocation4 + $0x598] sm:$0xff] %vm292, %v3458
      %3493 = vst.msk [vmem:[#allocation4 + $0x600] sm:$0xff] %vm292, %v3459
      %3494 = vst.msk [vmem:[#allocation4 + $0x668] sm:$0xff] %vm292, %v3460
      %3495 = vst.msk [vmem:[#allocation4 + $0x6d0] sm:$0xff] %vm292, %v3461
      %3496 = vst.msk [vmem:[#allocation4 + $0x738] sm:$0xff] %vm292, %v3462
      %3497 = vst.msk [vmem:[#allocation4 + $0x7a0] sm:$0xff] %vm292, %v3463
      %3498 = vst.msk [vmem:[#allocation4 + $0x808] sm:$0xff] %vm292, %v3464
      %3499 = vst.msk [vmem:[#allocation4 + $0x870] sm:$0xff] %vm292, %v3465
      %3500 = vst.msk [vmem:[#allocation4 + $0x8d8] sm:$0xff] %vm292, %v3466
      %3501 = vst.msk [vmem:[#allocation4 + $0x940] sm:$0xff] %vm292, %v3467
      %3502 = vst.msk [vmem:[#allocation4 + $0x9a8] sm:$0xff] %vm292, %v3468
      %3503 = vst.msk [vmem:[#allocation4 + $0xa10] sm:$0xff] %vm292, %v3469
      %3504 = vst.msk [vmem:[#allocation4 + $0xa78] sm:$0xff] %vm292, %v3470
      %3505 = vst.msk [vmem:[#allocation4 + $0xae0] sm:$0xff] %vm292, %v3471
      %3506 = vst.msk [vmem:[#allocation4 + $0xb48] sm:$0xff] %vm292, %v3472
      %3507 = vst.msk [vmem:[#allocation4 + $0xbb0] sm:$0xff] %vm292, %v3473
      %3508 = vst.msk [vmem:[#allocation4 + $0xc18] sm:$0xff] %vm292, %v3474
      %3509 = vst.msk [vmem:[#allocation4 + $0xc80] sm:$0xff] %vm292, %v3475
      %3510 = vst.msk [vmem:[#allocation4 + $0xce8] sm:$0xff] %vm292, %v3476
      %3511 = vst.msk [vmem:[#allocation4 + $0xd50] sm:$0xff] %vm292, %v3477
      %3512 = vst.msk [vmem:[#allocation4 + $0xdb8] sm:$0xff] %vm292, %v3478
      %v3513 = vld [vmem:[%s3444 + $0x1] sm:$0xff]
      %v3514 = vld [vmem:[%s3444 + $0x9] sm:$0xff]
      %v3515 = vld [vmem:[%s3444 + $0x19] sm:$0xff]
      %v3516 = vld [vmem:[%s3444 + $0x21] sm:$0xff]
      %v3517 = vld [vmem:[%s3444 + $0x31] sm:$0xff]
      %v3518 = vld [vmem:[%s3444 + $0x39] sm:$0xff]
      %v3519 = vld [vmem:[%s3444 + $0x49] sm:$0xff]
      %v3520 = vld [vmem:[%s3444 + $0x51] sm:$0xff]
      %v3521 = vld [vmem:[%s3444 + $0x61] sm:$0xff]
      %v3522 = vld [vmem:[%s3444 + $0x69] sm:$0xff]
      %v3523 = vld [vmem:[%s3444 + $0x79] sm:$0xff]
      %v3524 = vld [vmem:[%s3444 + $0x81] sm:$0xff]
      %v3525 = vld [vmem:[%s3444 + $0x91] sm:$0xff]
      %v3526 = vld [vmem:[%s3444 + $0x99] sm:$0xff]
      %v3527 = vld [vmem:[%s3444 + $0xa9] sm:$0xff]
      %v3528 = vld [vmem:[%s3444 + $0xb1] sm:$0xff]
      %v3529 = vld [vmem:[%s3444 + $0xc1] sm:$0xff]
      %v3530 = vld [vmem:[%s3444 + $0xc9] sm:$0xff]
      %v3531 = vld [vmem:[%s3444 + $0xd9] sm:$0xff]
      %v3532 = vld [vmem:[%s3444 + $0xe1] sm:$0xff]
      %v3533 = vld [vmem:[%s3444 + $0xf1] sm:$0xff]
      %v3534 = vld [vmem:[%s3444 + $0xf9] sm:$0xff]
      %v3535 = vld [vmem:[%s3444 + $0x109] sm:$0xff]
      %v3536 = vld [vmem:[%s3444 + $0x111] sm:$0xff]
      %v3537 = vld [vmem:[%s3444 + $0x121] sm:$0xff]
      %v3538 = vld [vmem:[%s3444 + $0x129] sm:$0xff]
      %v3539 = vld [vmem:[%s3444 + $0x139] sm:$0xff]
      %v3540 = vld [vmem:[%s3444 + $0x141] sm:$0xff]
      %v3541 = vld [vmem:[%s3444 + $0x151] sm:$0xff]
      %v3542 = vld [vmem:[%s3444 + $0x159] sm:$0xff]
      %v3543 = vld [vmem:[%s3444 + $0x169] sm:$0xff]
      %v3544 = vld [vmem:[%s3444 + $0x171] sm:$0xff]
      %v3545 = vld [vmem:[%s3444 + $0x181] sm:$0xff]
      %v3546 = vld [vmem:[%s3444 + $0x189] sm:$0xff]
      %3581 = vrot.lane.b32.xlu0 %v3513, 64
      %v3582 = vpop.permute.xlu0 %3581
      %3583 = vrot.lane.b32.xlu0 %v3514, 64
      %v3584 = vpop.permute.xlu0 %3583
      %3585 = vrot.lane.b32.xlu0 %v3515, 64
      %v3586 = vpop.permute.xlu0 %3585
      %3587 = vrot.lane.b32.xlu0 %v3516, 64
      %v3588 = vpop.permute.xlu0 %3587
      %3589 = vrot.lane.b32.xlu0 %v3517, 64
      %v3590 = vpop.permute.xlu0 %3589
      %3591 = vrot.lane.b32.xlu0 %v3518, 64
      %v3592 = vpop.permute.xlu0 %3591
      %3593 = vrot.lane.b32.xlu0 %v3519, 64
      %v3594 = vpop.permute.xlu0 %3593
      %3595 = vrot.lane.b32.xlu0 %v3520, 64
      %v3596 = vpop.permute.xlu0 %3595
      %3597 = vrot.lane.b32.xlu0 %v3521, 64
      %v3598 = vpop.permute.xlu0 %3597
      %3599 = vrot.lane.b32.xlu0 %v3522, 64
      %v3600 = vpop.permute.xlu0 %3599
      %3601 = vrot.lane.b32.xlu0 %v3523, 64
      %v3602 = vpop.permute.xlu0 %3601
      %3603 = vrot.lane.b32.xlu0 %v3524, 64
      %v3604 = vpop.permute.xlu0 %3603
      %3605 = vrot.lane.b32.xlu0 %v3525, 64
      %v3606 = vpop.permute.xlu0 %3605
      %3607 = vrot.lane.b32.xlu0 %v3526, 64
      %v3608 = vpop.permute.xlu0 %3607
      %3609 = vrot.lane.b32.xlu0 %v3527, 64
      %v3610 = vpop.permute.xlu0 %3609
      %3611 = vrot.lane.b32.xlu0 %v3528, 64
      %v3612 = vpop.permute.xlu0 %3611
      %3613 = vrot.lane.b32.xlu0 %v3529, 64
      %v3614 = vpop.permute.xlu0 %3613
      %3615 = vrot.lane.b32.xlu0 %v3530, 64
      %v3616 = vpop.permute.xlu0 %3615
      %3617 = vrot.lane.b32.xlu0 %v3531, 64
      %v3618 = vpop.permute.xlu0 %3617
      %3619 = vrot.lane.b32.xlu0 %v3532, 64
      %v3620 = vpop.permute.xlu0 %3619
      %3621 = vrot.lane.b32.xlu0 %v3533, 64
      %v3622 = vpop.permute.xlu0 %3621
      %3623 = vrot.lane.b32.xlu0 %v3534, 64
      %v3624 = vpop.permute.xlu0 %3623
      %3625 = vrot.lane.b32.xlu0 %v3535, 64
      %v3626 = vpop.permute.xlu0 %3625
      %3627 = vrot.lane.b32.xlu0 %v3536, 64
      %v3628 = vpop.permute.xlu0 %3627
      %3629 = vrot.lane.b32.xlu0 %v3537, 64
      %v3630 = vpop.permute.xlu0 %3629
      %3631 = vrot.lane.b32.xlu0 %v3538, 64
      %v3632 = vpop.permute.xlu0 %3631
      %3633 = vrot.lane.b32.xlu0 %v3539, 64
      %v3634 = vpop.permute.xlu0 %3633
      %3635 = vrot.lane.b32.xlu0 %v3540, 64
      %v3636 = vpop.permute.xlu0 %3635
      %3637 = vrot.lane.b32.xlu0 %v3541, 64
      %v3638 = vpop.permute.xlu0 %3637
      %3639 = vrot.lane.b32.xlu0 %v3542, 64
      %v3640 = vpop.permute.xlu0 %3639
      %3641 = vrot.lane.b32.xlu0 %v3543, 64
      %v3642 = vpop.permute.xlu0 %3641
      %3643 = vrot.lane.b32.xlu0 %v3544, 64
      %v3644 = vpop.permute.xlu0 %3643
      %3645 = vrot.lane.b32.xlu0 %v3545, 64
      %v3646 = vpop.permute.xlu0 %3645
      %3647 = vrot.lane.b32.xlu0 %v3546, 64
      %v3648 = vpop.permute.xlu0 %3647
      %3683 = vst.msk [vmem:[#allocation4 + $0x50] sm:$0xff] %vm959, %v3582
      %3684 = vst.msk [vmem:[#allocation4 + $0xb8] sm:$0xff] %vm959, %v3584
      %3685 = vst.msk [vmem:[#allocation4 + $0x120] sm:$0xff] %vm959, %v3586
      %3686 = vst.msk [vmem:[#allocation4 + $0x188] sm:$0xff] %vm959, %v3588
      %3687 = vst.msk [vmem:[#allocation4 + $0x1f0] sm:$0xff] %vm959, %v3590
      %3688 = vst.msk [vmem:[#allocation4 + $0x258] sm:$0xff] %vm959, %v3592
      %3689 = vst.msk [vmem:[#allocation4 + $0x2c0] sm:$0xff] %vm959, %v3594
      %3690 = vst.msk [vmem:[#allocation4 + $0x328] sm:$0xff] %vm959, %v3596
      %3691 = vst.msk [vmem:[#allocation4 + $0x390] sm:$0xff] %vm959, %v3598
      %3692 = vst.msk [vmem:[#allocation4 + $0x3f8] sm:$0xff] %vm959, %v3600
      %3693 = vst.msk [vmem:[#allocation4 + $0x460] sm:$0xff] %vm959, %v3602
      %3694 = vst.msk [vmem:[#allocation4 + $0x4c8] sm:$0xff] %vm959, %v3604
      %3695 = vst.msk [vmem:[#allocation4 + $0x530] sm:$0xff] %vm959, %v3606
      %3696 = vst.msk [vmem:[#allocation4 + $0x598] sm:$0xff] %vm959, %v3608
      %3697 = vst.msk [vmem:[#allocation4 + $0x600] sm:$0xff] %vm959, %v3610
      %3698 = vst.msk [vmem:[#allocation4 + $0x668] sm:$0xff] %vm959, %v3612
      %3699 = vst.msk [vmem:[#allocation4 + $0x6d0] sm:$0xff] %vm959, %v3614
      %3700 = vst.msk [vmem:[#allocation4 + $0x738] sm:$0xff] %vm959, %v3616
      %3701 = vst.msk [vmem:[#allocation4 + $0x7a0] sm:$0xff] %vm959, %v3618
      %3702 = vst.msk [vmem:[#allocation4 + $0x808] sm:$0xff] %vm959, %v3620
      %3703 = vst.msk [vmem:[#allocation4 + $0x870] sm:$0xff] %vm959, %v3622
      %3704 = vst.msk [vmem:[#allocation4 + $0x8d8] sm:$0xff] %vm959, %v3624
      %3705 = vst.msk [vmem:[#allocation4 + $0x940] sm:$0xff] %vm959, %v3626
      %3706 = vst.msk [vmem:[#allocation4 + $0x9a8] sm:$0xff] %vm959, %v3628
      %3707 = vst.msk [vmem:[#allocation4 + $0xa10] sm:$0xff] %vm959, %v3630
      %3708 = vst.msk [vmem:[#allocation4 + $0xa78] sm:$0xff] %vm959, %v3632
      %3709 = vst.msk [vmem:[#allocation4 + $0xae0] sm:$0xff] %vm959, %v3634
      %3710 = vst.msk [vmem:[#allocation4 + $0xb48] sm:$0xff] %vm959, %v3636
      %3711 = vst.msk [vmem:[#allocation4 + $0xbb0] sm:$0xff] %vm959, %v3638
      %3712 = vst.msk [vmem:[#allocation4 + $0xc18] sm:$0xff] %vm959, %v3640
      %3713 = vst.msk [vmem:[#allocation4 + $0xc80] sm:$0xff] %vm959, %v3642
      %3714 = vst.msk [vmem:[#allocation4 + $0xce8] sm:$0xff] %vm959, %v3644
      %3715 = vst.msk [vmem:[#allocation4 + $0xd50] sm:$0xff] %vm959, %v3646
      %3716 = vst.msk [vmem:[#allocation4 + $0xdb8] sm:$0xff] %vm959, %v3648
      %v3717 = vld [vmem:[%s3444 + $0x2] sm:$0xff]
      %v3718 = vld [vmem:[%s3444 + $0xa] sm:$0xff]
      %v3719 = vld [vmem:[%s3444 + $0x1a] sm:$0xff]
      %v3720 = vld [vmem:[%s3444 + $0x22] sm:$0xff]
      %v3721 = vld [vmem:[%s3444 + $0x32] sm:$0xff]
      %v3722 = vld [vmem:[%s3444 + $0x3a] sm:$0xff]
      %v3723 = vld [vmem:[%s3444 + $0x4a] sm:$0xff]
      %v3724 = vld [vmem:[%s3444 + $0x52] sm:$0xff]
      %v3725 = vld [vmem:[%s3444 + $0x62] sm:$0xff]
      %v3726 = vld [vmem:[%s3444 + $0x6a] sm:$0xff]
      %v3727 = vld [vmem:[%s3444 + $0x7a] sm:$0xff]
      %v3728 = vld [vmem:[%s3444 + $0x82] sm:$0xff]
      %v3729 = vld [vmem:[%s3444 + $0x92] sm:$0xff]
      %v3730 = vld [vmem:[%s3444 + $0x9a] sm:$0xff]
      %v3731 = vld [vmem:[%s3444 + $0xaa] sm:$0xff]
      %v3732 = vld [vmem:[%s3444 + $0xb2] sm:$0xff]
      %v3733 = vld [vmem:[%s3444 + $0xc2] sm:$0xff]
      %v3734 = vld [vmem:[%s3444 + $0xca] sm:$0xff]
      %v3735 = vld [vmem:[%s3444 + $0xda] sm:$0xff]
      %v3736 = vld [vmem:[%s3444 + $0xe2] sm:$0xff]
      %v3737 = vld [vmem:[%s3444 + $0xf2] sm:$0xff]
      %v3738 = vld [vmem:[%s3444 + $0xfa] sm:$0xff]
      %v3739 = vld [vmem:[%s3444 + $0x10a] sm:$0xff]
      %v3740 = vld [vmem:[%s3444 + $0x112] sm:$0xff]
      %v3741 = vld [vmem:[%s3444 + $0x122] sm:$0xff]
      %v3742 = vld [vmem:[%s3444 + $0x12a] sm:$0xff]
      %v3743 = vld [vmem:[%s3444 + $0x13a] sm:$0xff]
      %v3744 = vld [vmem:[%s3444 + $0x142] sm:$0xff]
      %v3745 = vld [vmem:[%s3444 + $0x152] sm:$0xff]
      %v3746 = vld [vmem:[%s3444 + $0x15a] sm:$0xff]
      %v3747 = vld [vmem:[%s3444 + $0x16a] sm:$0xff]
      %v3748 = vld [vmem:[%s3444 + $0x172] sm:$0xff]
      %v3749 = vld [vmem:[%s3444 + $0x182] sm:$0xff]
      %v3750 = vld [vmem:[%s3444 + $0x18a] sm:$0xff]
      %3751 = vst.msk [vmem:[#allocation4 + $0x58] sm:$0xff] %vm292, %v3717
      %3752 = vst.msk [vmem:[#allocation4 + $0xc0] sm:$0xff] %vm292, %v3718
      %3753 = vst.msk [vmem:[#allocation4 + $0x128] sm:$0xff] %vm292, %v3719
      %3754 = vst.msk [vmem:[#allocation4 + $0x190] sm:$0xff] %vm292, %v3720
      %3755 = vst.msk [vmem:[#allocation4 + $0x1f8] sm:$0xff] %vm292, %v3721
      %3756 = vst.msk [vmem:[#allocation4 + $0x260] sm:$0xff] %vm292, %v3722
      %3757 = vst.msk [vmem:[#allocation4 + $0x2c8] sm:$0xff] %vm292, %v3723
      %3758 = vst.msk [vmem:[#allocation4 + $0x330] sm:$0xff] %vm292, %v3724
      %3759 = vst.msk [vmem:[#allocation4 + $0x398] sm:$0xff] %vm292, %v3725
      %3760 = vst.msk [vmem:[#allocation4 + $0x400] sm:$0xff] %vm292, %v3726
      %3761 = vst.msk [vmem:[#allocation4 + $0x468] sm:$0xff] %vm292, %v3727
      %3762 = vst.msk [vmem:[#allocation4 + $0x4d0] sm:$0xff] %vm292, %v3728
      %3763 = vst.msk [vmem:[#allocation4 + $0x538] sm:$0xff] %vm292, %v3729
      %3764 = vst.msk [vmem:[#allocation4 + $0x5a0] sm:$0xff] %vm292, %v3730
      %3765 = vst.msk [vmem:[#allocation4 + $0x608] sm:$0xff] %vm292, %v3731
      %3766 = vst.msk [vmem:[#allocation4 + $0x670] sm:$0xff] %vm292, %v3732
      %3767 = vst.msk [vmem:[#allocation4 + $0x6d8] sm:$0xff] %vm292, %v3733
      %3768 = vst.msk [vmem:[#allocation4 + $0x740] sm:$0xff] %vm292, %v3734
      %3769 = vst.msk [vmem:[#allocation4 + $0x7a8] sm:$0xff] %vm292, %v3735
      %3770 = vst.msk [vmem:[#allocation4 + $0x810] sm:$0xff] %vm292, %v3736
      %3771 = vst.msk [vmem:[#allocation4 + $0x878] sm:$0xff] %vm292, %v3737
      %3772 = vst.msk [vmem:[#allocation4 + $0x8e0] sm:$0xff] %vm292, %v3738
      %3773 = vst.msk [vmem:[#allocation4 + $0x948] sm:$0xff] %vm292, %v3739
      %3774 = vst.msk [vmem:[#allocation4 + $0x9b0] sm:$0xff] %vm292, %v3740
      %3775 = vst.msk [vmem:[#allocation4 + $0xa18] sm:$0xff] %vm292, %v3741
      %3776 = vst.msk [vmem:[#allocation4 + $0xa80] sm:$0xff] %vm292, %v3742
      %3777 = vst.msk [vmem:[#allocation4 + $0xae8] sm:$0xff] %vm292, %v3743
      %3778 = vst.msk [vmem:[#allocation4 + $0xb50] sm:$0xff] %vm292, %v3744
      %3779 = vst.msk [vmem:[#allocation4 + $0xbb8] sm:$0xff] %vm292, %v3745
      %3780 = vst.msk [vmem:[#allocation4 + $0xc20] sm:$0xff] %vm292, %v3746
      %3781 = vst.msk [vmem:[#allocation4 + $0xc88] sm:$0xff] %vm292, %v3747
      %3782 = vst.msk [vmem:[#allocation4 + $0xcf0] sm:$0xff] %vm292, %v3748
      %3783 = vst.msk [vmem:[#allocation4 + $0xd58] sm:$0xff] %vm292, %v3749
      %3784 = vst.msk [vmem:[#allocation4 + $0xdc0] sm:$0xff] %vm292, %v3750
      %v3785 = vld [vmem:[%s3444 + $0x3] sm:$0xff]
      %v3786 = vld [vmem:[%s3444 + $0xb] sm:$0xff]
      %v3787 = vld [vmem:[%s3444 + $0x1b] sm:$0xff]
      %v3788 = vld [vmem:[%s3444 + $0x23] sm:$0xff]
      %v3789 = vld [vmem:[%s3444 + $0x33] sm:$0xff]
      %v3790 = vld [vmem:[%s3444 + $0x3b] sm:$0xff]
      %v3791 = vld [vmem:[%s3444 + $0x4b] sm:$0xff]
      %v3792 = vld [vmem:[%s3444 + $0x53] sm:$0xff]
      %v3793 = vld [vmem:[%s3444 + $0x63] sm:$0xff]
      %v3794 = vld [vmem:[%s3444 + $0x6b] sm:$0xff]
      %v3795 = vld [vmem:[%s3444 + $0x7b] sm:$0xff]
      %v3796 = vld [vmem:[%s3444 + $0x83] sm:$0xff]
      %v3797 = vld [vmem:[%s3444 + $0x93] sm:$0xff]
      %v3798 = vld [vmem:[%s3444 + $0x9b] sm:$0xff]
      %v3799 = vld [vmem:[%s3444 + $0xab] sm:$0xff]
      %v3800 = vld [vmem:[%s3444 + $0xb3] sm:$0xff]
      %v3801 = vld [vmem:[%s3444 + $0xc3] sm:$0xff]
      %v3802 = vld [vmem:[%s3444 + $0xcb] sm:$0xff]
      %v3803 = vld [vmem:[%s3444 + $0xdb] sm:$0xff]
      %v3804 = vld [vmem:[%s3444 + $0xe3] sm:$0xff]
      %v3805 = vld [vmem:[%s3444 + $0xf3] sm:$0xff]
      %v3806 = vld [vmem:[%s3444 + $0xfb] sm:$0xff]
      %v3807 = vld [vmem:[%s3444 + $0x10b] sm:$0xff]
      %v3808 = vld [vmem:[%s3444 + $0x113] sm:$0xff]
      %v3809 = vld [vmem:[%s3444 + $0x123] sm:$0xff]
      %v3810 = vld [vmem:[%s3444 + $0x12b] sm:$0xff]
      %v3811 = vld [vmem:[%s3444 + $0x13b] sm:$0xff]
      %v3812 = vld [vmem:[%s3444 + $0x143] sm:$0xff]
      %v3813 = vld [vmem:[%s3444 + $0x153] sm:$0xff]
      %v3814 = vld [vmem:[%s3444 + $0x15b] sm:$0xff]
      %v3815 = vld [vmem:[%s3444 + $0x16b] sm:$0xff]
      %v3816 = vld [vmem:[%s3444 + $0x173] sm:$0xff]
      %v3817 = vld [vmem:[%s3444 + $0x183] sm:$0xff]
      %v3818 = vld [vmem:[%s3444 + $0x18b] sm:$0xff]
      %3853 = vrot.lane.b32.xlu0 %v3785, 64
      %v3854 = vpop.permute.xlu0 %3853
      %3855 = vrot.lane.b32.xlu0 %v3786, 64
      %v3856 = vpop.permute.xlu0 %3855
      %3857 = vrot.lane.b32.xlu0 %v3787, 64
      %v3858 = vpop.permute.xlu0 %3857
      %3859 = vrot.lane.b32.xlu0 %v3788, 64
      %v3860 = vpop.permute.xlu0 %3859
      %3861 = vrot.lane.b32.xlu0 %v3789, 64
      %v3862 = vpop.permute.xlu0 %3861
      %3863 = vrot.lane.b32.xlu0 %v3790, 64
      %v3864 = vpop.permute.xlu0 %3863
      %3865 = vrot.lane.b32.xlu0 %v3791, 64
      %v3866 = vpop.permute.xlu0 %3865
      %3867 = vrot.lane.b32.xlu0 %v3792, 64
      %v3868 = vpop.permute.xlu0 %3867
      %3869 = vrot.lane.b32.xlu0 %v3793, 64
      %v3870 = vpop.permute.xlu0 %3869
      %3871 = vrot.lane.b32.xlu0 %v3794, 64
      %v3872 = vpop.permute.xlu0 %3871
      %3873 = vrot.lane.b32.xlu0 %v3795, 64
      %v3874 = vpop.permute.xlu0 %3873
      %3875 = vrot.lane.b32.xlu0 %v3796, 64
      %v3876 = vpop.permute.xlu0 %3875
      %3877 = vrot.lane.b32.xlu0 %v3797, 64
      %v3878 = vpop.permute.xlu0 %3877
      %3879 = vrot.lane.b32.xlu0 %v3798, 64
      %v3880 = vpop.permute.xlu0 %3879
      %3881 = vrot.lane.b32.xlu0 %v3799, 64
      %v3882 = vpop.permute.xlu0 %3881
      %3883 = vrot.lane.b32.xlu0 %v3800, 64
      %v3884 = vpop.permute.xlu0 %3883
      %3885 = vrot.lane.b32.xlu0 %v3801, 64
      %v3886 = vpop.permute.xlu0 %3885
      %3887 = vrot.lane.b32.xlu0 %v3802, 64
      %v3888 = vpop.permute.xlu0 %3887
      %3889 = vrot.lane.b32.xlu0 %v3803, 64
      %v3890 = vpop.permute.xlu0 %3889
      %3891 = vrot.lane.b32.xlu0 %v3804, 64
      %v3892 = vpop.permute.xlu0 %3891
      %3893 = vrot.lane.b32.xlu0 %v3805, 64
      %v3894 = vpop.permute.xlu0 %3893
      %3895 = vrot.lane.b32.xlu0 %v3806, 64
      %v3896 = vpop.permute.xlu0 %3895
      %3897 = vrot.lane.b32.xlu0 %v3807, 64
      %v3898 = vpop.permute.xlu0 %3897
      %3899 = vrot.lane.b32.xlu0 %v3808, 64
      %v3900 = vpop.permute.xlu0 %3899
      %3901 = vrot.lane.b32.xlu0 %v3809, 64
      %v3902 = vpop.permute.xlu0 %3901
      %3903 = vrot.lane.b32.xlu0 %v3810, 64
      %v3904 = vpop.permute.xlu0 %3903
      %3905 = vrot.lane.b32.xlu0 %v3811, 64
      %v3906 = vpop.permute.xlu0 %3905
      %3907 = vrot.lane.b32.xlu0 %v3812, 64
      %v3908 = vpop.permute.xlu0 %3907
      %3909 = vrot.lane.b32.xlu0 %v3813, 64
      %v3910 = vpop.permute.xlu0 %3909
      %3911 = vrot.lane.b32.xlu0 %v3814, 64
      %v3912 = vpop.permute.xlu0 %3911
      %3913 = vrot.lane.b32.xlu0 %v3815, 64
      %v3914 = vpop.permute.xlu0 %3913
      %3915 = vrot.lane.b32.xlu0 %v3816, 64
      %v3916 = vpop.permute.xlu0 %3915
      %3917 = vrot.lane.b32.xlu0 %v3817, 64
      %v3918 = vpop.permute.xlu0 %3917
      %3919 = vrot.lane.b32.xlu0 %v3818, 64
      %v3920 = vpop.permute.xlu0 %3919
      %3955 = vst.msk [vmem:[#allocation4 + $0x58] sm:$0xff] %vm959, %v3854
      %3956 = vst.msk [vmem:[#allocation4 + $0xc0] sm:$0xff] %vm959, %v3856
      %3957 = vst.msk [vmem:[#allocation4 + $0x128] sm:$0xff] %vm959, %v3858
      %3958 = vst.msk [vmem:[#allocation4 + $0x190] sm:$0xff] %vm959, %v3860
      %3959 = vst.msk [vmem:[#allocation4 + $0x1f8] sm:$0xff] %vm959, %v3862
      %3960 = vst.msk [vmem:[#allocation4 + $0x260] sm:$0xff] %vm959, %v3864
      %3961 = vst.msk [vmem:[#allocation4 + $0x2c8] sm:$0xff] %vm959, %v3866
      %3962 = vst.msk [vmem:[#allocation4 + $0x330] sm:$0xff] %vm959, %v3868
      %3963 = vst.msk [vmem:[#allocation4 + $0x398] sm:$0xff] %vm959, %v3870
      %3964 = vst.msk [vmem:[#allocation4 + $0x400] sm:$0xff] %vm959, %v3872
      %3965 = vst.msk [vmem:[#allocation4 + $0x468] sm:$0xff] %vm959, %v3874
      %3966 = vst.msk [vmem:[#allocation4 + $0x4d0] sm:$0xff] %vm959, %v3876
      %3967 = vst.msk [vmem:[#allocation4 + $0x538] sm:$0xff] %vm959, %v3878
      %3968 = vst.msk [vmem:[#allocation4 + $0x5a0] sm:$0xff] %vm959, %v3880
      %3969 = vst.msk [vmem:[#allocation4 + $0x608] sm:$0xff] %vm959, %v3882
      %3970 = vst.msk [vmem:[#allocation4 + $0x670] sm:$0xff] %vm959, %v3884
      %3971 = vst.msk [vmem:[#allocation4 + $0x6d8] sm:$0xff] %vm959, %v3886
      %3972 = vst.msk [vmem:[#allocation4 + $0x740] sm:$0xff] %vm959, %v3888
      %3973 = vst.msk [vmem:[#allocation4 + $0x7a8] sm:$0xff] %vm959, %v3890
      %3974 = vst.msk [vmem:[#allocation4 + $0x810] sm:$0xff] %vm959, %v3892
      %3975 = vst.msk [vmem:[#allocation4 + $0x878] sm:$0xff] %vm959, %v3894
      %3976 = vst.msk [vmem:[#allocation4 + $0x8e0] sm:$0xff] %vm959, %v3896
      %3977 = vst.msk [vmem:[#allocation4 + $0x948] sm:$0xff] %vm959, %v3898
      %3978 = vst.msk [vmem:[#allocation4 + $0x9b0] sm:$0xff] %vm959, %v3900
      %3979 = vst.msk [vmem:[#allocation4 + $0xa18] sm:$0xff] %vm959, %v3902
      %3980 = vst.msk [vmem:[#allocation4 + $0xa80] sm:$0xff] %vm959, %v3904
      %3981 = vst.msk [vmem:[#allocation4 + $0xae8] sm:$0xff] %vm959, %v3906
      %3982 = vst.msk [vmem:[#allocation4 + $0xb50] sm:$0xff] %vm959, %v3908
      %3983 = vst.msk [vmem:[#allocation4 + $0xbb8] sm:$0xff] %vm959, %v3910
      %3984 = vst.msk [vmem:[#allocation4 + $0xc20] sm:$0xff] %vm959, %v3912
      %3985 = vst.msk [vmem:[#allocation4 + $0xc88] sm:$0xff] %vm959, %v3914
      %3986 = vst.msk [vmem:[#allocation4 + $0xcf0] sm:$0xff] %vm959, %v3916
      %3987 = vst.msk [vmem:[#allocation4 + $0xd58] sm:$0xff] %vm959, %v3918
      %3988 = vst.msk [vmem:[#allocation4 + $0xdc0] sm:$0xff] %vm959, %v3920
      %v3989 = vld [vmem:[%s3444 + $0x4] sm:$0xff]
      %v3990 = vld [vmem:[%s3444 + $0xc] sm:$0xff]
      %v3991 = vld [vmem:[%s3444 + $0x1c] sm:$0xff]
      %v3992 = vld [vmem:[%s3444 + $0x24] sm:$0xff]
      %v3993 = vld [vmem:[%s3444 + $0x34] sm:$0xff]
      %v3994 = vld [vmem:[%s3444 + $0x3c] sm:$0xff]
      %v3995 = vld [vmem:[%s3444 + $0x4c] sm:$0xff]
      %v3996 = vld [vmem:[%s3444 + $0x54] sm:$0xff]
      %v3997 = vld [vmem:[%s3444 + $0x64] sm:$0xff]
      %v3998 = vld [vmem:[%s3444 + $0x6c] sm:$0xff]
      %v3999 = vld [vmem:[%s3444 + $0x7c] sm:$0xff]
      %v4000 = vld [vmem:[%s3444 + $0x84] sm:$0xff]
      %v4001 = vld [vmem:[%s3444 + $0x94] sm:$0xff]
      %v4002 = vld [vmem:[%s3444 + $0x9c] sm:$0xff]
      %v4003 = vld [vmem:[%s3444 + $0xac] sm:$0xff]
      %v4004 = vld [vmem:[%s3444 + $0xb4] sm:$0xff]
      %v4005 = vld [vmem:[%s3444 + $0xc4] sm:$0xff]
      %v4006 = vld [vmem:[%s3444 + $0xcc] sm:$0xff]
      %v4007 = vld [vmem:[%s3444 + $0xdc] sm:$0xff]
      %v4008 = vld [vmem:[%s3444 + $0xe4] sm:$0xff]
      %v4009 = vld [vmem:[%s3444 + $0xf4] sm:$0xff]
      %v4010 = vld [vmem:[%s3444 + $0xfc] sm:$0xff]
      %v4011 = vld [vmem:[%s3444 + $0x10c] sm:$0xff]
      %v4012 = vld [vmem:[%s3444 + $0x114] sm:$0xff]
      %v4013 = vld [vmem:[%s3444 + $0x124] sm:$0xff]
      %v4014 = vld [vmem:[%s3444 + $0x12c] sm:$0xff]
      %v4015 = vld [vmem:[%s3444 + $0x13c] sm:$0xff]
      %v4016 = vld [vmem:[%s3444 + $0x144] sm:$0xff]
      %v4017 = vld [vmem:[%s3444 + $0x154] sm:$0xff]
      %v4018 = vld [vmem:[%s3444 + $0x15c] sm:$0xff]
      %v4019 = vld [vmem:[%s3444 + $0x16c] sm:$0xff]
      %v4020 = vld [vmem:[%s3444 + $0x174] sm:$0xff]
      %v4021 = vld [vmem:[%s3444 + $0x184] sm:$0xff]
      %v4022 = vld [vmem:[%s3444 + $0x18c] sm:$0xff]
      %4023 = vst.msk [vmem:[#allocation4 + $0x60] sm:$0xff] %vm292, %v3989
      %4024 = vst.msk [vmem:[#allocation4 + $0xc8] sm:$0xff] %vm292, %v3990
      %4025 = vst.msk [vmem:[#allocation4 + $0x130] sm:$0xff] %vm292, %v3991
      %4026 = vst.msk [vmem:[#allocation4 + $0x198] sm:$0xff] %vm292, %v3992
      %4027 = vst.msk [vmem:[#allocation4 + $0x200] sm:$0xff] %vm292, %v3993
      %4028 = vst.msk [vmem:[#allocation4 + $0x268] sm:$0xff] %vm292, %v3994
      %4029 = vst.msk [vmem:[#allocation4 + $0x2d0] sm:$0xff] %vm292, %v3995
      %4030 = vst.msk [vmem:[#allocation4 + $0x338] sm:$0xff] %vm292, %v3996
      %4031 = vst.msk [vmem:[#allocation4 + $0x3a0] sm:$0xff] %vm292, %v3997
      %4032 = vst.msk [vmem:[#allocation4 + $0x408] sm:$0xff] %vm292, %v3998
      %4033 = vst.msk [vmem:[#allocation4 + $0x470] sm:$0xff] %vm292, %v3999
      %4034 = vst.msk [vmem:[#allocation4 + $0x4d8] sm:$0xff] %vm292, %v4000
      %4035 = vst.msk [vmem:[#allocation4 + $0x540] sm:$0xff] %vm292, %v4001
      %4036 = vst.msk [vmem:[#allocation4 + $0x5a8] sm:$0xff] %vm292, %v4002
      %4037 = vst.msk [vmem:[#allocation4 + $0x610] sm:$0xff] %vm292, %v4003
      %4038 = vst.msk [vmem:[#allocation4 + $0x678] sm:$0xff] %vm292, %v4004
      %4039 = vst.msk [vmem:[#allocation4 + $0x6e0] sm:$0xff] %vm292, %v4005
      %4040 = vst.msk [vmem:[#allocation4 + $0x748] sm:$0xff] %vm292, %v4006
      %4041 = vst.msk [vmem:[#allocation4 + $0x7b0] sm:$0xff] %vm292, %v4007
      %4042 = vst.msk [vmem:[#allocation4 + $0x818] sm:$0xff] %vm292, %v4008
      %4043 = vst.msk [vmem:[#allocation4 + $0x880] sm:$0xff] %vm292, %v4009
      %4044 = vst.msk [vmem:[#allocation4 + $0x8e8] sm:$0xff] %vm292, %v4010
      %4045 = vst.msk [vmem:[#allocation4 + $0x950] sm:$0xff] %vm292, %v4011
      %4046 = vst.msk [vmem:[#allocation4 + $0x9b8] sm:$0xff] %vm292, %v4012
      %4047 = vst.msk [vmem:[#allocation4 + $0xa20] sm:$0xff] %vm292, %v4013
      %4048 = vst.msk [vmem:[#allocation4 + $0xa88] sm:$0xff] %vm292, %v4014
      %4049 = vst.msk [vmem:[#allocation4 + $0xaf0] sm:$0xff] %vm292, %v4015
      %4050 = vst.msk [vmem:[#allocation4 + $0xb58] sm:$0xff] %vm292, %v4016
      %4051 = vst.msk [vmem:[#allocation4 + $0xbc0] sm:$0xff] %vm292, %v4017
      %4052 = vst.msk [vmem:[#allocation4 + $0xc28] sm:$0xff] %vm292, %v4018
      %4053 = vst.msk [vmem:[#allocation4 + $0xc90] sm:$0xff] %vm292, %v4019
      %4054 = vst.msk [vmem:[#allocation4 + $0xcf8] sm:$0xff] %vm292, %v4020
      %4055 = vst.msk [vmem:[#allocation4 + $0xd60] sm:$0xff] %vm292, %v4021
      %4056 = vst.msk [vmem:[#allocation4 + $0xdc8] sm:$0xff] %vm292, %v4022
      %v4057 = vld [vmem:[#allocation4] sm:$0xff]
      %v4058 = vld [vmem:[#allocation4 + $0x8] sm:$0xff]
      %v4059 = vld [vmem:[#allocation4 + $0x10] sm:$0xff]
      %v4060 = vld [vmem:[#allocation4 + $0x18] sm:$0xff]
      %v4061 = vld [vmem:[#allocation4 + $0x20] sm:$0xff]
      %v4062 = vld [vmem:[#allocation4 + $0x28] sm:$0xff]
      %v4063 = vld [vmem:[#allocation4 + $0x30] sm:$0xff]
      %v4064 = vld [vmem:[#allocation4 + $0x38] sm:$0xff]
      %v4065 = vld [vmem:[#allocation4 + $0x40] sm:$0xff]
      %v4066 = vld [vmem:[#allocation4 + $0x48] sm:$0xff]
      %v4067 = vld [vmem:[#allocation4 + $0x50] sm:$0xff]
      %v4068 = vld [vmem:[#allocation4 + $0x58] sm:$0xff]
      %v4069 = vld [vmem:[#allocation4 + $0x60] sm:$0xff]
      %v4070 = vld [vmem:[#allocation4 + $0x68] sm:$0xff]
      %v4071 = vld [vmem:[#allocation4 + $0x70] sm:$0xff]
      %v4072 = vld [vmem:[#allocation4 + $0x78] sm:$0xff]
      %v4073 = vld [vmem:[#allocation4 + $0x80] sm:$0xff]
      %v4074 = vld [vmem:[#allocation4 + $0x88] sm:$0xff]
      %v4075 = vld [vmem:[#allocation4 + $0x90] sm:$0xff]
      %v4076 = vld [vmem:[#allocation4 + $0x98] sm:$0xff]
      %v4077 = vld [vmem:[#allocation4 + $0xa0] sm:$0xff]
      %v4078 = vld [vmem:[#allocation4 + $0xa8] sm:$0xff]
      %v4079 = vld [vmem:[#allocation4 + $0xb0] sm:$0xff]
      %v4080 = vld [vmem:[#allocation4 + $0xb8] sm:$0xff]
      %v4081 = vld [vmem:[#allocation4 + $0xc0] sm:$0xff]
      %v4082 = vld [vmem:[#allocation4 + $0xc8] sm:$0xff]
      %v4083 = vld [vmem:[#allocation4 + $0xd0] sm:$0xff]
      %v4084 = vld [vmem:[#allocation4 + $0xd8] sm:$0xff]
      %v4085 = vld [vmem:[#allocation4 + $0xe0] sm:$0xff]
      %v4086 = vld [vmem:[#allocation4 + $0xe8] sm:$0xff]
      %v4087 = vld [vmem:[#allocation4 + $0xf0] sm:$0xff]
      %v4088 = vld [vmem:[#allocation4 + $0xf8] sm:$0xff]
      %v4089 = vld [vmem:[#allocation4 + $0x100] sm:$0xff]
      %v4090 = vld [vmem:[#allocation4 + $0x108] sm:$0xff]
      %v4091 = vld [vmem:[#allocation4 + $0x110] sm:$0xff]
      %v4092 = vld [vmem:[#allocation4 + $0x118] sm:$0xff]
      %v4093 = vld [vmem:[#allocation4 + $0x120] sm:$0xff]
      %v4094 = vld [vmem:[#allocation4 + $0x128] sm:$0xff]
      %v4095 = vld [vmem:[#allocation4 + $0x130] sm:$0xff]
      %v4096 = vld [vmem:[#allocation4 + $0x138] sm:$0xff]
      %v4097 = vld [vmem:[#allocation4 + $0x140] sm:$0xff]
      %v4098 = vld [vmem:[#allocation4 + $0x148] sm:$0xff]
      %v4099 = vld [vmem:[#allocation4 + $0x150] sm:$0xff]
      %v4100 = vld [vmem:[#allocation4 + $0x158] sm:$0xff]
      %v4101 = vld [vmem:[#allocation4 + $0x160] sm:$0xff]
      %v4102 = vld [vmem:[#allocation4 + $0x168] sm:$0xff]
      %v4103 = vld [vmem:[#allocation4 + $0x170] sm:$0xff]
      %v4104 = vld [vmem:[#allocation4 + $0x178] sm:$0xff]
      %v4105 = vld [vmem:[#allocation4 + $0x180] sm:$0xff]
      %v4106 = vld [vmem:[#allocation4 + $0x188] sm:$0xff]
      %v4107 = vld [vmem:[#allocation4 + $0x190] sm:$0xff]
      %v4108 = vld [vmem:[#allocation4 + $0x198] sm:$0xff]
      %v4109 = vld [vmem:[#allocation4 + $0x1a0] sm:$0xff]
      %v4110 = vld [vmem:[#allocation4 + $0x1a8] sm:$0xff]
      %v4111 = vld [vmem:[#allocation4 + $0x1b0] sm:$0xff]
      %v4112 = vld [vmem:[#allocation4 + $0x1b8] sm:$0xff]
      %v4113 = vld [vmem:[#allocation4 + $0x1c0] sm:$0xff]
      %v4114 = vld [vmem:[#allocation4 + $0x1c8] sm:$0xff]
      %v4115 = vld [vmem:[#allocation4 + $0x1d0] sm:$0xff]
      %v4116 = vld [vmem:[#allocation4 + $0x1d8] sm:$0xff]
      %v4117 = vld [vmem:[#allocation4 + $0x1e0] sm:$0xff]
      %v4118 = vld [vmem:[#allocation4 + $0x1e8] sm:$0xff]
      %v4119 = vld [vmem:[#allocation4 + $0x1f0] sm:$0xff]
      %v4120 = vld [vmem:[#allocation4 + $0x1f8] sm:$0xff]
      %v4121 = vld [vmem:[#allocation4 + $0x200] sm:$0xff]
      %v4122 = vld [vmem:[#allocation4 + $0x208] sm:$0xff]
      %v4123 = vld [vmem:[#allocation4 + $0x210] sm:$0xff]
      %v4124 = vld [vmem:[#allocation4 + $0x218] sm:$0xff]
      %v4125 = vld [vmem:[#allocation4 + $0x220] sm:$0xff]
      %v4126 = vld [vmem:[#allocation4 + $0x228] sm:$0xff]
      %v4127 = vld [vmem:[#allocation4 + $0x230] sm:$0xff]
      %v4128 = vld [vmem:[#allocation4 + $0x238] sm:$0xff]
      %v4129 = vld [vmem:[#allocation4 + $0x240] sm:$0xff]
      %v4130 = vld [vmem:[#allocation4 + $0x248] sm:$0xff]
      %v4131 = vld [vmem:[#allocation4 + $0x250] sm:$0xff]
      %v4132 = vld [vmem:[#allocation4 + $0x258] sm:$0xff]
      %v4133 = vld [vmem:[#allocation4 + $0x260] sm:$0xff]
      %v4134 = vld [vmem:[#allocation4 + $0x268] sm:$0xff]
      %v4135 = vld [vmem:[#allocation4 + $0x270] sm:$0xff]
      %v4136 = vld [vmem:[#allocation4 + $0x278] sm:$0xff]
      %v4137 = vld [vmem:[#allocation4 + $0x280] sm:$0xff]
      %v4138 = vld [vmem:[#allocation4 + $0x288] sm:$0xff]
      %v4139 = vld [vmem:[#allocation4 + $0x290] sm:$0xff]
      %v4140 = vld [vmem:[#allocation4 + $0x298] sm:$0xff]
      %v4141 = vld [vmem:[#allocation4 + $0x2a0] sm:$0xff]
      %v4142 = vld [vmem:[#allocation4 + $0x2a8] sm:$0xff]
      %v4143 = vld [vmem:[#allocation4 + $0x2b0] sm:$0xff]
      %v4144 = vld [vmem:[#allocation4 + $0x2b8] sm:$0xff]
      %v4145 = vld [vmem:[#allocation4 + $0x2c0] sm:$0xff]
      %v4146 = vld [vmem:[#allocation4 + $0x2c8] sm:$0xff]
      %v4147 = vld [vmem:[#allocation4 + $0x2d0] sm:$0xff]
      %v4148 = vld [vmem:[#allocation4 + $0x2d8] sm:$0xff]
      %v4149 = vld [vmem:[#allocation4 + $0x2e0] sm:$0xff]
      %v4150 = vld [vmem:[#allocation4 + $0x2e8] sm:$0xff]
      %v4151 = vld [vmem:[#allocation4 + $0x2f0] sm:$0xff]
      %v4152 = vld [vmem:[#allocation4 + $0x2f8] sm:$0xff]
      %v4153 = vld [vmem:[#allocation4 + $0x300] sm:$0xff]
      %v4154 = vld [vmem:[#allocation4 + $0x308] sm:$0xff]
      %v4155 = vld [vmem:[#allocation4 + $0x310] sm:$0xff]
      %v4156 = vld [vmem:[#allocation4 + $0x318] sm:$0xff]
      %v4157 = vld [vmem:[#allocation4 + $0x320] sm:$0xff]
      %v4158 = vld [vmem:[#allocation4 + $0x328] sm:$0xff]
      %v4159 = vld [vmem:[#allocation4 + $0x330] sm:$0xff]
      %v4160 = vld [vmem:[#allocation4 + $0x338] sm:$0xff]
      %v4161 = vld [vmem:[#allocation4 + $0x340] sm:$0xff]
      %v4162 = vld [vmem:[#allocation4 + $0x348] sm:$0xff]
      %v4163 = vld [vmem:[#allocation4 + $0x350] sm:$0xff]
      %v4164 = vld [vmem:[#allocation4 + $0x358] sm:$0xff]
      %v4165 = vld [vmem:[#allocation4 + $0x360] sm:$0xff]
      %v4166 = vld [vmem:[#allocation4 + $0x368] sm:$0xff]
      %v4167 = vld [vmem:[#allocation4 + $0x370] sm:$0xff]
      %v4168 = vld [vmem:[#allocation4 + $0x378] sm:$0xff]
      %v4169 = vld [vmem:[#allocation4 + $0x380] sm:$0xff]
      %v4170 = vld [vmem:[#allocation4 + $0x388] sm:$0xff]
      %v4171 = vld [vmem:[#allocation4 + $0x390] sm:$0xff]
      %v4172 = vld [vmem:[#allocation4 + $0x398] sm:$0xff]
      %v4173 = vld [vmem:[#allocation4 + $0x3a0] sm:$0xff]
      %v4174 = vld [vmem:[#allocation4 + $0x3a8] sm:$0xff]
      %v4175 = vld [vmem:[#allocation4 + $0x3b0] sm:$0xff]
      %v4176 = vld [vmem:[#allocation4 + $0x3b8] sm:$0xff]
      %v4177 = vld [vmem:[#allocation4 + $0x3c0] sm:$0xff]
      %v4178 = vld [vmem:[#allocation4 + $0x3c8] sm:$0xff]
      %v4179 = vld [vmem:[#allocation4 + $0x3d0] sm:$0xff]
      %v4180 = vld [vmem:[#allocation4 + $0x3d8] sm:$0xff]
      %v4181 = vld [vmem:[#allocation4 + $0x3e0] sm:$0xff]
      %v4182 = vld [vmem:[#allocation4 + $0x3e8] sm:$0xff]
      %v4183 = vld [vmem:[#allocation4 + $0x3f0] sm:$0xff]
      %v4184 = vld [vmem:[#allocation4 + $0x3f8] sm:$0xff]
      %v4185 = vld [vmem:[#allocation4 + $0x400] sm:$0xff]
      %v4186 = vld [vmem:[#allocation4 + $0x408] sm:$0xff]
      %v4187 = vld [vmem:[#allocation4 + $0x410] sm:$0xff]
      %v4188 = vld [vmem:[#allocation4 + $0x418] sm:$0xff]
      %v4189 = vld [vmem:[#allocation4 + $0x420] sm:$0xff]
      %v4190 = vld [vmem:[#allocation4 + $0x428] sm:$0xff]
      %v4191 = vld [vmem:[#allocation4 + $0x430] sm:$0xff]
      %v4192 = vld [vmem:[#allocation4 + $0x438] sm:$0xff]
      %v4193 = vld [vmem:[#allocation4 + $0x440] sm:$0xff]
      %v4194 = vld [vmem:[#allocation4 + $0x448] sm:$0xff]
      %v4195 = vld [vmem:[#allocation4 + $0x450] sm:$0xff]
      %v4196 = vld [vmem:[#allocation4 + $0x458] sm:$0xff]
      %v4197 = vld [vmem:[#allocation4 + $0x460] sm:$0xff]
      %v4198 = vld [vmem:[#allocation4 + $0x468] sm:$0xff]
      %v4199 = vld [vmem:[#allocation4 + $0x470] sm:$0xff]
      %v4200 = vld [vmem:[#allocation4 + $0x478] sm:$0xff]
      %v4201 = vld [vmem:[#allocation4 + $0x480] sm:$0xff]
      %v4202 = vld [vmem:[#allocation4 + $0x488] sm:$0xff]
      %v4203 = vld [vmem:[#allocation4 + $0x490] sm:$0xff]
      %v4204 = vld [vmem:[#allocation4 + $0x498] sm:$0xff]
      %v4205 = vld [vmem:[#allocation4 + $0x4a0] sm:$0xff]
      %v4206 = vld [vmem:[#allocation4 + $0x4a8] sm:$0xff]
      %v4207 = vld [vmem:[#allocation4 + $0x4b0] sm:$0xff]
      %v4208 = vld [vmem:[#allocation4 + $0x4b8] sm:$0xff]
      %v4209 = vld [vmem:[#allocation4 + $0x4c0] sm:$0xff]
      %v4210 = vld [vmem:[#allocation4 + $0x4c8] sm:$0xff]
      %v4211 = vld [vmem:[#allocation4 + $0x4d0] sm:$0xff]
      %v4212 = vld [vmem:[#allocation4 + $0x4d8] sm:$0xff]
      %v4213 = vld [vmem:[#allocation4 + $0x4e0] sm:$0xff]
      %v4214 = vld [vmem:[#allocation4 + $0x4e8] sm:$0xff]
      %v4215 = vld [vmem:[#allocation4 + $0x4f0] sm:$0xff]
      %v4216 = vld [vmem:[#allocation4 + $0x4f8] sm:$0xff]
      %v4217 = vld [vmem:[#allocation4 + $0x500] sm:$0xff]
      %v4218 = vld [vmem:[#allocation4 + $0x508] sm:$0xff]
      %v4219 = vld [vmem:[#allocation4 + $0x510] sm:$0xff]
      %v4220 = vld [vmem:[#allocation4 + $0x518] sm:$0xff]
      %v4221 = vld [vmem:[#allocation4 + $0x520] sm:$0xff]
      %v4222 = vld [vmem:[#allocation4 + $0x528] sm:$0xff]
      %v4223 = vld [vmem:[#allocation4 + $0x530] sm:$0xff]
      %v4224 = vld [vmem:[#allocation4 + $0x538] sm:$0xff]
      %v4225 = vld [vmem:[#allocation4 + $0x540] sm:$0xff]
      %v4226 = vld [vmem:[#allocation4 + $0x548] sm:$0xff]
      %v4227 = vld [vmem:[#allocation4 + $0x550] sm:$0xff]
      %v4228 = vld [vmem:[#allocation4 + $0x558] sm:$0xff]
      %v4229 = vld [vmem:[#allocation4 + $0x560] sm:$0xff]
      %v4230 = vld [vmem:[#allocation4 + $0x568] sm:$0xff]
      %v4231 = vld [vmem:[#allocation4 + $0x570] sm:$0xff]
      %v4232 = vld [vmem:[#allocation4 + $0x578] sm:$0xff]
      %v4233 = vld [vmem:[#allocation4 + $0x580] sm:$0xff]
      %v4234 = vld [vmem:[#allocation4 + $0x588] sm:$0xff]
      %v4235 = vld [vmem:[#allocation4 + $0x590] sm:$0xff]
      %v4236 = vld [vmem:[#allocation4 + $0x598] sm:$0xff]
      %v4237 = vld [vmem:[#allocation4 + $0x5a0] sm:$0xff]
      %v4238 = vld [vmem:[#allocation4 + $0x5a8] sm:$0xff]
      %v4239 = vld [vmem:[#allocation4 + $0x5b0] sm:$0xff]
      %v4240 = vld [vmem:[#allocation4 + $0x5b8] sm:$0xff]
      %v4241 = vld [vmem:[#allocation4 + $0x5c0] sm:$0xff]
      %v4242 = vld [vmem:[#allocation4 + $0x5c8] sm:$0xff]
      %v4243 = vld [vmem:[#allocation4 + $0x5d0] sm:$0xff]
      %v4244 = vld [vmem:[#allocation4 + $0x5d8] sm:$0xff]
      %v4245 = vld [vmem:[#allocation4 + $0x5e0] sm:$0xff]
      %v4246 = vld [vmem:[#allocation4 + $0x5e8] sm:$0xff]
      %v4247 = vld [vmem:[#allocation4 + $0x5f0] sm:$0xff]
      %v4248 = vld [vmem:[#allocation4 + $0x5f8] sm:$0xff]
      %v4249 = vld [vmem:[#allocation4 + $0x600] sm:$0xff]
      %v4250 = vld [vmem:[#allocation4 + $0x608] sm:$0xff]
      %v4251 = vld [vmem:[#allocation4 + $0x610] sm:$0xff]
      %v4252 = vld [vmem:[#allocation4 + $0x618] sm:$0xff]
      %v4253 = vld [vmem:[#allocation4 + $0x620] sm:$0xff]
      %v4254 = vld [vmem:[#allocation4 + $0x628] sm:$0xff]
      %v4255 = vld [vmem:[#allocation4 + $0x630] sm:$0xff]
      %v4256 = vld [vmem:[#allocation4 + $0x638] sm:$0xff]
      %v4257 = vld [vmem:[#allocation4 + $0x640] sm:$0xff]
      %v4258 = vld [vmem:[#allocation4 + $0x648] sm:$0xff]
      %v4259 = vld [vmem:[#allocation4 + $0x650] sm:$0xff]
      %v4260 = vld [vmem:[#allocation4 + $0x658] sm:$0xff]
      %v4261 = vld [vmem:[#allocation4 + $0x660] sm:$0xff]
      %v4262 = vld [vmem:[#allocation4 + $0x668] sm:$0xff]
      %v4263 = vld [vmem:[#allocation4 + $0x670] sm:$0xff]
      %v4264 = vld [vmem:[#allocation4 + $0x678] sm:$0xff]
      %v4265 = vld [vmem:[#allocation4 + $0x680] sm:$0xff]
      %v4266 = vld [vmem:[#allocation4 + $0x688] sm:$0xff]
      %v4267 = vld [vmem:[#allocation4 + $0x690] sm:$0xff]
      %v4268 = vld [vmem:[#allocation4 + $0x698] sm:$0xff]
      %v4269 = vld [vmem:[#allocation4 + $0x6a0] sm:$0xff]
      %v4270 = vld [vmem:[#allocation4 + $0x6a8] sm:$0xff]
      %v4271 = vld [vmem:[#allocation4 + $0x6b0] sm:$0xff]
      %v4272 = vld [vmem:[#allocation4 + $0x6b8] sm:$0xff]
      %v4273 = vld [vmem:[#allocation4 + $0x6c0] sm:$0xff]
      %v4274 = vld [vmem:[#allocation4 + $0x6c8] sm:$0xff]
      %v4275 = vld [vmem:[#allocation4 + $0x6d0] sm:$0xff]
      %v4276 = vld [vmem:[#allocation4 + $0x6d8] sm:$0xff]
      %v4277 = vld [vmem:[#allocation4 + $0x6e0] sm:$0xff]
      %v4278 = vld [vmem:[#allocation4 + $0x6e8] sm:$0xff]
      %v4279 = vld [vmem:[#allocation4 + $0x6f0] sm:$0xff]
      %v4280 = vld [vmem:[#allocation4 + $0x6f8] sm:$0xff]
      %v4281 = vld [vmem:[#allocation4 + $0x700] sm:$0xff]
      %v4282 = vld [vmem:[#allocation4 + $0x708] sm:$0xff]
      %v4283 = vld [vmem:[#allocation4 + $0x710] sm:$0xff]
      %v4284 = vld [vmem:[#allocation4 + $0x718] sm:$0xff]
      %v4285 = vld [vmem:[#allocation4 + $0x720] sm:$0xff]
      %v4286 = vld [vmem:[#allocation4 + $0x728] sm:$0xff]
      %v4287 = vld [vmem:[#allocation4 + $0x730] sm:$0xff]
      %v4288 = vld [vmem:[#allocation4 + $0x738] sm:$0xff]
      %v4289 = vld [vmem:[#allocation4 + $0x740] sm:$0xff]
      %v4290 = vld [vmem:[#allocation4 + $0x748] sm:$0xff]
      %v4291 = vld [vmem:[#allocation4 + $0x750] sm:$0xff]
      %v4292 = vld [vmem:[#allocation4 + $0x758] sm:$0xff]
      %v4293 = vld [vmem:[#allocation4 + $0x760] sm:$0xff]
      %v4294 = vld [vmem:[#allocation4 + $0x768] sm:$0xff]
      %v4295 = vld [vmem:[#allocation4 + $0x770] sm:$0xff]
      %v4296 = vld [vmem:[#allocation4 + $0x778] sm:$0xff]
      %v4297 = vld [vmem:[#allocation4 + $0x780] sm:$0xff]
      %v4298 = vld [vmem:[#allocation4 + $0x788] sm:$0xff]
      %v4299 = vld [vmem:[#allocation4 + $0x790] sm:$0xff]
      %v4300 = vld [vmem:[#allocation4 + $0x798] sm:$0xff]
      %v4301 = vld [vmem:[#allocation4 + $0x7a0] sm:$0xff]
      %v4302 = vld [vmem:[#allocation4 + $0x7a8] sm:$0xff]
      %v4303 = vld [vmem:[#allocation4 + $0x7b0] sm:$0xff]
      %v4304 = vld [vmem:[#allocation4 + $0x7b8] sm:$0xff]
      %v4305 = vld [vmem:[#allocation4 + $0x7c0] sm:$0xff]
      %v4306 = vld [vmem:[#allocation4 + $0x7c8] sm:$0xff]
      %v4307 = vld [vmem:[#allocation4 + $0x7d0] sm:$0xff]
      %v4308 = vld [vmem:[#allocation4 + $0x7d8] sm:$0xff]
      %v4309 = vld [vmem:[#allocation4 + $0x7e0] sm:$0xff]
      %v4310 = vld [vmem:[#allocation4 + $0x7e8] sm:$0xff]
      %v4311 = vld [vmem:[#allocation4 + $0x7f0] sm:$0xff]
      %v4312 = vld [vmem:[#allocation4 + $0x7f8] sm:$0xff]
      %v4313 = vld [vmem:[#allocation4 + $0x800] sm:$0xff]
      %v4314 = vld [vmem:[#allocation4 + $0x808] sm:$0xff]
      %v4315 = vld [vmem:[#allocation4 + $0x810] sm:$0xff]
      %v4316 = vld [vmem:[#allocation4 + $0x818] sm:$0xff]
      %v4317 = vld [vmem:[#allocation4 + $0x820] sm:$0xff]
      %v4318 = vld [vmem:[#allocation4 + $0x828] sm:$0xff]
      %v4319 = vld [vmem:[#allocation4 + $0x830] sm:$0xff]
      %v4320 = vld [vmem:[#allocation4 + $0x838] sm:$0xff]
      %v4321 = vld [vmem:[#allocation4 + $0x840] sm:$0xff]
      %v4322 = vld [vmem:[#allocation4 + $0x848] sm:$0xff]
      %v4323 = vld [vmem:[#allocation4 + $0x850] sm:$0xff]
      %v4324 = vld [vmem:[#allocation4 + $0x858] sm:$0xff]
      %v4325 = vld [vmem:[#allocation4 + $0x860] sm:$0xff]
      %v4326 = vld [vmem:[#allocation4 + $0x868] sm:$0xff]
      %v4327 = vld [vmem:[#allocation4 + $0x870] sm:$0xff]
      %v4328 = vld [vmem:[#allocation4 + $0x878] sm:$0xff]
      %v4329 = vld [vmem:[#allocation4 + $0x880] sm:$0xff]
      %v4330 = vld [vmem:[#allocation4 + $0x888] sm:$0xff]
      %v4331 = vld [vmem:[#allocation4 + $0x890] sm:$0xff]
      %v4332 = vld [vmem:[#allocation4 + $0x898] sm:$0xff]
      %v4333 = vld [vmem:[#allocation4 + $0x8a0] sm:$0xff]
      %v4334 = vld [vmem:[#allocation4 + $0x8a8] sm:$0xff]
      %v4335 = vld [vmem:[#allocation4 + $0x8b0] sm:$0xff]
      %v4336 = vld [vmem:[#allocation4 + $0x8b8] sm:$0xff]
      %v4337 = vld [vmem:[#allocation4 + $0x8c0] sm:$0xff]
      %v4338 = vld [vmem:[#allocation4 + $0x8c8] sm:$0xff]
      %v4339 = vld [vmem:[#allocation4 + $0x8d0] sm:$0xff]
      %v4340 = vld [vmem:[#allocation4 + $0x8d8] sm:$0xff]
      %v4341 = vld [vmem:[#allocation4 + $0x8e0] sm:$0xff]
      %v4342 = vld [vmem:[#allocation4 + $0x8e8] sm:$0xff]
      %v4343 = vld [vmem:[#allocation4 + $0x8f0] sm:$0xff]
      %v4344 = vld [vmem:[#allocation4 + $0x8f8] sm:$0xff]
      %v4345 = vld [vmem:[#allocation4 + $0x900] sm:$0xff]
      %v4346 = vld [vmem:[#allocation4 + $0x908] sm:$0xff]
      %v4347 = vld [vmem:[#allocation4 + $0x910] sm:$0xff]
      %v4348 = vld [vmem:[#allocation4 + $0x918] sm:$0xff]
      %v4349 = vld [vmem:[#allocation4 + $0x920] sm:$0xff]
      %v4350 = vld [vmem:[#allocation4 + $0x928] sm:$0xff]
      %v4351 = vld [vmem:[#allocation4 + $0x930] sm:$0xff]
      %v4352 = vld [vmem:[#allocation4 + $0x938] sm:$0xff]
      %v4353 = vld [vmem:[#allocation4 + $0x940] sm:$0xff]
      %v4354 = vld [vmem:[#allocation4 + $0x948] sm:$0xff]
      %v4355 = vld [vmem:[#allocation4 + $0x950] sm:$0xff]
      %v4356 = vld [vmem:[#allocation4 + $0x958] sm:$0xff]
      %v4357 = vld [vmem:[#allocation4 + $0x960] sm:$0xff]
      %v4358 = vld [vmem:[#allocation4 + $0x968] sm:$0xff]
      %v4359 = vld [vmem:[#allocation4 + $0x970] sm:$0xff]
      %v4360 = vld [vmem:[#allocation4 + $0x978] sm:$0xff]
      %v4361 = vld [vmem:[#allocation4 + $0x980] sm:$0xff]
      %v4362 = vld [vmem:[#allocation4 + $0x988] sm:$0xff]
      %v4363 = vld [vmem:[#allocation4 + $0x990] sm:$0xff]
      %v4364 = vld [vmem:[#allocation4 + $0x998] sm:$0xff]
      %v4365 = vld [vmem:[#allocation4 + $0x9a0] sm:$0xff]
      %v4366 = vld [vmem:[#allocation4 + $0x9a8] sm:$0xff]
      %v4367 = vld [vmem:[#allocation4 + $0x9b0] sm:$0xff]
      %v4368 = vld [vmem:[#allocation4 + $0x9b8] sm:$0xff]
      %v4369 = vld [vmem:[#allocation4 + $0x9c0] sm:$0xff]
      %v4370 = vld [vmem:[#allocation4 + $0x9c8] sm:$0xff]
      %v4371 = vld [vmem:[#allocation4 + $0x9d0] sm:$0xff]
      %v4372 = vld [vmem:[#allocation4 + $0x9d8] sm:$0xff]
      %v4373 = vld [vmem:[#allocation4 + $0x9e0] sm:$0xff]
      %v4374 = vld [vmem:[#allocation4 + $0x9e8] sm:$0xff]
      %v4375 = vld [vmem:[#allocation4 + $0x9f0] sm:$0xff]
      %v4376 = vld [vmem:[#allocation4 + $0x9f8] sm:$0xff]
      %v4377 = vld [vmem:[#allocation4 + $0xa00] sm:$0xff]
      %v4378 = vld [vmem:[#allocation4 + $0xa08] sm:$0xff]
      %v4379 = vld [vmem:[#allocation4 + $0xa10] sm:$0xff]
      %v4380 = vld [vmem:[#allocation4 + $0xa18] sm:$0xff]
      %v4381 = vld [vmem:[#allocation4 + $0xa20] sm:$0xff]
      %v4382 = vld [vmem:[#allocation4 + $0xa28] sm:$0xff]
      %v4383 = vld [vmem:[#allocation4 + $0xa30] sm:$0xff]
      %v4384 = vld [vmem:[#allocation4 + $0xa38] sm:$0xff]
      %v4385 = vld [vmem:[#allocation4 + $0xa40] sm:$0xff]
      %v4386 = vld [vmem:[#allocation4 + $0xa48] sm:$0xff]
      %v4387 = vld [vmem:[#allocation4 + $0xa50] sm:$0xff]
      %v4388 = vld [vmem:[#allocation4 + $0xa58] sm:$0xff]
      %v4389 = vld [vmem:[#allocation4 + $0xa60] sm:$0xff]
      %v4390 = vld [vmem:[#allocation4 + $0xa68] sm:$0xff]
      %v4391 = vld [vmem:[#allocation4 + $0xa70] sm:$0xff]
      %v4392 = vld [vmem:[#allocation4 + $0xa78] sm:$0xff]
      %v4393 = vld [vmem:[#allocation4 + $0xa80] sm:$0xff]
      %v4394 = vld [vmem:[#allocation4 + $0xa88] sm:$0xff]
      %v4395 = vld [vmem:[#allocation4 + $0xa90] sm:$0xff]
      %v4396 = vld [vmem:[#allocation4 + $0xa98] sm:$0xff]
      %v4397 = vld [vmem:[#allocation4 + $0xaa0] sm:$0xff]
      %v4398 = vld [vmem:[#allocation4 + $0xaa8] sm:$0xff]
      %v4399 = vld [vmem:[#allocation4 + $0xab0] sm:$0xff]
      %v4400 = vld [vmem:[#allocation4 + $0xab8] sm:$0xff]
      %v4401 = vld [vmem:[#allocation4 + $0xac0] sm:$0xff]
      %v4402 = vld [vmem:[#allocation4 + $0xac8] sm:$0xff]
      %v4403 = vld [vmem:[#allocation4 + $0xad0] sm:$0xff]
      %v4404 = vld [vmem:[#allocation4 + $0xad8] sm:$0xff]
      %v4405 = vld [vmem:[#allocation4 + $0xae0] sm:$0xff]
      %v4406 = vld [vmem:[#allocation4 + $0xae8] sm:$0xff]
      %v4407 = vld [vmem:[#allocation4 + $0xaf0] sm:$0xff]
      %v4408 = vld [vmem:[#allocation4 + $0xaf8] sm:$0xff]
      %v4409 = vld [vmem:[#allocation4 + $0xb00] sm:$0xff]
      %v4410 = vld [vmem:[#allocation4 + $0xb08] sm:$0xff]
      %v4411 = vld [vmem:[#allocation4 + $0xb10] sm:$0xff]
      %v4412 = vld [vmem:[#allocation4 + $0xb18] sm:$0xff]
      %v4413 = vld [vmem:[#allocation4 + $0xb20] sm:$0xff]
      %v4414 = vld [vmem:[#allocation4 + $0xb28] sm:$0xff]
      %v4415 = vld [vmem:[#allocation4 + $0xb30] sm:$0xff]
      %v4416 = vld [vmem:[#allocation4 + $0xb38] sm:$0xff]
      %v4417 = vld [vmem:[#allocation4 + $0xb40] sm:$0xff]
      %v4418 = vld [vmem:[#allocation4 + $0xb48] sm:$0xff]
      %v4419 = vld [vmem:[#allocation4 + $0xb50] sm:$0xff]
      %v4420 = vld [vmem:[#allocation4 + $0xb58] sm:$0xff]
      %v4421 = vld [vmem:[#allocation4 + $0xb60] sm:$0xff]
      %v4422 = vld [vmem:[#allocation4 + $0xb68] sm:$0xff]
      %v4423 = vld [vmem:[#allocation4 + $0xb70] sm:$0xff]
      %v4424 = vld [vmem:[#allocation4 + $0xb78] sm:$0xff]
      %v4425 = vld [vmem:[#allocation4 + $0xb80] sm:$0xff]
      %v4426 = vld [vmem:[#allocation4 + $0xb88] sm:$0xff]
      %v4427 = vld [vmem:[#allocation4 + $0xb90] sm:$0xff]
      %v4428 = vld [vmem:[#allocation4 + $0xb98] sm:$0xff]
      %v4429 = vld [vmem:[#allocation4 + $0xba0] sm:$0xff]
      %v4430 = vld [vmem:[#allocation4 + $0xba8] sm:$0xff]
      %v4431 = vld [vmem:[#allocation4 + $0xbb0] sm:$0xff]
      %v4432 = vld [vmem:[#allocation4 + $0xbb8] sm:$0xff]
      %v4433 = vld [vmem:[#allocation4 + $0xbc0] sm:$0xff]
      %v4434 = vld [vmem:[#allocation4 + $0xbc8] sm:$0xff]
      %v4435 = vld [vmem:[#allocation4 + $0xbd0] sm:$0xff]
      %v4436 = vld [vmem:[#allocation4 + $0xbd8] sm:$0xff]
      %v4437 = vld [vmem:[#allocation4 + $0xbe0] sm:$0xff]
      %v4438 = vld [vmem:[#allocation4 + $0xbe8] sm:$0xff]
      %v4439 = vld [vmem:[#allocation4 + $0xbf0] sm:$0xff]
      %v4440 = vld [vmem:[#allocation4 + $0xbf8] sm:$0xff]
      %v4441 = vld [vmem:[#allocation4 + $0xc00] sm:$0xff]
      %v4442 = vld [vmem:[#allocation4 + $0xc08] sm:$0xff]
      %v4443 = vld [vmem:[#allocation4 + $0xc10] sm:$0xff]
      %v4444 = vld [vmem:[#allocation4 + $0xc18] sm:$0xff]
      %v4445 = vld [vmem:[#allocation4 + $0xc20] sm:$0xff]
      %v4446 = vld [vmem:[#allocation4 + $0xc28] sm:$0xff]
      %v4447 = vld [vmem:[#allocation4 + $0xc30] sm:$0xff]
      %v4448 = vld [vmem:[#allocation4 + $0xc38] sm:$0xff]
      %v4449 = vld [vmem:[#allocation4 + $0xc40] sm:$0xff]
      %v4450 = vld [vmem:[#allocation4 + $0xc48] sm:$0xff]
      %v4451 = vld [vmem:[#allocation4 + $0xc50] sm:$0xff]
      %v4452 = vld [vmem:[#allocation4 + $0xc58] sm:$0xff]
      %v4453 = vld [vmem:[#allocation4 + $0xc60] sm:$0xff]
      %v4454 = vld [vmem:[#allocation4 + $0xc68] sm:$0xff]
      %v4455 = vld [vmem:[#allocation4 + $0xc70] sm:$0xff]
      %v4456 = vld [vmem:[#allocation4 + $0xc78] sm:$0xff]
      %v4457 = vld [vmem:[#allocation4 + $0xc80] sm:$0xff]
      %v4458 = vld [vmem:[#allocation4 + $0xc88] sm:$0xff]
      %v4459 = vld [vmem:[#allocation4 + $0xc90] sm:$0xff]
      %v4460 = vld [vmem:[#allocation4 + $0xc98] sm:$0xff]
      %v4461 = vld [vmem:[#allocation4 + $0xca0] sm:$0xff]
      %v4462 = vld [vmem:[#allocation4 + $0xca8] sm:$0xff]
      %v4463 = vld [vmem:[#allocation4 + $0xcb0] sm:$0xff]
      %v4464 = vld [vmem:[#allocation4 + $0xcb8] sm:$0xff]
      %v4465 = vld [vmem:[#allocation4 + $0xcc0] sm:$0xff]
      %v4466 = vld [vmem:[#allocation4 + $0xcc8] sm:$0xff]
      %v4467 = vld [vmem:[#allocation4 + $0xcd0] sm:$0xff]
      %v4468 = vld [vmem:[#allocation4 + $0xcd8] sm:$0xff]
      %v4469 = vld [vmem:[#allocation4 + $0xce0] sm:$0xff]
      %v4470 = vld [vmem:[#allocation4 + $0xce8] sm:$0xff]
      %v4471 = vld [vmem:[#allocation4 + $0xcf0] sm:$0xff]
      %v4472 = vld [vmem:[#allocation4 + $0xcf8] sm:$0xff]
      %v4473 = vld [vmem:[#allocation4 + $0xd00] sm:$0xff]
      %v4474 = vld [vmem:[#allocation4 + $0xd08] sm:$0xff]
      %v4475 = vld [vmem:[#allocation4 + $0xd10] sm:$0xff]
      %v4476 = vld [vmem:[#allocation4 + $0xd18] sm:$0xff]
      %v4477 = vld [vmem:[#allocation4 + $0xd20] sm:$0xff]
      %v4478 = vld [vmem:[#allocation4 + $0xd28] sm:$0xff]
      %v4479 = vld [vmem:[#allocation4 + $0xd30] sm:$0xff]
      %v4480 = vld [vmem:[#allocation4 + $0xd38] sm:$0xff]
      %v4481 = vld [vmem:[#allocation4 + $0xd40] sm:$0xff]
      %v4482 = vld [vmem:[#allocation4 + $0xd48] sm:$0xff]
      %v4483 = vld [vmem:[#allocation4 + $0xd50] sm:$0xff]
      %v4484 = vld [vmem:[#allocation4 + $0xd58] sm:$0xff]
      %v4485 = vld [vmem:[#allocation4 + $0xd60] sm:$0xff]
      %v4486 = vld [vmem:[#allocation4 + $0xd68] sm:$0xff]
      %v4487 = vld [vmem:[#allocation4 + $0xd70] sm:$0xff]
      %v4488 = vld [vmem:[#allocation4 + $0xd78] sm:$0xff]
      %v4489 = vld [vmem:[#allocation4 + $0xd80] sm:$0xff]
      %v4490 = vld [vmem:[#allocation4 + $0xd88] sm:$0xff]
      %v4491 = vld [vmem:[#allocation4 + $0xd90] sm:$0xff]
      %v4492 = vld [vmem:[#allocation4 + $0xd98] sm:$0xff]
      %v4493 = vld [vmem:[#allocation4 + $0xda0] sm:$0xff]
      %v4494 = vld [vmem:[#allocation4 + $0xda8] sm:$0xff]
      %v4495 = vld [vmem:[#allocation4 + $0xdb0] sm:$0xff]
      %v4496 = vld [vmem:[#allocation4 + $0xdb8] sm:$0xff]
      %v4497 = vld [vmem:[#allocation4 + $0xdc0] sm:$0xff]
      %v4498 = vld [vmem:[#allocation4 + $0xdc8] sm:$0xff]
      %v4499 = vld [vmem:[%s2] sm:$0xff]
      %v4500 = vld [vmem:[%s2 + $0x8] sm:$0xff]
      %v4501 = vld [vmem:[%s2 + $0x10] sm:$0xff]
      %v4502 = vld [vmem:[%s2 + $0x18] sm:$0xff]
      %v4503 = vld [vmem:[%s2 + $0x20] sm:$0xff]
      %v4504 = vld [vmem:[%s2 + $0x28] sm:$0xff]
      %v4505 = vld [vmem:[%s2 + $0x30] sm:$0xff]
      %v4506 = vld [vmem:[%s2 + $0x38] sm:$0xff]
      %v4507 = vld [vmem:[%s2 + $0x40] sm:$0xff]
      %v4508 = vld [vmem:[%s2 + $0x48] sm:$0xff]
      %v4509 = vld [vmem:[%s2 + $0x50] sm:$0xff]
      %v4510 = vld [vmem:[%s2 + $0x58] sm:$0xff]
      %v4511 = vld [vmem:[%s2 + $0x60] sm:$0xff]
      %v4512 = vld [vmem:[%s2 + $0x68] sm:$0xff]
      %v4513 = vld [vmem:[%s2 + $0x70] sm:$0xff]
      %v4514 = vld [vmem:[%s2 + $0x78] sm:$0xff]
      %v4515 = vld [vmem:[%s2 + $0x80] sm:$0xff]
      %v4516 = vld [vmem:[%s2 + $0x88] sm:$0xff]
      %v4517 = vld [vmem:[%s2 + $0x90] sm:$0xff]
      %v4518 = vld [vmem:[%s2 + $0x98] sm:$0xff]
      %v4519 = vld [vmem:[%s2 + $0xa0] sm:$0xff]
      %v4520 = vld [vmem:[%s2 + $0xa8] sm:$0xff]
      %v4521 = vld [vmem:[%s2 + $0xb0] sm:$0xff]
      %v4522 = vld [vmem:[%s2 + $0xb8] sm:$0xff]
      %v4523 = vld [vmem:[%s2 + $0xc0] sm:$0xff]
      %v4524 = vld [vmem:[%s2 + $0xc8] sm:$0xff]
      %v4525 = vld [vmem:[%s2 + $0xd0] sm:$0xff]
      %v4526 = vld [vmem:[%s2 + $0xd8] sm:$0xff]
      %v4527 = vld [vmem:[%s2 + $0xe0] sm:$0xff]
      %v4528 = vld [vmem:[%s2 + $0xe8] sm:$0xff]
      %v4529 = vld [vmem:[%s2 + $0xf0] sm:$0xff]
      %v4530 = vld [vmem:[%s2 + $0xf8] sm:$0xff]
      %v4531 = vld [vmem:[%s2 + $0x100] sm:$0xff]
      %v4532 = vld [vmem:[%s2 + $0x108] sm:$0xff]
      %v4533 = vld [vmem:[%s2 + $0x110] sm:$0xff]
      %v4534 = vld [vmem:[%s2 + $0x118] sm:$0xff]
      %v4535 = vld [vmem:[%s2 + $0x120] sm:$0xff]
      %v4536 = vld [vmem:[%s2 + $0x128] sm:$0xff]
      %v4537 = vld [vmem:[%s2 + $0x130] sm:$0xff]
      %v4538 = vld [vmem:[%s2 + $0x138] sm:$0xff]
      %v4539 = vld [vmem:[%s2 + $0x140] sm:$0xff]
      %v4540 = vld [vmem:[%s2 + $0x148] sm:$0xff]
      %v4541 = vld [vmem:[%s2 + $0x150] sm:$0xff]
      %v4542 = vld [vmem:[%s2 + $0x158] sm:$0xff]
      %v4543 = vld [vmem:[%s2 + $0x160] sm:$0xff]
      %v4544 = vld [vmem:[%s2 + $0x168] sm:$0xff]
      %v4545 = vld [vmem:[%s2 + $0x170] sm:$0xff]
      %v4546 = vld [vmem:[%s2 + $0x178] sm:$0xff]
      %v4547 = vld [vmem:[%s2 + $0x180] sm:$0xff]
      %v4548 = vld [vmem:[%s2 + $0x188] sm:$0xff]
      %v4549 = vld [vmem:[%s2 + $0x190] sm:$0xff]
      %v4550 = vld [vmem:[%s2 + $0x198] sm:$0xff]
      %v4551 = vld [vmem:[%s2 + $0x1a0] sm:$0xff]
      %v4552 = vld [vmem:[%s2 + $0x1a8] sm:$0xff]
      %v4553 = vld [vmem:[%s2 + $0x1b0] sm:$0xff]
      %v4554 = vld [vmem:[%s2 + $0x1b8] sm:$0xff]
      %v4555 = vld [vmem:[%s2 + $0x1c0] sm:$0xff]
      %v4556 = vld [vmem:[%s2 + $0x1c8] sm:$0xff]
      %v4557 = vld [vmem:[%s2 + $0x1d0] sm:$0xff]
      %v4558 = vld [vmem:[%s2 + $0x1d8] sm:$0xff]
      %v4559 = vld [vmem:[%s2 + $0x1e0] sm:$0xff]
      %v4560 = vld [vmem:[%s2 + $0x1e8] sm:$0xff]
      %v4561 = vld [vmem:[%s2 + $0x1f0] sm:$0xff]
      %v4562 = vld [vmem:[%s2 + $0x1f8] sm:$0xff]
      %v4563 = vld [vmem:[%s2 + $0x200] sm:$0xff]
      %v4564 = vld [vmem:[%s2 + $0x208] sm:$0xff]
      %v4565 = vld [vmem:[%s2 + $0x210] sm:$0xff]
      %v4566 = vld [vmem:[%s2 + $0x218] sm:$0xff]
      %v4567 = vld [vmem:[%s2 + $0x220] sm:$0xff]
      %v4568 = vld [vmem:[%s2 + $0x228] sm:$0xff]
      %v4569 = vld [vmem:[%s2 + $0x230] sm:$0xff]
      %v4570 = vld [vmem:[%s2 + $0x238] sm:$0xff]
      %v4571 = vld [vmem:[%s2 + $0x240] sm:$0xff]
      %v4572 = vld [vmem:[%s2 + $0x248] sm:$0xff]
      %v4573 = vld [vmem:[%s2 + $0x250] sm:$0xff]
      %v4574 = vld [vmem:[%s2 + $0x258] sm:$0xff]
      %v4575 = vld [vmem:[%s2 + $0x260] sm:$0xff]
      %v4576 = vld [vmem:[%s2 + $0x268] sm:$0xff]
      %v4577 = vld [vmem:[%s2 + $0x270] sm:$0xff]
      %v4578 = vld [vmem:[%s2 + $0x278] sm:$0xff]
      %v4579 = vld [vmem:[%s2 + $0x280] sm:$0xff]
      %v4580 = vld [vmem:[%s2 + $0x288] sm:$0xff]
      %v4581 = vld [vmem:[%s2 + $0x290] sm:$0xff]
      %v4582 = vld [vmem:[%s2 + $0x298] sm:$0xff]
      %v4583 = vld [vmem:[%s2 + $0x2a0] sm:$0xff]
      %v4584 = vld [vmem:[%s2 + $0x2a8] sm:$0xff]
      %v4585 = vld [vmem:[%s2 + $0x2b0] sm:$0xff]
      %v4586 = vld [vmem:[%s2 + $0x2b8] sm:$0xff]
      %v4587 = vld [vmem:[%s2 + $0x2c0] sm:$0xff]
      %v4588 = vld [vmem:[%s2 + $0x2c8] sm:$0xff]
      %v4589 = vld [vmem:[%s2 + $0x2d0] sm:$0xff]
      %v4590 = vld [vmem:[%s2 + $0x2d8] sm:$0xff]
      %v4591 = vld [vmem:[%s2 + $0x2e0] sm:$0xff]
      %v4592 = vld [vmem:[%s2 + $0x2e8] sm:$0xff]
      %v4593 = vld [vmem:[%s2 + $0x2f0] sm:$0xff]
      %v4594 = vld [vmem:[%s2 + $0x2f8] sm:$0xff]
      %v4595 = vld [vmem:[%s2 + $0x300] sm:$0xff]
      %v4596 = vld [vmem:[%s2 + $0x308] sm:$0xff]
      %v4597 = vld [vmem:[%s2 + $0x310] sm:$0xff]
      %v4598 = vld [vmem:[%s2 + $0x318] sm:$0xff]
      %v4599 = vld [vmem:[%s2 + $0x320] sm:$0xff]
      %v4600 = vld [vmem:[%s2 + $0x328] sm:$0xff]
      %v4601 = vld [vmem:[%s2 + $0x330] sm:$0xff]
      %v4602 = vld [vmem:[%s2 + $0x338] sm:$0xff]
      %v4603 = vld [vmem:[%s2 + $0x340] sm:$0xff]
      %v4604 = vld [vmem:[%s2 + $0x348] sm:$0xff]
      %v4605 = vld [vmem:[%s2 + $0x350] sm:$0xff]
      %v4606 = vld [vmem:[%s2 + $0x358] sm:$0xff]
      %v4607 = vld [vmem:[%s2 + $0x360] sm:$0xff]
      %v4608 = vld [vmem:[%s2 + $0x368] sm:$0xff]
      %v4609 = vld [vmem:[%s2 + $0x370] sm:$0xff]
      %v4610 = vld [vmem:[%s2 + $0x378] sm:$0xff]
      %v4611 = vld [vmem:[%s2 + $0x380] sm:$0xff]
      %v4612 = vld [vmem:[%s2 + $0x388] sm:$0xff]
      %v4613 = vld [vmem:[%s2 + $0x390] sm:$0xff]
      %v4614 = vld [vmem:[%s2 + $0x398] sm:$0xff]
      %v4615 = vld [vmem:[%s2 + $0x3a0] sm:$0xff]
      %v4616 = vld [vmem:[%s2 + $0x3a8] sm:$0xff]
      %v4617 = vld [vmem:[%s2 + $0x3b0] sm:$0xff]
      %v4618 = vld [vmem:[%s2 + $0x3b8] sm:$0xff]
      %v4619 = vld [vmem:[%s2 + $0x3c0] sm:$0xff]
      %v4620 = vld [vmem:[%s2 + $0x3c8] sm:$0xff]
      %v4621 = vld [vmem:[%s2 + $0x3d0] sm:$0xff]
      %v4622 = vld [vmem:[%s2 + $0x3d8] sm:$0xff]
      %v4623 = vld [vmem:[%s2 + $0x3e0] sm:$0xff]
      %v4624 = vld [vmem:[%s2 + $0x3e8] sm:$0xff]
      %v4625 = vld [vmem:[%s2 + $0x3f0] sm:$0xff]
      %v4626 = vld [vmem:[%s2 + $0x3f8] sm:$0xff]
      %v4627 = vld [vmem:[%s2 + $0x400] sm:$0xff]
      %v4628 = vld [vmem:[%s2 + $0x408] sm:$0xff]
      %v4629 = vld [vmem:[%s2 + $0x410] sm:$0xff]
      %v4630 = vld [vmem:[%s2 + $0x418] sm:$0xff]
      %v4631 = vld [vmem:[%s2 + $0x420] sm:$0xff]
      %v4632 = vld [vmem:[%s2 + $0x428] sm:$0xff]
      %v4633 = vld [vmem:[%s2 + $0x430] sm:$0xff]
      %v4634 = vld [vmem:[%s2 + $0x438] sm:$0xff]
      %v4635 = vld [vmem:[%s2 + $0x440] sm:$0xff]
      %v4636 = vld [vmem:[%s2 + $0x448] sm:$0xff]
      %v4637 = vld [vmem:[%s2 + $0x450] sm:$0xff]
      %v4638 = vld [vmem:[%s2 + $0x458] sm:$0xff]
      %v4639 = vld [vmem:[%s2 + $0x460] sm:$0xff]
      %v4640 = vld [vmem:[%s2 + $0x468] sm:$0xff]
      %v4641 = vld [vmem:[%s2 + $0x470] sm:$0xff]
      %v4642 = vld [vmem:[%s2 + $0x478] sm:$0xff]
      %v4643 = vld [vmem:[%s2 + $0x480] sm:$0xff]
      %v4644 = vld [vmem:[%s2 + $0x488] sm:$0xff]
      %v4645 = vld [vmem:[%s2 + $0x490] sm:$0xff]
      %v4646 = vld [vmem:[%s2 + $0x498] sm:$0xff]
      %v4647 = vld [vmem:[%s2 + $0x4a0] sm:$0xff]
      %v4648 = vld [vmem:[%s2 + $0x4a8] sm:$0xff]
      %v4649 = vld [vmem:[%s2 + $0x4b0] sm:$0xff]
      %v4650 = vld [vmem:[%s2 + $0x4b8] sm:$0xff]
      %v4651 = vld [vmem:[%s2 + $0x4c0] sm:$0xff]
      %v4652 = vld [vmem:[%s2 + $0x4c8] sm:$0xff]
      %v4653 = vld [vmem:[%s2 + $0x4d0] sm:$0xff]
      %v4654 = vld [vmem:[%s2 + $0x4d8] sm:$0xff]
      %v4655 = vld [vmem:[%s2 + $0x4e0] sm:$0xff]
      %v4656 = vld [vmem:[%s2 + $0x4e8] sm:$0xff]
      %v4657 = vld [vmem:[%s2 + $0x4f0] sm:$0xff]
      %v4658 = vld [vmem:[%s2 + $0x4f8] sm:$0xff]
      %v4659 = vld [vmem:[%s2 + $0x500] sm:$0xff]
      %v4660 = vld [vmem:[%s2 + $0x508] sm:$0xff]
      %v4661 = vld [vmem:[%s2 + $0x510] sm:$0xff]
      %v4662 = vld [vmem:[%s2 + $0x518] sm:$0xff]
      %v4663 = vld [vmem:[%s2 + $0x520] sm:$0xff]
      %v4664 = vld [vmem:[%s2 + $0x528] sm:$0xff]
      %v4665 = vld [vmem:[%s2 + $0x530] sm:$0xff]
      %v4666 = vld [vmem:[%s2 + $0x538] sm:$0xff]
      %v4667 = vld [vmem:[%s2 + $0x540] sm:$0xff]
      %v4668 = vld [vmem:[%s2 + $0x548] sm:$0xff]
      %v4669 = vld [vmem:[%s2 + $0x550] sm:$0xff]
      %v4670 = vld [vmem:[%s2 + $0x558] sm:$0xff]
      %v4671 = vld [vmem:[%s2 + $0x560] sm:$0xff]
      %v4672 = vld [vmem:[%s2 + $0x568] sm:$0xff]
      %v4673 = vld [vmem:[%s2 + $0x570] sm:$0xff]
      %v4674 = vld [vmem:[%s2 + $0x578] sm:$0xff]
      %v4675 = vld [vmem:[%s2 + $0x580] sm:$0xff]
      %v4676 = vld [vmem:[%s2 + $0x588] sm:$0xff]
      %v4677 = vld [vmem:[%s2 + $0x590] sm:$0xff]
      %v4678 = vld [vmem:[%s2 + $0x598] sm:$0xff]
      %v4679 = vld [vmem:[%s2 + $0x5a0] sm:$0xff]
      %v4680 = vld [vmem:[%s2 + $0x5a8] sm:$0xff]
      %v4681 = vld [vmem:[%s2 + $0x5b0] sm:$0xff]
      %v4682 = vld [vmem:[%s2 + $0x5b8] sm:$0xff]
      %v4683 = vld [vmem:[%s2 + $0x5c0] sm:$0xff]
      %v4684 = vld [vmem:[%s2 + $0x5c8] sm:$0xff]
      %v4685 = vld [vmem:[%s2 + $0x5d0] sm:$0xff]
      %v4686 = vld [vmem:[%s2 + $0x5d8] sm:$0xff]
      %v4687 = vld [vmem:[%s2 + $0x5e0] sm:$0xff]
      %v4688 = vld [vmem:[%s2 + $0x5e8] sm:$0xff]
      %v4689 = vld [vmem:[%s2 + $0x5f0] sm:$0xff]
      %v4690 = vld [vmem:[%s2 + $0x5f8] sm:$0xff]
      %v4691 = vld [vmem:[%s2 + $0x600] sm:$0xff]
      %v4692 = vld [vmem:[%s2 + $0x608] sm:$0xff]
      %v4693 = vld [vmem:[%s2 + $0x610] sm:$0xff]
      %v4694 = vld [vmem:[%s2 + $0x618] sm:$0xff]
      %v4695 = vld [vmem:[%s2 + $0x620] sm:$0xff]
      %v4696 = vld [vmem:[%s2 + $0x628] sm:$0xff]
      %v4697 = vld [vmem:[%s2 + $0x630] sm:$0xff]
      %v4698 = vld [vmem:[%s2 + $0x638] sm:$0xff]
      %v4699 = vld [vmem:[%s3] sm:$0x1]
      %v4701 = vlaneseq
      %v4702 = vshrl.u32 %v4701, 7
      %v4703 = vsub.s32 0, %v4702
      %v4704 = vrot.slane %v4699, %v4703
      %v4707 = vsel %vm292, %v4069, 0
      %v4710 = vsel %vm292, %v4082, 0
      %v4713 = vsel %vm292, %v4095, 0
      %v4716 = vsel %vm292, %v4108, 0
      %v4719 = vsel %vm292, %v4121, 0
      %v4722 = vsel %vm292, %v4134, 0
      %v4725 = vsel %vm292, %v4147, 0
      %v4728 = vsel %vm292, %v4160, 0
      %v4731 = vsel %vm292, %v4173, 0
      %v4734 = vsel %vm292, %v4186, 0
      %v4737 = vsel %vm292, %v4199, 0
      %v4740 = vsel %vm292, %v4212, 0
      %v4743 = vsel %vm292, %v4225, 0
      %v4746 = vsel %vm292, %v4238, 0
      %v4749 = vsel %vm292, %v4251, 0
      %v4752 = vsel %vm292, %v4264, 0
      %v4755 = vsel %vm292, %v4277, 0
      %v4758 = vsel %vm292, %v4290, 0
      %v4761 = vsel %vm292, %v4303, 0
      %v4764 = vsel %vm292, %v4316, 0
      %v4767 = vsel %vm292, %v4329, 0
      %v4770 = vsel %vm292, %v4342, 0
      %v4773 = vsel %vm292, %v4355, 0
      %v4776 = vsel %vm292, %v4368, 0
      %v4779 = vsel %vm292, %v4381, 0
      %v4782 = vsel %vm292, %v4394, 0
      %v4785 = vsel %vm292, %v4407, 0
      %v4788 = vsel %vm292, %v4420, 0
      %v4791 = vsel %vm292, %v4433, 0
      %v4794 = vsel %vm292, %v4446, 0
      %v4797 = vsel %vm292, %v4459, 0
      %v4800 = vsel %vm292, %v4472, 0
      %v4803 = vsel %vm292, %v4485, 0
      %v4806 = vsel %vm292, %v4498, 0
      %4808 = vmatprep.subr.mxu0 0.0
      %4809 = vmatpush1.msra.mxu0 %v4514
      %4810 = vmatprep.subr.mxu0 0.0
      %4811 = vmatpush1.msra.mxu0 %v4513
      %4812 = vmatprep.subr.mxu0 0.0
      %4813 = vmatpush1.msra.mxu0 %v4512
      %4814 = vmatprep.subr.mxu0 0.0
      %4815 = vmatpush1.msra.mxu0 %v4511
      %4816 = vmatprep.subr.mxu0 0.0
      %4817 = vmatpush1.msra.mxu0 %v4510
      %4818 = vmatprep.subr.mxu0 0.0
      %4819 = vmatpush1.msra.mxu0 %v4509
      %4820 = vmatprep.subr.mxu0 0.0
      %4821 = vmatpush1.msra.mxu0 %v4508
      %4822 = vmatprep.subr.mxu0 0.0
      %4823 = vmatpush1.msra.mxu0 %v4507
      %4824 = vmatprep.subr.mxu0 0.0
      %4825 = vmatpush1.msra.mxu0 %v4506
      %4826 = vmatprep.subr.mxu0 0.0
      %4827 = vmatpush1.msra.mxu0 %v4505
      %4828 = vmatprep.subr.mxu0 0.0
      %4829 = vmatpush1.msra.mxu0 %v4504
      %4830 = vmatprep.subr.mxu0 0.0
      %4831 = vmatpush1.msra.mxu0 %v4503
      %4832 = vmatprep.subr.mxu0 0.0
      %4833 = vmatpush1.msra.mxu0 %v4502
      %4834 = vmatprep.subr.mxu0 0.0
      %4835 = vmatpush1.msra.mxu0 %v4501
      %4836 = vmatprep.subr.mxu0 0.0
      %4837 = vmatpush1.msra.mxu0 %v4500
      %4838 = vmatprep.subr.mxu0 0.0
      %4839 = vmatpush1.msra.mxu0 %v4499
      %4840 = vmatprep.subr.mxu0 0.0
      %4841 = vmatpush2.msra.mxu0 %v4530
      %4842 = vmatprep.subr.mxu0 0.0
      %4843 = vmatpush2.msra.mxu0 %v4529
      %4844 = vmatprep.subr.mxu0 0.0
      %4845 = vmatpush2.msra.mxu0 %v4528
      %4846 = vmatprep.subr.mxu0 0.0
      %4847 = vmatpush2.msra.mxu0 %v4527
      %4848 = vmatprep.subr.mxu0 0.0
      %4849 = vmatpush2.msra.mxu0 %v4526
      %4850 = vmatprep.subr.mxu0 0.0
      %4851 = vmatpush2.msra.mxu0 %v4525
      %4852 = vmatprep.subr.mxu0 0.0
      %4853 = vmatpush2.msra.mxu0 %v4524
      %4854 = vmatprep.subr.mxu0 0.0
      %4855 = vmatpush2.msra.mxu0 %v4523
      %4856 = vmatprep.subr.mxu0 0.0
      %4857 = vmatpush2.msra.mxu0 %v4522
      %4858 = vmatprep.subr.mxu0 0.0
      %4859 = vmatpush2.msra.mxu0 %v4521
      %4860 = vmatprep.subr.mxu0 0.0
      %4861 = vmatpush2.msra.mxu0 %v4520
      %4862 = vmatprep.subr.mxu0 0.0
      %4863 = vmatpush2.msra.mxu0 %v4519
      %4864 = vmatprep.subr.mxu0 0.0
      %4865 = vmatpush2.msra.mxu0 %v4518
      %4866 = vmatprep.subr.mxu0 0.0
      %4867 = vmatpush2.msra.mxu0 %v4517
      %4868 = vmatprep.subr.mxu0 0.0
      %4869 = vmatpush2.msra.mxu0 %v4516
      %4870 = vmatprep.subr.mxu0 0.0
      %4871 = vmatpush2.msra.mxu0 %v4515
      %4872 = vmatprep.mubr.f32.mxu0 %v4058
      %4873 = vmatmul.mubr.f32.gmra.mxu0 %v4057
      %v4874 = vpop.f32.mrf.mxu0
      %v4875 = vadd.f32 %v4704, %v4874
      %v4876 = vpop.f32.mrf.mxu0
      %4877 = vmatprep.mubr.f32.mxu0 %v4071
      %4878 = vmatmul.mubr.f32.gmra.mxu0 %v4070
      %v4879 = vpop.f32.mrf.mxu0
      %v4880 = vadd.f32 %v4704, %v4879
      %v4881 = vpop.f32.mrf.mxu0
      %4882 = vmatprep.mubr.f32.mxu0 %v4084
      %4883 = vmatmul.mubr.f32.gmra.mxu0 %v4083
      %v4884 = vpop.f32.mrf.mxu0
      %v4885 = vadd.f32 %v4704, %v4884
      %v4886 = vpop.f32.mrf.mxu0
      %4887 = vmatprep.mubr.f32.mxu0 %v4097
      %4888 = vmatmul.mubr.f32.gmra.mxu0 %v4096
      %v4889 = vpop.f32.mrf.mxu0
      %v4890 = vadd.f32 %v4704, %v4889
      %v4891 = vpop.f32.mrf.mxu0
      %4892 = vmatprep.mubr.f32.mxu0 %v4110
      %4893 = vmatmul.mubr.f32.gmra.mxu0 %v4109
      %v4894 = vpop.f32.mrf.mxu0
      %v4895 = vadd.f32 %v4704, %v4894
      %v4896 = vpop.f32.mrf.mxu0
      %4897 = vmatprep.mubr.f32.mxu0 %v4123
      %4898 = vmatmul.mubr.f32.gmra.mxu0 %v4122
      %v4899 = vpop.f32.mrf.mxu0
      %v4900 = vadd.f32 %v4704, %v4899
      %v4901 = vpop.f32.mrf.mxu0
      %4902 = vmatprep.mubr.f32.mxu0 %v4136
      %4903 = vmatmul.mubr.f32.gmra.mxu0 %v4135
      %v4904 = vpop.f32.mrf.mxu0
      %v4905 = vadd.f32 %v4704, %v4904
      %v4906 = vpop.f32.mrf.mxu0
      %4907 = vmatprep.mubr.f32.mxu0 %v4149
      %4908 = vmatmul.mubr.f32.gmra.mxu0 %v4148
      %v4909 = vpop.f32.mrf.mxu0
      %v4910 = vadd.f32 %v4704, %v4909
      %v4911 = vpop.f32.mrf.mxu0
      %4912 = vmatprep.mubr.f32.mxu0 %v4162
      %4913 = vmatmul.mubr.f32.gmra.mxu0 %v4161
      %v4914 = vpop.f32.mrf.mxu0
      %v4915 = vadd.f32 %v4704, %v4914
      %v4916 = vpop.f32.mrf.mxu0
      %4917 = vmatprep.mubr.f32.mxu0 %v4175
      %4918 = vmatmul.mubr.f32.gmra.mxu0 %v4174
      %v4919 = vpop.f32.mrf.mxu0
      %v4920 = vadd.f32 %v4704, %v4919
      %v4921 = vpop.f32.mrf.mxu0
      %4922 = vmatprep.mubr.f32.mxu0 %v4188
      %4923 = vmatmul.mubr.f32.gmra.mxu0 %v4187
      %v4924 = vpop.f32.mrf.mxu0
      %v4925 = vadd.f32 %v4704, %v4924
      %v4926 = vpop.f32.mrf.mxu0
      %4927 = vmatprep.mubr.f32.mxu0 %v4201
      %4928 = vmatmul.mubr.f32.gmra.mxu0 %v4200
      %v4929 = vpop.f32.mrf.mxu0
      %v4930 = vadd.f32 %v4704, %v4929
      %v4931 = vpop.f32.mrf.mxu0
      %4932 = vmatprep.mubr.f32.mxu0 %v4214
      %4933 = vmatmul.mubr.f32.gmra.mxu0 %v4213
      %v4934 = vpop.f32.mrf.mxu0
      %v4935 = vadd.f32 %v4704, %v4934
      %v4936 = vpop.f32.mrf.mxu0
      %4937 = vmatprep.mubr.f32.mxu0 %v4227
      %4938 = vmatmul.mubr.f32.gmra.mxu0 %v4226
      %v4939 = vpop.f32.mrf.mxu0
      %v4940 = vadd.f32 %v4704, %v4939
      %v4941 = vpop.f32.mrf.mxu0
      %4942 = vmatprep.mubr.f32.mxu0 %v4240
      %4943 = vmatmul.mubr.f32.gmra.mxu0 %v4239
      %v4944 = vpop.f32.mrf.mxu0
      %v4945 = vadd.f32 %v4704, %v4944
      %v4946 = vpop.f32.mrf.mxu0
      %4947 = vmatprep.mubr.f32.mxu0 %v4253
      %4948 = vmatmul.mubr.f32.gmra.mxu0 %v4252
      %v4949 = vpop.f32.mrf.mxu0
      %v4950 = vadd.f32 %v4704, %v4949
      %v4951 = vpop.f32.mrf.mxu0
      %4952 = vmatprep.mubr.f32.mxu0 %v4266
      %4953 = vmatmul.mubr.f32.gmra.mxu0 %v4265
      %v4954 = vpop.f32.mrf.mxu0
      %v4955 = vadd.f32 %v4704, %v4954
      %v4956 = vpop.f32.mrf.mxu0
      %4957 = vmatprep.mubr.f32.mxu0 %v4279
      %4958 = vmatmul.mubr.f32.gmra.mxu0 %v4278
      %v4959 = vpop.f32.mrf.mxu0
      %v4960 = vadd.f32 %v4704, %v4959
      %v4961 = vpop.f32.mrf.mxu0
      %4962 = vmatprep.mubr.f32.mxu0 %v4292
      %4963 = vmatmul.mubr.f32.gmra.mxu0 %v4291
      %v4964 = vpop.f32.mrf.mxu0
      %v4965 = vadd.f32 %v4704, %v4964
      %v4966 = vpop.f32.mrf.mxu0
      %4967 = vmatprep.mubr.f32.mxu0 %v4305
      %4968 = vmatmul.mubr.f32.gmra.mxu0 %v4304
      %v4969 = vpop.f32.mrf.mxu0
      %v4970 = vadd.f32 %v4704, %v4969
      %v4971 = vpop.f32.mrf.mxu0
      %4972 = vmatprep.mubr.f32.mxu0 %v4318
      %4973 = vmatmul.mubr.f32.gmra.mxu0 %v4317
      %v4974 = vpop.f32.mrf.mxu0
      %v4975 = vadd.f32 %v4704, %v4974
      %v4976 = vpop.f32.mrf.mxu0
      %4977 = vmatprep.mubr.f32.mxu0 %v4331
      %4978 = vmatmul.mubr.f32.gmra.mxu0 %v4330
      %v4979 = vpop.f32.mrf.mxu0
      %v4980 = vadd.f32 %v4704, %v4979
      %v4981 = vpop.f32.mrf.mxu0
      %4982 = vmatprep.mubr.f32.mxu0 %v4344
      %4983 = vmatmul.mubr.f32.gmra.mxu0 %v4343
      %v4984 = vpop.f32.mrf.mxu0
      %v4985 = vadd.f32 %v4704, %v4984
      %v4986 = vpop.f32.mrf.mxu0
      %4987 = vmatprep.mubr.f32.mxu0 %v4357
      %4988 = vmatmul.mubr.f32.gmra.mxu0 %v4356
      %v4989 = vpop.f32.mrf.mxu0
      %v4990 = vadd.f32 %v4704, %v4989
      %v4991 = vpop.f32.mrf.mxu0
      %4992 = vmatprep.mubr.f32.mxu0 %v4370
      %4993 = vmatmul.mubr.f32.gmra.mxu0 %v4369
      %v4994 = vpop.f32.mrf.mxu0
      %v4995 = vadd.f32 %v4704, %v4994
      %v4996 = vpop.f32.mrf.mxu0
      %4997 = vmatprep.mubr.f32.mxu0 %v4383
      %4998 = vmatmul.mubr.f32.gmra.mxu0 %v4382
      %v4999 = vpop.f32.mrf.mxu0
      %v5000 = vadd.f32 %v4704, %v4999
      %v5001 = vpop.f32.mrf.mxu0
      %5002 = vmatprep.mubr.f32.mxu0 %v4396
      %5003 = vmatmul.mubr.f32.gmra.mxu0 %v4395
      %v5004 = vpop.f32.mrf.mxu0
      %v5005 = vadd.f32 %v4704, %v5004
      %v5006 = vpop.f32.mrf.mxu0
      %5007 = vmatprep.mubr.f32.mxu0 %v4409
      %5008 = vmatmul.mubr.f32.gmra.mxu0 %v4408
      %v5009 = vpop.f32.mrf.mxu0
      %v5010 = vadd.f32 %v4704, %v5009
      %v5011 = vpop.f32.mrf.mxu0
      %5012 = vmatprep.mubr.f32.mxu0 %v4422
      %5013 = vmatmul.mubr.f32.gmra.mxu0 %v4421
      %v5014 = vpop.f32.mrf.mxu0
      %v5015 = vadd.f32 %v4704, %v5014
      %v5016 = vpop.f32.mrf.mxu0
      %5017 = vmatprep.mubr.f32.mxu0 %v4435
      %5018 = vmatmul.mubr.f32.gmra.mxu0 %v4434
      %v5019 = vpop.f32.mrf.mxu0
      %v5020 = vadd.f32 %v4704, %v5019
      %v5021 = vpop.f32.mrf.mxu0
      %5022 = vmatprep.mubr.f32.mxu0 %v4448
      %5023 = vmatmul.mubr.f32.gmra.mxu0 %v4447
      %v5024 = vpop.f32.mrf.mxu0
      %v5025 = vadd.f32 %v4704, %v5024
      %v5026 = vpop.f32.mrf.mxu0
      %5027 = vmatprep.mubr.f32.mxu0 %v4461
      %5028 = vmatmul.mubr.f32.gmra.mxu0 %v4460
      %v5029 = vpop.f32.mrf.mxu0
      %v5030 = vadd.f32 %v4704, %v5029
      %v5031 = vpop.f32.mrf.mxu0
      %5032 = vmatprep.mubr.f32.mxu0 %v4474
      %5033 = vmatmul.mubr.f32.gmra.mxu0 %v4473
      %v5034 = vpop.f32.mrf.mxu0
      %v5035 = vadd.f32 %v4704, %v5034
      %v5036 = vpop.f32.mrf.mxu0
      %5037 = vmatprep.mubr.f32.mxu0 %v4487
      %5038 = vmatmul.mubr.f32.gmra.mxu0 %v4486
      %v5039 = vpop.f32.mrf.mxu0
      %v5040 = vadd.f32 %v4704, %v5039
      %v5041 = vpop.f32.mrf.mxu0
      %5042 = vdwg.mxu0
      %5043 = vmatprep.subr.mxu0 0.0
      %5044 = vmatpush1.msra.mxu0 %v4546
      %5045 = vmatprep.subr.mxu0 0.0
      %5046 = vmatpush1.msra.mxu0 %v4545
      %5047 = vmatprep.subr.mxu0 0.0
      %5048 = vmatpush1.msra.mxu0 %v4544
      %5049 = vmatprep.subr.mxu0 0.0
      %5050 = vmatpush1.msra.mxu0 %v4543
      %5051 = vmatprep.subr.mxu0 0.0
      %5052 = vmatpush1.msra.mxu0 %v4542
      %5053 = vmatprep.subr.mxu0 0.0
      %5054 = vmatpush1.msra.mxu0 %v4541
      %5055 = vmatprep.subr.mxu0 0.0
      %5056 = vmatpush1.msra.mxu0 %v4540
      %5057 = vmatprep.subr.mxu0 0.0
      %5058 = vmatpush1.msra.mxu0 %v4539
      %5059 = vmatprep.subr.mxu0 0.0
      %5060 = vmatpush1.msra.mxu0 %v4538
      %5061 = vmatprep.subr.mxu0 0.0
      %5062 = vmatpush1.msra.mxu0 %v4537
      %5063 = vmatprep.subr.mxu0 0.0
      %5064 = vmatpush1.msra.mxu0 %v4536
      %5065 = vmatprep.subr.mxu0 0.0
      %5066 = vmatpush1.msra.mxu0 %v4535
      %5067 = vmatprep.subr.mxu0 0.0
      %5068 = vmatpush1.msra.mxu0 %v4534
      %5069 = vmatprep.subr.mxu0 0.0
      %5070 = vmatpush1.msra.mxu0 %v4533
      %5071 = vmatprep.subr.mxu0 0.0
      %5072 = vmatpush1.msra.mxu0 %v4532
      %5073 = vmatprep.subr.mxu0 0.0
      %5074 = vmatpush1.msra.mxu0 %v4531
      %5075 = vmatprep.subr.mxu0 0.0
      %5076 = vmatpush2.msra.mxu0 %v4562
      %5077 = vmatprep.subr.mxu0 0.0
      %5078 = vmatpush2.msra.mxu0 %v4561
      %5079 = vmatprep.subr.mxu0 0.0
      %5080 = vmatpush2.msra.mxu0 %v4560
      %5081 = vmatprep.subr.mxu0 0.0
      %5082 = vmatpush2.msra.mxu0 %v4559
      %5083 = vmatprep.subr.mxu0 0.0
      %5084 = vmatpush2.msra.mxu0 %v4558
      %5085 = vmatprep.subr.mxu0 0.0
      %5086 = vmatpush2.msra.mxu0 %v4557
      %5087 = vmatprep.subr.mxu0 0.0
      %5088 = vmatpush2.msra.mxu0 %v4556
      %5089 = vmatprep.subr.mxu0 0.0
      %5090 = vmatpush2.msra.mxu0 %v4555
      %5091 = vmatprep.subr.mxu0 0.0
      %5092 = vmatpush2.msra.mxu0 %v4554
      %5093 = vmatprep.subr.mxu0 0.0
      %5094 = vmatpush2.msra.mxu0 %v4553
      %5095 = vmatprep.subr.mxu0 0.0
      %5096 = vmatpush2.msra.mxu0 %v4552
      %5097 = vmatprep.subr.mxu0 0.0
      %5098 = vmatpush2.msra.mxu0 %v4551
      %5099 = vmatprep.subr.mxu0 0.0
      %5100 = vmatpush2.msra.mxu0 %v4550
      %5101 = vmatprep.subr.mxu0 0.0
      %5102 = vmatpush2.msra.mxu0 %v4549
      %5103 = vmatprep.subr.mxu0 0.0
      %5104 = vmatpush2.msra.mxu0 %v4548
      %5105 = vmatprep.subr.mxu0 0.0
      %5106 = vmatpush2.msra.mxu0 %v4547
      %5107 = vmatprep.mubr.f32.mxu0 %v4060
      %5108 = vmatmul.mubr.f32.gmra.mxu0 %v4059
      %v5109 = vpop.f32.mrf.mxu0
      %v5110 = vadd.f32 %v4875, %v5109
      %v5111 = vpop.f32.mrf.mxu0
      %5112 = vmatprep.mubr.f32.mxu0 %v4073
      %5113 = vmatmul.mubr.f32.gmra.mxu0 %v4072
      %v5114 = vpop.f32.mrf.mxu0
      %v5115 = vadd.f32 %v4880, %v5114
      %v5116 = vpop.f32.mrf.mxu0
      %5117 = vmatprep.mubr.f32.mxu0 %v4086
      %5118 = vmatmul.mubr.f32.gmra.mxu0 %v4085
      %v5119 = vpop.f32.mrf.mxu0
      %v5120 = vadd.f32 %v4885, %v5119
      %v5121 = vpop.f32.mrf.mxu0
      %5122 = vmatprep.mubr.f32.mxu0 %v4099
      %5123 = vmatmul.mubr.f32.gmra.mxu0 %v4098
      %v5124 = vpop.f32.mrf.mxu0
      %v5125 = vadd.f32 %v4890, %v5124
      %v5126 = vpop.f32.mrf.mxu0
      %5127 = vmatprep.mubr.f32.mxu0 %v4112
      %5128 = vmatmul.mubr.f32.gmra.mxu0 %v4111
      %v5129 = vpop.f32.mrf.mxu0
      %v5130 = vadd.f32 %v4895, %v5129
      %v5131 = vpop.f32.mrf.mxu0
      %5132 = vmatprep.mubr.f32.mxu0 %v4125
      %5133 = vmatmul.mubr.f32.gmra.mxu0 %v4124
      %v5134 = vpop.f32.mrf.mxu0
      %v5135 = vadd.f32 %v4900, %v5134
      %v5136 = vpop.f32.mrf.mxu0
      %5137 = vmatprep.mubr.f32.mxu0 %v4138
      %5138 = vmatmul.mubr.f32.gmra.mxu0 %v4137
      %v5139 = vpop.f32.mrf.mxu0
      %v5140 = vadd.f32 %v4905, %v5139
      %v5141 = vpop.f32.mrf.mxu0
      %5142 = vmatprep.mubr.f32.mxu0 %v4151
      %5143 = vmatmul.mubr.f32.gmra.mxu0 %v4150
      %v5144 = vpop.f32.mrf.mxu0
      %v5145 = vadd.f32 %v4910, %v5144
      %v5146 = vpop.f32.mrf.mxu0
      %5147 = vmatprep.mubr.f32.mxu0 %v4164
      %5148 = vmatmul.mubr.f32.gmra.mxu0 %v4163
      %v5149 = vpop.f32.mrf.mxu0
      %v5150 = vadd.f32 %v4915, %v5149
      %v5151 = vpop.f32.mrf.mxu0
      %5152 = vmatprep.mubr.f32.mxu0 %v4177
      %5153 = vmatmul.mubr.f32.gmra.mxu0 %v4176
      %v5154 = vpop.f32.mrf.mxu0
      %v5155 = vadd.f32 %v4920, %v5154
      %v5156 = vpop.f32.mrf.mxu0
      %5157 = vmatprep.mubr.f32.mxu0 %v4190
      %5158 = vmatmul.mubr.f32.gmra.mxu0 %v4189
      %v5159 = vpop.f32.mrf.mxu0
      %v5160 = vadd.f32 %v4925, %v5159
      %v5161 = vpop.f32.mrf.mxu0
      %5162 = vmatprep.mubr.f32.mxu0 %v4203
      %5163 = vmatmul.mubr.f32.gmra.mxu0 %v4202
      %v5164 = vpop.f32.mrf.mxu0
      %v5165 = vadd.f32 %v4930, %v5164
      %v5166 = vpop.f32.mrf.mxu0
      %5167 = vmatprep.mubr.f32.mxu0 %v4216
      %5168 = vmatmul.mubr.f32.gmra.mxu0 %v4215
      %v5169 = vpop.f32.mrf.mxu0
      %v5170 = vadd.f32 %v4935, %v5169
      %v5171 = vpop.f32.mrf.mxu0
      %5172 = vmatprep.mubr.f32.mxu0 %v4229
      %5173 = vmatmul.mubr.f32.gmra.mxu0 %v4228
      %v5174 = vpop.f32.mrf.mxu0
      %v5175 = vadd.f32 %v4940, %v5174
      %v5176 = vpop.f32.mrf.mxu0
      %5177 = vmatprep.mubr.f32.mxu0 %v4242
      %5178 = vmatmul.mubr.f32.gmra.mxu0 %v4241
      %v5179 = vpop.f32.mrf.mxu0
      %v5180 = vadd.f32 %v4945, %v5179
      %v5181 = vpop.f32.mrf.mxu0
      %5182 = vmatprep.mubr.f32.mxu0 %v4255
      %5183 = vmatmul.mubr.f32.gmra.mxu0 %v4254
      %v5184 = vpop.f32.mrf.mxu0
      %v5185 = vadd.f32 %v4950, %v5184
      %v5186 = vpop.f32.mrf.mxu0
      %5187 = vmatprep.mubr.f32.mxu0 %v4268
      %5188 = vmatmul.mubr.f32.gmra.mxu0 %v4267
      %v5189 = vpop.f32.mrf.mxu0
      %v5190 = vadd.f32 %v4955, %v5189
      %v5191 = vpop.f32.mrf.mxu0
      %5192 = vmatprep.mubr.f32.mxu0 %v4281
      %5193 = vmatmul.mubr.f32.gmra.mxu0 %v4280
      %v5194 = vpop.f32.mrf.mxu0
      %v5195 = vadd.f32 %v4960, %v5194
      %v5196 = vpop.f32.mrf.mxu0
      %5197 = vmatprep.mubr.f32.mxu0 %v4294
      %5198 = vmatmul.mubr.f32.gmra.mxu0 %v4293
      %v5199 = vpop.f32.mrf.mxu0
      %v5200 = vadd.f32 %v4965, %v5199
      %v5201 = vpop.f32.mrf.mxu0
      %5202 = vmatprep.mubr.f32.mxu0 %v4307
      %5203 = vmatmul.mubr.f32.gmra.mxu0 %v4306
      %v5204 = vpop.f32.mrf.mxu0
      %v5205 = vadd.f32 %v4970, %v5204
      %v5206 = vpop.f32.mrf.mxu0
      %5207 = vmatprep.mubr.f32.mxu0 %v4320
      %5208 = vmatmul.mubr.f32.gmra.mxu0 %v4319
      %v5209 = vpop.f32.mrf.mxu0
      %v5210 = vadd.f32 %v4975, %v5209
      %v5211 = vpop.f32.mrf.mxu0
      %5212 = vmatprep.mubr.f32.mxu0 %v4333
      %5213 = vmatmul.mubr.f32.gmra.mxu0 %v4332
      %v5214 = vpop.f32.mrf.mxu0
      %v5215 = vadd.f32 %v4980, %v5214
      %v5216 = vpop.f32.mrf.mxu0
      %5217 = vmatprep.mubr.f32.mxu0 %v4346
      %5218 = vmatmul.mubr.f32.gmra.mxu0 %v4345
      %v5219 = vpop.f32.mrf.mxu0
      %v5220 = vadd.f32 %v4985, %v5219
      %v5221 = vpop.f32.mrf.mxu0
      %5222 = vmatprep.mubr.f32.mxu0 %v4359
      %5223 = vmatmul.mubr.f32.gmra.mxu0 %v4358
      %v5224 = vpop.f32.mrf.mxu0
      %v5225 = vadd.f32 %v4990, %v5224
      %v5226 = vpop.f32.mrf.mxu0
      %5227 = vmatprep.mubr.f32.mxu0 %v4372
      %5228 = vmatmul.mubr.f32.gmra.mxu0 %v4371
      %v5229 = vpop.f32.mrf.mxu0
      %v5230 = vadd.f32 %v4995, %v5229
      %v5231 = vpop.f32.mrf.mxu0
      %5232 = vmatprep.mubr.f32.mxu0 %v4385
      %5233 = vmatmul.mubr.f32.gmra.mxu0 %v4384
      %v5234 = vpop.f32.mrf.mxu0
      %v5235 = vadd.f32 %v5000, %v5234
      %v5236 = vpop.f32.mrf.mxu0
      %5237 = vmatprep.mubr.f32.mxu0 %v4398
      %5238 = vmatmul.mubr.f32.gmra.mxu0 %v4397
      %v5239 = vpop.f32.mrf.mxu0
      %v5240 = vadd.f32 %v5005, %v5239
      %v5241 = vpop.f32.mrf.mxu0
      %5242 = vmatprep.mubr.f32.mxu0 %v4411
      %5243 = vmatmul.mubr.f32.gmra.mxu0 %v4410
      %v5244 = vpop.f32.mrf.mxu0
      %v5245 = vadd.f32 %v5010, %v5244
      %v5246 = vpop.f32.mrf.mxu0
      %5247 = vmatprep.mubr.f32.mxu0 %v4424
      %5248 = vmatmul.mubr.f32.gmra.mxu0 %v4423
      %v5249 = vpop.f32.mrf.mxu0
      %v5250 = vadd.f32 %v5015, %v5249
      %v5251 = vpop.f32.mrf.mxu0
      %5252 = vmatprep.mubr.f32.mxu0 %v4437
      %5253 = vmatmul.mubr.f32.gmra.mxu0 %v4436
      %v5254 = vpop.f32.mrf.mxu0
      %v5255 = vadd.f32 %v5020, %v5254
      %v5256 = vpop.f32.mrf.mxu0
      %5257 = vmatprep.mubr.f32.mxu0 %v4450
      %5258 = vmatmul.mubr.f32.gmra.mxu0 %v4449
      %v5259 = vpop.f32.mrf.mxu0
      %v5260 = vadd.f32 %v5025, %v5259
      %v5261 = vpop.f32.mrf.mxu0
      %5262 = vmatprep.mubr.f32.mxu0 %v4463
      %5263 = vmatmul.mubr.f32.gmra.mxu0 %v4462
      %v5264 = vpop.f32.mrf.mxu0
      %v5265 = vadd.f32 %v5030, %v5264
      %v5266 = vpop.f32.mrf.mxu0
      %5267 = vmatprep.mubr.f32.mxu0 %v4476
      %5268 = vmatmul.mubr.f32.gmra.mxu0 %v4475
      %v5269 = vpop.f32.mrf.mxu0
      %v5270 = vadd.f32 %v5035, %v5269
      %v5271 = vpop.f32.mrf.mxu0
      %5272 = vmatprep.mubr.f32.mxu0 %v4489
      %5273 = vmatmul.mubr.f32.gmra.mxu0 %v4488
      %v5274 = vpop.f32.mrf.mxu0
      %v5275 = vadd.f32 %v5040, %v5274
      %v5276 = vpop.f32.mrf.mxu0
      %5277 = vdwg.mxu0
      %5278 = vmatprep.subr.mxu0 0.0
      %5279 = vmatpush1.msra.mxu0 %v4578
      %5280 = vmatprep.subr.mxu0 0.0
      %5281 = vmatpush1.msra.mxu0 %v4577
      %5282 = vmatprep.subr.mxu0 0.0
      %5283 = vmatpush1.msra.mxu0 %v4576
      %5284 = vmatprep.subr.mxu0 0.0
      %5285 = vmatpush1.msra.mxu0 %v4575
      %5286 = vmatprep.subr.mxu0 0.0
      %5287 = vmatpush1.msra.mxu0 %v4574
      %5288 = vmatprep.subr.mxu0 0.0
      %5289 = vmatpush1.msra.mxu0 %v4573
      %5290 = vmatprep.subr.mxu0 0.0
      %5291 = vmatpush1.msra.mxu0 %v4572
      %5292 = vmatprep.subr.mxu0 0.0
      %5293 = vmatpush1.msra.mxu0 %v4571
      %5294 = vmatprep.subr.mxu0 0.0
      %5295 = vmatpush1.msra.mxu0 %v4570
      %5296 = vmatprep.subr.mxu0 0.0
      %5297 = vmatpush1.msra.mxu0 %v4569
      %5298 = vmatprep.subr.mxu0 0.0
      %5299 = vmatpush1.msra.mxu0 %v4568
      %5300 = vmatprep.subr.mxu0 0.0
      %5301 = vmatpush1.msra.mxu0 %v4567
      %5302 = vmatprep.subr.mxu0 0.0
      %5303 = vmatpush1.msra.mxu0 %v4566
      %5304 = vmatprep.subr.mxu0 0.0
      %5305 = vmatpush1.msra.mxu0 %v4565
      %5306 = vmatprep.subr.mxu0 0.0
      %5307 = vmatpush1.msra.mxu0 %v4564
      %5308 = vmatprep.subr.mxu0 0.0
      %5309 = vmatpush1.msra.mxu0 %v4563
      %5310 = vmatprep.subr.mxu0 0.0
      %5311 = vmatpush2.msra.mxu0 %v4594
      %5312 = vmatprep.subr.mxu0 0.0
      %5313 = vmatpush2.msra.mxu0 %v4593
      %5314 = vmatprep.subr.mxu0 0.0
      %5315 = vmatpush2.msra.mxu0 %v4592
      %5316 = vmatprep.subr.mxu0 0.0
      %5317 = vmatpush2.msra.mxu0 %v4591
      %5318 = vmatprep.subr.mxu0 0.0
      %5319 = vmatpush2.msra.mxu0 %v4590
      %5320 = vmatprep.subr.mxu0 0.0
      %5321 = vmatpush2.msra.mxu0 %v4589
      %5322 = vmatprep.subr.mxu0 0.0
      %5323 = vmatpush2.msra.mxu0 %v4588
      %5324 = vmatprep.subr.mxu0 0.0
      %5325 = vmatpush2.msra.mxu0 %v4587
      %5326 = vmatprep.subr.mxu0 0.0
      %5327 = vmatpush2.msra.mxu0 %v4586
      %5328 = vmatprep.subr.mxu0 0.0
      %5329 = vmatpush2.msra.mxu0 %v4585
      %5330 = vmatprep.subr.mxu0 0.0
      %5331 = vmatpush2.msra.mxu0 %v4584
      %5332 = vmatprep.subr.mxu0 0.0
      %5333 = vmatpush2.msra.mxu0 %v4583
      %5334 = vmatprep.subr.mxu0 0.0
      %5335 = vmatpush2.msra.mxu0 %v4582
      %5336 = vmatprep.subr.mxu0 0.0
      %5337 = vmatpush2.msra.mxu0 %v4581
      %5338 = vmatprep.subr.mxu0 0.0
      %5339 = vmatpush2.msra.mxu0 %v4580
      %5340 = vmatprep.subr.mxu0 0.0
      %5341 = vmatpush2.msra.mxu0 %v4579
      %5342 = vmatprep.mubr.f32.mxu0 %v4062
      %5343 = vmatmul.mubr.f32.gmra.mxu0 %v4061
      %v5344 = vpop.f32.mrf.mxu0
      %v5345 = vadd.f32 %v5110, %v5344
      %v5346 = vpop.f32.mrf.mxu0
      %5347 = vmatprep.mubr.f32.mxu0 %v4075
      %5348 = vmatmul.mubr.f32.gmra.mxu0 %v4074
      %v5349 = vpop.f32.mrf.mxu0
      %v5350 = vadd.f32 %v5115, %v5349
      %v5351 = vpop.f32.mrf.mxu0
      %5352 = vmatprep.mubr.f32.mxu0 %v4088
      %5353 = vmatmul.mubr.f32.gmra.mxu0 %v4087
      %v5354 = vpop.f32.mrf.mxu0
      %v5355 = vadd.f32 %v5120, %v5354
      %v5356 = vpop.f32.mrf.mxu0
      %5357 = vmatprep.mubr.f32.mxu0 %v4101
      %5358 = vmatmul.mubr.f32.gmra.mxu0 %v4100
      %v5359 = vpop.f32.mrf.mxu0
      %v5360 = vadd.f32 %v5125, %v5359
      %v5361 = vpop.f32.mrf.mxu0
      %5362 = vmatprep.mubr.f32.mxu0 %v4114
      %5363 = vmatmul.mubr.f32.gmra.mxu0 %v4113
      %v5364 = vpop.f32.mrf.mxu0
      %v5365 = vadd.f32 %v5130, %v5364
      %v5366 = vpop.f32.mrf.mxu0
      %5367 = vmatprep.mubr.f32.mxu0 %v4127
      %5368 = vmatmul.mubr.f32.gmra.mxu0 %v4126
      %v5369 = vpop.f32.mrf.mxu0
      %v5370 = vadd.f32 %v5135, %v5369
      %v5371 = vpop.f32.mrf.mxu0
      %5372 = vmatprep.mubr.f32.mxu0 %v4140
      %5373 = vmatmul.mubr.f32.gmra.mxu0 %v4139
      %v5374 = vpop.f32.mrf.mxu0
      %v5375 = vadd.f32 %v5140, %v5374
      %v5376 = vpop.f32.mrf.mxu0
      %5377 = vmatprep.mubr.f32.mxu0 %v4153
      %5378 = vmatmul.mubr.f32.gmra.mxu0 %v4152
      %v5379 = vpop.f32.mrf.mxu0
      %v5380 = vadd.f32 %v5145, %v5379
      %v5381 = vpop.f32.mrf.mxu0
      %5382 = vmatprep.mubr.f32.mxu0 %v4166
      %5383 = vmatmul.mubr.f32.gmra.mxu0 %v4165
      %v5384 = vpop.f32.mrf.mxu0
      %v5385 = vadd.f32 %v5150, %v5384
      %v5386 = vpop.f32.mrf.mxu0
      %5387 = vmatprep.mubr.f32.mxu0 %v4179
      %5388 = vmatmul.mubr.f32.gmra.mxu0 %v4178
      %v5389 = vpop.f32.mrf.mxu0
      %v5390 = vadd.f32 %v5155, %v5389
      %v5391 = vpop.f32.mrf.mxu0
      %5392 = vmatprep.mubr.f32.mxu0 %v4192
      %5393 = vmatmul.mubr.f32.gmra.mxu0 %v4191
      %v5394 = vpop.f32.mrf.mxu0
      %v5395 = vadd.f32 %v5160, %v5394
      %v5396 = vpop.f32.mrf.mxu0
      %5397 = vmatprep.mubr.f32.mxu0 %v4205
      %5398 = vmatmul.mubr.f32.gmra.mxu0 %v4204
      %v5399 = vpop.f32.mrf.mxu0
      %v5400 = vadd.f32 %v5165, %v5399
      %v5401 = vpop.f32.mrf.mxu0
      %5402 = vmatprep.mubr.f32.mxu0 %v4218
      %5403 = vmatmul.mubr.f32.gmra.mxu0 %v4217
      %v5404 = vpop.f32.mrf.mxu0
      %v5405 = vadd.f32 %v5170, %v5404
      %v5406 = vpop.f32.mrf.mxu0
      %5407 = vmatprep.mubr.f32.mxu0 %v4231
      %5408 = vmatmul.mubr.f32.gmra.mxu0 %v4230
      %v5409 = vpop.f32.mrf.mxu0
      %v5410 = vadd.f32 %v5175, %v5409
      %v5411 = vpop.f32.mrf.mxu0
      %5412 = vmatprep.mubr.f32.mxu0 %v4244
      %5413 = vmatmul.mubr.f32.gmra.mxu0 %v4243
      %v5414 = vpop.f32.mrf.mxu0
      %v5415 = vadd.f32 %v5180, %v5414
      %v5416 = vpop.f32.mrf.mxu0
      %5417 = vmatprep.mubr.f32.mxu0 %v4257
      %5418 = vmatmul.mubr.f32.gmra.mxu0 %v4256
      %v5419 = vpop.f32.mrf.mxu0
      %v5420 = vadd.f32 %v5185, %v5419
      %v5421 = vpop.f32.mrf.mxu0
      %5422 = vmatprep.mubr.f32.mxu0 %v4270
      %5423 = vmatmul.mubr.f32.gmra.mxu0 %v4269
      %v5424 = vpop.f32.mrf.mxu0
      %v5425 = vadd.f32 %v5190, %v5424
      %v5426 = vpop.f32.mrf.mxu0
      %5427 = vmatprep.mubr.f32.mxu0 %v4283
      %5428 = vmatmul.mubr.f32.gmra.mxu0 %v4282
      %v5429 = vpop.f32.mrf.mxu0
      %v5430 = vadd.f32 %v5195, %v5429
      %v5431 = vpop.f32.mrf.mxu0
      %5432 = vmatprep.mubr.f32.mxu0 %v4296
      %5433 = vmatmul.mubr.f32.gmra.mxu0 %v4295
      %v5434 = vpop.f32.mrf.mxu0
      %v5435 = vadd.f32 %v5200, %v5434
      %v5436 = vpop.f32.mrf.mxu0
      %5437 = vmatprep.mubr.f32.mxu0 %v4309
      %5438 = vmatmul.mubr.f32.gmra.mxu0 %v4308
      %v5439 = vpop.f32.mrf.mxu0
      %v5440 = vadd.f32 %v5205, %v5439
      %v5441 = vpop.f32.mrf.mxu0
      %5442 = vmatprep.mubr.f32.mxu0 %v4322
      %5443 = vmatmul.mubr.f32.gmra.mxu0 %v4321
      %v5444 = vpop.f32.mrf.mxu0
      %v5445 = vadd.f32 %v5210, %v5444
      %v5446 = vpop.f32.mrf.mxu0
      %5447 = vmatprep.mubr.f32.mxu0 %v4335
      %5448 = vmatmul.mubr.f32.gmra.mxu0 %v4334
      %v5449 = vpop.f32.mrf.mxu0
      %v5450 = vadd.f32 %v5215, %v5449
      %v5451 = vpop.f32.mrf.mxu0
      %5452 = vmatprep.mubr.f32.mxu0 %v4348
      %5453 = vmatmul.mubr.f32.gmra.mxu0 %v4347
      %v5454 = vpop.f32.mrf.mxu0
      %v5455 = vadd.f32 %v5220, %v5454
      %v5456 = vpop.f32.mrf.mxu0
      %5457 = vmatprep.mubr.f32.mxu0 %v4361
      %5458 = vmatmul.mubr.f32.gmra.mxu0 %v4360
      %v5459 = vpop.f32.mrf.mxu0
      %v5460 = vadd.f32 %v5225, %v5459
      %v5461 = vpop.f32.mrf.mxu0
      %5462 = vmatprep.mubr.f32.mxu0 %v4374
      %5463 = vmatmul.mubr.f32.gmra.mxu0 %v4373
      %v5464 = vpop.f32.mrf.mxu0
      %v5465 = vadd.f32 %v5230, %v5464
      %v5466 = vpop.f32.mrf.mxu0
      %5467 = vmatprep.mubr.f32.mxu0 %v4387
      %5468 = vmatmul.mubr.f32.gmra.mxu0 %v4386
      %v5469 = vpop.f32.mrf.mxu0
      %v5470 = vadd.f32 %v5235, %v5469
      %v5471 = vpop.f32.mrf.mxu0
      %5472 = vmatprep.mubr.f32.mxu0 %v4400
      %5473 = vmatmul.mubr.f32.gmra.mxu0 %v4399
      %v5474 = vpop.f32.mrf.mxu0
      %v5475 = vadd.f32 %v5240, %v5474
      %v5476 = vpop.f32.mrf.mxu0
      %5477 = vmatprep.mubr.f32.mxu0 %v4413
      %5478 = vmatmul.mubr.f32.gmra.mxu0 %v4412
      %v5479 = vpop.f32.mrf.mxu0
      %v5480 = vadd.f32 %v5245, %v5479
      %v5481 = vpop.f32.mrf.mxu0
      %5482 = vmatprep.mubr.f32.mxu0 %v4426
      %5483 = vmatmul.mubr.f32.gmra.mxu0 %v4425
      %v5484 = vpop.f32.mrf.mxu0
      %v5485 = vadd.f32 %v5250, %v5484
      %v5486 = vpop.f32.mrf.mxu0
      %5487 = vmatprep.mubr.f32.mxu0 %v4439
      %5488 = vmatmul.mubr.f32.gmra.mxu0 %v4438
      %v5489 = vpop.f32.mrf.mxu0
      %v5490 = vadd.f32 %v5255, %v5489
      %v5491 = vpop.f32.mrf.mxu0
      %5492 = vmatprep.mubr.f32.mxu0 %v4452
      %5493 = vmatmul.mubr.f32.gmra.mxu0 %v4451
      %v5494 = vpop.f32.mrf.mxu0
      %v5495 = vadd.f32 %v5260, %v5494
      %v5496 = vpop.f32.mrf.mxu0
      %5497 = vmatprep.mubr.f32.mxu0 %v4465
      %5498 = vmatmul.mubr.f32.gmra.mxu0 %v4464
      %v5499 = vpop.f32.mrf.mxu0
      %v5500 = vadd.f32 %v5265, %v5499
      %v5501 = vpop.f32.mrf.mxu0
      %5502 = vmatprep.mubr.f32.mxu0 %v4478
      %5503 = vmatmul.mubr.f32.gmra.mxu0 %v4477
      %v5504 = vpop.f32.mrf.mxu0
      %v5505 = vadd.f32 %v5270, %v5504
      %v5506 = vpop.f32.mrf.mxu0
      %5507 = vmatprep.mubr.f32.mxu0 %v4491
      %5508 = vmatmul.mubr.f32.gmra.mxu0 %v4490
      %v5509 = vpop.f32.mrf.mxu0
      %v5510 = vadd.f32 %v5275, %v5509
      %v5511 = vpop.f32.mrf.mxu0
      %5512 = vdwg.mxu0
      %5513 = vmatprep.subr.mxu0 0.0
      %5514 = vmatpush1.msra.mxu0 %v4610
      %5515 = vmatprep.subr.mxu0 0.0
      %5516 = vmatpush1.msra.mxu0 %v4609
      %5517 = vmatprep.subr.mxu0 0.0
      %5518 = vmatpush1.msra.mxu0 %v4608
      %5519 = vmatprep.subr.mxu0 0.0
      %5520 = vmatpush1.msra.mxu0 %v4607
      %5521 = vmatprep.subr.mxu0 0.0
      %5522 = vmatpush1.msra.mxu0 %v4606
      %5523 = vmatprep.subr.mxu0 0.0
      %5524 = vmatpush1.msra.mxu0 %v4605
      %5525 = vmatprep.subr.mxu0 0.0
      %5526 = vmatpush1.msra.mxu0 %v4604
      %5527 = vmatprep.subr.mxu0 0.0
      %5528 = vmatpush1.msra.mxu0 %v4603
      %5529 = vmatprep.subr.mxu0 0.0
      %5530 = vmatpush1.msra.mxu0 %v4602
      %5531 = vmatprep.subr.mxu0 0.0
      %5532 = vmatpush1.msra.mxu0 %v4601
      %5533 = vmatprep.subr.mxu0 0.0
      %5534 = vmatpush1.msra.mxu0 %v4600
      %5535 = vmatprep.subr.mxu0 0.0
      %5536 = vmatpush1.msra.mxu0 %v4599
      %5537 = vmatprep.subr.mxu0 0.0
      %5538 = vmatpush1.msra.mxu0 %v4598
      %5539 = vmatprep.subr.mxu0 0.0
      %5540 = vmatpush1.msra.mxu0 %v4597
      %5541 = vmatprep.subr.mxu0 0.0
      %5542 = vmatpush1.msra.mxu0 %v4596
      %5543 = vmatprep.subr.mxu0 0.0
      %5544 = vmatpush1.msra.mxu0 %v4595
      %5545 = vmatprep.subr.mxu0 0.0
      %5546 = vmatpush2.msra.mxu0 %v4626
      %5547 = vmatprep.subr.mxu0 0.0
      %5548 = vmatpush2.msra.mxu0 %v4625
      %5549 = vmatprep.subr.mxu0 0.0
      %5550 = vmatpush2.msra.mxu0 %v4624
      %5551 = vmatprep.subr.mxu0 0.0
      %5552 = vmatpush2.msra.mxu0 %v4623
      %5553 = vmatprep.subr.mxu0 0.0
      %5554 = vmatpush2.msra.mxu0 %v4622
      %5555 = vmatprep.subr.mxu0 0.0
      %5556 = vmatpush2.msra.mxu0 %v4621
      %5557 = vmatprep.subr.mxu0 0.0
      %5558 = vmatpush2.msra.mxu0 %v4620
      %5559 = vmatprep.subr.mxu0 0.0
      %5560 = vmatpush2.msra.mxu0 %v4619
      %5561 = vmatprep.subr.mxu0 0.0
      %5562 = vmatpush2.msra.mxu0 %v4618
      %5563 = vmatprep.subr.mxu0 0.0
      %5564 = vmatpush2.msra.mxu0 %v4617
      %5565 = vmatprep.subr.mxu0 0.0
      %5566 = vmatpush2.msra.mxu0 %v4616
      %5567 = vmatprep.subr.mxu0 0.0
      %5568 = vmatpush2.msra.mxu0 %v4615
      %5569 = vmatprep.subr.mxu0 0.0
      %5570 = vmatpush2.msra.mxu0 %v4614
      %5571 = vmatprep.subr.mxu0 0.0
      %5572 = vmatpush2.msra.mxu0 %v4613
      %5573 = vmatprep.subr.mxu0 0.0
      %5574 = vmatpush2.msra.mxu0 %v4612
      %5575 = vmatprep.subr.mxu0 0.0
      %5576 = vmatpush2.msra.mxu0 %v4611
      %5577 = vmatprep.mubr.f32.mxu0 %v4064
      %5578 = vmatmul.mubr.f32.gmra.mxu0 %v4063
      %v5579 = vpop.f32.mrf.mxu0
      %v5580 = vadd.f32 %v5345, %v5579
      %v5581 = vpop.f32.mrf.mxu0
      %5582 = vmatprep.mubr.f32.mxu0 %v4077
      %5583 = vmatmul.mubr.f32.gmra.mxu0 %v4076
      %v5584 = vpop.f32.mrf.mxu0
      %v5585 = vadd.f32 %v5350, %v5584
      %v5586 = vpop.f32.mrf.mxu0
      %5587 = vmatprep.mubr.f32.mxu0 %v4090
      %5588 = vmatmul.mubr.f32.gmra.mxu0 %v4089
      %v5589 = vpop.f32.mrf.mxu0
      %v5590 = vadd.f32 %v5355, %v5589
      %v5591 = vpop.f32.mrf.mxu0
      %5592 = vmatprep.mubr.f32.mxu0 %v4103
      %5593 = vmatmul.mubr.f32.gmra.mxu0 %v4102
      %v5594 = vpop.f32.mrf.mxu0
      %v5595 = vadd.f32 %v5360, %v5594
      %v5596 = vpop.f32.mrf.mxu0
      %5597 = vmatprep.mubr.f32.mxu0 %v4116
      %5598 = vmatmul.mubr.f32.gmra.mxu0 %v4115
      %v5599 = vpop.f32.mrf.mxu0
      %v5600 = vadd.f32 %v5365, %v5599
      %v5601 = vpop.f32.mrf.mxu0
      %5602 = vmatprep.mubr.f32.mxu0 %v4129
      %5603 = vmatmul.mubr.f32.gmra.mxu0 %v4128
      %v5604 = vpop.f32.mrf.mxu0
      %v5605 = vadd.f32 %v5370, %v5604
      %v5606 = vpop.f32.mrf.mxu0
      %5607 = vmatprep.mubr.f32.mxu0 %v4142
      %5608 = vmatmul.mubr.f32.gmra.mxu0 %v4141
      %v5609 = vpop.f32.mrf.mxu0
      %v5610 = vadd.f32 %v5375, %v5609
      %v5611 = vpop.f32.mrf.mxu0
      %5612 = vmatprep.mubr.f32.mxu0 %v4155
      %5613 = vmatmul.mubr.f32.gmra.mxu0 %v4154
      %v5614 = vpop.f32.mrf.mxu0
      %v5615 = vadd.f32 %v5380, %v5614
      %v5616 = vpop.f32.mrf.mxu0
      %5617 = vmatprep.mubr.f32.mxu0 %v4168
      %5618 = vmatmul.mubr.f32.gmra.mxu0 %v4167
      %v5619 = vpop.f32.mrf.mxu0
      %v5620 = vadd.f32 %v5385, %v5619
      %v5621 = vpop.f32.mrf.mxu0
      %5622 = vmatprep.mubr.f32.mxu0 %v4181
      %5623 = vmatmul.mubr.f32.gmra.mxu0 %v4180
      %v5624 = vpop.f32.mrf.mxu0
      %v5625 = vadd.f32 %v5390, %v5624
      %v5626 = vpop.f32.mrf.mxu0
      %5627 = vmatprep.mubr.f32.mxu0 %v4194
      %5628 = vmatmul.mubr.f32.gmra.mxu0 %v4193
      %v5629 = vpop.f32.mrf.mxu0
      %v5630 = vadd.f32 %v5395, %v5629
      %v5631 = vpop.f32.mrf.mxu0
      %5632 = vmatprep.mubr.f32.mxu0 %v4207
      %5633 = vmatmul.mubr.f32.gmra.mxu0 %v4206
      %v5634 = vpop.f32.mrf.mxu0
      %v5635 = vadd.f32 %v5400, %v5634
      %v5636 = vpop.f32.mrf.mxu0
      %5637 = vmatprep.mubr.f32.mxu0 %v4220
      %5638 = vmatmul.mubr.f32.gmra.mxu0 %v4219
      %v5639 = vpop.f32.mrf.mxu0
      %v5640 = vadd.f32 %v5405, %v5639
      %v5641 = vpop.f32.mrf.mxu0
      %5642 = vmatprep.mubr.f32.mxu0 %v4233
      %5643 = vmatmul.mubr.f32.gmra.mxu0 %v4232
      %v5644 = vpop.f32.mrf.mxu0
      %v5645 = vadd.f32 %v5410, %v5644
      %v5646 = vpop.f32.mrf.mxu0
      %5647 = vmatprep.mubr.f32.mxu0 %v4246
      %5648 = vmatmul.mubr.f32.gmra.mxu0 %v4245
      %v5649 = vpop.f32.mrf.mxu0
      %v5650 = vadd.f32 %v5415, %v5649
      %v5651 = vpop.f32.mrf.mxu0
      %5652 = vmatprep.mubr.f32.mxu0 %v4259
      %5653 = vmatmul.mubr.f32.gmra.mxu0 %v4258
      %v5654 = vpop.f32.mrf.mxu0
      %v5655 = vadd.f32 %v5420, %v5654
      %v5656 = vpop.f32.mrf.mxu0
      %5657 = vmatprep.mubr.f32.mxu0 %v4272
      %5658 = vmatmul.mubr.f32.gmra.mxu0 %v4271
      %v5659 = vpop.f32.mrf.mxu0
      %v5660 = vadd.f32 %v5425, %v5659
      %v5661 = vpop.f32.mrf.mxu0
      %5662 = vmatprep.mubr.f32.mxu0 %v4285
      %5663 = vmatmul.mubr.f32.gmra.mxu0 %v4284
      %v5664 = vpop.f32.mrf.mxu0
      %v5665 = vadd.f32 %v5430, %v5664
      %v5666 = vpop.f32.mrf.mxu0
      %5667 = vmatprep.mubr.f32.mxu0 %v4298
      %5668 = vmatmul.mubr.f32.gmra.mxu0 %v4297
      %v5669 = vpop.f32.mrf.mxu0
      %v5670 = vadd.f32 %v5435, %v5669
      %v5671 = vpop.f32.mrf.mxu0
      %5672 = vmatprep.mubr.f32.mxu0 %v4311
      %5673 = vmatmul.mubr.f32.gmra.mxu0 %v4310
      %v5674 = vpop.f32.mrf.mxu0
      %v5675 = vadd.f32 %v5440, %v5674
      %v5676 = vpop.f32.mrf.mxu0
      %5677 = vmatprep.mubr.f32.mxu0 %v4324
      %5678 = vmatmul.mubr.f32.gmra.mxu0 %v4323
      %v5679 = vpop.f32.mrf.mxu0
      %v5680 = vadd.f32 %v5445, %v5679
      %v5681 = vpop.f32.mrf.mxu0
      %5682 = vmatprep.mubr.f32.mxu0 %v4337
      %5683 = vmatmul.mubr.f32.gmra.mxu0 %v4336
      %v5684 = vpop.f32.mrf.mxu0
      %v5685 = vadd.f32 %v5450, %v5684
      %v5686 = vpop.f32.mrf.mxu0
      %5687 = vmatprep.mubr.f32.mxu0 %v4350
      %5688 = vmatmul.mubr.f32.gmra.mxu0 %v4349
      %v5689 = vpop.f32.mrf.mxu0
      %v5690 = vadd.f32 %v5455, %v5689
      %v5691 = vpop.f32.mrf.mxu0
      %5692 = vmatprep.mubr.f32.mxu0 %v4363
      %5693 = vmatmul.mubr.f32.gmra.mxu0 %v4362
      %v5694 = vpop.f32.mrf.mxu0
      %v5695 = vadd.f32 %v5460, %v5694
      %v5696 = vpop.f32.mrf.mxu0
      %5697 = vmatprep.mubr.f32.mxu0 %v4376
      %5698 = vmatmul.mubr.f32.gmra.mxu0 %v4375
      %v5699 = vpop.f32.mrf.mxu0
      %v5700 = vadd.f32 %v5465, %v5699
      %v5701 = vpop.f32.mrf.mxu0
      %5702 = vmatprep.mubr.f32.mxu0 %v4389
      %5703 = vmatmul.mubr.f32.gmra.mxu0 %v4388
      %v5704 = vpop.f32.mrf.mxu0
      %v5705 = vadd.f32 %v5470, %v5704
      %v5706 = vpop.f32.mrf.mxu0
      %5707 = vmatprep.mubr.f32.mxu0 %v4402
      %5708 = vmatmul.mubr.f32.gmra.mxu0 %v4401
      %v5709 = vpop.f32.mrf.mxu0
      %v5710 = vadd.f32 %v5475, %v5709
      %v5711 = vpop.f32.mrf.mxu0
      %5712 = vmatprep.mubr.f32.mxu0 %v4415
      %5713 = vmatmul.mubr.f32.gmra.mxu0 %v4414
      %v5714 = vpop.f32.mrf.mxu0
      %v5715 = vadd.f32 %v5480, %v5714
      %v5716 = vpop.f32.mrf.mxu0
      %5717 = vmatprep.mubr.f32.mxu0 %v4428
      %5718 = vmatmul.mubr.f32.gmra.mxu0 %v4427
      %v5719 = vpop.f32.mrf.mxu0
      %v5720 = vadd.f32 %v5485, %v5719
      %v5721 = vpop.f32.mrf.mxu0
      %5722 = vmatprep.mubr.f32.mxu0 %v4441
      %5723 = vmatmul.mubr.f32.gmra.mxu0 %v4440
      %v5724 = vpop.f32.mrf.mxu0
      %v5725 = vadd.f32 %v5490, %v5724
      %v5726 = vpop.f32.mrf.mxu0
      %5727 = vmatprep.mubr.f32.mxu0 %v4454
      %5728 = vmatmul.mubr.f32.gmra.mxu0 %v4453
      %v5729 = vpop.f32.mrf.mxu0
      %v5730 = vadd.f32 %v5495, %v5729
      %v5731 = vpop.f32.mrf.mxu0
      %5732 = vmatprep.mubr.f32.mxu0 %v4467
      %5733 = vmatmul.mubr.f32.gmra.mxu0 %v4466
      %v5734 = vpop.f32.mrf.mxu0
      %v5735 = vadd.f32 %v5500, %v5734
      %v5736 = vpop.f32.mrf.mxu0
      %5737 = vmatprep.mubr.f32.mxu0 %v4480
      %5738 = vmatmul.mubr.f32.gmra.mxu0 %v4479
      %v5739 = vpop.f32.mrf.mxu0
      %v5740 = vadd.f32 %v5505, %v5739
      %v5741 = vpop.f32.mrf.mxu0
      %5742 = vmatprep.mubr.f32.mxu0 %v4493
      %5743 = vmatmul.mubr.f32.gmra.mxu0 %v4492
      %v5744 = vpop.f32.mrf.mxu0
      %v5745 = vadd.f32 %v5510, %v5744
      %v5746 = vpop.f32.mrf.mxu0
      %5747 = vdwg.mxu0
      %5748 = vmatprep.subr.mxu0 0.0
      %5749 = vmatpush1.msra.mxu0 %v4642
      %5750 = vmatprep.subr.mxu0 0.0
      %5751 = vmatpush1.msra.mxu0 %v4641
      %5752 = vmatprep.subr.mxu0 0.0
      %5753 = vmatpush1.msra.mxu0 %v4640
      %5754 = vmatprep.subr.mxu0 0.0
      %5755 = vmatpush1.msra.mxu0 %v4639
      %5756 = vmatprep.subr.mxu0 0.0
      %5757 = vmatpush1.msra.mxu0 %v4638
      %5758 = vmatprep.subr.mxu0 0.0
      %5759 = vmatpush1.msra.mxu0 %v4637
      %5760 = vmatprep.subr.mxu0 0.0
      %5761 = vmatpush1.msra.mxu0 %v4636
      %5762 = vmatprep.subr.mxu0 0.0
      %5763 = vmatpush1.msra.mxu0 %v4635
      %5764 = vmatprep.subr.mxu0 0.0
      %5765 = vmatpush1.msra.mxu0 %v4634
      %5766 = vmatprep.subr.mxu0 0.0
      %5767 = vmatpush1.msra.mxu0 %v4633
      %5768 = vmatprep.subr.mxu0 0.0
      %5769 = vmatpush1.msra.mxu0 %v4632
      %5770 = vmatprep.subr.mxu0 0.0
      %5771 = vmatpush1.msra.mxu0 %v4631
      %5772 = vmatprep.subr.mxu0 0.0
      %5773 = vmatpush1.msra.mxu0 %v4630
      %5774 = vmatprep.subr.mxu0 0.0
      %5775 = vmatpush1.msra.mxu0 %v4629
      %5776 = vmatprep.subr.mxu0 0.0
      %5777 = vmatpush1.msra.mxu0 %v4628
      %5778 = vmatprep.subr.mxu0 0.0
      %5779 = vmatpush1.msra.mxu0 %v4627
      %5780 = vmatprep.subr.mxu0 0.0
      %5781 = vmatpush2.msra.mxu0 %v4658
      %5782 = vmatprep.subr.mxu0 0.0
      %5783 = vmatpush2.msra.mxu0 %v4657
      %5784 = vmatprep.subr.mxu0 0.0
      %5785 = vmatpush2.msra.mxu0 %v4656
      %5786 = vmatprep.subr.mxu0 0.0
      %5787 = vmatpush2.msra.mxu0 %v4655
      %5788 = vmatprep.subr.mxu0 0.0
      %5789 = vmatpush2.msra.mxu0 %v4654
      %5790 = vmatprep.subr.mxu0 0.0
      %5791 = vmatpush2.msra.mxu0 %v4653
      %5792 = vmatprep.subr.mxu0 0.0
      %5793 = vmatpush2.msra.mxu0 %v4652
      %5794 = vmatprep.subr.mxu0 0.0
      %5795 = vmatpush2.msra.mxu0 %v4651
      %5796 = vmatprep.subr.mxu0 0.0
      %5797 = vmatpush2.msra.mxu0 %v4650
      %5798 = vmatprep.subr.mxu0 0.0
      %5799 = vmatpush2.msra.mxu0 %v4649
      %5800 = vmatprep.subr.mxu0 0.0
      %5801 = vmatpush2.msra.mxu0 %v4648
      %5802 = vmatprep.subr.mxu0 0.0
      %5803 = vmatpush2.msra.mxu0 %v4647
      %5804 = vmatprep.subr.mxu0 0.0
      %5805 = vmatpush2.msra.mxu0 %v4646
      %5806 = vmatprep.subr.mxu0 0.0
      %5807 = vmatpush2.msra.mxu0 %v4645
      %5808 = vmatprep.subr.mxu0 0.0
      %5809 = vmatpush2.msra.mxu0 %v4644
      %5810 = vmatprep.subr.mxu0 0.0
      %5811 = vmatpush2.msra.mxu0 %v4643
      %5812 = vmatprep.mubr.f32.mxu0 %v4066
      %5813 = vmatmul.mubr.f32.gmra.mxu0 %v4065
      %v5814 = vpop.f32.mrf.mxu0
      %v5815 = vadd.f32 %v5580, %v5814
      %v5816 = vpop.f32.mrf.mxu0
      %5817 = vmatprep.mubr.f32.mxu0 %v4079
      %5818 = vmatmul.mubr.f32.gmra.mxu0 %v4078
      %v5819 = vpop.f32.mrf.mxu0
      %v5820 = vadd.f32 %v5585, %v5819
      %v5821 = vpop.f32.mrf.mxu0
      %5822 = vmatprep.mubr.f32.mxu0 %v4092
      %5823 = vmatmul.mubr.f32.gmra.mxu0 %v4091
      %v5824 = vpop.f32.mrf.mxu0
      %v5825 = vadd.f32 %v5590, %v5824
      %v5826 = vpop.f32.mrf.mxu0
      %5827 = vmatprep.mubr.f32.mxu0 %v4105
      %5828 = vmatmul.mubr.f32.gmra.mxu0 %v4104
      %v5829 = vpop.f32.mrf.mxu0
      %v5830 = vadd.f32 %v5595, %v5829
      %v5831 = vpop.f32.mrf.mxu0
      %5832 = vmatprep.mubr.f32.mxu0 %v4118
      %5833 = vmatmul.mubr.f32.gmra.mxu0 %v4117
      %v5834 = vpop.f32.mrf.mxu0
      %v5835 = vadd.f32 %v5600, %v5834
      %v5836 = vpop.f32.mrf.mxu0
      %5837 = vmatprep.mubr.f32.mxu0 %v4131
      %5838 = vmatmul.mubr.f32.gmra.mxu0 %v4130
      %v5839 = vpop.f32.mrf.mxu0
      %v5840 = vadd.f32 %v5605, %v5839
      %v5841 = vpop.f32.mrf.mxu0
      %5842 = vmatprep.mubr.f32.mxu0 %v4144
      %5843 = vmatmul.mubr.f32.gmra.mxu0 %v4143
      %v5844 = vpop.f32.mrf.mxu0
      %v5845 = vadd.f32 %v5610, %v5844
      %v5846 = vpop.f32.mrf.mxu0
      %5847 = vmatprep.mubr.f32.mxu0 %v4157
      %5848 = vmatmul.mubr.f32.gmra.mxu0 %v4156
      %v5849 = vpop.f32.mrf.mxu0
      %v5850 = vadd.f32 %v5615, %v5849
      %v5851 = vpop.f32.mrf.mxu0
      %5852 = vmatprep.mubr.f32.mxu0 %v4170
      %5853 = vmatmul.mubr.f32.gmra.mxu0 %v4169
      %v5854 = vpop.f32.mrf.mxu0
      %v5855 = vadd.f32 %v5620, %v5854
      %v5856 = vpop.f32.mrf.mxu0
      %5857 = vmatprep.mubr.f32.mxu0 %v4183
      %5858 = vmatmul.mubr.f32.gmra.mxu0 %v4182
      %v5859 = vpop.f32.mrf.mxu0
      %v5860 = vadd.f32 %v5625, %v5859
      %v5861 = vpop.f32.mrf.mxu0
      %5862 = vmatprep.mubr.f32.mxu0 %v4196
      %5863 = vmatmul.mubr.f32.gmra.mxu0 %v4195
      %v5864 = vpop.f32.mrf.mxu0
      %v5865 = vadd.f32 %v5630, %v5864
      %v5866 = vpop.f32.mrf.mxu0
      %5867 = vmatprep.mubr.f32.mxu0 %v4209
      %5868 = vmatmul.mubr.f32.gmra.mxu0 %v4208
      %v5869 = vpop.f32.mrf.mxu0
      %v5870 = vadd.f32 %v5635, %v5869
      %v5871 = vpop.f32.mrf.mxu0
      %5872 = vmatprep.mubr.f32.mxu0 %v4222
      %5873 = vmatmul.mubr.f32.gmra.mxu0 %v4221
      %v5874 = vpop.f32.mrf.mxu0
      %v5875 = vadd.f32 %v5640, %v5874
      %v5876 = vpop.f32.mrf.mxu0
      %5877 = vmatprep.mubr.f32.mxu0 %v4235
      %5878 = vmatmul.mubr.f32.gmra.mxu0 %v4234
      %v5879 = vpop.f32.mrf.mxu0
      %v5880 = vadd.f32 %v5645, %v5879
      %v5881 = vpop.f32.mrf.mxu0
      %5882 = vmatprep.mubr.f32.mxu0 %v4248
      %5883 = vmatmul.mubr.f32.gmra.mxu0 %v4247
      %v5884 = vpop.f32.mrf.mxu0
      %v5885 = vadd.f32 %v5650, %v5884
      %v5886 = vpop.f32.mrf.mxu0
      %5887 = vmatprep.mubr.f32.mxu0 %v4261
      %5888 = vmatmul.mubr.f32.gmra.mxu0 %v4260
      %v5889 = vpop.f32.mrf.mxu0
      %v5890 = vadd.f32 %v5655, %v5889
      %v5891 = vpop.f32.mrf.mxu0
      %5892 = vmatprep.mubr.f32.mxu0 %v4274
      %5893 = vmatmul.mubr.f32.gmra.mxu0 %v4273
      %v5894 = vpop.f32.mrf.mxu0
      %v5895 = vadd.f32 %v5660, %v5894
      %v5896 = vpop.f32.mrf.mxu0
      %5897 = vmatprep.mubr.f32.mxu0 %v4287
      %5898 = vmatmul.mubr.f32.gmra.mxu0 %v4286
      %v5899 = vpop.f32.mrf.mxu0
      %v5900 = vadd.f32 %v5665, %v5899
      %v5901 = vpop.f32.mrf.mxu0
      %5902 = vmatprep.mubr.f32.mxu0 %v4300
      %5903 = vmatmul.mubr.f32.gmra.mxu0 %v4299
      %v5904 = vpop.f32.mrf.mxu0
      %v5905 = vadd.f32 %v5670, %v5904
      %v5906 = vpop.f32.mrf.mxu0
      %5907 = vmatprep.mubr.f32.mxu0 %v4313
      %5908 = vmatmul.mubr.f32.gmra.mxu0 %v4312
      %v5909 = vpop.f32.mrf.mxu0
      %v5910 = vadd.f32 %v5675, %v5909
      %v5911 = vpop.f32.mrf.mxu0
      %5912 = vmatprep.mubr.f32.mxu0 %v4326
      %5913 = vmatmul.mubr.f32.gmra.mxu0 %v4325
      %v5914 = vpop.f32.mrf.mxu0
      %v5915 = vadd.f32 %v5680, %v5914
      %v5916 = vpop.f32.mrf.mxu0
      %5917 = vmatprep.mubr.f32.mxu0 %v4339
      %5918 = vmatmul.mubr.f32.gmra.mxu0 %v4338
      %v5919 = vpop.f32.mrf.mxu0
      %v5920 = vadd.f32 %v5685, %v5919
      %v5921 = vpop.f32.mrf.mxu0
      %5922 = vmatprep.mubr.f32.mxu0 %v4352
      %5923 = vmatmul.mubr.f32.gmra.mxu0 %v4351
      %v5924 = vpop.f32.mrf.mxu0
      %v5925 = vadd.f32 %v5690, %v5924
      %v5926 = vpop.f32.mrf.mxu0
      %5927 = vmatprep.mubr.f32.mxu0 %v4365
      %5928 = vmatmul.mubr.f32.gmra.mxu0 %v4364
      %v5929 = vpop.f32.mrf.mxu0
      %v5930 = vadd.f32 %v5695, %v5929
      %v5931 = vpop.f32.mrf.mxu0
      %5932 = vmatprep.mubr.f32.mxu0 %v4378
      %5933 = vmatmul.mubr.f32.gmra.mxu0 %v4377
      %v5934 = vpop.f32.mrf.mxu0
      %v5935 = vadd.f32 %v5700, %v5934
      %v5936 = vpop.f32.mrf.mxu0
      %5937 = vmatprep.mubr.f32.mxu0 %v4391
      %5938 = vmatmul.mubr.f32.gmra.mxu0 %v4390
      %v5939 = vpop.f32.mrf.mxu0
      %v5940 = vadd.f32 %v5705, %v5939
      %v5941 = vpop.f32.mrf.mxu0
      %5942 = vmatprep.mubr.f32.mxu0 %v4404
      %5943 = vmatmul.mubr.f32.gmra.mxu0 %v4403
      %v5944 = vpop.f32.mrf.mxu0
      %v5945 = vadd.f32 %v5710, %v5944
      %v5946 = vpop.f32.mrf.mxu0
      %5947 = vmatprep.mubr.f32.mxu0 %v4417
      %5948 = vmatmul.mubr.f32.gmra.mxu0 %v4416
      %v5949 = vpop.f32.mrf.mxu0
      %v5950 = vadd.f32 %v5715, %v5949
      %v5951 = vpop.f32.mrf.mxu0
      %5952 = vmatprep.mubr.f32.mxu0 %v4430
      %5953 = vmatmul.mubr.f32.gmra.mxu0 %v4429
      %v5954 = vpop.f32.mrf.mxu0
      %v5955 = vadd.f32 %v5720, %v5954
      %v5956 = vpop.f32.mrf.mxu0
      %5957 = vmatprep.mubr.f32.mxu0 %v4443
      %5958 = vmatmul.mubr.f32.gmra.mxu0 %v4442
      %v5959 = vpop.f32.mrf.mxu0
      %v5960 = vadd.f32 %v5725, %v5959
      %v5961 = vpop.f32.mrf.mxu0
      %5962 = vmatprep.mubr.f32.mxu0 %v4456
      %5963 = vmatmul.mubr.f32.gmra.mxu0 %v4455
      %v5964 = vpop.f32.mrf.mxu0
      %v5965 = vadd.f32 %v5730, %v5964
      %v5966 = vpop.f32.mrf.mxu0
      %5967 = vmatprep.mubr.f32.mxu0 %v4469
      %5968 = vmatmul.mubr.f32.gmra.mxu0 %v4468
      %v5969 = vpop.f32.mrf.mxu0
      %v5970 = vadd.f32 %v5735, %v5969
      %v5971 = vpop.f32.mrf.mxu0
      %5972 = vmatprep.mubr.f32.mxu0 %v4482
      %5973 = vmatmul.mubr.f32.gmra.mxu0 %v4481
      %v5974 = vpop.f32.mrf.mxu0
      %v5975 = vadd.f32 %v5740, %v5974
      %v5976 = vpop.f32.mrf.mxu0
      %5977 = vmatprep.mubr.f32.mxu0 %v4495
      %5978 = vmatmul.mubr.f32.gmra.mxu0 %v4494
      %v5979 = vpop.f32.mrf.mxu0
      %v5980 = vadd.f32 %v5745, %v5979
      %v5981 = vpop.f32.mrf.mxu0
      %5982 = vdwg.mxu0
      %5983 = vmatprep.subr.mxu0 0.0
      %5984 = vmatpush1.msra.mxu0 %v4674
      %5985 = vmatprep.subr.mxu0 0.0
      %5986 = vmatpush1.msra.mxu0 %v4673
      %5987 = vmatprep.subr.mxu0 0.0
      %5988 = vmatpush1.msra.mxu0 %v4672
      %5989 = vmatprep.subr.mxu0 0.0
      %5990 = vmatpush1.msra.mxu0 %v4671
      %5991 = vmatprep.subr.mxu0 0.0
      %5992 = vmatpush1.msra.mxu0 %v4670
      %5993 = vmatprep.subr.mxu0 0.0
      %5994 = vmatpush1.msra.mxu0 %v4669
      %5995 = vmatprep.subr.mxu0 0.0
      %5996 = vmatpush1.msra.mxu0 %v4668
      %5997 = vmatprep.subr.mxu0 0.0
      %5998 = vmatpush1.msra.mxu0 %v4667
      %5999 = vmatprep.subr.mxu0 0.0
      %6000 = vmatpush1.msra.mxu0 %v4666
      %6001 = vmatprep.subr.mxu0 0.0
      %6002 = vmatpush1.msra.mxu0 %v4665
      %6003 = vmatprep.subr.mxu0 0.0
      %6004 = vmatpush1.msra.mxu0 %v4664
      %6005 = vmatprep.subr.mxu0 0.0
      %6006 = vmatpush1.msra.mxu0 %v4663
      %6007 = vmatprep.subr.mxu0 0.0
      %6008 = vmatpush1.msra.mxu0 %v4662
      %6009 = vmatprep.subr.mxu0 0.0
      %6010 = vmatpush1.msra.mxu0 %v4661
      %6011 = vmatprep.subr.mxu0 0.0
      %6012 = vmatpush1.msra.mxu0 %v4660
      %6013 = vmatprep.subr.mxu0 0.0
      %6014 = vmatpush1.msra.mxu0 %v4659
      %6015 = vmatprep.subr.mxu0 0.0
      %6016 = vmatpush2.msra.mxu0 %v4690
      %6017 = vmatprep.subr.mxu0 0.0
      %6018 = vmatpush2.msra.mxu0 %v4689
      %6019 = vmatprep.subr.mxu0 0.0
      %6020 = vmatpush2.msra.mxu0 %v4688
      %6021 = vmatprep.subr.mxu0 0.0
      %6022 = vmatpush2.msra.mxu0 %v4687
      %6023 = vmatprep.subr.mxu0 0.0
      %6024 = vmatpush2.msra.mxu0 %v4686
      %6025 = vmatprep.subr.mxu0 0.0
      %6026 = vmatpush2.msra.mxu0 %v4685
      %6027 = vmatprep.subr.mxu0 0.0
      %6028 = vmatpush2.msra.mxu0 %v4684
      %6029 = vmatprep.subr.mxu0 0.0
      %6030 = vmatpush2.msra.mxu0 %v4683
      %6031 = vmatprep.subr.mxu0 0.0
      %6032 = vmatpush2.msra.mxu0 %v4682
      %6033 = vmatprep.subr.mxu0 0.0
      %6034 = vmatpush2.msra.mxu0 %v4681
      %6035 = vmatprep.subr.mxu0 0.0
      %6036 = vmatpush2.msra.mxu0 %v4680
      %6037 = vmatprep.subr.mxu0 0.0
      %6038 = vmatpush2.msra.mxu0 %v4679
      %6039 = vmatprep.subr.mxu0 0.0
      %6040 = vmatpush2.msra.mxu0 %v4678
      %6041 = vmatprep.subr.mxu0 0.0
      %6042 = vmatpush2.msra.mxu0 %v4677
      %6043 = vmatprep.subr.mxu0 0.0
      %6044 = vmatpush2.msra.mxu0 %v4676
      %6045 = vmatprep.subr.mxu0 0.0
      %6046 = vmatpush2.msra.mxu0 %v4675
      %6047 = vmatprep.mubr.f32.mxu0 %v4068
      %6048 = vmatmul.mubr.f32.gmra.mxu0 %v4067
      %v6049 = vpop.f32.mrf.mxu0
      %v6050 = vadd.f32 %v5815, %v6049
      %v6051 = vpop.f32.mrf.mxu0
      %6052 = vmatprep.mubr.f32.mxu0 %v4081
      %6053 = vmatmul.mubr.f32.gmra.mxu0 %v4080
      %v6054 = vpop.f32.mrf.mxu0
      %v6055 = vadd.f32 %v5820, %v6054
      %v6056 = vpop.f32.mrf.mxu0
      %6057 = vmatprep.mubr.f32.mxu0 %v4094
      %6058 = vmatmul.mubr.f32.gmra.mxu0 %v4093
      %v6059 = vpop.f32.mrf.mxu0
      %v6060 = vadd.f32 %v5825, %v6059
      %v6061 = vpop.f32.mrf.mxu0
      %6062 = vmatprep.mubr.f32.mxu0 %v4107
      %6063 = vmatmul.mubr.f32.gmra.mxu0 %v4106
      %v6064 = vpop.f32.mrf.mxu0
      %v6065 = vadd.f32 %v5830, %v6064
      %v6066 = vpop.f32.mrf.mxu0
      %6067 = vmatprep.mubr.f32.mxu0 %v4120
      %6068 = vmatmul.mubr.f32.gmra.mxu0 %v4119
      %v6069 = vpop.f32.mrf.mxu0
      %v6070 = vadd.f32 %v5835, %v6069
      %v6071 = vpop.f32.mrf.mxu0
      %6072 = vmatprep.mubr.f32.mxu0 %v4133
      %6073 = vmatmul.mubr.f32.gmra.mxu0 %v4132
      %v6074 = vpop.f32.mrf.mxu0
      %v6075 = vadd.f32 %v5840, %v6074
      %v6076 = vpop.f32.mrf.mxu0
      %6077 = vmatprep.mubr.f32.mxu0 %v4146
      %6078 = vmatmul.mubr.f32.gmra.mxu0 %v4145
      %v6079 = vpop.f32.mrf.mxu0
      %v6080 = vadd.f32 %v5845, %v6079
      %v6081 = vpop.f32.mrf.mxu0
      %6082 = vmatprep.mubr.f32.mxu0 %v4159
      %6083 = vmatmul.mubr.f32.gmra.mxu0 %v4158
      %v6084 = vpop.f32.mrf.mxu0
      %v6085 = vadd.f32 %v5850, %v6084
      %v6086 = vpop.f32.mrf.mxu0
      %6087 = vmatprep.mubr.f32.mxu0 %v4172
      %6088 = vmatmul.mubr.f32.gmra.mxu0 %v4171
      %v6089 = vpop.f32.mrf.mxu0
      %v6090 = vadd.f32 %v5855, %v6089
      %v6091 = vpop.f32.mrf.mxu0
      %6092 = vmatprep.mubr.f32.mxu0 %v4185
      %6093 = vmatmul.mubr.f32.gmra.mxu0 %v4184
      %v6094 = vpop.f32.mrf.mxu0
      %v6095 = vadd.f32 %v5860, %v6094
      %v6096 = vpop.f32.mrf.mxu0
      %6097 = vmatprep.mubr.f32.mxu0 %v4198
      %6098 = vmatmul.mubr.f32.gmra.mxu0 %v4197
      %v6099 = vpop.f32.mrf.mxu0
      %v6100 = vadd.f32 %v5865, %v6099
      %v6101 = vpop.f32.mrf.mxu0
      %6102 = vmatprep.mubr.f32.mxu0 %v4211
      %6103 = vmatmul.mubr.f32.gmra.mxu0 %v4210
      %v6104 = vpop.f32.mrf.mxu0
      %v6105 = vadd.f32 %v5870, %v6104
      %v6106 = vpop.f32.mrf.mxu0
      %6107 = vmatprep.mubr.f32.mxu0 %v4224
      %6108 = vmatmul.mubr.f32.gmra.mxu0 %v4223
      %v6109 = vpop.f32.mrf.mxu0
      %v6110 = vadd.f32 %v5875, %v6109
      %v6111 = vpop.f32.mrf.mxu0
      %6112 = vmatprep.mubr.f32.mxu0 %v4237
      %6113 = vmatmul.mubr.f32.gmra.mxu0 %v4236
      %v6114 = vpop.f32.mrf.mxu0
      %v6115 = vadd.f32 %v5880, %v6114
      %v6116 = vpop.f32.mrf.mxu0
      %6117 = vmatprep.mubr.f32.mxu0 %v4250
      %6118 = vmatmul.mubr.f32.gmra.mxu0 %v4249
      %v6119 = vpop.f32.mrf.mxu0
      %v6120 = vadd.f32 %v5885, %v6119
      %v6121 = vpop.f32.mrf.mxu0
      %6122 = vmatprep.mubr.f32.mxu0 %v4263
      %6123 = vmatmul.mubr.f32.gmra.mxu0 %v4262
      %v6124 = vpop.f32.mrf.mxu0
      %v6125 = vadd.f32 %v5890, %v6124
      %v6126 = vpop.f32.mrf.mxu0
      %6127 = vmatprep.mubr.f32.mxu0 %v4276
      %6128 = vmatmul.mubr.f32.gmra.mxu0 %v4275
      %v6129 = vpop.f32.mrf.mxu0
      %v6130 = vadd.f32 %v5895, %v6129
      %v6131 = vpop.f32.mrf.mxu0
      %6132 = vmatprep.mubr.f32.mxu0 %v4289
      %6133 = vmatmul.mubr.f32.gmra.mxu0 %v4288
      %v6134 = vpop.f32.mrf.mxu0
      %v6135 = vadd.f32 %v5900, %v6134
      %v6136 = vpop.f32.mrf.mxu0
      %6137 = vmatprep.mubr.f32.mxu0 %v4302
      %6138 = vmatmul.mubr.f32.gmra.mxu0 %v4301
      %v6139 = vpop.f32.mrf.mxu0
      %v6140 = vadd.f32 %v5905, %v6139
      %v6141 = vpop.f32.mrf.mxu0
      %6142 = vmatprep.mubr.f32.mxu0 %v4315
      %6143 = vmatmul.mubr.f32.gmra.mxu0 %v4314
      %v6144 = vpop.f32.mrf.mxu0
      %v6145 = vadd.f32 %v5910, %v6144
      %v6146 = vpop.f32.mrf.mxu0
      %6147 = vmatprep.mubr.f32.mxu0 %v4328
      %6148 = vmatmul.mubr.f32.gmra.mxu0 %v4327
      %v6149 = vpop.f32.mrf.mxu0
      %v6150 = vadd.f32 %v5915, %v6149
      %v6151 = vpop.f32.mrf.mxu0
      %6152 = vmatprep.mubr.f32.mxu0 %v4341
      %6153 = vmatmul.mubr.f32.gmra.mxu0 %v4340
      %v6154 = vpop.f32.mrf.mxu0
      %v6155 = vadd.f32 %v5920, %v6154
      %v6156 = vpop.f32.mrf.mxu0
      %6157 = vmatprep.mubr.f32.mxu0 %v4354
      %6158 = vmatmul.mubr.f32.gmra.mxu0 %v4353
      %v6159 = vpop.f32.mrf.mxu0
      %v6160 = vadd.f32 %v5925, %v6159
      %v6161 = vpop.f32.mrf.mxu0
      %6162 = vmatprep.mubr.f32.mxu0 %v4367
      %6163 = vmatmul.mubr.f32.gmra.mxu0 %v4366
      %v6164 = vpop.f32.mrf.mxu0
      %v6165 = vadd.f32 %v5930, %v6164
      %v6166 = vpop.f32.mrf.mxu0
      %6167 = vmatprep.mubr.f32.mxu0 %v4380
      %6168 = vmatmul.mubr.f32.gmra.mxu0 %v4379
      %v6169 = vpop.f32.mrf.mxu0
      %v6170 = vadd.f32 %v5935, %v6169
      %v6171 = vpop.f32.mrf.mxu0
      %6172 = vmatprep.mubr.f32.mxu0 %v4393
      %6173 = vmatmul.mubr.f32.gmra.mxu0 %v4392
      %v6174 = vpop.f32.mrf.mxu0
      %v6175 = vadd.f32 %v5940, %v6174
      %v6176 = vpop.f32.mrf.mxu0
      %6177 = vmatprep.mubr.f32.mxu0 %v4406
      %6178 = vmatmul.mubr.f32.gmra.mxu0 %v4405
      %v6179 = vpop.f32.mrf.mxu0
      %v6180 = vadd.f32 %v5945, %v6179
      %v6181 = vpop.f32.mrf.mxu0
      %6182 = vmatprep.mubr.f32.mxu0 %v4419
      %6183 = vmatmul.mubr.f32.gmra.mxu0 %v4418
      %v6184 = vpop.f32.mrf.mxu0
      %v6185 = vadd.f32 %v5950, %v6184
      %v6186 = vpop.f32.mrf.mxu0
      %6187 = vmatprep.mubr.f32.mxu0 %v4432
      %6188 = vmatmul.mubr.f32.gmra.mxu0 %v4431
      %v6189 = vpop.f32.mrf.mxu0
      %v6190 = vadd.f32 %v5955, %v6189
      %v6191 = vpop.f32.mrf.mxu0
      %6192 = vmatprep.mubr.f32.mxu0 %v4445
      %6193 = vmatmul.mubr.f32.gmra.mxu0 %v4444
      %v6194 = vpop.f32.mrf.mxu0
      %v6195 = vadd.f32 %v5960, %v6194
      %v6196 = vpop.f32.mrf.mxu0
      %6197 = vmatprep.mubr.f32.mxu0 %v4458
      %6198 = vmatmul.mubr.f32.gmra.mxu0 %v4457
      %v6199 = vpop.f32.mrf.mxu0
      %v6200 = vadd.f32 %v5965, %v6199
      %v6201 = vpop.f32.mrf.mxu0
      %6202 = vmatprep.mubr.f32.mxu0 %v4471
      %6203 = vmatmul.mubr.f32.gmra.mxu0 %v4470
      %v6204 = vpop.f32.mrf.mxu0
      %v6205 = vadd.f32 %v5970, %v6204
      %v6206 = vpop.f32.mrf.mxu0
      %6207 = vmatprep.mubr.f32.mxu0 %v4484
      %6208 = vmatmul.mubr.f32.gmra.mxu0 %v4483
      %v6209 = vpop.f32.mrf.mxu0
      %v6210 = vadd.f32 %v5975, %v6209
      %v6211 = vpop.f32.mrf.mxu0
      %6212 = vmatprep.mubr.f32.mxu0 %v4497
      %6213 = vmatmul.mubr.f32.gmra.mxu0 %v4496
      %v6214 = vpop.f32.mrf.mxu0
      %v6215 = vadd.f32 %v5980, %v6214
      %v6216 = vpop.f32.mrf.mxu0
      %6217 = vdwg.mxu0
      %6218 = vmatprep.subr.mxu0 0.0
      %6219 = vmatpush1.msra.mxu0 0.0
      %6220 = vmatprep.subr.mxu0 0.0
      %6221 = vmatpush1.msra.mxu0 0.0
      %6222 = vmatprep.subr.mxu0 0.0
      %6223 = vmatpush1.msra.mxu0 0.0
      %6224 = vmatprep.subr.mxu0 0.0
      %6225 = vmatpush1.msra.mxu0 0.0
      %6226 = vmatprep.subr.mxu0 0.0
      %6227 = vmatpush1.msra.mxu0 0.0
      %6228 = vmatprep.subr.mxu0 0.0
      %6229 = vmatpush1.msra.mxu0 0.0
      %6230 = vmatprep.subr.mxu0 0.0
      %6231 = vmatpush1.msra.mxu0 0.0
      %6232 = vmatprep.subr.mxu0 0.0
      %6233 = vmatpush1.msra.mxu0 0.0
      %6234 = vmatprep.subr.mxu0 0.0
      %6235 = vmatpush1.msra.mxu0 %v4698
      %6236 = vmatprep.subr.mxu0 0.0
      %6237 = vmatpush1.msra.mxu0 %v4697
      %6238 = vmatprep.subr.mxu0 0.0
      %6239 = vmatpush1.msra.mxu0 %v4696
      %6240 = vmatprep.subr.mxu0 0.0
      %6241 = vmatpush1.msra.mxu0 %v4695
      %6242 = vmatprep.subr.mxu0 0.0
      %6243 = vmatpush1.msra.mxu0 %v4694
      %6244 = vmatprep.subr.mxu0 0.0
      %6245 = vmatpush1.msra.mxu0 %v4693
      %6246 = vmatprep.subr.mxu0 0.0
      %6247 = vmatpush1.msra.mxu0 %v4692
      %6248 = vmatprep.subr.mxu0 0.0
      %6249 = vmatpush1.msra.mxu0 %v4691
      %6250 = vmatprep.subr.mxu0 0.0
      %6251 = vmatpush2.msra.mxu0 0.0
      %6252 = vmatprep.subr.mxu0 0.0
      %6253 = vmatpush2.msra.mxu0 0.0
      %6254 = vmatprep.subr.mxu0 0.0
      %6255 = vmatpush2.msra.mxu0 0.0
      %6256 = vmatprep.subr.mxu0 0.0
      %6257 = vmatpush2.msra.mxu0 0.0
      %6258 = vmatprep.subr.mxu0 0.0
      %6259 = vmatpush2.msra.mxu0 0.0
      %6260 = vmatprep.subr.mxu0 0.0
      %6261 = vmatpush2.msra.mxu0 0.0
      %6262 = vmatprep.subr.mxu0 0.0
      %6263 = vmatpush2.msra.mxu0 0.0
      %6264 = vmatprep.subr.mxu0 0.0
      %6265 = vmatpush2.msra.mxu0 0.0
      %6266 = vmatprep.subr.mxu0 0.0
      %6267 = vmatpush2.msra.mxu0 0.0
      %6268 = vmatprep.subr.mxu0 0.0
      %6269 = vmatpush2.msra.mxu0 0.0
      %6270 = vmatprep.subr.mxu0 0.0
      %6271 = vmatpush2.msra.mxu0 0.0
      %6272 = vmatprep.subr.mxu0 0.0
      %6273 = vmatpush2.msra.mxu0 0.0
      %6274 = vmatprep.subr.mxu0 0.0
      %6275 = vmatpush2.msra.mxu0 0.0
      %6276 = vmatprep.subr.mxu0 0.0
      %6277 = vmatpush2.msra.mxu0 0.0
      %6278 = vmatprep.subr.mxu0 0.0
      %6279 = vmatpush2.msra.mxu0 0.0
      %6280 = vmatprep.subr.mxu0 0.0
      %6281 = vmatpush2.msra.mxu0 0.0
      %6282 = vmatprep.mubr.f32.mxu0 0.0
      %6283 = vmatmul.mubr.f32.gmra.mxu0 %v4707
      %v6284 = vpop.f32.mrf.mxu0
      %v6285 = vadd.f32 %v6050, %v6284
      %v6286 = vpop.f32.mrf.mxu0
      %6287 = vmatprep.mubr.f32.mxu0 0.0
      %6288 = vmatmul.mubr.f32.gmra.mxu0 %v4710
      %v6289 = vpop.f32.mrf.mxu0
      %v6290 = vadd.f32 %v6055, %v6289
      %v6291 = vpop.f32.mrf.mxu0
      %6292 = vmatprep.mubr.f32.mxu0 0.0
      %6293 = vmatmul.mubr.f32.gmra.mxu0 %v4713
      %v6294 = vpop.f32.mrf.mxu0
      %v6295 = vadd.f32 %v6060, %v6294
      %v6296 = vpop.f32.mrf.mxu0
      %6297 = vmatprep.mubr.f32.mxu0 0.0
      %6298 = vmatmul.mubr.f32.gmra.mxu0 %v4716
      %v6299 = vpop.f32.mrf.mxu0
      %v6300 = vadd.f32 %v6065, %v6299
      %v6301 = vpop.f32.mrf.mxu0
      %6302 = vmatprep.mubr.f32.mxu0 0.0
      %6303 = vmatmul.mubr.f32.gmra.mxu0 %v4719
      %v6304 = vpop.f32.mrf.mxu0
      %v6305 = vadd.f32 %v6070, %v6304
      %v6306 = vpop.f32.mrf.mxu0
      %6307 = vmatprep.mubr.f32.mxu0 0.0
      %6308 = vmatmul.mubr.f32.gmra.mxu0 %v4722
      %v6309 = vpop.f32.mrf.mxu0
      %v6310 = vadd.f32 %v6075, %v6309
      %v6311 = vpop.f32.mrf.mxu0
      %6312 = vmatprep.mubr.f32.mxu0 0.0
      %6313 = vmatmul.mubr.f32.gmra.mxu0 %v4725
      %v6314 = vpop.f32.mrf.mxu0
      %v6315 = vadd.f32 %v6080, %v6314
      %v6316 = vpop.f32.mrf.mxu0
      %6317 = vmatprep.mubr.f32.mxu0 0.0
      %6318 = vmatmul.mubr.f32.gmra.mxu0 %v4728
      %v6319 = vpop.f32.mrf.mxu0
      %v6320 = vadd.f32 %v6085, %v6319
      %v6321 = vpop.f32.mrf.mxu0
      %6322 = vmatprep.mubr.f32.mxu0 0.0
      %6323 = vmatmul.mubr.f32.gmra.mxu0 %v4731
      %v6324 = vpop.f32.mrf.mxu0
      %v6325 = vadd.f32 %v6090, %v6324
      %v6326 = vpop.f32.mrf.mxu0
      %6327 = vmatprep.mubr.f32.mxu0 0.0
      %6328 = vmatmul.mubr.f32.gmra.mxu0 %v4734
      %v6329 = vpop.f32.mrf.mxu0
      %v6330 = vadd.f32 %v6095, %v6329
      %v6331 = vpop.f32.mrf.mxu0
      %6332 = vmatprep.mubr.f32.mxu0 0.0
      %6333 = vmatmul.mubr.f32.gmra.mxu0 %v4737
      %v6334 = vpop.f32.mrf.mxu0
      %v6335 = vadd.f32 %v6100, %v6334
      %v6336 = vpop.f32.mrf.mxu0
      %6337 = vmatprep.mubr.f32.mxu0 0.0
      %6338 = vmatmul.mubr.f32.gmra.mxu0 %v4740
      %v6339 = vpop.f32.mrf.mxu0
      %v6340 = vadd.f32 %v6105, %v6339
      %v6341 = vpop.f32.mrf.mxu0
      %6342 = vmatprep.mubr.f32.mxu0 0.0
      %6343 = vmatmul.mubr.f32.gmra.mxu0 %v4743
      %v6344 = vpop.f32.mrf.mxu0
      %v6345 = vadd.f32 %v6110, %v6344
      %v6346 = vpop.f32.mrf.mxu0
      %6347 = vmatprep.mubr.f32.mxu0 0.0
      %6348 = vmatmul.mubr.f32.gmra.mxu0 %v4746
      %v6349 = vpop.f32.mrf.mxu0
      %v6350 = vadd.f32 %v6115, %v6349
      %v6351 = vpop.f32.mrf.mxu0
      %6352 = vmatprep.mubr.f32.mxu0 0.0
      %6353 = vmatmul.mubr.f32.gmra.mxu0 %v4749
      %v6354 = vpop.f32.mrf.mxu0
      %v6355 = vadd.f32 %v6120, %v6354
      %v6356 = vpop.f32.mrf.mxu0
      %6357 = vmatprep.mubr.f32.mxu0 0.0
      %6358 = vmatmul.mubr.f32.gmra.mxu0 %v4752
      %v6359 = vpop.f32.mrf.mxu0
      %v6360 = vadd.f32 %v6125, %v6359
      %v6361 = vpop.f32.mrf.mxu0
      %6362 = vmatprep.mubr.f32.mxu0 0.0
      %6363 = vmatmul.mubr.f32.gmra.mxu0 %v4755
      %v6364 = vpop.f32.mrf.mxu0
      %v6365 = vadd.f32 %v6130, %v6364
      %v6366 = vpop.f32.mrf.mxu0
      %6367 = vmatprep.mubr.f32.mxu0 0.0
      %6368 = vmatmul.mubr.f32.gmra.mxu0 %v4758
      %v6369 = vpop.f32.mrf.mxu0
      %v6370 = vadd.f32 %v6135, %v6369
      %v6371 = vpop.f32.mrf.mxu0
      %6372 = vmatprep.mubr.f32.mxu0 0.0
      %6373 = vmatmul.mubr.f32.gmra.mxu0 %v4761
      %v6374 = vpop.f32.mrf.mxu0
      %v6375 = vadd.f32 %v6140, %v6374
      %v6376 = vpop.f32.mrf.mxu0
      %6377 = vmatprep.mubr.f32.mxu0 0.0
      %6378 = vmatmul.mubr.f32.gmra.mxu0 %v4764
      %v6379 = vpop.f32.mrf.mxu0
      %v6380 = vadd.f32 %v6145, %v6379
      %v6381 = vpop.f32.mrf.mxu0
      %6382 = vmatprep.mubr.f32.mxu0 0.0
      %6383 = vmatmul.mubr.f32.gmra.mxu0 %v4767
      %v6384 = vpop.f32.mrf.mxu0
      %v6385 = vadd.f32 %v6150, %v6384
      %v6386 = vpop.f32.mrf.mxu0
      %6387 = vmatprep.mubr.f32.mxu0 0.0
      %6388 = vmatmul.mubr.f32.gmra.mxu0 %v4770
      %v6389 = vpop.f32.mrf.mxu0
      %v6390 = vadd.f32 %v6155, %v6389
      %v6391 = vpop.f32.mrf.mxu0
      %6392 = vmatprep.mubr.f32.mxu0 0.0
      %6393 = vmatmul.mubr.f32.gmra.mxu0 %v4773
      %v6394 = vpop.f32.mrf.mxu0
      %v6395 = vadd.f32 %v6160, %v6394
      %v6396 = vpop.f32.mrf.mxu0
      %6397 = vmatprep.mubr.f32.mxu0 0.0
      %6398 = vmatmul.mubr.f32.gmra.mxu0 %v4776
      %v6399 = vpop.f32.mrf.mxu0
      %v6400 = vadd.f32 %v6165, %v6399
      %v6401 = vpop.f32.mrf.mxu0
      %6402 = vmatprep.mubr.f32.mxu0 0.0
      %6403 = vmatmul.mubr.f32.gmra.mxu0 %v4779
      %v6404 = vpop.f32.mrf.mxu0
      %v6405 = vadd.f32 %v6170, %v6404
      %v6406 = vpop.f32.mrf.mxu0
      %6407 = vmatprep.mubr.f32.mxu0 0.0
      %6408 = vmatmul.mubr.f32.gmra.mxu0 %v4782
      %v6409 = vpop.f32.mrf.mxu0
      %v6410 = vadd.f32 %v6175, %v6409
      %v6411 = vpop.f32.mrf.mxu0
      %6412 = vmatprep.mubr.f32.mxu0 0.0
      %6413 = vmatmul.mubr.f32.gmra.mxu0 %v4785
      %v6414 = vpop.f32.mrf.mxu0
      %v6415 = vadd.f32 %v6180, %v6414
      %v6416 = vpop.f32.mrf.mxu0
      %6417 = vmatprep.mubr.f32.mxu0 0.0
      %6418 = vmatmul.mubr.f32.gmra.mxu0 %v4788
      %v6419 = vpop.f32.mrf.mxu0
      %v6420 = vadd.f32 %v6185, %v6419
      %v6421 = vpop.f32.mrf.mxu0
      %6422 = vmatprep.mubr.f32.mxu0 0.0
      %6423 = vmatmul.mubr.f32.gmra.mxu0 %v4791
      %v6424 = vpop.f32.mrf.mxu0
      %v6425 = vadd.f32 %v6190, %v6424
      %v6426 = vpop.f32.mrf.mxu0
      %6427 = vmatprep.mubr.f32.mxu0 0.0
      %6428 = vmatmul.mubr.f32.gmra.mxu0 %v4794
      %v6429 = vpop.f32.mrf.mxu0
      %v6430 = vadd.f32 %v6195, %v6429
      %v6431 = vpop.f32.mrf.mxu0
      %6432 = vmatprep.mubr.f32.mxu0 0.0
      %6433 = vmatmul.mubr.f32.gmra.mxu0 %v4797
      %v6434 = vpop.f32.mrf.mxu0
      %v6435 = vadd.f32 %v6200, %v6434
      %v6436 = vpop.f32.mrf.mxu0
      %6437 = vmatprep.mubr.f32.mxu0 0.0
      %6438 = vmatmul.mubr.f32.gmra.mxu0 %v4800
      %v6439 = vpop.f32.mrf.mxu0
      %v6440 = vadd.f32 %v6205, %v6439
      %v6441 = vpop.f32.mrf.mxu0
      %6442 = vmatprep.mubr.f32.mxu0 0.0
      %6443 = vmatmul.mubr.f32.gmra.mxu0 %v4803
      %v6444 = vpop.f32.mrf.mxu0
      %v6445 = vadd.f32 %v6210, %v6444
      %v6446 = vpop.f32.mrf.mxu0
      %6447 = vmatprep.mubr.f32.mxu0 0.0
      %6448 = vmatmul.mubr.f32.gmra.mxu0 %v4806
      %v6449 = vpop.f32.mrf.mxu0
      %v6450 = vadd.f32 %v6215, %v6449
      %v6451 = vpop.f32.mrf.mxu0
      %6452 = vdwg.mxu0
      %v6453 = vmax.f32 %v6285, 0.0
      %v6454 = vmax.f32 %v6290, 0.0
      %v6455 = vmax.f32 %v6295, 0.0
      %v6456 = vmax.f32 %v6300, 0.0
      %v6457 = vmax.f32 %v6305, 0.0
      %v6458 = vmax.f32 %v6310, 0.0
      %v6459 = vmax.f32 %v6315, 0.0
      %v6460 = vmax.f32 %v6320, 0.0
      %v6461 = vmax.f32 %v6325, 0.0
      %v6462 = vmax.f32 %v6330, 0.0
      %v6463 = vmax.f32 %v6335, 0.0
      %v6464 = vmax.f32 %v6340, 0.0
      %v6465 = vmax.f32 %v6345, 0.0
      %v6466 = vmax.f32 %v6350, 0.0
      %v6467 = vmax.f32 %v6355, 0.0
      %v6468 = vmax.f32 %v6360, 0.0
      %v6469 = vmax.f32 %v6365, 0.0
      %v6470 = vmax.f32 %v6370, 0.0
      %v6471 = vmax.f32 %v6375, 0.0
      %v6472 = vmax.f32 %v6380, 0.0
      %v6473 = vmax.f32 %v6385, 0.0
      %v6474 = vmax.f32 %v6390, 0.0
      %v6475 = vmax.f32 %v6395, 0.0
      %v6476 = vmax.f32 %v6400, 0.0
      %v6477 = vmax.f32 %v6405, 0.0
      %v6478 = vmax.f32 %v6410, 0.0
      %v6479 = vmax.f32 %v6415, 0.0
      %v6480 = vmax.f32 %v6420, 0.0
      %v6481 = vmax.f32 %v6425, 0.0
      %v6482 = vmax.f32 %v6430, 0.0
      %v6483 = vmax.f32 %v6435, 0.0
      %v6484 = vmax.f32 %v6440, 0.0
      %v6485 = vmax.f32 %v6445, 0.0
      %v6486 = vmax.f32 %v6450, 0.0
      %6487 = vst.msk [vmem:[#allocation3] sm:$0xff] %vm292, 0.0
      %6488 = vst.msk [vmem:[#allocation3 + $0x8] sm:$0xff] %vm292, 0.0
      %6489 = vst.msk [vmem:[#allocation3 + $0x10] sm:$0x3] %vm656, 0.0
      %s6490 = scalar_lea.vmem [#allocation3], 432
      %6491 = vst.msk [vmem:[%s6490] sm:$0xff] %vm292, 0.0
      %6492 = vst.msk [vmem:[%s6490 + $0x8] sm:$0xff] %vm292, 0.0
      %6493 = vst.msk [vmem:[%s6490 + $0x10] sm:$0x3] %vm656, 0.0
      %s6494 = scalar_lea.vmem [#allocation3], 24
      %vm6495 = vcmask 516096
      %6496 = vst.msk [vmem:[%s6494] sm:$0x1] %vm6495, 0.0
      %6497 = vst.msk [vmem:[%s6494 + $0x18] sm:$0x1] %vm6495, 0.0
      %6498 = vst.msk [vmem:[%s6494 + $0x30] sm:$0x1] %vm6495, 0.0
      %6499 = vst.msk [vmem:[%s6494 + $0x48] sm:$0x1] %vm6495, 0.0
      %6500 = vst.msk [vmem:[%s6494 + $0x60] sm:$0x1] %vm6495, 0.0
      %6501 = vst.msk [vmem:[%s6494 + $0x78] sm:$0x1] %vm6495, 0.0
      %6502 = vst.msk [vmem:[%s6494 + $0x90] sm:$0x1] %vm6495, 0.0
      %6503 = vst.msk [vmem:[%s6494 + $0xa8] sm:$0x1] %vm6495, 0.0
      %6504 = vst.msk [vmem:[%s6494 + $0xc0] sm:$0x1] %vm6495, 0.0
      %6505 = vst.msk [vmem:[%s6494 + $0xd8] sm:$0x1] %vm6495, 0.0
      %6506 = vst.msk [vmem:[%s6494 + $0xf0] sm:$0x1] %vm6495, 0.0
      %6507 = vst.msk [vmem:[%s6494 + $0x108] sm:$0x1] %vm6495, 0.0
      %6508 = vst.msk [vmem:[%s6494 + $0x120] sm:$0x1] %vm6495, 0.0
      %6509 = vst.msk [vmem:[%s6494 + $0x138] sm:$0x1] %vm6495, 0.0
      %6510 = vst.msk [vmem:[%s6494 + $0x150] sm:$0x1] %vm6495, 0.0
      %6511 = vst.msk [vmem:[%s6494 + $0x168] sm:$0x1] %vm6495, 0.0
      %6512 = vst.msk [vmem:[%s6494 + $0x180] sm:$0x1] %vm6495, 0.0
      %6513 = vst.msk [vmem:[%s6494 + $0x11] sm:$0x1] %vm6495, 0.0
      %6514 = vst.msk [vmem:[%s6494 + $0x29] sm:$0x1] %vm6495, 0.0
      %6515 = vst.msk [vmem:[%s6494 + $0x41] sm:$0x1] %vm6495, 0.0
      %6516 = vst.msk [vmem:[%s6494 + $0x59] sm:$0x1] %vm6495, 0.0
      %6517 = vst.msk [vmem:[%s6494 + $0x71] sm:$0x1] %vm6495, 0.0
      %6518 = vst.msk [vmem:[%s6494 + $0x89] sm:$0x1] %vm6495, 0.0
      %6519 = vst.msk [vmem:[%s6494 + $0xa1] sm:$0x1] %vm6495, 0.0
      %6520 = vst.msk [vmem:[%s6494 + $0xb9] sm:$0x1] %vm6495, 0.0
      %6521 = vst.msk [vmem:[%s6494 + $0xd1] sm:$0x1] %vm6495, 0.0
      %6522 = vst.msk [vmem:[%s6494 + $0xe9] sm:$0x1] %vm6495, 0.0
      %6523 = vst.msk [vmem:[%s6494 + $0x101] sm:$0x1] %vm6495, 0.0
      %6524 = vst.msk [vmem:[%s6494 + $0x119] sm:$0x1] %vm6495, 0.0
      %6525 = vst.msk [vmem:[%s6494 + $0x131] sm:$0x1] %vm6495, 0.0
      %6526 = vst.msk [vmem:[%s6494 + $0x149] sm:$0x1] %vm6495, 0.0
      %6527 = vst.msk [vmem:[%s6494 + $0x161] sm:$0x1] %vm6495, 0.0
      %6528 = vst.msk [vmem:[%s6494 + $0x179] sm:$0x1] %vm6495, 0.0
      %6529 = vst.msk [vmem:[%s6494 + $0x191] sm:$0x1] %vm6495, 0.0
      %6530 = vst.msk [vmem:[%s6494 + $0x1] sm:$0xff] %vm292, %v6453
      %6531 = vst.msk [vmem:[%s6494 + $0x9] sm:$0xff] %vm292, %v6454
      %6532 = vst.msk [vmem:[%s6494 + $0x19] sm:$0xff] %vm292, %v6455
      %6533 = vst.msk [vmem:[%s6494 + $0x21] sm:$0xff] %vm292, %v6456
      %6534 = vst.msk [vmem:[%s6494 + $0x31] sm:$0xff] %vm292, %v6457
      %6535 = vst.msk [vmem:[%s6494 + $0x39] sm:$0xff] %vm292, %v6458
      %6536 = vst.msk [vmem:[%s6494 + $0x49] sm:$0xff] %vm292, %v6459
      %6537 = vst.msk [vmem:[%s6494 + $0x51] sm:$0xff] %vm292, %v6460
      %6538 = vst.msk [vmem:[%s6494 + $0x61] sm:$0xff] %vm292, %v6461
      %6539 = vst.msk [vmem:[%s6494 + $0x69] sm:$0xff] %vm292, %v6462
      %6540 = vst.msk [vmem:[%s6494 + $0x79] sm:$0xff] %vm292, %v6463
      %6541 = vst.msk [vmem:[%s6494 + $0x81] sm:$0xff] %vm292, %v6464
      %6542 = vst.msk [vmem:[%s6494 + $0x91] sm:$0xff] %vm292, %v6465
      %6543 = vst.msk [vmem:[%s6494 + $0x99] sm:$0xff] %vm292, %v6466
      %6544 = vst.msk [vmem:[%s6494 + $0xa9] sm:$0xff] %vm292, %v6467
      %6545 = vst.msk [vmem:[%s6494 + $0xb1] sm:$0xff] %vm292, %v6468
      %6546 = vst.msk [vmem:[%s6494 + $0xc1] sm:$0xff] %vm292, %v6469
      %6547 = vst.msk [vmem:[%s6494 + $0xc9] sm:$0xff] %vm292, %v6470
      %6548 = vst.msk [vmem:[%s6494 + $0xd9] sm:$0xff] %vm292, %v6471
      %6549 = vst.msk [vmem:[%s6494 + $0xe1] sm:$0xff] %vm292, %v6472
      %6550 = vst.msk [vmem:[%s6494 + $0xf1] sm:$0xff] %vm292, %v6473
      %6551 = vst.msk [vmem:[%s6494 + $0xf9] sm:$0xff] %vm292, %v6474
      %6552 = vst.msk [vmem:[%s6494 + $0x109] sm:$0xff] %vm292, %v6475
      %6553 = vst.msk [vmem:[%s6494 + $0x111] sm:$0xff] %vm292, %v6476
      %6554 = vst.msk [vmem:[%s6494 + $0x121] sm:$0xff] %vm292, %v6477
      %6555 = vst.msk [vmem:[%s6494 + $0x129] sm:$0xff] %vm292, %v6478
      %6556 = vst.msk [vmem:[%s6494 + $0x139] sm:$0xff] %vm292, %v6479
      %6557 = vst.msk [vmem:[%s6494 + $0x141] sm:$0xff] %vm292, %v6480
      %6558 = vst.msk [vmem:[%s6494 + $0x151] sm:$0xff] %vm292, %v6481
      %6559 = vst.msk [vmem:[%s6494 + $0x159] sm:$0xff] %vm292, %v6482
      %6560 = vst.msk [vmem:[%s6494 + $0x169] sm:$0xff] %vm292, %v6483
      %6561 = vst.msk [vmem:[%s6494 + $0x171] sm:$0xff] %vm292, %v6484
      %6562 = vst.msk [vmem:[%s6494 + $0x181] sm:$0xff] %vm292, %v6485
      %6563 = vst.msk [vmem:[%s6494 + $0x189] sm:$0xff] %vm292, %v6486
      %v6564 = vld [vmem:[#allocation3] sm:$0xff]
      %v6565 = vld [vmem:[#allocation3 + $0x8] sm:$0xff]
      %v6566 = vld [vmem:[#allocation3 + $0x18] sm:$0xff]
      %v6567 = vld [vmem:[#allocation3 + $0x20] sm:$0xff]
      %v6568 = vld [vmem:[#allocation3 + $0x30] sm:$0xff]
      %v6569 = vld [vmem:[#allocation3 + $0x38] sm:$0xff]
      %v6570 = vld [vmem:[#allocation3 + $0x48] sm:$0xff]
      %v6571 = vld [vmem:[#allocation3 + $0x50] sm:$0xff]
      %v6572 = vld [vmem:[#allocation3 + $0x60] sm:$0xff]
      %v6573 = vld [vmem:[#allocation3 + $0x68] sm:$0xff]
      %v6574 = vld [vmem:[#allocation3 + $0x78] sm:$0xff]
      %v6575 = vld [vmem:[#allocation3 + $0x80] sm:$0xff]
      %v6576 = vld [vmem:[#allocation3 + $0x90] sm:$0xff]
      %v6577 = vld [vmem:[#allocation3 + $0x98] sm:$0xff]
      %v6578 = vld [vmem:[#allocation3 + $0xa8] sm:$0xff]
      %v6579 = vld [vmem:[#allocation3 + $0xb0] sm:$0xff]
      %v6580 = vld [vmem:[#allocation3 + $0xc0] sm:$0xff]
      %v6581 = vld [vmem:[#allocation3 + $0xc8] sm:$0xff]
      %v6582 = vld [vmem:[#allocation3 + $0xd8] sm:$0xff]
      %v6583 = vld [vmem:[#allocation3 + $0xe0] sm:$0xff]
      %v6584 = vld [vmem:[#allocation3 + $0xf0] sm:$0xff]
      %v6585 = vld [vmem:[#allocation3 + $0xf8] sm:$0xff]
      %v6586 = vld [vmem:[#allocation3 + $0x108] sm:$0xff]
      %v6587 = vld [vmem:[#allocation3 + $0x110] sm:$0xff]
      %v6588 = vld [vmem:[#allocation3 + $0x120] sm:$0xff]
      %v6589 = vld [vmem:[#allocation3 + $0x128] sm:$0xff]
      %v6590 = vld [vmem:[#allocation3 + $0x138] sm:$0xff]
      %v6591 = vld [vmem:[#allocation3 + $0x140] sm:$0xff]
      %v6592 = vld [vmem:[#allocation3 + $0x150] sm:$0xff]
      %v6593 = vld [vmem:[#allocation3 + $0x158] sm:$0xff]
      %v6594 = vld [vmem:[#allocation3 + $0x168] sm:$0xff]
      %v6595 = vld [vmem:[#allocation3 + $0x170] sm:$0xff]
      %v6596 = vld [vmem:[#allocation3 + $0x180] sm:$0xff]
      %v6597 = vld [vmem:[#allocation3 + $0x188] sm:$0xff]
      %6598 = vst.msk [vmem:[#allocation5] sm:$0xff] %vm292, %v6564
      %6599 = vst.msk [vmem:[#allocation5 + $0x28] sm:$0xff] %vm292, %v6565
      %6600 = vst.msk [vmem:[#allocation5 + $0x50] sm:$0xff] %vm292, %v6566
      %6601 = vst.msk [vmem:[#allocation5 + $0x78] sm:$0xff] %vm292, %v6567
      %6602 = vst.msk [vmem:[#allocation5 + $0xa0] sm:$0xff] %vm292, %v6568
      %6603 = vst.msk [vmem:[#allocation5 + $0xc8] sm:$0xff] %vm292, %v6569
      %6604 = vst.msk [vmem:[#allocation5 + $0xf0] sm:$0xff] %vm292, %v6570
      %6605 = vst.msk [vmem:[#allocation5 + $0x118] sm:$0xff] %vm292, %v6571
      %6606 = vst.msk [vmem:[#allocation5 + $0x140] sm:$0xff] %vm292, %v6572
      %6607 = vst.msk [vmem:[#allocation5 + $0x168] sm:$0xff] %vm292, %v6573
      %6608 = vst.msk [vmem:[#allocation5 + $0x190] sm:$0xff] %vm292, %v6574
      %6609 = vst.msk [vmem:[#allocation5 + $0x1b8] sm:$0xff] %vm292, %v6575
      %6610 = vst.msk [vmem:[#allocation5 + $0x1e0] sm:$0xff] %vm292, %v6576
      %6611 = vst.msk [vmem:[#allocation5 + $0x208] sm:$0xff] %vm292, %v6577
      %6612 = vst.msk [vmem:[#allocation5 + $0x230] sm:$0xff] %vm292, %v6578
      %6613 = vst.msk [vmem:[#allocation5 + $0x258] sm:$0xff] %vm292, %v6579
      %6614 = vst.msk [vmem:[#allocation5 + $0x280] sm:$0xff] %vm292, %v6580
      %6615 = vst.msk [vmem:[#allocation5 + $0x2a8] sm:$0xff] %vm292, %v6581
      %6616 = vst.msk [vmem:[#allocation5 + $0x2d0] sm:$0xff] %vm292, %v6582
      %6617 = vst.msk [vmem:[#allocation5 + $0x2f8] sm:$0xff] %vm292, %v6583
      %6618 = vst.msk [vmem:[#allocation5 + $0x320] sm:$0xff] %vm292, %v6584
      %6619 = vst.msk [vmem:[#allocation5 + $0x348] sm:$0xff] %vm292, %v6585
      %6620 = vst.msk [vmem:[#allocation5 + $0x370] sm:$0xff] %vm292, %v6586
      %6621 = vst.msk [vmem:[#allocation5 + $0x398] sm:$0xff] %vm292, %v6587
      %6622 = vst.msk [vmem:[#allocation5 + $0x3c0] sm:$0xff] %vm292, %v6588
      %6623 = vst.msk [vmem:[#allocation5 + $0x3e8] sm:$0xff] %vm292, %v6589
      %6624 = vst.msk [vmem:[#allocation5 + $0x410] sm:$0xff] %vm292, %v6590
      %6625 = vst.msk [vmem:[#allocation5 + $0x438] sm:$0xff] %vm292, %v6591
      %6626 = vst.msk [vmem:[#allocation5 + $0x460] sm:$0xff] %vm292, %v6592
      %6627 = vst.msk [vmem:[#allocation5 + $0x488] sm:$0xff] %vm292, %v6593
      %6628 = vst.msk [vmem:[#allocation5 + $0x4b0] sm:$0xff] %vm292, %v6594
      %6629 = vst.msk [vmem:[#allocation5 + $0x4d8] sm:$0xff] %vm292, %v6595
      %6630 = vst.msk [vmem:[#allocation5 + $0x500] sm:$0xff] %vm292, %v6596
      %6631 = vst.msk [vmem:[#allocation5 + $0x528] sm:$0xff] %vm292, %v6597
      %v6632 = vld [vmem:[#allocation3 + $0x1] sm:$0xff]
      %v6633 = vld [vmem:[#allocation3 + $0x9] sm:$0xff]
      %v6634 = vld [vmem:[#allocation3 + $0x19] sm:$0xff]
      %v6635 = vld [vmem:[#allocation3 + $0x21] sm:$0xff]
      %v6636 = vld [vmem:[#allocation3 + $0x31] sm:$0xff]
      %v6637 = vld [vmem:[#allocation3 + $0x39] sm:$0xff]
      %v6638 = vld [vmem:[#allocation3 + $0x49] sm:$0xff]
      %v6639 = vld [vmem:[#allocation3 + $0x51] sm:$0xff]
      %v6640 = vld [vmem:[#allocation3 + $0x61] sm:$0xff]
      %v6641 = vld [vmem:[#allocation3 + $0x69] sm:$0xff]
      %v6642 = vld [vmem:[#allocation3 + $0x79] sm:$0xff]
      %v6643 = vld [vmem:[#allocation3 + $0x81] sm:$0xff]
      %v6644 = vld [vmem:[#allocation3 + $0x91] sm:$0xff]
      %v6645 = vld [vmem:[#allocation3 + $0x99] sm:$0xff]
      %v6646 = vld [vmem:[#allocation3 + $0xa9] sm:$0xff]
      %v6647 = vld [vmem:[#allocation3 + $0xb1] sm:$0xff]
      %v6648 = vld [vmem:[#allocation3 + $0xc1] sm:$0xff]
      %v6649 = vld [vmem:[#allocation3 + $0xc9] sm:$0xff]
      %v6650 = vld [vmem:[#allocation3 + $0xd9] sm:$0xff]
      %v6651 = vld [vmem:[#allocation3 + $0xe1] sm:$0xff]
      %v6652 = vld [vmem:[#allocation3 + $0xf1] sm:$0xff]
      %v6653 = vld [vmem:[#allocation3 + $0xf9] sm:$0xff]
      %v6654 = vld [vmem:[#allocation3 + $0x109] sm:$0xff]
      %v6655 = vld [vmem:[#allocation3 + $0x111] sm:$0xff]
      %v6656 = vld [vmem:[#allocation3 + $0x121] sm:$0xff]
      %v6657 = vld [vmem:[#allocation3 + $0x129] sm:$0xff]
      %v6658 = vld [vmem:[#allocation3 + $0x139] sm:$0xff]
      %v6659 = vld [vmem:[#allocation3 + $0x141] sm:$0xff]
      %v6660 = vld [vmem:[#allocation3 + $0x151] sm:$0xff]
      %v6661 = vld [vmem:[#allocation3 + $0x159] sm:$0xff]
      %v6662 = vld [vmem:[#allocation3 + $0x169] sm:$0xff]
      %v6663 = vld [vmem:[#allocation3 + $0x171] sm:$0xff]
      %v6664 = vld [vmem:[#allocation3 + $0x181] sm:$0xff]
      %v6665 = vld [vmem:[#allocation3 + $0x189] sm:$0xff]
      %6700 = vrot.lane.b32.xlu0 %v6632, 64
      %v6701 = vpop.permute.xlu0 %6700
      %6702 = vrot.lane.b32.xlu0 %v6633, 64
      %v6703 = vpop.permute.xlu0 %6702
      %6704 = vrot.lane.b32.xlu0 %v6634, 64
      %v6705 = vpop.permute.xlu0 %6704
      %6706 = vrot.lane.b32.xlu0 %v6635, 64
      %v6707 = vpop.permute.xlu0 %6706
      %6708 = vrot.lane.b32.xlu0 %v6636, 64
      %v6709 = vpop.permute.xlu0 %6708
      %6710 = vrot.lane.b32.xlu0 %v6637, 64
      %v6711 = vpop.permute.xlu0 %6710
      %6712 = vrot.lane.b32.xlu0 %v6638, 64
      %v6713 = vpop.permute.xlu0 %6712
      %6714 = vrot.lane.b32.xlu0 %v6639, 64
      %v6715 = vpop.permute.xlu0 %6714
      %6716 = vrot.lane.b32.xlu0 %v6640, 64
      %v6717 = vpop.permute.xlu0 %6716
      %6718 = vrot.lane.b32.xlu0 %v6641, 64
      %v6719 = vpop.permute.xlu0 %6718
      %6720 = vrot.lane.b32.xlu0 %v6642, 64
      %v6721 = vpop.permute.xlu0 %6720
      %6722 = vrot.lane.b32.xlu0 %v6643, 64
      %v6723 = vpop.permute.xlu0 %6722
      %6724 = vrot.lane.b32.xlu0 %v6644, 64
      %v6725 = vpop.permute.xlu0 %6724
      %6726 = vrot.lane.b32.xlu0 %v6645, 64
      %v6727 = vpop.permute.xlu0 %6726
      %6728 = vrot.lane.b32.xlu0 %v6646, 64
      %v6729 = vpop.permute.xlu0 %6728
      %6730 = vrot.lane.b32.xlu0 %v6647, 64
      %v6731 = vpop.permute.xlu0 %6730
      %6732 = vrot.lane.b32.xlu0 %v6648, 64
      %v6733 = vpop.permute.xlu0 %6732
      %6734 = vrot.lane.b32.xlu0 %v6649, 64
      %v6735 = vpop.permute.xlu0 %6734
      %6736 = vrot.lane.b32.xlu0 %v6650, 64
      %v6737 = vpop.permute.xlu0 %6736
      %6738 = vrot.lane.b32.xlu0 %v6651, 64
      %v6739 = vpop.permute.xlu0 %6738
      %6740 = vrot.lane.b32.xlu0 %v6652, 64
      %v6741 = vpop.permute.xlu0 %6740
      %6742 = vrot.lane.b32.xlu0 %v6653, 64
      %v6743 = vpop.permute.xlu0 %6742
      %6744 = vrot.lane.b32.xlu0 %v6654, 64
      %v6745 = vpop.permute.xlu0 %6744
      %6746 = vrot.lane.b32.xlu0 %v6655, 64
      %v6747 = vpop.permute.xlu0 %6746
      %6748 = vrot.lane.b32.xlu0 %v6656, 64
      %v6749 = vpop.permute.xlu0 %6748
      %6750 = vrot.lane.b32.xlu0 %v6657, 64
      %v6751 = vpop.permute.xlu0 %6750
      %6752 = vrot.lane.b32.xlu0 %v6658, 64
      %v6753 = vpop.permute.xlu0 %6752
      %6754 = vrot.lane.b32.xlu0 %v6659, 64
      %v6755 = vpop.permute.xlu0 %6754
      %6756 = vrot.lane.b32.xlu0 %v6660, 64
      %v6757 = vpop.permute.xlu0 %6756
      %6758 = vrot.lane.b32.xlu0 %v6661, 64
      %v6759 = vpop.permute.xlu0 %6758
      %6760 = vrot.lane.b32.xlu0 %v6662, 64
      %v6761 = vpop.permute.xlu0 %6760
      %6762 = vrot.lane.b32.xlu0 %v6663, 64
      %v6763 = vpop.permute.xlu0 %6762
      %6764 = vrot.lane.b32.xlu0 %v6664, 64
      %v6765 = vpop.permute.xlu0 %6764
      %6766 = vrot.lane.b32.xlu0 %v6665, 64
      %v6767 = vpop.permute.xlu0 %6766
      %6802 = vst.msk [vmem:[#allocation5] sm:$0xff] %vm959, %v6701
      %6803 = vst.msk [vmem:[#allocation5 + $0x28] sm:$0xff] %vm959, %v6703
      %6804 = vst.msk [vmem:[#allocation5 + $0x50] sm:$0xff] %vm959, %v6705
      %6805 = vst.msk [vmem:[#allocation5 + $0x78] sm:$0xff] %vm959, %v6707
      %6806 = vst.msk [vmem:[#allocation5 + $0xa0] sm:$0xff] %vm959, %v6709
      %6807 = vst.msk [vmem:[#allocation5 + $0xc8] sm:$0xff] %vm959, %v6711
      %6808 = vst.msk [vmem:[#allocation5 + $0xf0] sm:$0xff] %vm959, %v6713
      %6809 = vst.msk [vmem:[#allocation5 + $0x118] sm:$0xff] %vm959, %v6715
      %6810 = vst.msk [vmem:[#allocation5 + $0x140] sm:$0xff] %vm959, %v6717
      %6811 = vst.msk [vmem:[#allocation5 + $0x168] sm:$0xff] %vm959, %v6719
      %6812 = vst.msk [vmem:[#allocation5 + $0x190] sm:$0xff] %vm959, %v6721
      %6813 = vst.msk [vmem:[#allocation5 + $0x1b8] sm:$0xff] %vm959, %v6723
      %6814 = vst.msk [vmem:[#allocation5 + $0x1e0] sm:$0xff] %vm959, %v6725
      %6815 = vst.msk [vmem:[#allocation5 + $0x208] sm:$0xff] %vm959, %v6727
      %6816 = vst.msk [vmem:[#allocation5 + $0x230] sm:$0xff] %vm959, %v6729
      %6817 = vst.msk [vmem:[#allocation5 + $0x258] sm:$0xff] %vm959, %v6731
      %6818 = vst.msk [vmem:[#allocation5 + $0x280] sm:$0xff] %vm959, %v6733
      %6819 = vst.msk [vmem:[#allocation5 + $0x2a8] sm:$0xff] %vm959, %v6735
      %6820 = vst.msk [vmem:[#allocation5 + $0x2d0] sm:$0xff] %vm959, %v6737
      %6821 = vst.msk [vmem:[#allocation5 + $0x2f8] sm:$0xff] %vm959, %v6739
      %6822 = vst.msk [vmem:[#allocation5 + $0x320] sm:$0xff] %vm959, %v6741
      %6823 = vst.msk [vmem:[#allocation5 + $0x348] sm:$0xff] %vm959, %v6743
      %6824 = vst.msk [vmem:[#allocation5 + $0x370] sm:$0xff] %vm959, %v6745
      %6825 = vst.msk [vmem:[#allocation5 + $0x398] sm:$0xff] %vm959, %v6747
      %6826 = vst.msk [vmem:[#allocation5 + $0x3c0] sm:$0xff] %vm959, %v6749
      %6827 = vst.msk [vmem:[#allocation5 + $0x3e8] sm:$0xff] %vm959, %v6751
      %6828 = vst.msk [vmem:[#allocation5 + $0x410] sm:$0xff] %vm959, %v6753
      %6829 = vst.msk [vmem:[#allocation5 + $0x438] sm:$0xff] %vm959, %v6755
      %6830 = vst.msk [vmem:[#allocation5 + $0x460] sm:$0xff] %vm959, %v6757
      %6831 = vst.msk [vmem:[#allocation5 + $0x488] sm:$0xff] %vm959, %v6759
      %6832 = vst.msk [vmem:[#allocation5 + $0x4b0] sm:$0xff] %vm959, %v6761
      %6833 = vst.msk [vmem:[#allocation5 + $0x4d8] sm:$0xff] %vm959, %v6763
      %6834 = vst.msk [vmem:[#allocation5 + $0x500] sm:$0xff] %vm959, %v6765
      %6835 = vst.msk [vmem:[#allocation5 + $0x528] sm:$0xff] %vm959, %v6767
      %v6836 = vld [vmem:[#allocation3 + $0x2] sm:$0xff]
      %v6837 = vld [vmem:[#allocation3 + $0xa] sm:$0xff]
      %v6838 = vld [vmem:[#allocation3 + $0x1a] sm:$0xff]
      %v6839 = vld [vmem:[#allocation3 + $0x22] sm:$0xff]
      %v6840 = vld [vmem:[#allocation3 + $0x32] sm:$0xff]
      %v6841 = vld [vmem:[#allocation3 + $0x3a] sm:$0xff]
      %v6842 = vld [vmem:[#allocation3 + $0x4a] sm:$0xff]
      %v6843 = vld [vmem:[#allocation3 + $0x52] sm:$0xff]
      %v6844 = vld [vmem:[#allocation3 + $0x62] sm:$0xff]
      %v6845 = vld [vmem:[#allocation3 + $0x6a] sm:$0xff]
      %v6846 = vld [vmem:[#allocation3 + $0x7a] sm:$0xff]
      %v6847 = vld [vmem:[#allocation3 + $0x82] sm:$0xff]
      %v6848 = vld [vmem:[#allocation3 + $0x92] sm:$0xff]
      %v6849 = vld [vmem:[#allocation3 + $0x9a] sm:$0xff]
      %v6850 = vld [vmem:[#allocation3 + $0xaa] sm:$0xff]
      %v6851 = vld [vmem:[#allocation3 + $0xb2] sm:$0xff]
      %v6852 = vld [vmem:[#allocation3 + $0xc2] sm:$0xff]
      %v6853 = vld [vmem:[#allocation3 + $0xca] sm:$0xff]
      %v6854 = vld [vmem:[#allocation3 + $0xda] sm:$0xff]
      %v6855 = vld [vmem:[#allocation3 + $0xe2] sm:$0xff]
      %v6856 = vld [vmem:[#allocation3 + $0xf2] sm:$0xff]
      %v6857 = vld [vmem:[#allocation3 + $0xfa] sm:$0xff]
      %v6858 = vld [vmem:[#allocation3 + $0x10a] sm:$0xff]
      %v6859 = vld [vmem:[#allocation3 + $0x112] sm:$0xff]
      %v6860 = vld [vmem:[#allocation3 + $0x122] sm:$0xff]
      %v6861 = vld [vmem:[#allocation3 + $0x12a] sm:$0xff]
      %v6862 = vld [vmem:[#allocation3 + $0x13a] sm:$0xff]
      %v6863 = vld [vmem:[#allocation3 + $0x142] sm:$0xff]
      %v6864 = vld [vmem:[#allocation3 + $0x152] sm:$0xff]
      %v6865 = vld [vmem:[#allocation3 + $0x15a] sm:$0xff]
      %v6866 = vld [vmem:[#allocation3 + $0x16a] sm:$0xff]
      %v6867 = vld [vmem:[#allocation3 + $0x172] sm:$0xff]
      %v6868 = vld [vmem:[#allocation3 + $0x182] sm:$0xff]
      %v6869 = vld [vmem:[#allocation3 + $0x18a] sm:$0xff]
      %6870 = vst.msk [vmem:[#allocation5 + $0x8] sm:$0xff] %vm292, %v6836
      %6871 = vst.msk [vmem:[#allocation5 + $0x30] sm:$0xff] %vm292, %v6837
      %6872 = vst.msk [vmem:[#allocation5 + $0x58] sm:$0xff] %vm292, %v6838
      %6873 = vst.msk [vmem:[#allocation5 + $0x80] sm:$0xff] %vm292, %v6839
      %6874 = vst.msk [vmem:[#allocation5 + $0xa8] sm:$0xff] %vm292, %v6840
      %6875 = vst.msk [vmem:[#allocation5 + $0xd0] sm:$0xff] %vm292, %v6841
      %6876 = vst.msk [vmem:[#allocation5 + $0xf8] sm:$0xff] %vm292, %v6842
      %6877 = vst.msk [vmem:[#allocation5 + $0x120] sm:$0xff] %vm292, %v6843
      %6878 = vst.msk [vmem:[#allocation5 + $0x148] sm:$0xff] %vm292, %v6844
      %6879 = vst.msk [vmem:[#allocation5 + $0x170] sm:$0xff] %vm292, %v6845
      %6880 = vst.msk [vmem:[#allocation5 + $0x198] sm:$0xff] %vm292, %v6846
      %6881 = vst.msk [vmem:[#allocation5 + $0x1c0] sm:$0xff] %vm292, %v6847
      %6882 = vst.msk [vmem:[#allocation5 + $0x1e8] sm:$0xff] %vm292, %v6848
      %6883 = vst.msk [vmem:[#allocation5 + $0x210] sm:$0xff] %vm292, %v6849
      %6884 = vst.msk [vmem:[#allocation5 + $0x238] sm:$0xff] %vm292, %v6850
      %6885 = vst.msk [vmem:[#allocation5 + $0x260] sm:$0xff] %vm292, %v6851
      %6886 = vst.msk [vmem:[#allocation5 + $0x288] sm:$0xff] %vm292, %v6852
      %6887 = vst.msk [vmem:[#allocation5 + $0x2b0] sm:$0xff] %vm292, %v6853
      %6888 = vst.msk [vmem:[#allocation5 + $0x2d8] sm:$0xff] %vm292, %v6854
      %6889 = vst.msk [vmem:[#allocation5 + $0x300] sm:$0xff] %vm292, %v6855
      %6890 = vst.msk [vmem:[#allocation5 + $0x328] sm:$0xff] %vm292, %v6856
      %6891 = vst.msk [vmem:[#allocation5 + $0x350] sm:$0xff] %vm292, %v6857
      %6892 = vst.msk [vmem:[#allocation5 + $0x378] sm:$0xff] %vm292, %v6858
      %6893 = vst.msk [vmem:[#allocation5 + $0x3a0] sm:$0xff] %vm292, %v6859
      %6894 = vst.msk [vmem:[#allocation5 + $0x3c8] sm:$0xff] %vm292, %v6860
      %6895 = vst.msk [vmem:[#allocation5 + $0x3f0] sm:$0xff] %vm292, %v6861
      %6896 = vst.msk [vmem:[#allocation5 + $0x418] sm:$0xff] %vm292, %v6862
      %6897 = vst.msk [vmem:[#allocation5 + $0x440] sm:$0xff] %vm292, %v6863
      %6898 = vst.msk [vmem:[#allocation5 + $0x468] sm:$0xff] %vm292, %v6864
      %6899 = vst.msk [vmem:[#allocation5 + $0x490] sm:$0xff] %vm292, %v6865
      %6900 = vst.msk [vmem:[#allocation5 + $0x4b8] sm:$0xff] %vm292, %v6866
      %6901 = vst.msk [vmem:[#allocation5 + $0x4e0] sm:$0xff] %vm292, %v6867
      %6902 = vst.msk [vmem:[#allocation5 + $0x508] sm:$0xff] %vm292, %v6868
      %6903 = vst.msk [vmem:[#allocation5 + $0x530] sm:$0xff] %vm292, %v6869
      %v6904 = vld [vmem:[%s6494] sm:$0xff]
      %v6905 = vld [vmem:[%s6494 + $0x8] sm:$0xff]
      %v6906 = vld [vmem:[%s6494 + $0x18] sm:$0xff]
      %v6907 = vld [vmem:[%s6494 + $0x20] sm:$0xff]
      %v6908 = vld [vmem:[%s6494 + $0x30] sm:$0xff]
      %v6909 = vld [vmem:[%s6494 + $0x38] sm:$0xff]
      %v6910 = vld [vmem:[%s6494 + $0x48] sm:$0xff]
      %v6911 = vld [vmem:[%s6494 + $0x50] sm:$0xff]
      %v6912 = vld [vmem:[%s6494 + $0x60] sm:$0xff]
      %v6913 = vld [vmem:[%s6494 + $0x68] sm:$0xff]
      %v6914 = vld [vmem:[%s6494 + $0x78] sm:$0xff]
      %v6915 = vld [vmem:[%s6494 + $0x80] sm:$0xff]
      %v6916 = vld [vmem:[%s6494 + $0x90] sm:$0xff]
      %v6917 = vld [vmem:[%s6494 + $0x98] sm:$0xff]
      %v6918 = vld [vmem:[%s6494 + $0xa8] sm:$0xff]
      %v6919 = vld [vmem:[%s6494 + $0xb0] sm:$0xff]
      %v6920 = vld [vmem:[%s6494 + $0xc0] sm:$0xff]
      %v6921 = vld [vmem:[%s6494 + $0xc8] sm:$0xff]
      %v6922 = vld [vmem:[%s6494 + $0xd8] sm:$0xff]
      %v6923 = vld [vmem:[%s6494 + $0xe0] sm:$0xff]
      %v6924 = vld [vmem:[%s6494 + $0xf0] sm:$0xff]
      %v6925 = vld [vmem:[%s6494 + $0xf8] sm:$0xff]
      %v6926 = vld [vmem:[%s6494 + $0x108] sm:$0xff]
      %v6927 = vld [vmem:[%s6494 + $0x110] sm:$0xff]
      %v6928 = vld [vmem:[%s6494 + $0x120] sm:$0xff]
      %v6929 = vld [vmem:[%s6494 + $0x128] sm:$0xff]
      %v6930 = vld [vmem:[%s6494 + $0x138] sm:$0xff]
      %v6931 = vld [vmem:[%s6494 + $0x140] sm:$0xff]
      %v6932 = vld [vmem:[%s6494 + $0x150] sm:$0xff]
      %v6933 = vld [vmem:[%s6494 + $0x158] sm:$0xff]
      %v6934 = vld [vmem:[%s6494 + $0x168] sm:$0xff]
      %v6935 = vld [vmem:[%s6494 + $0x170] sm:$0xff]
      %v6936 = vld [vmem:[%s6494 + $0x180] sm:$0xff]
      %v6937 = vld [vmem:[%s6494 + $0x188] sm:$0xff]
      %6972 = vrot.lane.b32.xlu0 %v6904, 64
      %v6973 = vpop.permute.xlu0 %6972
      %6974 = vrot.lane.b32.xlu0 %v6905, 64
      %v6975 = vpop.permute.xlu0 %6974
      %6976 = vrot.lane.b32.xlu0 %v6906, 64
      %v6977 = vpop.permute.xlu0 %6976
      %6978 = vrot.lane.b32.xlu0 %v6907, 64
      %v6979 = vpop.permute.xlu0 %6978
      %6980 = vrot.lane.b32.xlu0 %v6908, 64
      %v6981 = vpop.permute.xlu0 %6980
      %6982 = vrot.lane.b32.xlu0 %v6909, 64
      %v6983 = vpop.permute.xlu0 %6982
      %6984 = vrot.lane.b32.xlu0 %v6910, 64
      %v6985 = vpop.permute.xlu0 %6984
      %6986 = vrot.lane.b32.xlu0 %v6911, 64
      %v6987 = vpop.permute.xlu0 %6986
      %6988 = vrot.lane.b32.xlu0 %v6912, 64
      %v6989 = vpop.permute.xlu0 %6988
      %6990 = vrot.lane.b32.xlu0 %v6913, 64
      %v6991 = vpop.permute.xlu0 %6990
      %6992 = vrot.lane.b32.xlu0 %v6914, 64
      %v6993 = vpop.permute.xlu0 %6992
      %6994 = vrot.lane.b32.xlu0 %v6915, 64
      %v6995 = vpop.permute.xlu0 %6994
      %6996 = vrot.lane.b32.xlu0 %v6916, 64
      %v6997 = vpop.permute.xlu0 %6996
      %6998 = vrot.lane.b32.xlu0 %v6917, 64
      %v6999 = vpop.permute.xlu0 %6998
      %7000 = vrot.lane.b32.xlu0 %v6918, 64
      %v7001 = vpop.permute.xlu0 %7000
      %7002 = vrot.lane.b32.xlu0 %v6919, 64
      %v7003 = vpop.permute.xlu0 %7002
      %7004 = vrot.lane.b32.xlu0 %v6920, 64
      %v7005 = vpop.permute.xlu0 %7004
      %7006 = vrot.lane.b32.xlu0 %v6921, 64
      %v7007 = vpop.permute.xlu0 %7006
      %7008 = vrot.lane.b32.xlu0 %v6922, 64
      %v7009 = vpop.permute.xlu0 %7008
      %7010 = vrot.lane.b32.xlu0 %v6923, 64
      %v7011 = vpop.permute.xlu0 %7010
      %7012 = vrot.lane.b32.xlu0 %v6924, 64
      %v7013 = vpop.permute.xlu0 %7012
      %7014 = vrot.lane.b32.xlu0 %v6925, 64
      %v7015 = vpop.permute.xlu0 %7014
      %7016 = vrot.lane.b32.xlu0 %v6926, 64
      %v7017 = vpop.permute.xlu0 %7016
      %7018 = vrot.lane.b32.xlu0 %v6927, 64
      %v7019 = vpop.permute.xlu0 %7018
      %7020 = vrot.lane.b32.xlu0 %v6928, 64
      %v7021 = vpop.permute.xlu0 %7020
      %7022 = vrot.lane.b32.xlu0 %v6929, 64
      %v7023 = vpop.permute.xlu0 %7022
      %7024 = vrot.lane.b32.xlu0 %v6930, 64
      %v7025 = vpop.permute.xlu0 %7024
      %7026 = vrot.lane.b32.xlu0 %v6931, 64
      %v7027 = vpop.permute.xlu0 %7026
      %7028 = vrot.lane.b32.xlu0 %v6932, 64
      %v7029 = vpop.permute.xlu0 %7028
      %7030 = vrot.lane.b32.xlu0 %v6933, 64
      %v7031 = vpop.permute.xlu0 %7030
      %7032 = vrot.lane.b32.xlu0 %v6934, 64
      %v7033 = vpop.permute.xlu0 %7032
      %7034 = vrot.lane.b32.xlu0 %v6935, 64
      %v7035 = vpop.permute.xlu0 %7034
      %7036 = vrot.lane.b32.xlu0 %v6936, 64
      %v7037 = vpop.permute.xlu0 %7036
      %7038 = vrot.lane.b32.xlu0 %v6937, 64
      %v7039 = vpop.permute.xlu0 %7038
      %7074 = vst.msk [vmem:[#allocation5 + $0x8] sm:$0xff] %vm959, %v6973
      %7075 = vst.msk [vmem:[#allocation5 + $0x30] sm:$0xff] %vm959, %v6975
      %7076 = vst.msk [vmem:[#allocation5 + $0x58] sm:$0xff] %vm959, %v6977
      %7077 = vst.msk [vmem:[#allocation5 + $0x80] sm:$0xff] %vm959, %v6979
      %7078 = vst.msk [vmem:[#allocation5 + $0xa8] sm:$0xff] %vm959, %v6981
      %7079 = vst.msk [vmem:[#allocation5 + $0xd0] sm:$0xff] %vm959, %v6983
      %7080 = vst.msk [vmem:[#allocation5 + $0xf8] sm:$0xff] %vm959, %v6985
      %7081 = vst.msk [vmem:[#allocation5 + $0x120] sm:$0xff] %vm959, %v6987
      %7082 = vst.msk [vmem:[#allocation5 + $0x148] sm:$0xff] %vm959, %v6989
      %7083 = vst.msk [vmem:[#allocation5 + $0x170] sm:$0xff] %vm959, %v6991
      %7084 = vst.msk [vmem:[#allocation5 + $0x198] sm:$0xff] %vm959, %v6993
      %7085 = vst.msk [vmem:[#allocation5 + $0x1c0] sm:$0xff] %vm959, %v6995
      %7086 = vst.msk [vmem:[#allocation5 + $0x1e8] sm:$0xff] %vm959, %v6997
      %7087 = vst.msk [vmem:[#allocation5 + $0x210] sm:$0xff] %vm959, %v6999
      %7088 = vst.msk [vmem:[#allocation5 + $0x238] sm:$0xff] %vm959, %v7001
      %7089 = vst.msk [vmem:[#allocation5 + $0x260] sm:$0xff] %vm959, %v7003
      %7090 = vst.msk [vmem:[#allocation5 + $0x288] sm:$0xff] %vm959, %v7005
      %7091 = vst.msk [vmem:[#allocation5 + $0x2b0] sm:$0xff] %vm959, %v7007
      %7092 = vst.msk [vmem:[#allocation5 + $0x2d8] sm:$0xff] %vm959, %v7009
      %7093 = vst.msk [vmem:[#allocation5 + $0x300] sm:$0xff] %vm959, %v7011
      %7094 = vst.msk [vmem:[#allocation5 + $0x328] sm:$0xff] %vm959, %v7013
      %7095 = vst.msk [vmem:[#allocation5 + $0x350] sm:$0xff] %vm959, %v7015
      %7096 = vst.msk [vmem:[#allocation5 + $0x378] sm:$0xff] %vm959, %v7017
      %7097 = vst.msk [vmem:[#allocation5 + $0x3a0] sm:$0xff] %vm959, %v7019
      %7098 = vst.msk [vmem:[#allocation5 + $0x3c8] sm:$0xff] %vm959, %v7021
      %7099 = vst.msk [vmem:[#allocation5 + $0x3f0] sm:$0xff] %vm959, %v7023
      %7100 = vst.msk [vmem:[#allocation5 + $0x418] sm:$0xff] %vm959, %v7025
      %7101 = vst.msk [vmem:[#allocation5 + $0x440] sm:$0xff] %vm959, %v7027
      %7102 = vst.msk [vmem:[#allocation5 + $0x468] sm:$0xff] %vm959, %v7029
      %7103 = vst.msk [vmem:[#allocation5 + $0x490] sm:$0xff] %vm959, %v7031
      %7104 = vst.msk [vmem:[#allocation5 + $0x4b8] sm:$0xff] %vm959, %v7033
      %7105 = vst.msk [vmem:[#allocation5 + $0x4e0] sm:$0xff] %vm959, %v7035
      %7106 = vst.msk [vmem:[#allocation5 + $0x508] sm:$0xff] %vm959, %v7037
      %7107 = vst.msk [vmem:[#allocation5 + $0x530] sm:$0xff] %vm959, %v7039
      %v7108 = vld [vmem:[%s6494 + $0x1] sm:$0xff]
      %v7109 = vld [vmem:[%s6494 + $0x9] sm:$0xff]
      %v7110 = vld [vmem:[%s6494 + $0x19] sm:$0xff]
      %v7111 = vld [vmem:[%s6494 + $0x21] sm:$0xff]
      %v7112 = vld [vmem:[%s6494 + $0x31] sm:$0xff]
      %v7113 = vld [vmem:[%s6494 + $0x39] sm:$0xff]
      %v7114 = vld [vmem:[%s6494 + $0x49] sm:$0xff]
      %v7115 = vld [vmem:[%s6494 + $0x51] sm:$0xff]
      %v7116 = vld [vmem:[%s6494 + $0x61] sm:$0xff]
      %v7117 = vld [vmem:[%s6494 + $0x69] sm:$0xff]
      %v7118 = vld [vmem:[%s6494 + $0x79] sm:$0xff]
      %v7119 = vld [vmem:[%s6494 + $0x81] sm:$0xff]
      %v7120 = vld [vmem:[%s6494 + $0x91] sm:$0xff]
      %v7121 = vld [vmem:[%s6494 + $0x99] sm:$0xff]
      %v7122 = vld [vmem:[%s6494 + $0xa9] sm:$0xff]
      %v7123 = vld [vmem:[%s6494 + $0xb1] sm:$0xff]
      %v7124 = vld [vmem:[%s6494 + $0xc1] sm:$0xff]
      %v7125 = vld [vmem:[%s6494 + $0xc9] sm:$0xff]
      %v7126 = vld [vmem:[%s6494 + $0xd9] sm:$0xff]
      %v7127 = vld [vmem:[%s6494 + $0xe1] sm:$0xff]
      %v7128 = vld [vmem:[%s6494 + $0xf1] sm:$0xff]
      %v7129 = vld [vmem:[%s6494 + $0xf9] sm:$0xff]
      %v7130 = vld [vmem:[%s6494 + $0x109] sm:$0xff]
      %v7131 = vld [vmem:[%s6494 + $0x111] sm:$0xff]
      %v7132 = vld [vmem:[%s6494 + $0x121] sm:$0xff]
      %v7133 = vld [vmem:[%s6494 + $0x129] sm:$0xff]
      %v7134 = vld [vmem:[%s6494 + $0x139] sm:$0xff]
      %v7135 = vld [vmem:[%s6494 + $0x141] sm:$0xff]
      %v7136 = vld [vmem:[%s6494 + $0x151] sm:$0xff]
      %v7137 = vld [vmem:[%s6494 + $0x159] sm:$0xff]
      %v7138 = vld [vmem:[%s6494 + $0x169] sm:$0xff]
      %v7139 = vld [vmem:[%s6494 + $0x171] sm:$0xff]
      %v7140 = vld [vmem:[%s6494 + $0x181] sm:$0xff]
      %v7141 = vld [vmem:[%s6494 + $0x189] sm:$0xff]
      %7142 = vst.msk [vmem:[#allocation5 + $0x10] sm:$0xff] %vm292, %v7108
      %7143 = vst.msk [vmem:[#allocation5 + $0x38] sm:$0xff] %vm292, %v7109
      %7144 = vst.msk [vmem:[#allocation5 + $0x60] sm:$0xff] %vm292, %v7110
      %7145 = vst.msk [vmem:[#allocation5 + $0x88] sm:$0xff] %vm292, %v7111
      %7146 = vst.msk [vmem:[#allocation5 + $0xb0] sm:$0xff] %vm292, %v7112
      %7147 = vst.msk [vmem:[#allocation5 + $0xd8] sm:$0xff] %vm292, %v7113
      %7148 = vst.msk [vmem:[#allocation5 + $0x100] sm:$0xff] %vm292, %v7114
      %7149 = vst.msk [vmem:[#allocation5 + $0x128] sm:$0xff] %vm292, %v7115
      %7150 = vst.msk [vmem:[#allocation5 + $0x150] sm:$0xff] %vm292, %v7116
      %7151 = vst.msk [vmem:[#allocation5 + $0x178] sm:$0xff] %vm292, %v7117
      %7152 = vst.msk [vmem:[#allocation5 + $0x1a0] sm:$0xff] %vm292, %v7118
      %7153 = vst.msk [vmem:[#allocation5 + $0x1c8] sm:$0xff] %vm292, %v7119
      %7154 = vst.msk [vmem:[#allocation5 + $0x1f0] sm:$0xff] %vm292, %v7120
      %7155 = vst.msk [vmem:[#allocation5 + $0x218] sm:$0xff] %vm292, %v7121
      %7156 = vst.msk [vmem:[#allocation5 + $0x240] sm:$0xff] %vm292, %v7122
      %7157 = vst.msk [vmem:[#allocation5 + $0x268] sm:$0xff] %vm292, %v7123
      %7158 = vst.msk [vmem:[#allocation5 + $0x290] sm:$0xff] %vm292, %v7124
      %7159 = vst.msk [vmem:[#allocation5 + $0x2b8] sm:$0xff] %vm292, %v7125
      %7160 = vst.msk [vmem:[#allocation5 + $0x2e0] sm:$0xff] %vm292, %v7126
      %7161 = vst.msk [vmem:[#allocation5 + $0x308] sm:$0xff] %vm292, %v7127
      %7162 = vst.msk [vmem:[#allocation5 + $0x330] sm:$0xff] %vm292, %v7128
      %7163 = vst.msk [vmem:[#allocation5 + $0x358] sm:$0xff] %vm292, %v7129
      %7164 = vst.msk [vmem:[#allocation5 + $0x380] sm:$0xff] %vm292, %v7130
      %7165 = vst.msk [vmem:[#allocation5 + $0x3a8] sm:$0xff] %vm292, %v7131
      %7166 = vst.msk [vmem:[#allocation5 + $0x3d0] sm:$0xff] %vm292, %v7132
      %7167 = vst.msk [vmem:[#allocation5 + $0x3f8] sm:$0xff] %vm292, %v7133
      %7168 = vst.msk [vmem:[#allocation5 + $0x420] sm:$0xff] %vm292, %v7134
      %7169 = vst.msk [vmem:[#allocation5 + $0x448] sm:$0xff] %vm292, %v7135
      %7170 = vst.msk [vmem:[#allocation5 + $0x470] sm:$0xff] %vm292, %v7136
      %7171 = vst.msk [vmem:[#allocation5 + $0x498] sm:$0xff] %vm292, %v7137
      %7172 = vst.msk [vmem:[#allocation5 + $0x4c0] sm:$0xff] %vm292, %v7138
      %7173 = vst.msk [vmem:[#allocation5 + $0x4e8] sm:$0xff] %vm292, %v7139
      %7174 = vst.msk [vmem:[#allocation5 + $0x510] sm:$0xff] %vm292, %v7140
      %7175 = vst.msk [vmem:[#allocation5 + $0x538] sm:$0xff] %vm292, %v7141
      %v7176 = vld [vmem:[%s6494 + $0x2] sm:$0xff]
      %v7177 = vld [vmem:[%s6494 + $0xa] sm:$0xff]
      %v7178 = vld [vmem:[%s6494 + $0x1a] sm:$0xff]
      %v7179 = vld [vmem:[%s6494 + $0x22] sm:$0xff]
      %v7180 = vld [vmem:[%s6494 + $0x32] sm:$0xff]
      %v7181 = vld [vmem:[%s6494 + $0x3a] sm:$0xff]
      %v7182 = vld [vmem:[%s6494 + $0x4a] sm:$0xff]
      %v7183 = vld [vmem:[%s6494 + $0x52] sm:$0xff]
      %v7184 = vld [vmem:[%s6494 + $0x62] sm:$0xff]
      %v7185 = vld [vmem:[%s6494 + $0x6a] sm:$0xff]
      %v7186 = vld [vmem:[%s6494 + $0x7a] sm:$0xff]
      %v7187 = vld [vmem:[%s6494 + $0x82] sm:$0xff]
      %v7188 = vld [vmem:[%s6494 + $0x92] sm:$0xff]
      %v7189 = vld [vmem:[%s6494 + $0x9a] sm:$0xff]
      %v7190 = vld [vmem:[%s6494 + $0xaa] sm:$0xff]
      %v7191 = vld [vmem:[%s6494 + $0xb2] sm:$0xff]
      %v7192 = vld [vmem:[%s6494 + $0xc2] sm:$0xff]
      %v7193 = vld [vmem:[%s6494 + $0xca] sm:$0xff]
      %v7194 = vld [vmem:[%s6494 + $0xda] sm:$0xff]
      %v7195 = vld [vmem:[%s6494 + $0xe2] sm:$0xff]
      %v7196 = vld [vmem:[%s6494 + $0xf2] sm:$0xff]
      %v7197 = vld [vmem:[%s6494 + $0xfa] sm:$0xff]
      %v7198 = vld [vmem:[%s6494 + $0x10a] sm:$0xff]
      %v7199 = vld [vmem:[%s6494 + $0x112] sm:$0xff]
      %v7200 = vld [vmem:[%s6494 + $0x122] sm:$0xff]
      %v7201 = vld [vmem:[%s6494 + $0x12a] sm:$0xff]
      %v7202 = vld [vmem:[%s6494 + $0x13a] sm:$0xff]
      %v7203 = vld [vmem:[%s6494 + $0x142] sm:$0xff]
      %v7204 = vld [vmem:[%s6494 + $0x152] sm:$0xff]
      %v7205 = vld [vmem:[%s6494 + $0x15a] sm:$0xff]
      %v7206 = vld [vmem:[%s6494 + $0x16a] sm:$0xff]
      %v7207 = vld [vmem:[%s6494 + $0x172] sm:$0xff]
      %v7208 = vld [vmem:[%s6494 + $0x182] sm:$0xff]
      %v7209 = vld [vmem:[%s6494 + $0x18a] sm:$0xff]
      %7244 = vrot.lane.b32.xlu0 %v7176, 64
      %v7245 = vpop.permute.xlu0 %7244
      %7246 = vrot.lane.b32.xlu0 %v7177, 64
      %v7247 = vpop.permute.xlu0 %7246
      %7248 = vrot.lane.b32.xlu0 %v7178, 64
      %v7249 = vpop.permute.xlu0 %7248
      %7250 = vrot.lane.b32.xlu0 %v7179, 64
      %v7251 = vpop.permute.xlu0 %7250
      %7252 = vrot.lane.b32.xlu0 %v7180, 64
      %v7253 = vpop.permute.xlu0 %7252
      %7254 = vrot.lane.b32.xlu0 %v7181, 64
      %v7255 = vpop.permute.xlu0 %7254
      %7256 = vrot.lane.b32.xlu0 %v7182, 64
      %v7257 = vpop.permute.xlu0 %7256
      %7258 = vrot.lane.b32.xlu0 %v7183, 64
      %v7259 = vpop.permute.xlu0 %7258
      %7260 = vrot.lane.b32.xlu0 %v7184, 64
      %v7261 = vpop.permute.xlu0 %7260
      %7262 = vrot.lane.b32.xlu0 %v7185, 64
      %v7263 = vpop.permute.xlu0 %7262
      %7264 = vrot.lane.b32.xlu0 %v7186, 64
      %v7265 = vpop.permute.xlu0 %7264
      %7266 = vrot.lane.b32.xlu0 %v7187, 64
      %v7267 = vpop.permute.xlu0 %7266
      %7268 = vrot.lane.b32.xlu0 %v7188, 64
      %v7269 = vpop.permute.xlu0 %7268
      %7270 = vrot.lane.b32.xlu0 %v7189, 64
      %v7271 = vpop.permute.xlu0 %7270
      %7272 = vrot.lane.b32.xlu0 %v7190, 64
      %v7273 = vpop.permute.xlu0 %7272
      %7274 = vrot.lane.b32.xlu0 %v7191, 64
      %v7275 = vpop.permute.xlu0 %7274
      %7276 = vrot.lane.b32.xlu0 %v7192, 64
      %v7277 = vpop.permute.xlu0 %7276
      %7278 = vrot.lane.b32.xlu0 %v7193, 64
      %v7279 = vpop.permute.xlu0 %7278
      %7280 = vrot.lane.b32.xlu0 %v7194, 64
      %v7281 = vpop.permute.xlu0 %7280
      %7282 = vrot.lane.b32.xlu0 %v7195, 64
      %v7283 = vpop.permute.xlu0 %7282
      %7284 = vrot.lane.b32.xlu0 %v7196, 64
      %v7285 = vpop.permute.xlu0 %7284
      %7286 = vrot.lane.b32.xlu0 %v7197, 64
      %v7287 = vpop.permute.xlu0 %7286
      %7288 = vrot.lane.b32.xlu0 %v7198, 64
      %v7289 = vpop.permute.xlu0 %7288
      %7290 = vrot.lane.b32.xlu0 %v7199, 64
      %v7291 = vpop.permute.xlu0 %7290
      %7292 = vrot.lane.b32.xlu0 %v7200, 64
      %v7293 = vpop.permute.xlu0 %7292
      %7294 = vrot.lane.b32.xlu0 %v7201, 64
      %v7295 = vpop.permute.xlu0 %7294
      %7296 = vrot.lane.b32.xlu0 %v7202, 64
      %v7297 = vpop.permute.xlu0 %7296
      %7298 = vrot.lane.b32.xlu0 %v7203, 64
      %v7299 = vpop.permute.xlu0 %7298
      %7300 = vrot.lane.b32.xlu0 %v7204, 64
      %v7301 = vpop.permute.xlu0 %7300
      %7302 = vrot.lane.b32.xlu0 %v7205, 64
      %v7303 = vpop.permute.xlu0 %7302
      %7304 = vrot.lane.b32.xlu0 %v7206, 64
      %v7305 = vpop.permute.xlu0 %7304
      %7306 = vrot.lane.b32.xlu0 %v7207, 64
      %v7307 = vpop.permute.xlu0 %7306
      %7308 = vrot.lane.b32.xlu0 %v7208, 64
      %v7309 = vpop.permute.xlu0 %7308
      %7310 = vrot.lane.b32.xlu0 %v7209, 64
      %v7311 = vpop.permute.xlu0 %7310
      %7346 = vst.msk [vmem:[#allocation5 + $0x10] sm:$0xff] %vm959, %v7245
      %7347 = vst.msk [vmem:[#allocation5 + $0x38] sm:$0xff] %vm959, %v7247
      %7348 = vst.msk [vmem:[#allocation5 + $0x60] sm:$0xff] %vm959, %v7249
      %7349 = vst.msk [vmem:[#allocation5 + $0x88] sm:$0xff] %vm959, %v7251
      %7350 = vst.msk [vmem:[#allocation5 + $0xb0] sm:$0xff] %vm959, %v7253
      %7351 = vst.msk [vmem:[#allocation5 + $0xd8] sm:$0xff] %vm959, %v7255
      %7352 = vst.msk [vmem:[#allocation5 + $0x100] sm:$0xff] %vm959, %v7257
      %7353 = vst.msk [vmem:[#allocation5 + $0x128] sm:$0xff] %vm959, %v7259
      %7354 = vst.msk [vmem:[#allocation5 + $0x150] sm:$0xff] %vm959, %v7261
      %7355 = vst.msk [vmem:[#allocation5 + $0x178] sm:$0xff] %vm959, %v7263
      %7356 = vst.msk [vmem:[#allocation5 + $0x1a0] sm:$0xff] %vm959, %v7265
      %7357 = vst.msk [vmem:[#allocation5 + $0x1c8] sm:$0xff] %vm959, %v7267
      %7358 = vst.msk [vmem:[#allocation5 + $0x1f0] sm:$0xff] %vm959, %v7269
      %7359 = vst.msk [vmem:[#allocation5 + $0x218] sm:$0xff] %vm959, %v7271
      %7360 = vst.msk [vmem:[#allocation5 + $0x240] sm:$0xff] %vm959, %v7273
      %7361 = vst.msk [vmem:[#allocation5 + $0x268] sm:$0xff] %vm959, %v7275
      %7362 = vst.msk [vmem:[#allocation5 + $0x290] sm:$0xff] %vm959, %v7277
      %7363 = vst.msk [vmem:[#allocation5 + $0x2b8] sm:$0xff] %vm959, %v7279
      %7364 = vst.msk [vmem:[#allocation5 + $0x2e0] sm:$0xff] %vm959, %v7281
      %7365 = vst.msk [vmem:[#allocation5 + $0x308] sm:$0xff] %vm959, %v7283
      %7366 = vst.msk [vmem:[#allocation5 + $0x330] sm:$0xff] %vm959, %v7285
      %7367 = vst.msk [vmem:[#allocation5 + $0x358] sm:$0xff] %vm959, %v7287
      %7368 = vst.msk [vmem:[#allocation5 + $0x380] sm:$0xff] %vm959, %v7289
      %7369 = vst.msk [vmem:[#allocation5 + $0x3a8] sm:$0xff] %vm959, %v7291
      %7370 = vst.msk [vmem:[#allocation5 + $0x3d0] sm:$0xff] %vm959, %v7293
      %7371 = vst.msk [vmem:[#allocation5 + $0x3f8] sm:$0xff] %vm959, %v7295
      %7372 = vst.msk [vmem:[#allocation5 + $0x420] sm:$0xff] %vm959, %v7297
      %7373 = vst.msk [vmem:[#allocation5 + $0x448] sm:$0xff] %vm959, %v7299
      %7374 = vst.msk [vmem:[#allocation5 + $0x470] sm:$0xff] %vm959, %v7301
      %7375 = vst.msk [vmem:[#allocation5 + $0x498] sm:$0xff] %vm959, %v7303
      %7376 = vst.msk [vmem:[#allocation5 + $0x4c0] sm:$0xff] %vm959, %v7305
      %7377 = vst.msk [vmem:[#allocation5 + $0x4e8] sm:$0xff] %vm959, %v7307
      %7378 = vst.msk [vmem:[#allocation5 + $0x510] sm:$0xff] %vm959, %v7309
      %7379 = vst.msk [vmem:[#allocation5 + $0x538] sm:$0xff] %vm959, %v7311
      %s7380 = scalar_lea.vmem [#allocation3], 48
      %v7381 = vld [vmem:[%s7380] sm:$0xff]
      %v7382 = vld [vmem:[%s7380 + $0x8] sm:$0xff]
      %v7383 = vld [vmem:[%s7380 + $0x18] sm:$0xff]
      %v7384 = vld [vmem:[%s7380 + $0x20] sm:$0xff]
      %v7385 = vld [vmem:[%s7380 + $0x30] sm:$0xff]
      %v7386 = vld [vmem:[%s7380 + $0x38] sm:$0xff]
      %v7387 = vld [vmem:[%s7380 + $0x48] sm:$0xff]
      %v7388 = vld [vmem:[%s7380 + $0x50] sm:$0xff]
      %v7389 = vld [vmem:[%s7380 + $0x60] sm:$0xff]
      %v7390 = vld [vmem:[%s7380 + $0x68] sm:$0xff]
      %v7391 = vld [vmem:[%s7380 + $0x78] sm:$0xff]
      %v7392 = vld [vmem:[%s7380 + $0x80] sm:$0xff]
      %v7393 = vld [vmem:[%s7380 + $0x90] sm:$0xff]
      %v7394 = vld [vmem:[%s7380 + $0x98] sm:$0xff]
      %v7395 = vld [vmem:[%s7380 + $0xa8] sm:$0xff]
      %v7396 = vld [vmem:[%s7380 + $0xb0] sm:$0xff]
      %v7397 = vld [vmem:[%s7380 + $0xc0] sm:$0xff]
      %v7398 = vld [vmem:[%s7380 + $0xc8] sm:$0xff]
      %v7399 = vld [vmem:[%s7380 + $0xd8] sm:$0xff]
      %v7400 = vld [vmem:[%s7380 + $0xe0] sm:$0xff]
      %v7401 = vld [vmem:[%s7380 + $0xf0] sm:$0xff]
      %v7402 = vld [vmem:[%s7380 + $0xf8] sm:$0xff]
      %v7403 = vld [vmem:[%s7380 + $0x108] sm:$0xff]
      %v7404 = vld [vmem:[%s7380 + $0x110] sm:$0xff]
      %v7405 = vld [vmem:[%s7380 + $0x120] sm:$0xff]
      %v7406 = vld [vmem:[%s7380 + $0x128] sm:$0xff]
      %v7407 = vld [vmem:[%s7380 + $0x138] sm:$0xff]
      %v7408 = vld [vmem:[%s7380 + $0x140] sm:$0xff]
      %v7409 = vld [vmem:[%s7380 + $0x150] sm:$0xff]
      %v7410 = vld [vmem:[%s7380 + $0x158] sm:$0xff]
      %v7411 = vld [vmem:[%s7380 + $0x168] sm:$0xff]
      %v7412 = vld [vmem:[%s7380 + $0x170] sm:$0xff]
      %v7413 = vld [vmem:[%s7380 + $0x180] sm:$0xff]
      %v7414 = vld [vmem:[%s7380 + $0x188] sm:$0xff]
      %7415 = vst.msk [vmem:[#allocation5 + $0x18] sm:$0xff] %vm292, %v7381
      %7416 = vst.msk [vmem:[#allocation5 + $0x40] sm:$0xff] %vm292, %v7382
      %7417 = vst.msk [vmem:[#allocation5 + $0x68] sm:$0xff] %vm292, %v7383
      %7418 = vst.msk [vmem:[#allocation5 + $0x90] sm:$0xff] %vm292, %v7384
      %7419 = vst.msk [vmem:[#allocation5 + $0xb8] sm:$0xff] %vm292, %v7385
      %7420 = vst.msk [vmem:[#allocation5 + $0xe0] sm:$0xff] %vm292, %v7386
      %7421 = vst.msk [vmem:[#allocation5 + $0x108] sm:$0xff] %vm292, %v7387
      %7422 = vst.msk [vmem:[#allocation5 + $0x130] sm:$0xff] %vm292, %v7388
      %7423 = vst.msk [vmem:[#allocation5 + $0x158] sm:$0xff] %vm292, %v7389
      %7424 = vst.msk [vmem:[#allocation5 + $0x180] sm:$0xff] %vm292, %v7390
      %7425 = vst.msk [vmem:[#allocation5 + $0x1a8] sm:$0xff] %vm292, %v7391
      %7426 = vst.msk [vmem:[#allocation5 + $0x1d0] sm:$0xff] %vm292, %v7392
      %7427 = vst.msk [vmem:[#allocation5 + $0x1f8] sm:$0xff] %vm292, %v7393
      %7428 = vst.msk [vmem:[#allocation5 + $0x220] sm:$0xff] %vm292, %v7394
      %7429 = vst.msk [vmem:[#allocation5 + $0x248] sm:$0xff] %vm292, %v7395
      %7430 = vst.msk [vmem:[#allocation5 + $0x270] sm:$0xff] %vm292, %v7396
      %7431 = vst.msk [vmem:[#allocation5 + $0x298] sm:$0xff] %vm292, %v7397
      %7432 = vst.msk [vmem:[#allocation5 + $0x2c0] sm:$0xff] %vm292, %v7398
      %7433 = vst.msk [vmem:[#allocation5 + $0x2e8] sm:$0xff] %vm292, %v7399
      %7434 = vst.msk [vmem:[#allocation5 + $0x310] sm:$0xff] %vm292, %v7400
      %7435 = vst.msk [vmem:[#allocation5 + $0x338] sm:$0xff] %vm292, %v7401
      %7436 = vst.msk [vmem:[#allocation5 + $0x360] sm:$0xff] %vm292, %v7402
      %7437 = vst.msk [vmem:[#allocation5 + $0x388] sm:$0xff] %vm292, %v7403
      %7438 = vst.msk [vmem:[#allocation5 + $0x3b0] sm:$0xff] %vm292, %v7404
      %7439 = vst.msk [vmem:[#allocation5 + $0x3d8] sm:$0xff] %vm292, %v7405
      %7440 = vst.msk [vmem:[#allocation5 + $0x400] sm:$0xff] %vm292, %v7406
      %7441 = vst.msk [vmem:[#allocation5 + $0x428] sm:$0xff] %vm292, %v7407
      %7442 = vst.msk [vmem:[#allocation5 + $0x450] sm:$0xff] %vm292, %v7408
      %7443 = vst.msk [vmem:[#allocation5 + $0x478] sm:$0xff] %vm292, %v7409
      %7444 = vst.msk [vmem:[#allocation5 + $0x4a0] sm:$0xff] %vm292, %v7410
      %7445 = vst.msk [vmem:[#allocation5 + $0x4c8] sm:$0xff] %vm292, %v7411
      %7446 = vst.msk [vmem:[#allocation5 + $0x4f0] sm:$0xff] %vm292, %v7412
      %7447 = vst.msk [vmem:[#allocation5 + $0x518] sm:$0xff] %vm292, %v7413
      %7448 = vst.msk [vmem:[#allocation5 + $0x540] sm:$0xff] %vm292, %v7414
      %v7449 = vld [vmem:[%s7380 + $0x1] sm:$0xff]
      %v7450 = vld [vmem:[%s7380 + $0x9] sm:$0xff]
      %v7451 = vld [vmem:[%s7380 + $0x19] sm:$0xff]
      %v7452 = vld [vmem:[%s7380 + $0x21] sm:$0xff]
      %v7453 = vld [vmem:[%s7380 + $0x31] sm:$0xff]
      %v7454 = vld [vmem:[%s7380 + $0x39] sm:$0xff]
      %v7455 = vld [vmem:[%s7380 + $0x49] sm:$0xff]
      %v7456 = vld [vmem:[%s7380 + $0x51] sm:$0xff]
      %v7457 = vld [vmem:[%s7380 + $0x61] sm:$0xff]
      %v7458 = vld [vmem:[%s7380 + $0x69] sm:$0xff]
      %v7459 = vld [vmem:[%s7380 + $0x79] sm:$0xff]
      %v7460 = vld [vmem:[%s7380 + $0x81] sm:$0xff]
      %v7461 = vld [vmem:[%s7380 + $0x91] sm:$0xff]
      %v7462 = vld [vmem:[%s7380 + $0x99] sm:$0xff]
      %v7463 = vld [vmem:[%s7380 + $0xa9] sm:$0xff]
      %v7464 = vld [vmem:[%s7380 + $0xb1] sm:$0xff]
      %v7465 = vld [vmem:[%s7380 + $0xc1] sm:$0xff]
      %v7466 = vld [vmem:[%s7380 + $0xc9] sm:$0xff]
      %v7467 = vld [vmem:[%s7380 + $0xd9] sm:$0xff]
      %v7468 = vld [vmem:[%s7380 + $0xe1] sm:$0xff]
      %v7469 = vld [vmem:[%s7380 + $0xf1] sm:$0xff]
      %v7470 = vld [vmem:[%s7380 + $0xf9] sm:$0xff]
      %v7471 = vld [vmem:[%s7380 + $0x109] sm:$0xff]
      %v7472 = vld [vmem:[%s7380 + $0x111] sm:$0xff]
      %v7473 = vld [vmem:[%s7380 + $0x121] sm:$0xff]
      %v7474 = vld [vmem:[%s7380 + $0x129] sm:$0xff]
      %v7475 = vld [vmem:[%s7380 + $0x139] sm:$0xff]
      %v7476 = vld [vmem:[%s7380 + $0x141] sm:$0xff]
      %v7477 = vld [vmem:[%s7380 + $0x151] sm:$0xff]
      %v7478 = vld [vmem:[%s7380 + $0x159] sm:$0xff]
      %v7479 = vld [vmem:[%s7380 + $0x169] sm:$0xff]
      %v7480 = vld [vmem:[%s7380 + $0x171] sm:$0xff]
      %v7481 = vld [vmem:[%s7380 + $0x181] sm:$0xff]
      %v7482 = vld [vmem:[%s7380 + $0x189] sm:$0xff]
      %7517 = vrot.lane.b32.xlu0 %v7449, 64
      %v7518 = vpop.permute.xlu0 %7517
      %7519 = vrot.lane.b32.xlu0 %v7450, 64
      %v7520 = vpop.permute.xlu0 %7519
      %7521 = vrot.lane.b32.xlu0 %v7451, 64
      %v7522 = vpop.permute.xlu0 %7521
      %7523 = vrot.lane.b32.xlu0 %v7452, 64
      %v7524 = vpop.permute.xlu0 %7523
      %7525 = vrot.lane.b32.xlu0 %v7453, 64
      %v7526 = vpop.permute.xlu0 %7525
      %7527 = vrot.lane.b32.xlu0 %v7454, 64
      %v7528 = vpop.permute.xlu0 %7527
      %7529 = vrot.lane.b32.xlu0 %v7455, 64
      %v7530 = vpop.permute.xlu0 %7529
      %7531 = vrot.lane.b32.xlu0 %v7456, 64
      %v7532 = vpop.permute.xlu0 %7531
      %7533 = vrot.lane.b32.xlu0 %v7457, 64
      %v7534 = vpop.permute.xlu0 %7533
      %7535 = vrot.lane.b32.xlu0 %v7458, 64
      %v7536 = vpop.permute.xlu0 %7535
      %7537 = vrot.lane.b32.xlu0 %v7459, 64
      %v7538 = vpop.permute.xlu0 %7537
      %7539 = vrot.lane.b32.xlu0 %v7460, 64
      %v7540 = vpop.permute.xlu0 %7539
      %7541 = vrot.lane.b32.xlu0 %v7461, 64
      %v7542 = vpop.permute.xlu0 %7541
      %7543 = vrot.lane.b32.xlu0 %v7462, 64
      %v7544 = vpop.permute.xlu0 %7543
      %7545 = vrot.lane.b32.xlu0 %v7463, 64
      %v7546 = vpop.permute.xlu0 %7545
      %7547 = vrot.lane.b32.xlu0 %v7464, 64
      %v7548 = vpop.permute.xlu0 %7547
      %7549 = vrot.lane.b32.xlu0 %v7465, 64
      %v7550 = vpop.permute.xlu0 %7549
      %7551 = vrot.lane.b32.xlu0 %v7466, 64
      %v7552 = vpop.permute.xlu0 %7551
      %7553 = vrot.lane.b32.xlu0 %v7467, 64
      %v7554 = vpop.permute.xlu0 %7553
      %7555 = vrot.lane.b32.xlu0 %v7468, 64
      %v7556 = vpop.permute.xlu0 %7555
      %7557 = vrot.lane.b32.xlu0 %v7469, 64
      %v7558 = vpop.permute.xlu0 %7557
      %7559 = vrot.lane.b32.xlu0 %v7470, 64
      %v7560 = vpop.permute.xlu0 %7559
      %7561 = vrot.lane.b32.xlu0 %v7471, 64
      %v7562 = vpop.permute.xlu0 %7561
      %7563 = vrot.lane.b32.xlu0 %v7472, 64
      %v7564 = vpop.permute.xlu0 %7563
      %7565 = vrot.lane.b32.xlu0 %v7473, 64
      %v7566 = vpop.permute.xlu0 %7565
      %7567 = vrot.lane.b32.xlu0 %v7474, 64
      %v7568 = vpop.permute.xlu0 %7567
      %7569 = vrot.lane.b32.xlu0 %v7475, 64
      %v7570 = vpop.permute.xlu0 %7569
      %7571 = vrot.lane.b32.xlu0 %v7476, 64
      %v7572 = vpop.permute.xlu0 %7571
      %7573 = vrot.lane.b32.xlu0 %v7477, 64
      %v7574 = vpop.permute.xlu0 %7573
      %7575 = vrot.lane.b32.xlu0 %v7478, 64
      %v7576 = vpop.permute.xlu0 %7575
      %7577 = vrot.lane.b32.xlu0 %v7479, 64
      %v7578 = vpop.permute.xlu0 %7577
      %7579 = vrot.lane.b32.xlu0 %v7480, 64
      %v7580 = vpop.permute.xlu0 %7579
      %7581 = vrot.lane.b32.xlu0 %v7481, 64
      %v7582 = vpop.permute.xlu0 %7581
      %7583 = vrot.lane.b32.xlu0 %v7482, 64
      %v7584 = vpop.permute.xlu0 %7583
      %7619 = vst.msk [vmem:[#allocation5 + $0x18] sm:$0xff] %vm959, %v7518
      %7620 = vst.msk [vmem:[#allocation5 + $0x40] sm:$0xff] %vm959, %v7520
      %7621 = vst.msk [vmem:[#allocation5 + $0x68] sm:$0xff] %vm959, %v7522
      %7622 = vst.msk [vmem:[#allocation5 + $0x90] sm:$0xff] %vm959, %v7524
      %7623 = vst.msk [vmem:[#allocation5 + $0xb8] sm:$0xff] %vm959, %v7526
      %7624 = vst.msk [vmem:[#allocation5 + $0xe0] sm:$0xff] %vm959, %v7528
      %7625 = vst.msk [vmem:[#allocation5 + $0x108] sm:$0xff] %vm959, %v7530
      %7626 = vst.msk [vmem:[#allocation5 + $0x130] sm:$0xff] %vm959, %v7532
      %7627 = vst.msk [vmem:[#allocation5 + $0x158] sm:$0xff] %vm959, %v7534
      %7628 = vst.msk [vmem:[#allocation5 + $0x180] sm:$0xff] %vm959, %v7536
      %7629 = vst.msk [vmem:[#allocation5 + $0x1a8] sm:$0xff] %vm959, %v7538
      %7630 = vst.msk [vmem:[#allocation5 + $0x1d0] sm:$0xff] %vm959, %v7540
      %7631 = vst.msk [vmem:[#allocation5 + $0x1f8] sm:$0xff] %vm959, %v7542
      %7632 = vst.msk [vmem:[#allocation5 + $0x220] sm:$0xff] %vm959, %v7544
      %7633 = vst.msk [vmem:[#allocation5 + $0x248] sm:$0xff] %vm959, %v7546
      %7634 = vst.msk [vmem:[#allocation5 + $0x270] sm:$0xff] %vm959, %v7548
      %7635 = vst.msk [vmem:[#allocation5 + $0x298] sm:$0xff] %vm959, %v7550
      %7636 = vst.msk [vmem:[#allocation5 + $0x2c0] sm:$0xff] %vm959, %v7552
      %7637 = vst.msk [vmem:[#allocation5 + $0x2e8] sm:$0xff] %vm959, %v7554
      %7638 = vst.msk [vmem:[#allocation5 + $0x310] sm:$0xff] %vm959, %v7556
      %7639 = vst.msk [vmem:[#allocation5 + $0x338] sm:$0xff] %vm959, %v7558
      %7640 = vst.msk [vmem:[#allocation5 + $0x360] sm:$0xff] %vm959, %v7560
      %7641 = vst.msk [vmem:[#allocation5 + $0x388] sm:$0xff] %vm959, %v7562
      %7642 = vst.msk [vmem:[#allocation5 + $0x3b0] sm:$0xff] %vm959, %v7564
      %7643 = vst.msk [vmem:[#allocation5 + $0x3d8] sm:$0xff] %vm959, %v7566
      %7644 = vst.msk [vmem:[#allocation5 + $0x400] sm:$0xff] %vm959, %v7568
      %7645 = vst.msk [vmem:[#allocation5 + $0x428] sm:$0xff] %vm959, %v7570
      %7646 = vst.msk [vmem:[#allocation5 + $0x450] sm:$0xff] %vm959, %v7572
      %7647 = vst.msk [vmem:[#allocation5 + $0x478] sm:$0xff] %vm959, %v7574
      %7648 = vst.msk [vmem:[#allocation5 + $0x4a0] sm:$0xff] %vm959, %v7576
      %7649 = vst.msk [vmem:[#allocation5 + $0x4c8] sm:$0xff] %vm959, %v7578
      %7650 = vst.msk [vmem:[#allocation5 + $0x4f0] sm:$0xff] %vm959, %v7580
      %7651 = vst.msk [vmem:[#allocation5 + $0x518] sm:$0xff] %vm959, %v7582
      %7652 = vst.msk [vmem:[#allocation5 + $0x540] sm:$0xff] %vm959, %v7584
      %v7653 = vld [vmem:[%s7380 + $0x2] sm:$0xff]
      %v7654 = vld [vmem:[%s7380 + $0xa] sm:$0xff]
      %v7655 = vld [vmem:[%s7380 + $0x1a] sm:$0xff]
      %v7656 = vld [vmem:[%s7380 + $0x22] sm:$0xff]
      %v7657 = vld [vmem:[%s7380 + $0x32] sm:$0xff]
      %v7658 = vld [vmem:[%s7380 + $0x3a] sm:$0xff]
      %v7659 = vld [vmem:[%s7380 + $0x4a] sm:$0xff]
      %v7660 = vld [vmem:[%s7380 + $0x52] sm:$0xff]
      %v7661 = vld [vmem:[%s7380 + $0x62] sm:$0xff]
      %v7662 = vld [vmem:[%s7380 + $0x6a] sm:$0xff]
      %v7663 = vld [vmem:[%s7380 + $0x7a] sm:$0xff]
      %v7664 = vld [vmem:[%s7380 + $0x82] sm:$0xff]
      %v7665 = vld [vmem:[%s7380 + $0x92] sm:$0xff]
      %v7666 = vld [vmem:[%s7380 + $0x9a] sm:$0xff]
      %v7667 = vld [vmem:[%s7380 + $0xaa] sm:$0xff]
      %v7668 = vld [vmem:[%s7380 + $0xb2] sm:$0xff]
      %v7669 = vld [vmem:[%s7380 + $0xc2] sm:$0xff]
      %v7670 = vld [vmem:[%s7380 + $0xca] sm:$0xff]
      %v7671 = vld [vmem:[%s7380 + $0xda] sm:$0xff]
      %v7672 = vld [vmem:[%s7380 + $0xe2] sm:$0xff]
      %v7673 = vld [vmem:[%s7380 + $0xf2] sm:$0xff]
      %v7674 = vld [vmem:[%s7380 + $0xfa] sm:$0xff]
      %v7675 = vld [vmem:[%s7380 + $0x10a] sm:$0xff]
      %v7676 = vld [vmem:[%s7380 + $0x112] sm:$0xff]
      %v7677 = vld [vmem:[%s7380 + $0x122] sm:$0xff]
      %v7678 = vld [vmem:[%s7380 + $0x12a] sm:$0xff]
      %v7679 = vld [vmem:[%s7380 + $0x13a] sm:$0xff]
      %v7680 = vld [vmem:[%s7380 + $0x142] sm:$0xff]
      %v7681 = vld [vmem:[%s7380 + $0x152] sm:$0xff]
      %v7682 = vld [vmem:[%s7380 + $0x15a] sm:$0xff]
      %v7683 = vld [vmem:[%s7380 + $0x16a] sm:$0xff]
      %v7684 = vld [vmem:[%s7380 + $0x172] sm:$0xff]
      %v7685 = vld [vmem:[%s7380 + $0x182] sm:$0xff]
      %v7686 = vld [vmem:[%s7380 + $0x18a] sm:$0xff]
      %7687 = vst.msk [vmem:[#allocation5 + $0x20] sm:$0xff] %vm292, %v7653
      %7688 = vst.msk [vmem:[#allocation5 + $0x48] sm:$0xff] %vm292, %v7654
      %7689 = vst.msk [vmem:[#allocation5 + $0x70] sm:$0xff] %vm292, %v7655
      %7690 = vst.msk [vmem:[#allocation5 + $0x98] sm:$0xff] %vm292, %v7656
      %7691 = vst.msk [vmem:[#allocation5 + $0xc0] sm:$0xff] %vm292, %v7657
      %7692 = vst.msk [vmem:[#allocation5 + $0xe8] sm:$0xff] %vm292, %v7658
      %7693 = vst.msk [vmem:[#allocation5 + $0x110] sm:$0xff] %vm292, %v7659
      %7694 = vst.msk [vmem:[#allocation5 + $0x138] sm:$0xff] %vm292, %v7660
      %7695 = vst.msk [vmem:[#allocation5 + $0x160] sm:$0xff] %vm292, %v7661
      %7696 = vst.msk [vmem:[#allocation5 + $0x188] sm:$0xff] %vm292, %v7662
      %7697 = vst.msk [vmem:[#allocation5 + $0x1b0] sm:$0xff] %vm292, %v7663
      %7698 = vst.msk [vmem:[#allocation5 + $0x1d8] sm:$0xff] %vm292, %v7664
      %7699 = vst.msk [vmem:[#allocation5 + $0x200] sm:$0xff] %vm292, %v7665
      %7700 = vst.msk [vmem:[#allocation5 + $0x228] sm:$0xff] %vm292, %v7666
      %7701 = vst.msk [vmem:[#allocation5 + $0x250] sm:$0xff] %vm292, %v7667
      %7702 = vst.msk [vmem:[#allocation5 + $0x278] sm:$0xff] %vm292, %v7668
      %7703 = vst.msk [vmem:[#allocation5 + $0x2a0] sm:$0xff] %vm292, %v7669
      %7704 = vst.msk [vmem:[#allocation5 + $0x2c8] sm:$0xff] %vm292, %v7670
      %7705 = vst.msk [vmem:[#allocation5 + $0x2f0] sm:$0xff] %vm292, %v7671
      %7706 = vst.msk [vmem:[#allocation5 + $0x318] sm:$0xff] %vm292, %v7672
      %7707 = vst.msk [vmem:[#allocation5 + $0x340] sm:$0xff] %vm292, %v7673
      %7708 = vst.msk [vmem:[#allocation5 + $0x368] sm:$0xff] %vm292, %v7674
      %7709 = vst.msk [vmem:[#allocation5 + $0x390] sm:$0xff] %vm292, %v7675
      %7710 = vst.msk [vmem:[#allocation5 + $0x3b8] sm:$0xff] %vm292, %v7676
      %7711 = vst.msk [vmem:[#allocation5 + $0x3e0] sm:$0xff] %vm292, %v7677
      %7712 = vst.msk [vmem:[#allocation5 + $0x408] sm:$0xff] %vm292, %v7678
      %7713 = vst.msk [vmem:[#allocation5 + $0x430] sm:$0xff] %vm292, %v7679
      %7714 = vst.msk [vmem:[#allocation5 + $0x458] sm:$0xff] %vm292, %v7680
      %7715 = vst.msk [vmem:[#allocation5 + $0x480] sm:$0xff] %vm292, %v7681
      %7716 = vst.msk [vmem:[#allocation5 + $0x4a8] sm:$0xff] %vm292, %v7682
      %7717 = vst.msk [vmem:[#allocation5 + $0x4d0] sm:$0xff] %vm292, %v7683
      %7718 = vst.msk [vmem:[#allocation5 + $0x4f8] sm:$0xff] %vm292, %v7684
      %7719 = vst.msk [vmem:[#allocation5 + $0x520] sm:$0xff] %vm292, %v7685
      %7720 = vst.msk [vmem:[#allocation5 + $0x548] sm:$0xff] %vm292, %v7686
      %v7721 = vld [vmem:[%s4] sm:$0xff]
      %v7722 = vld [vmem:[%s4 + $0x8] sm:$0xff]
      %v7723 = vld [vmem:[%s4 + $0x10] sm:$0xff]
      %v7724 = vld [vmem:[%s4 + $0x18] sm:$0xff]
      %v7725 = vld [vmem:[%s4 + $0x20] sm:$0xff]
      %v7726 = vld [vmem:[%s4 + $0x28] sm:$0xff]
      %v7727 = vld [vmem:[%s4 + $0x30] sm:$0xff]
      %v7728 = vld [vmem:[%s4 + $0x38] sm:$0xff]
      %v7729 = vld [vmem:[%s4 + $0x40] sm:$0xff]
      %v7730 = vld [vmem:[%s4 + $0x48] sm:$0xff]
      %v7731 = vld [vmem:[%s4 + $0x50] sm:$0xff]
      %v7732 = vld [vmem:[%s4 + $0x58] sm:$0xff]
      %v7733 = vld [vmem:[%s4 + $0x60] sm:$0xff]
      %v7734 = vld [vmem:[%s4 + $0x68] sm:$0xff]
      %v7735 = vld [vmem:[%s4 + $0x70] sm:$0xff]
      %v7736 = vld [vmem:[%s4 + $0x78] sm:$0xff]
      %v7737 = vld [vmem:[%s4 + $0x80] sm:$0xff]
      %v7738 = vld [vmem:[%s4 + $0x88] sm:$0xff]
      %v7739 = vld [vmem:[%s4 + $0x90] sm:$0xff]
      %v7740 = vld [vmem:[%s4 + $0x98] sm:$0xff]
      %v7741 = vld [vmem:[%s4 + $0xa0] sm:$0xff]
      %v7742 = vld [vmem:[%s4 + $0xa8] sm:$0xff]
      %v7743 = vld [vmem:[%s4 + $0xb0] sm:$0xff]
      %v7744 = vld [vmem:[%s4 + $0xb8] sm:$0xff]
      %v7745 = vld [vmem:[%s4 + $0xc0] sm:$0xff]
      %v7746 = vld [vmem:[%s4 + $0xc8] sm:$0xff]
      %v7747 = vld [vmem:[%s4 + $0xd0] sm:$0xff]
      %v7748 = vld [vmem:[%s4 + $0xd8] sm:$0xff]
      %v7749 = vld [vmem:[%s4 + $0xe0] sm:$0xff]
      %v7750 = vld [vmem:[%s4 + $0xe8] sm:$0xff]
      %v7751 = vld [vmem:[%s4 + $0xf0] sm:$0xff]
      %v7752 = vld [vmem:[%s4 + $0xf8] sm:$0xff]
      %v7753 = vld [vmem:[%s4 + $0x100] sm:$0xff]
      %v7754 = vld [vmem:[%s4 + $0x108] sm:$0xff]
      %v7755 = vld [vmem:[%s4 + $0x110] sm:$0xff]
      %v7756 = vld [vmem:[%s4 + $0x118] sm:$0xff]
      %v7757 = vld [vmem:[%s4 + $0x120] sm:$0xff]
      %v7758 = vld [vmem:[%s4 + $0x128] sm:$0xff]
      %v7759 = vld [vmem:[%s4 + $0x130] sm:$0xff]
      %v7760 = vld [vmem:[%s4 + $0x138] sm:$0xff]
      %v7761 = vld [vmem:[#allocation5] sm:$0xff]
      %v7762 = vld [vmem:[#allocation5 + $0x8] sm:$0xff]
      %v7763 = vld [vmem:[#allocation5 + $0x10] sm:$0xff]
      %v7764 = vld [vmem:[#allocation5 + $0x18] sm:$0xff]
      %v7765 = vld [vmem:[#allocation5 + $0x20] sm:$0xff]
      %v7766 = vld [vmem:[#allocation5 + $0x28] sm:$0xff]
      %v7767 = vld [vmem:[#allocation5 + $0x30] sm:$0xff]
      %v7768 = vld [vmem:[#allocation5 + $0x38] sm:$0xff]
      %v7769 = vld [vmem:[#allocation5 + $0x40] sm:$0xff]
      %v7770 = vld [vmem:[#allocation5 + $0x48] sm:$0xff]
      %v7771 = vld [vmem:[#allocation5 + $0x50] sm:$0xff]
      %v7772 = vld [vmem:[#allocation5 + $0x58] sm:$0xff]
      %v7773 = vld [vmem:[#allocation5 + $0x60] sm:$0xff]
      %v7774 = vld [vmem:[#allocation5 + $0x68] sm:$0xff]
      %v7775 = vld [vmem:[#allocation5 + $0x70] sm:$0xff]
      %v7776 = vld [vmem:[#allocation5 + $0x78] sm:$0xff]
      %v7777 = vld [vmem:[#allocation5 + $0x80] sm:$0xff]
      %v7778 = vld [vmem:[#allocation5 + $0x88] sm:$0xff]
      %v7779 = vld [vmem:[#allocation5 + $0x90] sm:$0xff]
      %v7780 = vld [vmem:[#allocation5 + $0x98] sm:$0xff]
      %v7781 = vld [vmem:[#allocation5 + $0xa0] sm:$0xff]
      %v7782 = vld [vmem:[#allocation5 + $0xa8] sm:$0xff]
      %v7783 = vld [vmem:[#allocation5 + $0xb0] sm:$0xff]
      %v7784 = vld [vmem:[#allocation5 + $0xb8] sm:$0xff]
      %v7785 = vld [vmem:[#allocation5 + $0xc0] sm:$0xff]
      %v7786 = vld [vmem:[#allocation5 + $0xc8] sm:$0xff]
      %v7787 = vld [vmem:[#allocation5 + $0xd0] sm:$0xff]
      %v7788 = vld [vmem:[#allocation5 + $0xd8] sm:$0xff]
      %v7789 = vld [vmem:[#allocation5 + $0xe0] sm:$0xff]
      %v7790 = vld [vmem:[#allocation5 + $0xe8] sm:$0xff]
      %v7791 = vld [vmem:[#allocation5 + $0xf0] sm:$0xff]
      %v7792 = vld [vmem:[#allocation5 + $0xf8] sm:$0xff]
      %v7793 = vld [vmem:[#allocation5 + $0x100] sm:$0xff]
      %v7794 = vld [vmem:[#allocation5 + $0x108] sm:$0xff]
      %v7795 = vld [vmem:[#allocation5 + $0x110] sm:$0xff]
      %v7796 = vld [vmem:[#allocation5 + $0x118] sm:$0xff]
      %v7797 = vld [vmem:[#allocation5 + $0x120] sm:$0xff]
      %v7798 = vld [vmem:[#allocation5 + $0x128] sm:$0xff]
      %v7799 = vld [vmem:[#allocation5 + $0x130] sm:$0xff]
      %v7800 = vld [vmem:[#allocation5 + $0x138] sm:$0xff]
      %v7801 = vld [vmem:[#allocation5 + $0x140] sm:$0xff]
      %v7802 = vld [vmem:[#allocation5 + $0x148] sm:$0xff]
      %v7803 = vld [vmem:[#allocation5 + $0x150] sm:$0xff]
      %v7804 = vld [vmem:[#allocation5 + $0x158] sm:$0xff]
      %v7805 = vld [vmem:[#allocation5 + $0x160] sm:$0xff]
      %v7806 = vld [vmem:[#allocation5 + $0x168] sm:$0xff]
      %v7807 = vld [vmem:[#allocation5 + $0x170] sm:$0xff]
      %v7808 = vld [vmem:[#allocation5 + $0x178] sm:$0xff]
      %v7809 = vld [vmem:[#allocation5 + $0x180] sm:$0xff]
      %v7810 = vld [vmem:[#allocation5 + $0x188] sm:$0xff]
      %v7811 = vld [vmem:[#allocation5 + $0x190] sm:$0xff]
      %v7812 = vld [vmem:[#allocation5 + $0x198] sm:$0xff]
      %v7813 = vld [vmem:[#allocation5 + $0x1a0] sm:$0xff]
      %v7814 = vld [vmem:[#allocation5 + $0x1a8] sm:$0xff]
      %v7815 = vld [vmem:[#allocation5 + $0x1b0] sm:$0xff]
      %v7816 = vld [vmem:[#allocation5 + $0x1b8] sm:$0xff]
      %v7817 = vld [vmem:[#allocation5 + $0x1c0] sm:$0xff]
      %v7818 = vld [vmem:[#allocation5 + $0x1c8] sm:$0xff]
      %v7819 = vld [vmem:[#allocation5 + $0x1d0] sm:$0xff]
      %v7820 = vld [vmem:[#allocation5 + $0x1d8] sm:$0xff]
      %v7821 = vld [vmem:[#allocation5 + $0x1e0] sm:$0xff]
      %v7822 = vld [vmem:[#allocation5 + $0x1e8] sm:$0xff]
      %v7823 = vld [vmem:[#allocation5 + $0x1f0] sm:$0xff]
      %v7824 = vld [vmem:[#allocation5 + $0x1f8] sm:$0xff]
      %v7825 = vld [vmem:[#allocation5 + $0x200] sm:$0xff]
      %v7826 = vld [vmem:[#allocation5 + $0x208] sm:$0xff]
      %v7827 = vld [vmem:[#allocation5 + $0x210] sm:$0xff]
      %v7828 = vld [vmem:[#allocation5 + $0x218] sm:$0xff]
      %v7829 = vld [vmem:[#allocation5 + $0x220] sm:$0xff]
      %v7830 = vld [vmem:[#allocation5 + $0x228] sm:$0xff]
      %v7831 = vld [vmem:[#allocation5 + $0x230] sm:$0xff]
      %v7832 = vld [vmem:[#allocation5 + $0x238] sm:$0xff]
      %v7833 = vld [vmem:[#allocation5 + $0x240] sm:$0xff]
      %v7834 = vld [vmem:[#allocation5 + $0x248] sm:$0xff]
      %v7835 = vld [vmem:[#allocation5 + $0x250] sm:$0xff]
      %v7836 = vld [vmem:[#allocation5 + $0x258] sm:$0xff]
      %v7837 = vld [vmem:[#allocation5 + $0x260] sm:$0xff]
      %v7838 = vld [vmem:[#allocation5 + $0x268] sm:$0xff]
      %v7839 = vld [vmem:[#allocation5 + $0x270] sm:$0xff]
      %v7840 = vld [vmem:[#allocation5 + $0x278] sm:$0xff]
      %v7841 = vld [vmem:[#allocation5 + $0x280] sm:$0xff]
      %v7842 = vld [vmem:[#allocation5 + $0x288] sm:$0xff]
      %v7843 = vld [vmem:[#allocation5 + $0x290] sm:$0xff]
      %v7844 = vld [vmem:[#allocation5 + $0x298] sm:$0xff]
      %v7845 = vld [vmem:[#allocation5 + $0x2a0] sm:$0xff]
      %v7846 = vld [vmem:[#allocation5 + $0x2a8] sm:$0xff]
      %v7847 = vld [vmem:[#allocation5 + $0x2b0] sm:$0xff]
      %v7848 = vld [vmem:[#allocation5 + $0x2b8] sm:$0xff]
      %v7849 = vld [vmem:[#allocation5 + $0x2c0] sm:$0xff]
      %v7850 = vld [vmem:[#allocation5 + $0x2c8] sm:$0xff]
      %v7851 = vld [vmem:[#allocation5 + $0x2d0] sm:$0xff]
      %v7852 = vld [vmem:[#allocation5 + $0x2d8] sm:$0xff]
      %v7853 = vld [vmem:[#allocation5 + $0x2e0] sm:$0xff]
      %v7854 = vld [vmem:[#allocation5 + $0x2e8] sm:$0xff]
      %v7855 = vld [vmem:[#allocation5 + $0x2f0] sm:$0xff]
      %v7856 = vld [vmem:[#allocation5 + $0x2f8] sm:$0xff]
      %v7857 = vld [vmem:[#allocation5 + $0x300] sm:$0xff]
      %v7858 = vld [vmem:[#allocation5 + $0x308] sm:$0xff]
      %v7859 = vld [vmem:[#allocation5 + $0x310] sm:$0xff]
      %v7860 = vld [vmem:[#allocation5 + $0x318] sm:$0xff]
      %v7861 = vld [vmem:[#allocation5 + $0x320] sm:$0xff]
      %v7862 = vld [vmem:[#allocation5 + $0x328] sm:$0xff]
      %v7863 = vld [vmem:[#allocation5 + $0x330] sm:$0xff]
      %v7864 = vld [vmem:[#allocation5 + $0x338] sm:$0xff]
      %v7865 = vld [vmem:[#allocation5 + $0x340] sm:$0xff]
      %v7866 = vld [vmem:[#allocation5 + $0x348] sm:$0xff]
      %v7867 = vld [vmem:[#allocation5 + $0x350] sm:$0xff]
      %v7868 = vld [vmem:[#allocation5 + $0x358] sm:$0xff]
      %v7869 = vld [vmem:[#allocation5 + $0x360] sm:$0xff]
      %v7870 = vld [vmem:[#allocation5 + $0x368] sm:$0xff]
      %v7871 = vld [vmem:[#allocation5 + $0x370] sm:$0xff]
      %v7872 = vld [vmem:[#allocation5 + $0x378] sm:$0xff]
      %v7873 = vld [vmem:[#allocation5 + $0x380] sm:$0xff]
      %v7874 = vld [vmem:[#allocation5 + $0x388] sm:$0xff]
      %v7875 = vld [vmem:[#allocation5 + $0x390] sm:$0xff]
      %v7876 = vld [vmem:[#allocation5 + $0x398] sm:$0xff]
      %v7877 = vld [vmem:[#allocation5 + $0x3a0] sm:$0xff]
      %v7878 = vld [vmem:[#allocation5 + $0x3a8] sm:$0xff]
      %v7879 = vld [vmem:[#allocation5 + $0x3b0] sm:$0xff]
      %v7880 = vld [vmem:[#allocation5 + $0x3b8] sm:$0xff]
      %v7881 = vld [vmem:[#allocation5 + $0x3c0] sm:$0xff]
      %v7882 = vld [vmem:[#allocation5 + $0x3c8] sm:$0xff]
      %v7883 = vld [vmem:[#allocation5 + $0x3d0] sm:$0xff]
      %v7884 = vld [vmem:[#allocation5 + $0x3d8] sm:$0xff]
      %v7885 = vld [vmem:[#allocation5 + $0x3e0] sm:$0xff]
      %v7886 = vld [vmem:[#allocation5 + $0x3e8] sm:$0xff]
      %v7887 = vld [vmem:[#allocation5 + $0x3f0] sm:$0xff]
      %v7888 = vld [vmem:[#allocation5 + $0x3f8] sm:$0xff]
      %v7889 = vld [vmem:[#allocation5 + $0x400] sm:$0xff]
      %v7890 = vld [vmem:[#allocation5 + $0x408] sm:$0xff]
      %v7891 = vld [vmem:[#allocation5 + $0x410] sm:$0xff]
      %v7892 = vld [vmem:[#allocation5 + $0x418] sm:$0xff]
      %v7893 = vld [vmem:[#allocation5 + $0x420] sm:$0xff]
      %v7894 = vld [vmem:[#allocation5 + $0x428] sm:$0xff]
      %v7895 = vld [vmem:[#allocation5 + $0x430] sm:$0xff]
      %v7896 = vld [vmem:[#allocation5 + $0x438] sm:$0xff]
      %v7897 = vld [vmem:[#allocation5 + $0x440] sm:$0xff]
      %v7898 = vld [vmem:[#allocation5 + $0x448] sm:$0xff]
      %v7899 = vld [vmem:[#allocation5 + $0x450] sm:$0xff]
      %v7900 = vld [vmem:[#allocation5 + $0x458] sm:$0xff]
      %v7901 = vld [vmem:[#allocation5 + $0x460] sm:$0xff]
      %v7902 = vld [vmem:[#allocation5 + $0x468] sm:$0xff]
      %v7903 = vld [vmem:[#allocation5 + $0x470] sm:$0xff]
      %v7904 = vld [vmem:[#allocation5 + $0x478] sm:$0xff]
      %v7905 = vld [vmem:[#allocation5 + $0x480] sm:$0xff]
      %v7906 = vld [vmem:[#allocation5 + $0x488] sm:$0xff]
      %v7907 = vld [vmem:[#allocation5 + $0x490] sm:$0xff]
      %v7908 = vld [vmem:[#allocation5 + $0x498] sm:$0xff]
      %v7909 = vld [vmem:[#allocation5 + $0x4a0] sm:$0xff]
      %v7910 = vld [vmem:[#allocation5 + $0x4a8] sm:$0xff]
      %v7911 = vld [vmem:[#allocation5 + $0x4b0] sm:$0xff]
      %v7912 = vld [vmem:[#allocation5 + $0x4b8] sm:$0xff]
      %v7913 = vld [vmem:[#allocation5 + $0x4c0] sm:$0xff]
      %v7914 = vld [vmem:[#allocation5 + $0x4c8] sm:$0xff]
      %v7915 = vld [vmem:[#allocation5 + $0x4d0] sm:$0xff]
      %v7916 = vld [vmem:[#allocation5 + $0x4d8] sm:$0xff]
      %v7917 = vld [vmem:[#allocation5 + $0x4e0] sm:$0xff]
      %v7918 = vld [vmem:[#allocation5 + $0x4e8] sm:$0xff]
      %v7919 = vld [vmem:[#allocation5 + $0x4f0] sm:$0xff]
      %v7920 = vld [vmem:[#allocation5 + $0x4f8] sm:$0xff]
      %v7921 = vld [vmem:[#allocation5 + $0x500] sm:$0xff]
      %v7922 = vld [vmem:[#allocation5 + $0x508] sm:$0xff]
      %v7923 = vld [vmem:[#allocation5 + $0x510] sm:$0xff]
      %v7924 = vld [vmem:[#allocation5 + $0x518] sm:$0xff]
      %v7925 = vld [vmem:[#allocation5 + $0x520] sm:$0xff]
      %v7926 = vld [vmem:[#allocation5 + $0x528] sm:$0xff]
      %v7927 = vld [vmem:[#allocation5 + $0x530] sm:$0xff]
      %v7928 = vld [vmem:[#allocation5 + $0x538] sm:$0xff]
      %v7929 = vld [vmem:[#allocation5 + $0x540] sm:$0xff]
      %v7930 = vld [vmem:[#allocation5 + $0x548] sm:$0xff]
      %v7931 = vld [vmem:[%s5] sm:$0xff]
      %v7932 = vld [vmem:[%s5 + $0x8] sm:$0xff]
      %v7933 = vld [vmem:[%s5 + $0x10] sm:$0xff]
      %v7934 = vld [vmem:[%s5 + $0x18] sm:$0xff]
      %v7935 = vld [vmem:[%s5 + $0x20] sm:$0xff]
      %v7936 = vld [vmem:[%s5 + $0x28] sm:$0xff]
      %v7937 = vld [vmem:[%s5 + $0x30] sm:$0xff]
      %v7938 = vld [vmem:[%s5 + $0x38] sm:$0xff]
      %7940 = vset.pattern.permute.xlu0 0
      %7941 = vperm.xlu0 %7940, %v7931
      %v7942 = vpop.permute.xlu0 %7941
      %7945 = vset.pattern.permute.xlu0 0
      %7946 = vperm.xlu0 %7945, %v7932
      %v7947 = vpop.permute.xlu0 %7946
      %7950 = vset.pattern.permute.xlu0 0
      %7951 = vperm.xlu0 %7950, %v7933
      %v7952 = vpop.permute.xlu0 %7951
      %7955 = vset.pattern.permute.xlu0 0
      %7956 = vperm.xlu0 %7955, %v7934
      %v7957 = vpop.permute.xlu0 %7956
      %7960 = vset.pattern.permute.xlu0 0
      %7961 = vperm.xlu0 %7960, %v7935
      %v7962 = vpop.permute.xlu0 %7961
      %7965 = vset.pattern.permute.xlu0 0
      %7966 = vperm.xlu0 %7965, %v7936
      %v7967 = vpop.permute.xlu0 %7966
      %7970 = vset.pattern.permute.xlu0 0
      %7971 = vperm.xlu0 %7970, %v7937
      %v7972 = vpop.permute.xlu0 %7971
      %7975 = vset.pattern.permute.xlu0 0
      %7976 = vperm.xlu0 %7975, %v7938
      %v7977 = vpop.permute.xlu0 %7976
      %v7980 = vsel %vm292, %v7725, 0
      %v7983 = vsel %vm292, %v7730, 0
      %v7986 = vsel %vm292, %v7735, 0
      %v7989 = vsel %vm292, %v7740, 0
      %v7992 = vsel %vm292, %v7745, 0
      %v7995 = vsel %vm292, %v7750, 0
      %v7998 = vsel %vm292, %v7755, 0
      %v8001 = vsel %vm292, %v7760, 0
      %v8004 = vsel %vm292, %v7765, 0
      %v8007 = vsel %vm292, %v7770, 0
      %v8010 = vsel %vm292, %v7775, 0
      %v8013 = vsel %vm292, %v7780, 0
      %v8016 = vsel %vm292, %v7785, 0
      %v8019 = vsel %vm292, %v7790, 0
      %v8022 = vsel %vm292, %v7795, 0
      %v8025 = vsel %vm292, %v7800, 0
      %v8028 = vsel %vm292, %v7805, 0
      %v8031 = vsel %vm292, %v7810, 0
      %v8034 = vsel %vm292, %v7815, 0
      %v8037 = vsel %vm292, %v7820, 0
      %v8040 = vsel %vm292, %v7825, 0
      %v8043 = vsel %vm292, %v7830, 0
      %v8046 = vsel %vm292, %v7835, 0
      %v8049 = vsel %vm292, %v7840, 0
      %v8052 = vsel %vm292, %v7845, 0
      %v8055 = vsel %vm292, %v7850, 0
      %v8058 = vsel %vm292, %v7855, 0
      %v8061 = vsel %vm292, %v7860, 0
      %v8064 = vsel %vm292, %v7865, 0
      %v8067 = vsel %vm292, %v7870, 0
      %v8070 = vsel %vm292, %v7875, 0
      %v8073 = vsel %vm292, %v7880, 0
      %v8076 = vsel %vm292, %v7885, 0
      %v8079 = vsel %vm292, %v7890, 0
      %v8082 = vsel %vm292, %v7895, 0
      %v8085 = vsel %vm292, %v7900, 0
      %v8088 = vsel %vm292, %v7905, 0
      %v8091 = vsel %vm292, %v7910, 0
      %v8094 = vsel %vm292, %v7915, 0
      %v8097 = vsel %vm292, %v7920, 0
      %v8100 = vsel %vm292, %v7925, 0
      %v8103 = vsel %vm292, %v7930, 0
      %8105 = vmatprep.subr.mxu0 %v7837
      %8106 = vmatpush1.xpose.msra.mxu0 %v7836
      %8107 = vmatprep.subr.mxu0 %v7832
      %8108 = vmatpush1.xpose.msra.mxu0 %v7831
      %8109 = vmatprep.subr.mxu0 %v7827
      %8110 = vmatpush1.xpose.msra.mxu0 %v7826
      %8111 = vmatprep.subr.mxu0 %v7822
      %8112 = vmatpush1.xpose.msra.mxu0 %v7821
      %8113 = vmatprep.subr.mxu0 %v7817
      %8114 = vmatpush1.xpose.msra.mxu0 %v7816
      %8115 = vmatprep.subr.mxu0 %v7812
      %8116 = vmatpush1.xpose.msra.mxu0 %v7811
      %8117 = vmatprep.subr.mxu0 %v7807
      %8118 = vmatpush1.xpose.msra.mxu0 %v7806
      %8119 = vmatprep.subr.mxu0 %v7802
      %8120 = vmatpush1.xpose.msra.mxu0 %v7801
      %8121 = vmatprep.subr.mxu0 %v7797
      %8122 = vmatpush1.xpose.msra.mxu0 %v7796
      %8123 = vmatprep.subr.mxu0 %v7792
      %8124 = vmatpush1.xpose.msra.mxu0 %v7791
      %8125 = vmatprep.subr.mxu0 %v7787
      %8126 = vmatpush1.xpose.msra.mxu0 %v7786
      %8127 = vmatprep.subr.mxu0 %v7782
      %8128 = vmatpush1.xpose.msra.mxu0 %v7781
      %8129 = vmatprep.subr.mxu0 %v7777
      %8130 = vmatpush1.xpose.msra.mxu0 %v7776
      %8131 = vmatprep.subr.mxu0 %v7772
      %8132 = vmatpush1.xpose.msra.mxu0 %v7771
      %8133 = vmatprep.subr.mxu0 %v7767
      %8134 = vmatpush1.xpose.msra.mxu0 %v7766
      %8135 = vmatprep.subr.mxu0 %v7762
      %8136 = vmatpush1.xpose.msra.mxu0 %v7761
      %8137 = vmatprep.subr.mxu0 %v7917
      %8138 = vmatpush2.xpose.msra.mxu0 %v7916
      %8139 = vmatprep.subr.mxu0 %v7912
      %8140 = vmatpush2.xpose.msra.mxu0 %v7911
      %8141 = vmatprep.subr.mxu0 %v7907
      %8142 = vmatpush2.xpose.msra.mxu0 %v7906
      %8143 = vmatprep.subr.mxu0 %v7902
      %8144 = vmatpush2.xpose.msra.mxu0 %v7901
      %8145 = vmatprep.subr.mxu0 %v7897
      %8146 = vmatpush2.xpose.msra.mxu0 %v7896
      %8147 = vmatprep.subr.mxu0 %v7892
      %8148 = vmatpush2.xpose.msra.mxu0 %v7891
      %8149 = vmatprep.subr.mxu0 %v7887
      %8150 = vmatpush2.xpose.msra.mxu0 %v7886
      %8151 = vmatprep.subr.mxu0 %v7882
      %8152 = vmatpush2.xpose.msra.mxu0 %v7881
      %8153 = vmatprep.subr.mxu0 %v7877
      %8154 = vmatpush2.xpose.msra.mxu0 %v7876
      %8155 = vmatprep.subr.mxu0 %v7872
      %8156 = vmatpush2.xpose.msra.mxu0 %v7871
      %8157 = vmatprep.subr.mxu0 %v7867
      %8158 = vmatpush2.xpose.msra.mxu0 %v7866
      %8159 = vmatprep.subr.mxu0 %v7862
      %8160 = vmatpush2.xpose.msra.mxu0 %v7861
      %8161 = vmatprep.subr.mxu0 %v7857
      %8162 = vmatpush2.xpose.msra.mxu0 %v7856
      %8163 = vmatprep.subr.mxu0 %v7852
      %8164 = vmatpush2.xpose.msra.mxu0 %v7851
      %8165 = vmatprep.subr.mxu0 %v7847
      %8166 = vmatpush2.xpose.msra.mxu0 %v7846
      %8167 = vmatprep.subr.mxu0 %v7842
      %8168 = vmatpush2.xpose.msra.mxu0 %v7841
      %8169 = vmatprep.mubr.f32.mxu0 %v7722
      %8170 = vmatmul.mubr.f32.gmra.mxu0 %v7721
      %v8171 = vpop.f32.mrf.mxu0
      %v8172 = vadd.f32 %v7942, %v8171
      %v8173 = vpop.f32.mrf.mxu0
      %v8174 = vadd.f32 %v7942, %v8173
      %8175 = vmatprep.mubr.f32.mxu0 %v7727
      %8176 = vmatmul.mubr.f32.gmra.mxu0 %v7726
      %v8177 = vpop.f32.mrf.mxu0
      %v8178 = vadd.f32 %v7947, %v8177
      %v8179 = vpop.f32.mrf.mxu0
      %v8180 = vadd.f32 %v7947, %v8179
      %8181 = vmatprep.mubr.f32.mxu0 %v7732
      %8182 = vmatmul.mubr.f32.gmra.mxu0 %v7731
      %v8183 = vpop.f32.mrf.mxu0
      %v8184 = vadd.f32 %v7952, %v8183
      %v8185 = vpop.f32.mrf.mxu0
      %v8186 = vadd.f32 %v7952, %v8185
      %8187 = vmatprep.mubr.f32.mxu0 %v7737
      %8188 = vmatmul.mubr.f32.gmra.mxu0 %v7736
      %v8189 = vpop.f32.mrf.mxu0
      %v8190 = vadd.f32 %v7957, %v8189
      %v8191 = vpop.f32.mrf.mxu0
      %v8192 = vadd.f32 %v7957, %v8191
      %8193 = vmatprep.mubr.f32.mxu0 %v7742
      %8194 = vmatmul.mubr.f32.gmra.mxu0 %v7741
      %v8195 = vpop.f32.mrf.mxu0
      %v8196 = vadd.f32 %v7962, %v8195
      %v8197 = vpop.f32.mrf.mxu0
      %v8198 = vadd.f32 %v7962, %v8197
      %8199 = vmatprep.mubr.f32.mxu0 %v7747
      %8200 = vmatmul.mubr.f32.gmra.mxu0 %v7746
      %v8201 = vpop.f32.mrf.mxu0
      %v8202 = vadd.f32 %v7967, %v8201
      %v8203 = vpop.f32.mrf.mxu0
      %v8204 = vadd.f32 %v7967, %v8203
      %8205 = vmatprep.mubr.f32.mxu0 %v7752
      %8206 = vmatmul.mubr.f32.gmra.mxu0 %v7751
      %v8207 = vpop.f32.mrf.mxu0
      %v8208 = vadd.f32 %v7972, %v8207
      %v8209 = vpop.f32.mrf.mxu0
      %v8210 = vadd.f32 %v7972, %v8209
      %8211 = vmatprep.mubr.f32.mxu0 %v7757
      %8212 = vmatmul.mubr.f32.gmra.mxu0 %v7756
      %v8213 = vpop.f32.mrf.mxu0
      %v8214 = vadd.f32 %v7977, %v8213
      %v8215 = vpop.f32.mrf.mxu0
      %v8216 = vadd.f32 %v7977, %v8215
      %8217 = vdwg.mxu0
      %8218 = vmatprep.subr.mxu0 %v7839
      %8219 = vmatpush1.xpose.msra.mxu0 %v7838
      %8220 = vmatprep.subr.mxu0 %v7834
      %8221 = vmatpush1.xpose.msra.mxu0 %v7833
      %8222 = vmatprep.subr.mxu0 %v7829
      %8223 = vmatpush1.xpose.msra.mxu0 %v7828
      %8224 = vmatprep.subr.mxu0 %v7824
      %8225 = vmatpush1.xpose.msra.mxu0 %v7823
      %8226 = vmatprep.subr.mxu0 %v7819
      %8227 = vmatpush1.xpose.msra.mxu0 %v7818
      %8228 = vmatprep.subr.mxu0 %v7814
      %8229 = vmatpush1.xpose.msra.mxu0 %v7813
      %8230 = vmatprep.subr.mxu0 %v7809
      %8231 = vmatpush1.xpose.msra.mxu0 %v7808
      %8232 = vmatprep.subr.mxu0 %v7804
      %8233 = vmatpush1.xpose.msra.mxu0 %v7803
      %8234 = vmatprep.subr.mxu0 %v7799
      %8235 = vmatpush1.xpose.msra.mxu0 %v7798
      %8236 = vmatprep.subr.mxu0 %v7794
      %8237 = vmatpush1.xpose.msra.mxu0 %v7793
      %8238 = vmatprep.subr.mxu0 %v7789
      %8239 = vmatpush1.xpose.msra.mxu0 %v7788
      %8240 = vmatprep.subr.mxu0 %v7784
      %8241 = vmatpush1.xpose.msra.mxu0 %v7783
      %8242 = vmatprep.subr.mxu0 %v7779
      %8243 = vmatpush1.xpose.msra.mxu0 %v7778
      %8244 = vmatprep.subr.mxu0 %v7774
      %8245 = vmatpush1.xpose.msra.mxu0 %v7773
      %8246 = vmatprep.subr.mxu0 %v7769
      %8247 = vmatpush1.xpose.msra.mxu0 %v7768
      %8248 = vmatprep.subr.mxu0 %v7764
      %8249 = vmatpush1.xpose.msra.mxu0 %v7763
      %8250 = vmatprep.subr.mxu0 %v7919
      %8251 = vmatpush2.xpose.msra.mxu0 %v7918
      %8252 = vmatprep.subr.mxu0 %v7914
      %8253 = vmatpush2.xpose.msra.mxu0 %v7913
      %8254 = vmatprep.subr.mxu0 %v7909
      %8255 = vmatpush2.xpose.msra.mxu0 %v7908
      %8256 = vmatprep.subr.mxu0 %v7904
      %8257 = vmatpush2.xpose.msra.mxu0 %v7903
      %8258 = vmatprep.subr.mxu0 %v7899
      %8259 = vmatpush2.xpose.msra.mxu0 %v7898
      %8260 = vmatprep.subr.mxu0 %v7894
      %8261 = vmatpush2.xpose.msra.mxu0 %v7893
      %8262 = vmatprep.subr.mxu0 %v7889
      %8263 = vmatpush2.xpose.msra.mxu0 %v7888
      %8264 = vmatprep.subr.mxu0 %v7884
      %8265 = vmatpush2.xpose.msra.mxu0 %v7883
      %8266 = vmatprep.subr.mxu0 %v7879
      %8267 = vmatpush2.xpose.msra.mxu0 %v7878
      %8268 = vmatprep.subr.mxu0 %v7874
      %8269 = vmatpush2.xpose.msra.mxu0 %v7873
      %8270 = vmatprep.subr.mxu0 %v7869
      %8271 = vmatpush2.xpose.msra.mxu0 %v7868
      %8272 = vmatprep.subr.mxu0 %v7864
      %8273 = vmatpush2.xpose.msra.mxu0 %v7863
      %8274 = vmatprep.subr.mxu0 %v7859
      %8275 = vmatpush2.xpose.msra.mxu0 %v7858
      %8276 = vmatprep.subr.mxu0 %v7854
      %8277 = vmatpush2.xpose.msra.mxu0 %v7853
      %8278 = vmatprep.subr.mxu0 %v7849
      %8279 = vmatpush2.xpose.msra.mxu0 %v7848
      %8280 = vmatprep.subr.mxu0 %v7844
      %8281 = vmatpush2.xpose.msra.mxu0 %v7843
      %8282 = vmatprep.mubr.f32.mxu0 %v7724
      %8283 = vmatmul.mubr.f32.gmra.mxu0 %v7723
      %v8284 = vpop.f32.mrf.mxu0
      %v8285 = vadd.f32 %v8172, %v8284
      %v8286 = vpop.f32.mrf.mxu0
      %v8287 = vadd.f32 %v8174, %v8286
      %8288 = vmatprep.mubr.f32.mxu0 %v7729
      %8289 = vmatmul.mubr.f32.gmra.mxu0 %v7728
      %v8290 = vpop.f32.mrf.mxu0
      %v8291 = vadd.f32 %v8178, %v8290
      %v8292 = vpop.f32.mrf.mxu0
      %v8293 = vadd.f32 %v8180, %v8292
      %8294 = vmatprep.mubr.f32.mxu0 %v7734
      %8295 = vmatmul.mubr.f32.gmra.mxu0 %v7733
      %v8296 = vpop.f32.mrf.mxu0
      %v8297 = vadd.f32 %v8184, %v8296
      %v8298 = vpop.f32.mrf.mxu0
      %v8299 = vadd.f32 %v8186, %v8298
      %8300 = vmatprep.mubr.f32.mxu0 %v7739
      %8301 = vmatmul.mubr.f32.gmra.mxu0 %v7738
      %v8302 = vpop.f32.mrf.mxu0
      %v8303 = vadd.f32 %v8190, %v8302
      %v8304 = vpop.f32.mrf.mxu0
      %v8305 = vadd.f32 %v8192, %v8304
      %8306 = vmatprep.mubr.f32.mxu0 %v7744
      %8307 = vmatmul.mubr.f32.gmra.mxu0 %v7743
      %v8308 = vpop.f32.mrf.mxu0
      %v8309 = vadd.f32 %v8196, %v8308
      %v8310 = vpop.f32.mrf.mxu0
      %v8311 = vadd.f32 %v8198, %v8310
      %8312 = vmatprep.mubr.f32.mxu0 %v7749
      %8313 = vmatmul.mubr.f32.gmra.mxu0 %v7748
      %v8314 = vpop.f32.mrf.mxu0
      %v8315 = vadd.f32 %v8202, %v8314
      %v8316 = vpop.f32.mrf.mxu0
      %v8317 = vadd.f32 %v8204, %v8316
      %8318 = vmatprep.mubr.f32.mxu0 %v7754
      %8319 = vmatmul.mubr.f32.gmra.mxu0 %v7753
      %v8320 = vpop.f32.mrf.mxu0
      %v8321 = vadd.f32 %v8208, %v8320
      %v8322 = vpop.f32.mrf.mxu0
      %v8323 = vadd.f32 %v8210, %v8322
      %8324 = vmatprep.mubr.f32.mxu0 %v7759
      %8325 = vmatmul.mubr.f32.gmra.mxu0 %v7758
      %v8326 = vpop.f32.mrf.mxu0
      %v8327 = vadd.f32 %v8214, %v8326
      %v8328 = vpop.f32.mrf.mxu0
      %v8329 = vadd.f32 %v8216, %v8328
      %8330 = vdwg.mxu0
      %8331 = vmatprep.subr.mxu0 0.0
      %8332 = vmatpush1.xpose.msra.mxu0 %v8049
      %8333 = vmatprep.subr.mxu0 0.0
      %8334 = vmatpush1.xpose.msra.mxu0 %v8046
      %8335 = vmatprep.subr.mxu0 0.0
      %8336 = vmatpush1.xpose.msra.mxu0 %v8043
      %8337 = vmatprep.subr.mxu0 0.0
      %8338 = vmatpush1.xpose.msra.mxu0 %v8040
      %8339 = vmatprep.subr.mxu0 0.0
      %8340 = vmatpush1.xpose.msra.mxu0 %v8037
      %8341 = vmatprep.subr.mxu0 0.0
      %8342 = vmatpush1.xpose.msra.mxu0 %v8034
      %8343 = vmatprep.subr.mxu0 0.0
      %8344 = vmatpush1.xpose.msra.mxu0 %v8031
      %8345 = vmatprep.subr.mxu0 0.0
      %8346 = vmatpush1.xpose.msra.mxu0 %v8028
      %8347 = vmatprep.subr.mxu0 0.0
      %8348 = vmatpush1.xpose.msra.mxu0 %v8025
      %8349 = vmatprep.subr.mxu0 0.0
      %8350 = vmatpush1.xpose.msra.mxu0 %v8022
      %8351 = vmatprep.subr.mxu0 0.0
      %8352 = vmatpush1.xpose.msra.mxu0 %v8019
      %8353 = vmatprep.subr.mxu0 0.0
      %8354 = vmatpush1.xpose.msra.mxu0 %v8016
      %8355 = vmatprep.subr.mxu0 0.0
      %8356 = vmatpush1.xpose.msra.mxu0 %v8013
      %8357 = vmatprep.subr.mxu0 0.0
      %8358 = vmatpush1.xpose.msra.mxu0 %v8010
      %8359 = vmatprep.subr.mxu0 0.0
      %8360 = vmatpush1.xpose.msra.mxu0 %v8007
      %8361 = vmatprep.subr.mxu0 0.0
      %8362 = vmatpush1.xpose.msra.mxu0 %v8004
      %8363 = vmatprep.subr.mxu0 0.0
      %8364 = vmatpush2.xpose.msra.mxu0 %v8097
      %8365 = vmatprep.subr.mxu0 0.0
      %8366 = vmatpush2.xpose.msra.mxu0 %v8094
      %8367 = vmatprep.subr.mxu0 0.0
      %8368 = vmatpush2.xpose.msra.mxu0 %v8091
      %8369 = vmatprep.subr.mxu0 0.0
      %8370 = vmatpush2.xpose.msra.mxu0 %v8088
      %8371 = vmatprep.subr.mxu0 0.0
      %8372 = vmatpush2.xpose.msra.mxu0 %v8085
      %8373 = vmatprep.subr.mxu0 0.0
      %8374 = vmatpush2.xpose.msra.mxu0 %v8082
      %8375 = vmatprep.subr.mxu0 0.0
      %8376 = vmatpush2.xpose.msra.mxu0 %v8079
      %8377 = vmatprep.subr.mxu0 0.0
      %8378 = vmatpush2.xpose.msra.mxu0 %v8076
      %8379 = vmatprep.subr.mxu0 0.0
      %8380 = vmatpush2.xpose.msra.mxu0 %v8073
      %8381 = vmatprep.subr.mxu0 0.0
      %8382 = vmatpush2.xpose.msra.mxu0 %v8070
      %8383 = vmatprep.subr.mxu0 0.0
      %8384 = vmatpush2.xpose.msra.mxu0 %v8067
      %8385 = vmatprep.subr.mxu0 0.0
      %8386 = vmatpush2.xpose.msra.mxu0 %v8064
      %8387 = vmatprep.subr.mxu0 0.0
      %8388 = vmatpush2.xpose.msra.mxu0 %v8061
      %8389 = vmatprep.subr.mxu0 0.0
      %8390 = vmatpush2.xpose.msra.mxu0 %v8058
      %8391 = vmatprep.subr.mxu0 0.0
      %8392 = vmatpush2.xpose.msra.mxu0 %v8055
      %8393 = vmatprep.subr.mxu0 0.0
      %8394 = vmatpush2.xpose.msra.mxu0 %v8052
      %8395 = vmatprep.mubr.f32.mxu0 0.0
      %8396 = vmatmul.mubr.f32.gmra.mxu0 %v7980
      %v8397 = vpop.f32.mrf.mxu0
      %v8398 = vadd.f32 %v8285, %v8397
      %v8399 = vpop.f32.mrf.mxu0
      %v8400 = vadd.f32 %v8287, %v8399
      %8401 = vmatprep.mubr.f32.mxu0 0.0
      %8402 = vmatmul.mubr.f32.gmra.mxu0 %v7983
      %v8403 = vpop.f32.mrf.mxu0
      %v8404 = vadd.f32 %v8291, %v8403
      %v8405 = vpop.f32.mrf.mxu0
      %v8406 = vadd.f32 %v8293, %v8405
      %8407 = vmatprep.mubr.f32.mxu0 0.0
      %8408 = vmatmul.mubr.f32.gmra.mxu0 %v7986
      %v8409 = vpop.f32.mrf.mxu0
      %v8410 = vadd.f32 %v8297, %v8409
      %v8411 = vpop.f32.mrf.mxu0
      %v8412 = vadd.f32 %v8299, %v8411
      %8413 = vmatprep.mubr.f32.mxu0 0.0
      %8414 = vmatmul.mubr.f32.gmra.mxu0 %v7989
      %v8415 = vpop.f32.mrf.mxu0
      %v8416 = vadd.f32 %v8303, %v8415
      %v8417 = vpop.f32.mrf.mxu0
      %v8418 = vadd.f32 %v8305, %v8417
      %8419 = vmatprep.mubr.f32.mxu0 0.0
      %8420 = vmatmul.mubr.f32.gmra.mxu0 %v7992
      %v8421 = vpop.f32.mrf.mxu0
      %v8422 = vadd.f32 %v8309, %v8421
      %v8423 = vpop.f32.mrf.mxu0
      %v8424 = vadd.f32 %v8311, %v8423
      %8425 = vmatprep.mubr.f32.mxu0 0.0
      %8426 = vmatmul.mubr.f32.gmra.mxu0 %v7995
      %v8427 = vpop.f32.mrf.mxu0
      %v8428 = vadd.f32 %v8315, %v8427
      %v8429 = vpop.f32.mrf.mxu0
      %v8430 = vadd.f32 %v8317, %v8429
      %8431 = vmatprep.mubr.f32.mxu0 0.0
      %8432 = vmatmul.mubr.f32.gmra.mxu0 %v7998
      %v8433 = vpop.f32.mrf.mxu0
      %v8434 = vadd.f32 %v8321, %v8433
      %v8435 = vpop.f32.mrf.mxu0
      %v8436 = vadd.f32 %v8323, %v8435
      %8437 = vmatprep.mubr.f32.mxu0 0.0
      %8438 = vmatmul.mubr.f32.gmra.mxu0 %v8001
      %v8439 = vpop.f32.mrf.mxu0
      %v8440 = vadd.f32 %v8327, %v8439
      %v8441 = vpop.f32.mrf.mxu0
      %v8442 = vadd.f32 %v8329, %v8441
      %8443 = vdwg.mxu0
      %8444 = vmatprep.subr.mxu0 0.0
      %8445 = vmatpush1.xpose.msra.mxu0 0.0
      %8446 = vmatprep.subr.mxu0 0.0
      %8447 = vmatpush1.xpose.msra.mxu0 0.0
      %8448 = vmatprep.subr.mxu0 0.0
      %8449 = vmatpush1.xpose.msra.mxu0 0.0
      %8450 = vmatprep.subr.mxu0 0.0
      %8451 = vmatpush1.xpose.msra.mxu0 0.0
      %8452 = vmatprep.subr.mxu0 0.0
      %8453 = vmatpush1.xpose.msra.mxu0 0.0
      %8454 = vmatprep.subr.mxu0 0.0
      %8455 = vmatpush1.xpose.msra.mxu0 0.0
      %8456 = vmatprep.subr.mxu0 0.0
      %8457 = vmatpush1.xpose.msra.mxu0 0.0
      %8458 = vmatprep.subr.mxu0 0.0
      %8459 = vmatpush1.xpose.msra.mxu0 0.0
      %8460 = vmatprep.subr.mxu0 0.0
      %8461 = vmatpush1.xpose.msra.mxu0 0.0
      %8462 = vmatprep.subr.mxu0 0.0
      %8463 = vmatpush1.xpose.msra.mxu0 0.0
      %8464 = vmatprep.subr.mxu0 0.0
      %8465 = vmatpush1.xpose.msra.mxu0 0.0
      %8466 = vmatprep.subr.mxu0 0.0
      %8467 = vmatpush1.xpose.msra.mxu0 0.0
      %8468 = vmatprep.subr.mxu0 0.0
      %8469 = vmatpush1.xpose.msra.mxu0 0.0
      %8470 = vmatprep.subr.mxu0 0.0
      %8471 = vmatpush1.xpose.msra.mxu0 0.0
      %8472 = vmatprep.subr.mxu0 %v7927
      %8473 = vmatpush1.xpose.msra.mxu0 %v7926
      %8474 = vmatprep.subr.mxu0 %v7922
      %8475 = vmatpush1.xpose.msra.mxu0 %v7921
      %8476 = vmatprep.subr.mxu0 0.0
      %8477 = vmatpush2.xpose.msra.mxu0 0.0
      %8478 = vmatprep.subr.mxu0 0.0
      %8479 = vmatpush2.xpose.msra.mxu0 0.0
      %8480 = vmatprep.subr.mxu0 0.0
      %8481 = vmatpush2.xpose.msra.mxu0 0.0
      %8482 = vmatprep.subr.mxu0 0.0
      %8483 = vmatpush2.xpose.msra.mxu0 0.0
      %8484 = vmatprep.subr.mxu0 0.0
      %8485 = vmatpush2.xpose.msra.mxu0 0.0
      %8486 = vmatprep.subr.mxu0 0.0
      %8487 = vmatpush2.xpose.msra.mxu0 0.0
      %8488 = vmatprep.subr.mxu0 0.0
      %8489 = vmatpush2.xpose.msra.mxu0 0.0
      %8490 = vmatprep.subr.mxu0 0.0
      %8491 = vmatpush2.xpose.msra.mxu0 0.0
      %8492 = vmatprep.subr.mxu0 0.0
      %8493 = vmatpush2.xpose.msra.mxu0 0.0
      %8494 = vmatprep.subr.mxu0 0.0
      %8495 = vmatpush2.xpose.msra.mxu0 0.0
      %8496 = vmatprep.subr.mxu0 0.0
      %8497 = vmatpush2.xpose.msra.mxu0 0.0
      %8498 = vmatprep.subr.mxu0 0.0
      %8499 = vmatpush2.xpose.msra.mxu0 0.0
      %8500 = vmatprep.subr.mxu0 0.0
      %8501 = vmatpush2.xpose.msra.mxu0 0.0
      %8502 = vmatprep.subr.mxu0 0.0
      %8503 = vmatpush2.xpose.msra.mxu0 0.0
      %8504 = vmatprep.subr.mxu0 0.0
      %8505 = vmatpush2.xpose.msra.mxu0 0.0
      %8506 = vmatprep.subr.mxu0 0.0
      %8507 = vmatpush2.xpose.msra.mxu0 0.0
      %8508 = vmatprep.mubr.f32.mxu0 %v7722
      %8509 = vmatmul.mubr.f32.gmra.mxu0 %v7721
      %v8510 = vpop.f32.mrf.mxu0
      %v8511 = vadd.f32 %v7942, %v8510
      %v8512 = vpop.f32.mrf.mxu0
      %8513 = vmatprep.mubr.f32.mxu0 %v7727
      %8514 = vmatmul.mubr.f32.gmra.mxu0 %v7726
      %v8515 = vpop.f32.mrf.mxu0
      %v8516 = vadd.f32 %v7947, %v8515
      %v8517 = vpop.f32.mrf.mxu0
      %8518 = vmatprep.mubr.f32.mxu0 %v7732
      %8519 = vmatmul.mubr.f32.gmra.mxu0 %v7731
      %v8520 = vpop.f32.mrf.mxu0
      %v8521 = vadd.f32 %v7952, %v8520
      %v8522 = vpop.f32.mrf.mxu0
      %8523 = vmatprep.mubr.f32.mxu0 %v7737
      %8524 = vmatmul.mubr.f32.gmra.mxu0 %v7736
      %v8525 = vpop.f32.mrf.mxu0
      %v8526 = vadd.f32 %v7957, %v8525
      %v8527 = vpop.f32.mrf.mxu0
      %8528 = vmatprep.mubr.f32.mxu0 %v7742
      %8529 = vmatmul.mubr.f32.gmra.mxu0 %v7741
      %v8530 = vpop.f32.mrf.mxu0
      %v8531 = vadd.f32 %v7962, %v8530
      %v8532 = vpop.f32.mrf.mxu0
      %8533 = vmatprep.mubr.f32.mxu0 %v7747
      %8534 = vmatmul.mubr.f32.gmra.mxu0 %v7746
      %v8535 = vpop.f32.mrf.mxu0
      %v8536 = vadd.f32 %v7967, %v8535
      %v8537 = vpop.f32.mrf.mxu0
      %8538 = vmatprep.mubr.f32.mxu0 %v7752
      %8539 = vmatmul.mubr.f32.gmra.mxu0 %v7751
      %v8540 = vpop.f32.mrf.mxu0
      %v8541 = vadd.f32 %v7972, %v8540
      %v8542 = vpop.f32.mrf.mxu0
      %8543 = vmatprep.mubr.f32.mxu0 %v7757
      %8544 = vmatmul.mubr.f32.gmra.mxu0 %v7756
      %v8545 = vpop.f32.mrf.mxu0
      %v8546 = vadd.f32 %v7977, %v8545
      %v8547 = vpop.f32.mrf.mxu0
      %8548 = vdwg.mxu0
      %8549 = vmatprep.subr.mxu0 0.0
      %8550 = vmatpush1.xpose.msra.mxu0 0.0
      %8551 = vmatprep.subr.mxu0 0.0
      %8552 = vmatpush1.xpose.msra.mxu0 0.0
      %8553 = vmatprep.subr.mxu0 0.0
      %8554 = vmatpush1.xpose.msra.mxu0 0.0
      %8555 = vmatprep.subr.mxu0 0.0
      %8556 = vmatpush1.xpose.msra.mxu0 0.0
      %8557 = vmatprep.subr.mxu0 0.0
      %8558 = vmatpush1.xpose.msra.mxu0 0.0
      %8559 = vmatprep.subr.mxu0 0.0
      %8560 = vmatpush1.xpose.msra.mxu0 0.0
      %8561 = vmatprep.subr.mxu0 0.0
      %8562 = vmatpush1.xpose.msra.mxu0 0.0
      %8563 = vmatprep.subr.mxu0 0.0
      %8564 = vmatpush1.xpose.msra.mxu0 0.0
      %8565 = vmatprep.subr.mxu0 0.0
      %8566 = vmatpush1.xpose.msra.mxu0 0.0
      %8567 = vmatprep.subr.mxu0 0.0
      %8568 = vmatpush1.xpose.msra.mxu0 0.0
      %8569 = vmatprep.subr.mxu0 0.0
      %8570 = vmatpush1.xpose.msra.mxu0 0.0
      %8571 = vmatprep.subr.mxu0 0.0
      %8572 = vmatpush1.xpose.msra.mxu0 0.0
      %8573 = vmatprep.subr.mxu0 0.0
      %8574 = vmatpush1.xpose.msra.mxu0 0.0
      %8575 = vmatprep.subr.mxu0 0.0
      %8576 = vmatpush1.xpose.msra.mxu0 0.0
      %8577 = vmatprep.subr.mxu0 %v7929
      %8578 = vmatpush1.xpose.msra.mxu0 %v7928
      %8579 = vmatprep.subr.mxu0 %v7924
      %8580 = vmatpush1.xpose.msra.mxu0 %v7923
      %8581 = vmatprep.subr.mxu0 0.0
      %8582 = vmatpush2.xpose.msra.mxu0 0.0
      %8583 = vmatprep.subr.mxu0 0.0
      %8584 = vmatpush2.xpose.msra.mxu0 0.0
      %8585 = vmatprep.subr.mxu0 0.0
      %8586 = vmatpush2.xpose.msra.mxu0 0.0
      %8587 = vmatprep.subr.mxu0 0.0
      %8588 = vmatpush2.xpose.msra.mxu0 0.0
      %8589 = vmatprep.subr.mxu0 0.0
      %8590 = vmatpush2.xpose.msra.mxu0 0.0
      %8591 = vmatprep.subr.mxu0 0.0
      %8592 = vmatpush2.xpose.msra.mxu0 0.0
      %8593 = vmatprep.subr.mxu0 0.0
      %8594 = vmatpush2.xpose.msra.mxu0 0.0
      %8595 = vmatprep.subr.mxu0 0.0
      %8596 = vmatpush2.xpose.msra.mxu0 0.0
      %8597 = vmatprep.subr.mxu0 0.0
      %8598 = vmatpush2.xpose.msra.mxu0 0.0
      %8599 = vmatprep.subr.mxu0 0.0
      %8600 = vmatpush2.xpose.msra.mxu0 0.0
      %8601 = vmatprep.subr.mxu0 0.0
      %8602 = vmatpush2.xpose.msra.mxu0 0.0
      %8603 = vmatprep.subr.mxu0 0.0
      %8604 = vmatpush2.xpose.msra.mxu0 0.0
      %8605 = vmatprep.subr.mxu0 0.0
      %8606 = vmatpush2.xpose.msra.mxu0 0.0
      %8607 = vmatprep.subr.mxu0 0.0
      %8608 = vmatpush2.xpose.msra.mxu0 0.0
      %8609 = vmatprep.subr.mxu0 0.0
      %8610 = vmatpush2.xpose.msra.mxu0 0.0
      %8611 = vmatprep.subr.mxu0 0.0
      %8612 = vmatpush2.xpose.msra.mxu0 0.0
      %8613 = vmatprep.mubr.f32.mxu0 %v7724
      %8614 = vmatmul.mubr.f32.gmra.mxu0 %v7723
      %v8615 = vpop.f32.mrf.mxu0
      %v8616 = vadd.f32 %v8511, %v8615
      %v8617 = vpop.f32.mrf.mxu0
      %8618 = vmatprep.mubr.f32.mxu0 %v7729
      %8619 = vmatmul.mubr.f32.gmra.mxu0 %v7728
      %v8620 = vpop.f32.mrf.mxu0
      %v8621 = vadd.f32 %v8516, %v8620
      %v8622 = vpop.f32.mrf.mxu0
      %8623 = vmatprep.mubr.f32.mxu0 %v7734
      %8624 = vmatmul.mubr.f32.gmra.mxu0 %v7733
      %v8625 = vpop.f32.mrf.mxu0
      %v8626 = vadd.f32 %v8521, %v8625
      %v8627 = vpop.f32.mrf.mxu0
      %8628 = vmatprep.mubr.f32.mxu0 %v7739
      %8629 = vmatmul.mubr.f32.gmra.mxu0 %v7738
      %v8630 = vpop.f32.mrf.mxu0
      %v8631 = vadd.f32 %v8526, %v8630
      %v8632 = vpop.f32.mrf.mxu0
      %8633 = vmatprep.mubr.f32.mxu0 %v7744
      %8634 = vmatmul.mubr.f32.gmra.mxu0 %v7743
      %v8635 = vpop.f32.mrf.mxu0
      %v8636 = vadd.f32 %v8531, %v8635
      %v8637 = vpop.f32.mrf.mxu0
      %8638 = vmatprep.mubr.f32.mxu0 %v7749
      %8639 = vmatmul.mubr.f32.gmra.mxu0 %v7748
      %v8640 = vpop.f32.mrf.mxu0
      %v8641 = vadd.f32 %v8536, %v8640
      %v8642 = vpop.f32.mrf.mxu0
      %8643 = vmatprep.mubr.f32.mxu0 %v7754
      %8644 = vmatmul.mubr.f32.gmra.mxu0 %v7753
      %v8645 = vpop.f32.mrf.mxu0
      %v8646 = vadd.f32 %v8541, %v8645
      %v8647 = vpop.f32.mrf.mxu0
      %8648 = vmatprep.mubr.f32.mxu0 %v7759
      %8649 = vmatmul.mubr.f32.gmra.mxu0 %v7758
      %v8650 = vpop.f32.mrf.mxu0
      %v8651 = vadd.f32 %v8546, %v8650
      %v8652 = vpop.f32.mrf.mxu0
      %8653 = vdwg.mxu0
      %8654 = vmatprep.subr.mxu0 0.0
      %8655 = vmatpush1.xpose.msra.mxu0 0.0
      %8656 = vmatprep.subr.mxu0 0.0
      %8657 = vmatpush1.xpose.msra.mxu0 0.0
      %8658 = vmatprep.subr.mxu0 0.0
      %8659 = vmatpush1.xpose.msra.mxu0 0.0
      %8660 = vmatprep.subr.mxu0 0.0
      %8661 = vmatpush1.xpose.msra.mxu0 0.0
      %8662 = vmatprep.subr.mxu0 0.0
      %8663 = vmatpush1.xpose.msra.mxu0 0.0
      %8664 = vmatprep.subr.mxu0 0.0
      %8665 = vmatpush1.xpose.msra.mxu0 0.0
      %8666 = vmatprep.subr.mxu0 0.0
      %8667 = vmatpush1.xpose.msra.mxu0 0.0
      %8668 = vmatprep.subr.mxu0 0.0
      %8669 = vmatpush1.xpose.msra.mxu0 0.0
      %8670 = vmatprep.subr.mxu0 0.0
      %8671 = vmatpush1.xpose.msra.mxu0 0.0
      %8672 = vmatprep.subr.mxu0 0.0
      %8673 = vmatpush1.xpose.msra.mxu0 0.0
      %8674 = vmatprep.subr.mxu0 0.0
      %8675 = vmatpush1.xpose.msra.mxu0 0.0
      %8676 = vmatprep.subr.mxu0 0.0
      %8677 = vmatpush1.xpose.msra.mxu0 0.0
      %8678 = vmatprep.subr.mxu0 0.0
      %8679 = vmatpush1.xpose.msra.mxu0 0.0
      %8680 = vmatprep.subr.mxu0 0.0
      %8681 = vmatpush1.xpose.msra.mxu0 0.0
      %8682 = vmatprep.subr.mxu0 0.0
      %8683 = vmatpush1.xpose.msra.mxu0 %v8103
      %8684 = vmatprep.subr.mxu0 0.0
      %8685 = vmatpush1.xpose.msra.mxu0 %v8100
      %8686 = vmatprep.subr.mxu0 0.0
      %8687 = vmatpush2.xpose.msra.mxu0 0.0
      %8688 = vmatprep.subr.mxu0 0.0
      %8689 = vmatpush2.xpose.msra.mxu0 0.0
      %8690 = vmatprep.subr.mxu0 0.0
      %8691 = vmatpush2.xpose.msra.mxu0 0.0
      %8692 = vmatprep.subr.mxu0 0.0
      %8693 = vmatpush2.xpose.msra.mxu0 0.0
      %8694 = vmatprep.subr.mxu0 0.0
      %8695 = vmatpush2.xpose.msra.mxu0 0.0
      %8696 = vmatprep.subr.mxu0 0.0
      %8697 = vmatpush2.xpose.msra.mxu0 0.0
      %8698 = vmatprep.subr.mxu0 0.0
      %8699 = vmatpush2.xpose.msra.mxu0 0.0
      %8700 = vmatprep.subr.mxu0 0.0
      %8701 = vmatpush2.xpose.msra.mxu0 0.0
      %8702 = vmatprep.subr.mxu0 0.0
      %8703 = vmatpush2.xpose.msra.mxu0 0.0
      %8704 = vmatprep.subr.mxu0 0.0
      %8705 = vmatpush2.xpose.msra.mxu0 0.0
      %8706 = vmatprep.subr.mxu0 0.0
      %8707 = vmatpush2.xpose.msra.mxu0 0.0
      %8708 = vmatprep.subr.mxu0 0.0
      %8709 = vmatpush2.xpose.msra.mxu0 0.0
      %8710 = vmatprep.subr.mxu0 0.0
      %8711 = vmatpush2.xpose.msra.mxu0 0.0
      %8712 = vmatprep.subr.mxu0 0.0
      %8713 = vmatpush2.xpose.msra.mxu0 0.0
      %8714 = vmatprep.subr.mxu0 0.0
      %8715 = vmatpush2.xpose.msra.mxu0 0.0
      %8716 = vmatprep.subr.mxu0 0.0
      %8717 = vmatpush2.xpose.msra.mxu0 0.0
      %8718 = vmatprep.mubr.f32.mxu0 0.0
      %8719 = vmatmul.mubr.f32.gmra.mxu0 %v7980
      %v8720 = vpop.f32.mrf.mxu0
      %v8721 = vadd.f32 %v8616, %v8720
      %v8722 = vpop.f32.mrf.mxu0
      %8723 = vmatprep.mubr.f32.mxu0 0.0
      %8724 = vmatmul.mubr.f32.gmra.mxu0 %v7983
      %v8725 = vpop.f32.mrf.mxu0
      %v8726 = vadd.f32 %v8621, %v8725
      %v8727 = vpop.f32.mrf.mxu0
      %8728 = vmatprep.mubr.f32.mxu0 0.0
      %8729 = vmatmul.mubr.f32.gmra.mxu0 %v7986
      %v8730 = vpop.f32.mrf.mxu0
      %v8731 = vadd.f32 %v8626, %v8730
      %v8732 = vpop.f32.mrf.mxu0
      %8733 = vmatprep.mubr.f32.mxu0 0.0
      %8734 = vmatmul.mubr.f32.gmra.mxu0 %v7989
      %v8735 = vpop.f32.mrf.mxu0
      %v8736 = vadd.f32 %v8631, %v8735
      %v8737 = vpop.f32.mrf.mxu0
      %8738 = vmatprep.mubr.f32.mxu0 0.0
      %8739 = vmatmul.mubr.f32.gmra.mxu0 %v7992
      %v8740 = vpop.f32.mrf.mxu0
      %v8741 = vadd.f32 %v8636, %v8740
      %v8742 = vpop.f32.mrf.mxu0
      %8743 = vmatprep.mubr.f32.mxu0 0.0
      %8744 = vmatmul.mubr.f32.gmra.mxu0 %v7995
      %v8745 = vpop.f32.mrf.mxu0
      %v8746 = vadd.f32 %v8641, %v8745
      %v8747 = vpop.f32.mrf.mxu0
      %8748 = vmatprep.mubr.f32.mxu0 0.0
      %8749 = vmatmul.mubr.f32.gmra.mxu0 %v7998
      %v8750 = vpop.f32.mrf.mxu0
      %v8751 = vadd.f32 %v8646, %v8750
      %v8752 = vpop.f32.mrf.mxu0
      %8753 = vmatprep.mubr.f32.mxu0 0.0
      %8754 = vmatmul.mubr.f32.gmra.mxu0 %v8001
      %v8755 = vpop.f32.mrf.mxu0
      %v8756 = vadd.f32 %v8651, %v8755
      %v8757 = vpop.f32.mrf.mxu0
      %8758 = vdwg.mxu0
      %v8759 = vmax.f32 %v8398, 0.0
      %v8760 = vmax.f32 %v8400, 0.0
      %v8761 = vmax.f32 %v8721, 0.0
      %v8762 = vmax.f32 %v8404, 0.0
      %v8763 = vmax.f32 %v8406, 0.0
      %v8764 = vmax.f32 %v8726, 0.0
      %v8765 = vmax.f32 %v8410, 0.0
      %v8766 = vmax.f32 %v8412, 0.0
      %v8767 = vmax.f32 %v8731, 0.0
      %v8768 = vmax.f32 %v8416, 0.0
      %v8769 = vmax.f32 %v8418, 0.0
      %v8770 = vmax.f32 %v8736, 0.0
      %v8771 = vmax.f32 %v8422, 0.0
      %v8772 = vmax.f32 %v8424, 0.0
      %v8773 = vmax.f32 %v8741, 0.0
      %v8774 = vmax.f32 %v8428, 0.0
      %v8775 = vmax.f32 %v8430, 0.0
      %v8776 = vmax.f32 %v8746, 0.0
      %v8777 = vmax.f32 %v8434, 0.0
      %v8778 = vmax.f32 %v8436, 0.0
      %v8779 = vmax.f32 %v8751, 0.0
      %v8780 = vmax.f32 %v8440, 0.0
      %v8781 = vmax.f32 %v8442, 0.0
      %v8782 = vmax.f32 %v8756, 0.0
      %8783 = vst [vmem:[%s251] sm:$0xff] %v8759
      %8784 = vst [vmem:[%s251 + $0x8] sm:$0xff] %v8760
      %vm8785 = vcmask 130048
      %8786 = vst.msk [vmem:[%s251 + $0x10] sm:$0xff] %vm8785, %v8761
      %8787 = vst [vmem:[%s251 + $0x18] sm:$0xff] %v8762
      %8788 = vst [vmem:[%s251 + $0x20] sm:$0xff] %v8763
      %8789 = vst.msk [vmem:[%s251 + $0x28] sm:$0xff] %vm8785, %v8764
      %8790 = vst [vmem:[%s251 + $0x30] sm:$0xff] %v8765
      %8791 = vst [vmem:[%s251 + $0x38] sm:$0xff] %v8766
      %8792 = vst.msk [vmem:[%s251 + $0x40] sm:$0xff] %vm8785, %v8767
      %8793 = vst [vmem:[%s251 + $0x48] sm:$0xff] %v8768
      %8794 = vst [vmem:[%s251 + $0x50] sm:$0xff] %v8769
      %8795 = vst.msk [vmem:[%s251 + $0x58] sm:$0xff] %vm8785, %v8770
      %8796 = vst [vmem:[%s251 + $0x60] sm:$0xff] %v8771
      %8797 = vst [vmem:[%s251 + $0x68] sm:$0xff] %v8772
      %8798 = vst.msk [vmem:[%s251 + $0x70] sm:$0xff] %vm8785, %v8773
      %8799 = vst [vmem:[%s251 + $0x78] sm:$0xff] %v8774
      %8800 = vst [vmem:[%s251 + $0x80] sm:$0xff] %v8775
      %8801 = vst.msk [vmem:[%s251 + $0x88] sm:$0xff] %vm8785, %v8776
      %8802 = vst [vmem:[%s251 + $0x90] sm:$0xff] %v8777
      %8803 = vst [vmem:[%s251 + $0x98] sm:$0xff] %v8778
      %8804 = vst.msk [vmem:[%s251 + $0xa0] sm:$0xff] %vm8785, %v8779
      %8805 = vst [vmem:[%s251 + $0xa8] sm:$0xff] %v8780
      %8806 = vst [vmem:[%s251 + $0xb0] sm:$0xff] %v8781
      %8807 = vst.msk [vmem:[%s251 + $0xb8] sm:$0xff] %vm8785, %v8782
      %p8808 = scmp.lt.s32.totalorder %s17, 1
      %s8809 = scalar_select %p8808, %s17, 1
      %s8810 = smul.addr %s8809, 24
      %s8811 = smul.addr %s8810, 8
      %s8812 = scalar_lea.vmem %s6, %s8811
      // Predicated region
      $region45: #{up1_forward.1} parent=43 // pred_check
        %p8813 = pneg %p166
      $region46: #{up1_forward.1} parent=43 // pred_check_branch
        %8815 = sbr.rel (%p8813) target = $region48
      $region47: #{up1_forward.1} parent=43 // pred_region
        _
      $region48: #{up1_forward.1} parent=43 // pred_fallthru
        _
    $region44: #{up1_forward.1} parent=5 // pred_fallthru
      _
    %p8816 = scmp.le.s32.totalorder 2, %s12
    // Predicated region
    $region49: #{up1_forward.1} parent=5 // pred_check
      %p8817 = pneg %p8816
    $region50: #{up1_forward.1} parent=5 // pred_check_branch
      %8819 = sbr.rel (%p8817) target = $region52
    $region51: #{up1_forward.1} parent=5 // pred_region
      %s8820 = ssub.s32 %s12, 2
      // Predicated region
      $region53: #{up1_forward.1} parent=51 // pred_check
        %p8821 = pneg %p172
      $region54: #{up1_forward.1} parent=51 // pred_check_branch
        %8823 = sbr.rel (%p8821) target = $region56
      $region55: #{up1_forward.1} parent=51 // pred_region
        %p8824 = scmp.lt.s32.totalorder %s18, 1
        %s8825 = scalar_select %p8824, %s18, 1
        %s8826 = smul.addr %s8825, 24
        %s8827 = smul.addr %s8826, 8
        %s8828 = scalar_lea.vmem %s6, %s8827
      $region56: #{up1_forward.1} parent=51 // pred_fallthru
        _
    $region52: #{up1_forward.1} parent=5 // pred_fallthru
      _
  $region6: #{up1_forward.1} parent=0 // loop_footer
    %s16 = sadd.s32 1, %s12
  $region7: #{up1_forward.1} parent=0 // loop_footer_branch
    %11 = sbr.rel target = $region3
  $region8: #{up1_forward.1} parent=0 // loop_exit
    _

</llo_original>
